<compile_context>
chip_gen: v7x
topology: tpu7x:2x2x1
jax: 0.10.0
libtpu: 0.0.40
codegen_flags: <defaults>
</compile_context>

<pallas_src>
import functools

import jax
import jax.numpy as jnp
from jax import lax
from jax.experimental import pallas as pl
from jax.experimental.pallas import tpu as pltpu


# Finite stand-in for float('-inf') in the GAT mask: identical result whenever a
# node has >= 1 neighbor (always true once self-loops exist) and avoids the NaN
# that -inf produces for isolated nodes.
_MASK_NEG = -1e30

_CONV_NAMES = ("l1", "l2", "p1", "p2", "g")
_FUSION_NAMES = ("wq", "bq", "wk", "bk", "wt", "bt", "ws", "bs",
                 "g1w", "g1b", "g2w", "g2b")


# ----------------------------------------------------------------------------
# Matmul helpers (all dimension-number patterns used by official Pallas kernels)
# ----------------------------------------------------------------------------
def _mm(a, b):
    # (M, K) @ (K, N)
    return jnp.dot(a, b, preferred_element_type=jnp.float32)


def _mm_tn(a, b):
    # a: (K, M), b: (K, N) -> (M, N)   == a.T @ b without an explicit transpose
    return lax.dot_general(a, b, (((0,), (0,)), ((), ())),
                           preferred_element_type=jnp.float32)


def _mm_nt(a, b):
    # a: (M, K), b: (N, K) -> (M, N)   == a @ b.T without an explicit transpose
    return lax.dot_general(a, b, (((1,), (1,)), ((), ())),
                           preferred_element_type=jnp.float32)


def _row_sums_on_lanes(x):
    # x: (R, C) -> (1, R) with entry r = sum_c x[r, c].  Done as a matmul so the
    # reduction runs on the MXU and the result lands on the lane axis, ready for
    # the (hidR,1)@(1,m) outer-product encoders.
    ones = jnp.ones((1, x.shape[1]), jnp.float32)
    return _mm_nt(ones, x)


# ----------------------------------------------------------------------------
# Per-sample math in feature-major layout (traced inside the fused kernel).
# ----------------------------------------------------------------------------
def _conv_branch_fm(x2d, w2, b, ks, dil, pool, *, T, m, hidP):
    """One ConvBranch (Conv2d + folded BN + AdaptiveMaxPool + tanh).

    x2d: (C, T*m) with column index t*m + node; w2: (k, ks*C) with column index
    dk*C + c; b: (k, 1).  Returns (k*hidP, m) (or (k, m) for the global branch).
    """
    kk = w2.shape[0]
    L = T - dil * (ks - 1)
    # im2col: each dilated window is a contiguous lane slice of x2d.
    patch = jnp.concatenate(
        [x2d[:, dk * dil * m:(dk * dil + L) * m] for dk in range(ks)], axis=0)
    conv = _mm(w2, patch) + b                       # (k, L*m) -- one wide matmul
    if not pool:                                    # conv_g: ks == T so L == 1
        out = conv[:, :m]
    else:                                           # AdaptiveMaxPool2d((hidP, m))
        bins = []
        for i in range(hidP):
            s = (i * L) // hidP
            e = -(-((i + 1) * L) // hidP)           # ceil
            acc = conv[:, s * m:(s + 1) * m]
            for t in range(s + 1, e):
                acc = jnp.maximum(acc, conv[:, t * m:(t + 1) * m])
            bins.append(acc)
        if hidP == 1:
            out = bins[0]
        else:
            out = jnp.stack(bins, axis=1).reshape(kk * hidP, m)
    return jnp.tanh(out)


def _backbone_fm(x2d, convs, *, T, m, hidP):
    pieces = [_conv_branch_fm(x2d, w2, b, ks, dil, pool, T=T, m=m, hidP=hidP)
              for (w2, b, ks, dil, pool) in convs]
    return jnp.tanh(jnp.concatenate(pieces, axis=0))        # (hidR, m)


def _fusion_fm(temp, adjb, fp, adjacency_type, alpha=1.0):
    """Attention/degree fusion + graph learner + Laplacian.  temp: (hidR, m)."""
    m = adjb.shape[0]
    q = _mm(fp["wq"], temp) + fp["bq"]                      # (hidA, m)
    kmat = _mm(fp["wk"], temp) + fp["bk"]                   # (hidA, m)
    attn = _mm_tn(q, kmat)                                  # (m, m), attn[i,j]=q_i.k_j
    ssq = jnp.sum(attn * attn, axis=-1, keepdims=True)
    attn = attn * lax.rsqrt(jnp.maximum(ssq, 1e-24))        # F.normalize(p=2, eps=1e-12)
    arow = _row_sums_on_lanes(attn)                         # (1, m)
    t_enc = _mm(fp["wt"], arow) + fp["bt"]                  # (hidR, m)
    d = _row_sums_on_lanes(adjb)                            # (1, m)
    s_enc = _mm(fp["ws"], d) + fp["bs"]                     # (hidR, m)
    feat = temp + t_enc + s_enc                             # (hidR, m)

    if adjacency_type == "static":
        combined = adjb
    else:
        n1 = jnp.tanh(alpha * (_mm(fp["g1w"], feat) + fp["g1b"]))
        n2 = jnp.tanh(alpha * (_mm(fp["g2w"], feat) + fp["g2b"]))
        la = (_mm_tn(n1, n2) - _mm_tn(n2, n1)) * alpha
        la = jnp.maximum(jnp.tanh(la), 0.0)
        rows = lax.broadcasted_iota(jnp.int32, (m, m), 0)
        cols = lax.broadcasted_iota(jnp.int32, (m, m), 1)
        la = jnp.clip(la + (rows == cols).astype(jnp.float32), 1e-6, 1.0)
        combined = la if adjacency_type == "dynamic" else la + adjb

    # getLaplaceMat: row-normalized binarized adjacency.
    adj_bin = (combined > 0).astype(jnp.float32)
    deg = jnp.sum(adj_bin, axis=-1, keepdims=True)
    lap = adj_bin * pl.reciprocal(deg + 1e-12, approx=True)
    return feat, lap


def _gat_fm(node, lap, w, a1bdT, a2bd, num_heads, fo, lrelu=0.2):
    """MultiHeadGATLayer + F.elu.  node: (hidR, m), lap: (m, m)."""
    wh = _mm(w, node)                                       # (H*Fo, m)
    # Attention logits for all heads with two block-diagonal matmuls.
    e1c = _mm_tn(wh, a1bdT)                                 # (m, H): a1[h].Wh[h, i]
    e2r = _mm(a2bd, wh)                                     # (H, m): a2[h].Wh[h, j]
    heads = []
    for h in range(num_heads):
        whh = wh[h * fo:(h + 1) * fo, :]                    # (Fo, m)
        e = e1c[:, h:h + 1] + e2r[h:h + 1, :]               # (m, m)
        e = jnp.where(e > 0, e, lrelu * e)                  # LeakyReLU(0.2)
        e = jnp.where(lap == 0.0, _MASK_NEG, e)             # masked_fill(adj==0, -inf)
        e = e - jnp.max(e, axis=-1, keepdims=True)
        p = jnp.exp(e)
        att = p * pl.reciprocal(jnp.sum(p, axis=-1, keepdims=True), approx=True)
        heads.append(_mm_nt(whh, att))                      # (Fo, m)
    out = jnp.concatenate(heads, axis=0)                    # (H*Fo, m)
    return jnp.where(out > 0, out, jnp.exp(out) - 1.0)      # F.elu


# ----------------------------------------------------------------------------
# Fused Pallas forward.
# ----------------------------------------------------------------------------
def _branch_meta(T, dilation_factor):
    return ((3, 1, True), (5, 1, True),
            (3, dilation_factor, True), (5, dilation_factor, True),
            (T, 1, False))


def _const_spec(a):
    nd = a.ndim
    return pl.BlockSpec(a.shape, lambda b, _nd=nd: (0,) * _nd)


def epignn_forward(X, adj, params, *, hidP=1, dilation_factor=2, num_heads=4,
                   adjacency_type="static"):
    """Fused EpiGNN forward.  X: (bs, T, m, feats), adj: (bs, m, m).

    Returns (bs, T_out, m) -- already in the module's output layout.
    """
    bsz, T, m, C = X.shape
    # X.permute(0, 3, 1, 2) of the PyTorch module, flattened to (bs, C, T*m) so
    # every dilated conv window becomes a contiguous lane slice in the kernel.
    x2 = jnp.transpose(X, (0, 3, 1, 2)).reshape(bsz, C, T * m)

    meta = _branch_meta(T, dilation_factor)
    conv_flat = []
    for n in _CONV_NAMES:
        w2, b = params["conv"][n]
        conv_flat += [w2, b]
    fusion_flat = [params["fusion"][n] for n in _FUSION_NAMES]
    gat_flat = []
    for layer in params["gat"]:
        gat_flat += [layer["w"], layer["a1bdT"], layer["a2bd"]]
    n_layer = len(params["gat"])
    fo = params["gat"][0]["w"].shape[0] // num_heads
    out_w, out_b = params["out_w"], params["out_b"]
    T_out = out_w.shape[0]
    k = params["conv"]["l1"][0].shape[0]
    hidR = 4 * k * hidP + k
    assert params["gat"][0]["w"].shape[1] == hidR

    weights = conv_flat + fusion_flat + gat_flat + [out_w, out_b]
    n_conv, n_fuse = len(conv_flat), len(fusion_flat)

    def kernel(x_ref, adj_ref, *rest):
        w_refs, out_ref = rest[:-1], rest[-1]

        convs = []
        for i, (ks, dil, pool) in enumerate(meta):
            convs.append((w_refs[2 * i][...], w_refs[2 * i + 1][...], ks, dil, pool))
        need_gl = adjacency_type != "static"
        fp = {}
        for j, name in enumerate(_FUSION_NAMES):
            if need_gl or not name.startswith("g"):
                fp[name] = w_refs[n_conv + j][...]
        gats = []
        for l in range(n_layer):
            base = n_conv + n_fuse + 3 * l
            gats.append((w_refs[base][...], w_refs[base + 1][...],
                         w_refs[base + 2][...]))
        ow = w_refs[-2][...]
        ob = w_refs[-1][...]

        x2d = x_ref[0]                                      # (C, T*m)
        adjb = adj_ref[0]                                   # (m, m)

        temp = _backbone_fm(x2d, convs, T=T, m=m, hidP=hidP)          # (hidR, m)
        feat, lap = _fusion_fm(temp, adjb, fp, adjacency_type)
        node = feat
        gat_outs = []
        for (wl, a1bdT, a2bd) in gats:
            node = _gat_fm(node, lap, wl, a1bdT, a2bd, num_heads, fo)
            gat_outs.append(node)
        ns_all = jnp.concatenate(gat_outs + [feat], axis=0)           # (D, m)
        out_ref[0] = _mm(ow, ns_all) + ob                             # (T_out, m)

    return pl.pallas_call(
        kernel,
        out_shape=jax.ShapeDtypeStruct((bsz, T_out, m), jnp.float32),
        grid=(bsz,),
        in_specs=[pl.BlockSpec((1, C, T * m), lambda b: (b, 0, 0)),
                  pl.BlockSpec((1, m, m), lambda b: (b, 0, 0))]
                 + [_const_spec(w) for w in weights],
        out_specs=pl.BlockSpec((1, T_out, m), lambda b: (b, 0, 0)),
        compiler_params=pltpu.CompilerParams(dimension_semantics=("parallel",)),
    )(x2, adj, *weights)


# ----------------------------------------------------------------------------
# Plain-JAX reference (node-major, mirrors the PyTorch module).
# ----------------------------------------------------------------------------
def _ref_conv_branch(x, w2, b, ks, dil, hidP, pool):
    C, T, m = x.shape
    kk = w2.shape[0]
    L = T - dil * (ks - 1)
    cols = []
    for t in range(L):
        patch = jnp.concatenate([x[:, t + dk * dil, :] for dk in range(ks)], axis=0)
        cols.append(w2 @ patch + b)
    conv = jnp.stack(cols, axis=1)                          # (k, L, m)
    if not pool:
        out = conv[:, 0, :]
    else:
        bins = []
        for i in range(hidP):
            s = (i * L) // hidP
            e = -(-((i + 1) * L) // hidP)
            bins.append(jnp.max(conv[:, s:e, :], axis=1))
        out = jnp.stack(bins, axis=1).reshape(kk * hidP, m)
    return jnp.tanh(out)


def _ref_fusion(temp, adjb, fp, adjacency_type, alpha=1.0):
    m = adjb.shape[0]
    q = temp @ fp["wq"].T + fp["bq"][:, 0]
    kmat = temp @ fp["wk"].T + fp["bk"][:, 0]
    attn = q @ kmat.T
    norm = jnp.sqrt(jnp.sum(attn * attn, axis=-1, keepdims=True))
    attn = attn / jnp.maximum(norm, 1e-12)
    arow = jnp.sum(attn, axis=-1, keepdims=True)
    t_enc = arow @ fp["wt"].T + fp["bt"][:, 0]
    d = jnp.sum(adjb, axis=-1, keepdims=True)
    s_enc = d @ fp["ws"].T + fp["bs"][:, 0]
    feat = temp + t_enc + s_enc
    if adjacency_type == "static":
        combined = adjb
    else:
        n1 = jnp.tanh(alpha * (feat @ fp["g1w"].T + fp["g1b"][:, 0]))
        n2 = jnp.tanh(alpha * (feat @ fp["g2w"].T + fp["g2b"][:, 0]))
        la = (n1 @ n2.T - n2 @ n1.T) * alpha
        la = jnp.clip(jnp.maximum(jnp.tanh(la), 0.0) + jnp.eye(m, dtype=jnp.float32),
                      1e-6, 1.0)
        combined = la if adjacency_type == "dynamic" else la + adjb
    adj_bin = (combined > 0).astype(jnp.float32)
    deg = jnp.sum(adj_bin, axis=-1, keepdims=True)
    lap = adj_bin / (deg + 1e-12)
    return feat, lap


def _ref_gat(h, lap, w, a1, a2, num_heads, fo, lrelu=0.2):
    wh = h @ w.T                                            # (m, H*Fo)
    heads = []
    for hd in range(num_heads):
        whh = wh[:, hd * fo:(hd + 1) * fo]
        e = (whh @ a1[hd])[:, None] + (whh @ a2[hd])[None, :]
        e = jnp.where(e > 0, e, lrelu * e)
        e = jnp.where(lap == 0.0, _MASK_NEG, e)
        att = jax.nn.softmax(e, axis=-1)
        heads.append(att @ whh)
    out = jnp.concatenate(heads, axis=-1)
    return jnp.where(out > 0, out, jnp.exp(out) - 1.0)


def ref_forward(X, adj, params, *, hidP=1, dilation_factor=2, num_heads=4,
                adjacency_type="static"):
    bsz, T, m, C = X.shape
    x = jnp.transpose(X, (0, 3, 1, 2))
    meta = _branch_meta(T, dilation_factor)
    fo = params["gat"][0]["a1"].shape[1]

    def one(xb, adjb):
        pieces = [_ref_conv_branch(xb, params["conv"][n][0], params["conv"][n][1],
                                   ks, dil, hidP, pool)
                  for n, (ks, dil, pool) in zip(_CONV_NAMES, meta)]
        temp = jnp.tanh(jnp.concatenate(pieces, axis=0)).T          # (m, hidR)
        feat, lap = _ref_fusion(temp, adjb, params["fusion"], adjacency_type)
        node = feat
        outs = []
        for lp in params["gat"]:
            node = _ref_gat(node, lap, lp["w"], lp["a1"], lp["a2"], num_heads, fo)
            outs.append(node)
        ns_all = jnp.concatenate(outs + [feat], axis=-1)
        res = ns_all @ params["out_w"].T + params["out_b"][:, 0]
        return res.T                                                # (T_out, m)

    return jax.vmap(one)(x, adj)


# ----------------------------------------------------------------------------
# Deterministic synthetic parameters (shapes follow EpiGNN.__init__).
# ----------------------------------------------------------------------------
def init_params(key, *, m, nfeat, T, T_out, k=8, hidA=32, hidR=40, hidP=1,
                n_layer=3, num_heads=4):
    assert hidR == 4 * k * hidP + k, "hidR must equal the RegionAwareConv width"
    fo = hidR // num_heads
    keys = iter(jax.random.split(key, 64))

    def uni(shape, a):
        return jax.random.uniform(next(keys), shape, jnp.float32, minval=-a, maxval=a)

    def xav(shape):
        fan_out, fan_in = shape
        return uni(shape, (6.0 / (fan_in + fan_out)) ** 0.5)

    def conv_branch(ks):
        C = nfeat
        w = uni((k, C, ks), (6.0 / (C * ks + k)) ** 0.5)    # Conv2d weight (k,C,ks,1)
        b = uni((k,), 0.1)                                  # Conv2d bias
        gamma = 1.0 + uni((k,), 0.1)                        # BatchNorm2d weight
        beta = uni((k,), 0.1)                               # BatchNorm2d bias
        # Fold eval-mode BatchNorm (running_mean=0, running_var=1, eps=1e-5).
        # TODO(synk): for a trained checkpoint, fold the real running statistics here.
        s = gamma / jnp.sqrt(jnp.float32(1.0 + 1e-5))
        w_eff = w * s[:, None, None]
        b_eff = b * s + beta
        w2 = jnp.transpose(w_eff, (0, 2, 1)).reshape(k, ks * C)   # columns (dk, c)
        return w2, b_eff[:, None]

    conv = {"l1": conv_branch(3), "l2": conv_branch(5),
            "p1": conv_branch(3), "p2": conv_branch(5), "g": conv_branch(T)}

    fusion = dict(
        wq=xav((hidA, hidR)), bq=uni((hidA, 1), 0.1),
        wk=xav((hidA, hidR)), bk=uni((hidA, 1), 0.1),
        wt=xav((hidR, 1)), bt=uni((hidR, 1), 0.1),          # t_enc = Linear(1, hidR)
        ws=xav((hidR, 1)), bs=uni((hidR, 1), 0.1),          # s_enc = Linear(1, hidR)
        g1w=xav((hidR, hidR)), g1b=uni((hidR, 1), 0.1),     # GraphLearner.linear1
        g2w=xav((hidR, hidR)), g2b=uni((hidR, 1), 0.1),     # GraphLearner.linear2
    )

    def blockdiag(a):     # (H, Fo) -> (H, H*Fo) block-diagonal packing
        H, F = a.shape
        return (jnp.eye(H, dtype=a.dtype)[:, :, None] * a[None, :, :]).reshape(H, H * F)

    gat = []
    for _ in range(n_layer):
        w = xav((num_heads * fo, hidR))             # MultiHeadGATLayer.W (bias=False)
        a_full = xav((num_heads, 2 * fo))           # MultiHeadGATLayer.a
        a1, a2 = a_full[:, :fo], a_full[:, fo:]
        gat.append(dict(w=w, a1=a1, a2=a2,
                        a1bdT=blockdiag(a1).T, a2bd=blockdiag(a2)))

    out_w = xav((T_out, num_heads * fo * n_layer + hidR))
    out_b = uni((T_out, 1), 0.1)
    # TODO(synk): d_gate (m, m) is defined in the module but never used in forward; omitted.
    return dict(conv=conv, fusion=fusion, gat=gat, out_w=out_w, out_b=out_b)


# ----------------------------------------------------------------------------
if __name__ == "__main__":
    bsz, m, nfeat, T_in, T_out = 2, 16, 4, 12, 4
    k, hidA, hidR, hidP, n_layer, num_heads, dil = 8, 32, 40, 1, 3, 4, 2

    key = jax.random.PRNGKey(0)
    kx, ka, kp = jax.random.split(key, 3)
    X = jax.random.normal(kx, (bsz, T_in, m, nfeat), jnp.float32)
    u = jax.random.uniform(ka, (bsz, m, m), jnp.float32)
    adj = jnp.where(u > 0.5, u, 0.0) + jnp.eye(m, dtype=jnp.float32)[None]  # deg >= 1

    params = init_params(kp, m=m, nfeat=nfeat, T=T_in, T_out=T_out, k=k,
                         hidA=hidA, hidR=hidR, hidP=hidP, n_layer=n_layer,
                         num_heads=num_heads)

    fwd = jax.jit(functools.partial(epignn_forward, hidP=hidP,
                                    dilation_factor=dil, num_heads=num_heads,
                                    adjacency_type="static"))
    out = jax.block_until_ready(fwd(X, adj, params))
    assert out.shape == (bsz, T_out, m), out.shape
    assert bool(jnp.all(jnp.isfinite(out)))

    ref = jax.block_until_ready(
        ref_forward(X, adj, params, hidP=hidP, dilation_factor=dil,
                    num_heads=num_heads, adjacency_type="static"))
    err = float(jnp.max(jnp.abs(out - ref)))
    assert err < 2e-2, err

    print("KERNEL_OK")
</pallas_src>

<mosaic_0001>
module attributes {stable_mosaic.version = 11 : i64} {
  func.func @kernel(%arg0: i32, %arg1: memref<1x4x192xf32, #tpu.memory_space<vmem>>, %arg2: memref<1x16x16xf32, #tpu.memory_space<vmem>>, %arg3: memref<8x12xf32, #tpu.memory_space<vmem>>, %arg4: memref<8x1xf32, #tpu.memory_space<vmem>>, %arg5: memref<8x20xf32, #tpu.memory_space<vmem>>, %arg6: memref<8x1xf32, #tpu.memory_space<vmem>>, %arg7: memref<8x12xf32, #tpu.memory_space<vmem>>, %arg8: memref<8x1xf32, #tpu.memory_space<vmem>>, %arg9: memref<8x20xf32, #tpu.memory_space<vmem>>, %arg10: memref<8x1xf32, #tpu.memory_space<vmem>>, %arg11: memref<8x48xf32, #tpu.memory_space<vmem>>, %arg12: memref<8x1xf32, #tpu.memory_space<vmem>>, %arg13: memref<32x40xf32, #tpu.memory_space<vmem>>, %arg14: memref<32x1xf32, #tpu.memory_space<vmem>>, %arg15: memref<32x40xf32, #tpu.memory_space<vmem>>, %arg16: memref<32x1xf32, #tpu.memory_space<vmem>>, %arg17: memref<40x1xf32, #tpu.memory_space<vmem>>, %arg18: memref<40x1xf32, #tpu.memory_space<vmem>>, %arg19: memref<40x1xf32, #tpu.memory_space<vmem>>, %arg20: memref<40x1xf32, #tpu.memory_space<vmem>>, %arg21: memref<40x40xf32, #tpu.memory_space<vmem>>, %arg22: memref<40x1xf32, #tpu.memory_space<vmem>>, %arg23: memref<40x40xf32, #tpu.memory_space<vmem>>, %arg24: memref<40x1xf32, #tpu.memory_space<vmem>>, %arg25: memref<40x40xf32, #tpu.memory_space<vmem>>, %arg26: memref<40x4xf32, #tpu.memory_space<vmem>>, %arg27: memref<4x40xf32, #tpu.memory_space<vmem>>, %arg28: memref<40x40xf32, #tpu.memory_space<vmem>>, %arg29: memref<40x4xf32, #tpu.memory_space<vmem>>, %arg30: memref<4x40xf32, #tpu.memory_space<vmem>>, %arg31: memref<40x40xf32, #tpu.memory_space<vmem>>, %arg32: memref<40x4xf32, #tpu.memory_space<vmem>>, %arg33: memref<4x40xf32, #tpu.memory_space<vmem>>, %arg34: memref<4x160xf32, #tpu.memory_space<vmem>>, %arg35: memref<4x1xf32, #tpu.memory_space<vmem>>, %arg36: memref<1x4x16xf32, #tpu.memory_space<vmem>>) attributes {dimension_semantics = [#tpu.dimension_semantics<parallel>], iteration_bounds = array<i64: 2>, scalar_prefetch = 0 : i64, scratch_operands = 0 : i64, tpu.core_type = #tpu.core_type<tc>, window_params = [{transform_indices = @transform_0, window_bounds = array<i64: 1, 4, 192>}, {transform_indices = @transform_1, window_bounds = array<i64: 1, 16, 16>}, {pipeline_mode = #tpu.pipeline_mode<synchronous>, transform_indices = @transform_2, window_bounds = array<i64: 8, 12>}, {pipeline_mode = #tpu.pipeline_mode<synchronous>, transform_indices = @transform_3, window_bounds = array<i64: 8, 1>}, {pipeline_mode = #tpu.pipeline_mode<synchronous>, transform_indices = @transform_4, window_bounds = array<i64: 8, 20>}, {pipeline_mode = #tpu.pipeline_mode<synchronous>, transform_indices = @transform_5, window_bounds = array<i64: 8, 1>}, {pipeline_mode = #tpu.pipeline_mode<synchronous>, transform_indices = @transform_6, window_bounds = array<i64: 8, 12>}, {pipeline_mode = #tpu.pipeline_mode<synchronous>, transform_indices = @transform_7, window_bounds = array<i64: 8, 1>}, {pipeline_mode = #tpu.pipeline_mode<synchronous>, transform_indices = @transform_8, window_bounds = array<i64: 8, 20>}, {pipeline_mode = #tpu.pipeline_mode<synchronous>, transform_indices = @transform_9, window_bounds = array<i64: 8, 1>}, {pipeline_mode = #tpu.pipeline_mode<synchronous>, transform_indices = @transform_10, window_bounds = array<i64: 8, 48>}, {pipeline_mode = #tpu.pipeline_mode<synchronous>, transform_indices = @transform_11, window_bounds = array<i64: 8, 1>}, {pipeline_mode = #tpu.pipeline_mode<synchronous>, transform_indices = @transform_12, window_bounds = array<i64: 32, 40>}, {pipeline_mode = #tpu.pipeline_mode<synchronous>, transform_indices = @transform_13, window_bounds = array<i64: 32, 1>}, {pipeline_mode = #tpu.pipeline_mode<synchronous>, transform_indices = @transform_14, window_bounds = array<i64: 32, 40>}, {pipeline_mode = #tpu.pipeline_mode<synchronous>, transform_indices = @transform_15, window_bounds = array<i64: 32, 1>}, {pipeline_mode = #tpu.pipeline_mode<synchronous>, transform_indices = @transform_16, window_bounds = array<i64: 40, 1>}, {pipeline_mode = #tpu.pipeline_mode<synchronous>, transform_indices = @transform_17, window_bounds = array<i64: 40, 1>}, {pipeline_mode = #tpu.pipeline_mode<synchronous>, transform_indices = @transform_18, window_bounds = array<i64: 40, 1>}, {pipeline_mode = #tpu.pipeline_mode<synchronous>, transform_indices = @transform_19, window_bounds = array<i64: 40, 1>}, {pipeline_mode = #tpu.pipeline_mode<synchronous>, transform_indices = @transform_20, window_bounds = array<i64: 40, 40>}, {pipeline_mode = #tpu.pipeline_mode<synchronous>, transform_indices = @transform_21, window_bounds = array<i64: 40, 1>}, {pipeline_mode = #tpu.pipeline_mode<synchronous>, transform_indices = @transform_22, window_bounds = array<i64: 40, 40>}, {pipeline_mode = #tpu.pipeline_mode<synchronous>, transform_indices = @transform_23, window_bounds = array<i64: 40, 1>}, {pipeline_mode = #tpu.pipeline_mode<synchronous>, transform_indices = @transform_24, window_bounds = array<i64: 40, 40>}, {pipeline_mode = #tpu.pipeline_mode<synchronous>, transform_indices = @transform_25, window_bounds = array<i64: 40, 4>}, {pipeline_mode = #tpu.pipeline_mode<synchronous>, transform_indices = @transform_26, window_bounds = array<i64: 4, 40>}, {pipeline_mode = #tpu.pipeline_mode<synchronous>, transform_indices = @transform_27, window_bounds = array<i64: 40, 40>}, {pipeline_mode = #tpu.pipeline_mode<synchronous>, transform_indices = @transform_28, window_bounds = array<i64: 40, 4>}, {pipeline_mode = #tpu.pipeline_mode<synchronous>, transform_indices = @transform_29, window_bounds = array<i64: 4, 40>}, {pipeline_mode = #tpu.pipeline_mode<synchronous>, transform_indices = @transform_30, window_bounds = array<i64: 40, 40>}, {pipeline_mode = #tpu.pipeline_mode<synchronous>, transform_indices = @transform_31, window_bounds = array<i64: 40, 4>}, {pipeline_mode = #tpu.pipeline_mode<synchronous>, transform_indices = @transform_32, window_bounds = array<i64: 4, 40>}, {pipeline_mode = #tpu.pipeline_mode<synchronous>, transform_indices = @transform_33, window_bounds = array<i64: 4, 160>}, {pipeline_mode = #tpu.pipeline_mode<synchronous>, transform_indices = @transform_34, window_bounds = array<i64: 4, 1>}, {transform_indices = @transform_35, window_bounds = array<i64: 1, 4, 16>}]} {
    %c0 = arith.constant 0 : index
    %c0_0 = arith.constant 0 : index
    %0 = vector.load %arg3[%c0, %c0_0] : memref<8x12xf32, #tpu.memory_space<vmem>>, vector<8x12xf32>
    %c0_1 = arith.constant 0 : index
    %c0_2 = arith.constant 0 : index
    %1 = vector.load %arg4[%c0_1, %c0_2] : memref<8x1xf32, #tpu.memory_space<vmem>>, vector<8x1xf32>
    %c0_3 = arith.constant 0 : index
    %c0_4 = arith.constant 0 : index
    %2 = vector.load %arg5[%c0_3, %c0_4] : memref<8x20xf32, #tpu.memory_space<vmem>>, vector<8x20xf32>
    %c0_5 = arith.constant 0 : index
    %c0_6 = arith.constant 0 : index
    %3 = vector.load %arg6[%c0_5, %c0_6] : memref<8x1xf32, #tpu.memory_space<vmem>>, vector<8x1xf32>
    %c0_7 = arith.constant 0 : index
    %c0_8 = arith.constant 0 : index
    %4 = vector.load %arg7[%c0_7, %c0_8] : memref<8x12xf32, #tpu.memory_space<vmem>>, vector<8x12xf32>
    %c0_9 = arith.constant 0 : index
    %c0_10 = arith.constant 0 : index
    %5 = vector.load %arg8[%c0_9, %c0_10] : memref<8x1xf32, #tpu.memory_space<vmem>>, vector<8x1xf32>
    %c0_11 = arith.constant 0 : index
    %c0_12 = arith.constant 0 : index
    %6 = vector.load %arg9[%c0_11, %c0_12] : memref<8x20xf32, #tpu.memory_space<vmem>>, vector<8x20xf32>
    %c0_13 = arith.constant 0 : index
    %c0_14 = arith.constant 0 : index
    %7 = vector.load %arg10[%c0_13, %c0_14] : memref<8x1xf32, #tpu.memory_space<vmem>>, vector<8x1xf32>
    %c0_15 = arith.constant 0 : index
    %c0_16 = arith.constant 0 : index
    %8 = vector.load %arg11[%c0_15, %c0_16] : memref<8x48xf32, #tpu.memory_space<vmem>>, vector<8x48xf32>
    %c0_17 = arith.constant 0 : index
    %c0_18 = arith.constant 0 : index
    %9 = vector.load %arg12[%c0_17, %c0_18] : memref<8x1xf32, #tpu.memory_space<vmem>>, vector<8x1xf32>
    %c0_19 = arith.constant 0 : index
    %c0_20 = arith.constant 0 : index
    %10 = vector.load %arg13[%c0_19, %c0_20] : memref<32x40xf32, #tpu.memory_space<vmem>>, vector<32x40xf32>
    %c0_21 = arith.constant 0 : index
    %c0_22 = arith.constant 0 : index
    %11 = vector.load %arg14[%c0_21, %c0_22] : memref<32x1xf32, #tpu.memory_space<vmem>>, vector<32x1xf32>
    %c0_23 = arith.constant 0 : index
    %c0_24 = arith.constant 0 : index
    %12 = vector.load %arg15[%c0_23, %c0_24] : memref<32x40xf32, #tpu.memory_space<vmem>>, vector<32x40xf32>
    %c0_25 = arith.constant 0 : index
    %c0_26 = arith.constant 0 : index
    %13 = vector.load %arg16[%c0_25, %c0_26] : memref<32x1xf32, #tpu.memory_space<vmem>>, vector<32x1xf32>
    %c0_27 = arith.constant 0 : index
    %c0_28 = arith.constant 0 : index
    %14 = vector.load %arg17[%c0_27, %c0_28] : memref<40x1xf32, #tpu.memory_space<vmem>>, vector<40x1xf32>
    %c0_29 = arith.constant 0 : index
    %c0_30 = arith.constant 0 : index
    %15 = vector.load %arg18[%c0_29, %c0_30] : memref<40x1xf32, #tpu.memory_space<vmem>>, vector<40x1xf32>
    %c0_31 = arith.constant 0 : index
    %c0_32 = arith.constant 0 : index
    %16 = vector.load %arg19[%c0_31, %c0_32] : memref<40x1xf32, #tpu.memory_space<vmem>>, vector<40x1xf32>
    %c0_33 = arith.constant 0 : index
    %c0_34 = arith.constant 0 : index
    %17 = vector.load %arg20[%c0_33, %c0_34] : memref<40x1xf32, #tpu.memory_space<vmem>>, vector<40x1xf32>
    %c0_35 = arith.constant 0 : index
    %c0_36 = arith.constant 0 : index
    %18 = vector.load %arg25[%c0_35, %c0_36] : memref<40x40xf32, #tpu.memory_space<vmem>>, vector<40x40xf32>
    %c0_37 = arith.constant 0 : index
    %c0_38 = arith.constant 0 : index
    %19 = vector.load %arg26[%c0_37, %c0_38] : memref<40x4xf32, #tpu.memory_space<vmem>>, vector<40x4xf32>
    %c0_39 = arith.constant 0 : index
    %c0_40 = arith.constant 0 : index
    %20 = vector.load %arg27[%c0_39, %c0_40] : memref<4x40xf32, #tpu.memory_space<vmem>>, vector<4x40xf32>
    %c0_41 = arith.constant 0 : index
    %c0_42 = arith.constant 0 : index
    %21 = vector.load %arg28[%c0_41, %c0_42] : memref<40x40xf32, #tpu.memory_space<vmem>>, vector<40x40xf32>
    %c0_43 = arith.constant 0 : index
    %c0_44 = arith.constant 0 : index
    %22 = vector.load %arg29[%c0_43, %c0_44] : memref<40x4xf32, #tpu.memory_space<vmem>>, vector<40x4xf32>
    %c0_45 = arith.constant 0 : index
    %c0_46 = arith.constant 0 : index
    %23 = vector.load %arg30[%c0_45, %c0_46] : memref<4x40xf32, #tpu.memory_space<vmem>>, vector<4x40xf32>
    %c0_47 = arith.constant 0 : index
    %c0_48 = arith.constant 0 : index
    %24 = vector.load %arg31[%c0_47, %c0_48] : memref<40x40xf32, #tpu.memory_space<vmem>>, vector<40x40xf32>
    %c0_49 = arith.constant 0 : index
    %c0_50 = arith.constant 0 : index
    %25 = vector.load %arg32[%c0_49, %c0_50] : memref<40x4xf32, #tpu.memory_space<vmem>>, vector<40x4xf32>
    %c0_51 = arith.constant 0 : index
    %c0_52 = arith.constant 0 : index
    %26 = vector.load %arg33[%c0_51, %c0_52] : memref<4x40xf32, #tpu.memory_space<vmem>>, vector<4x40xf32>
    %c0_53 = arith.constant 0 : index
    %c0_54 = arith.constant 0 : index
    %27 = vector.load %arg34[%c0_53, %c0_54] : memref<4x160xf32, #tpu.memory_space<vmem>>, vector<4x160xf32>
    %c0_55 = arith.constant 0 : index
    %c0_56 = arith.constant 0 : index
    %28 = vector.load %arg35[%c0_55, %c0_56] : memref<4x1xf32, #tpu.memory_space<vmem>>, vector<4x1xf32>
    %c0_57 = arith.constant 0 : index
    %c0_58 = arith.constant 0 : index
    %c0_59 = arith.constant 0 : index
    %29 = vector.load %arg1[%c0_57, %c0_58, %c0_59] : memref<1x4x192xf32, #tpu.memory_space<vmem>>, vector<1x4x192xf32>
    %30 = vector.shape_cast %29 : vector<1x4x192xf32> to vector<4x192xf32>
    %c0_60 = arith.constant 0 : index
    %c0_61 = arith.constant 0 : index
    %c0_62 = arith.constant 0 : index
    %31 = vector.load %arg2[%c0_60, %c0_61, %c0_62] : memref<1x16x16xf32, #tpu.memory_space<vmem>>, vector<1x16x16xf32>
    %32 = vector.shape_cast %31 : vector<1x16x16xf32> to vector<16x16xf32>
    %33 = vector.extract_strided_slice %30 {offsets = [0, 0], sizes = [4, 160], strides = [1, 1]} : vector<4x192xf32> to vector<4x160xf32>
    %34 = vector.extract_strided_slice %30 {offsets = [0, 16], sizes = [4, 160], strides = [1, 1]} : vector<4x192xf32> to vector<4x160xf32>
    %35 = vector.extract_strided_slice %30 {offsets = [0, 32], sizes = [4, 160], strides = [1, 1]} : vector<4x192xf32> to vector<4x160xf32>
    %36 = tpu.concatenate %33, %34, %35 in 0 : vector<4x160xf32>, vector<4x160xf32>, vector<4x160xf32> -> vector<12x160xf32>
    %cst = arith.constant dense<0.000000e+00> : vector<8x160xf32>
    %37 = tpu.matmul %0, %36, %cst {dimension_numbers = #tpu.dot_dimension_numbers<[1], [0], [0], [1], [0, 0, 1, 1], [], []>} : vector<8x12xf32>, vector<12x160xf32>, vector<8x160xf32> -> vector<8x160xf32>
    %38 = vector.broadcast %1 : vector<8x1xf32> to vector<8x160xf32>
    %39 = arith.addf %37, %38 : vector<8x160xf32>
    %40 = vector.extract_strided_slice %39 {offsets = [0, 0], sizes = [8, 16], strides = [1, 1]} : vector<8x160xf32> to vector<8x16xf32>
    %41 = vector.extract_strided_slice %39 {offsets = [0, 16], sizes = [8, 16], strides = [1, 1]} : vector<8x160xf32> to vector<8x16xf32>
    %42 = arith.maximumf %40, %41 : vector<8x16xf32>
    %43 = vector.extract_strided_slice %39 {offsets = [0, 32], sizes = [8, 16], strides = [1, 1]} : vector<8x160xf32> to vector<8x16xf32>
    %44 = arith.maximumf %42, %43 : vector<8x16xf32>
    %45 = vector.extract_strided_slice %39 {offsets = [0, 48], sizes = [8, 16], strides = [1, 1]} : vector<8x160xf32> to vector<8x16xf32>
    %46 = arith.maximumf %44, %45 : vector<8x16xf32>
    %47 = vector.extract_strided_slice %39 {offsets = [0, 64], sizes = [8, 16], strides = [1, 1]} : vector<8x160xf32> to vector<8x16xf32>
    %48 = arith.maximumf %46, %47 : vector<8x16xf32>
    %49 = vector.extract_strided_slice %39 {offsets = [0, 80], sizes = [8, 16], strides = [1, 1]} : vector<8x160xf32> to vector<8x16xf32>
    %50 = arith.maximumf %48, %49 : vector<8x16xf32>
    %51 = vector.extract_strided_slice %39 {offsets = [0, 96], sizes = [8, 16], strides = [1, 1]} : vector<8x160xf32> to vector<8x16xf32>
    %52 = arith.maximumf %50, %51 : vector<8x16xf32>
    %53 = vector.extract_strided_slice %39 {offsets = [0, 112], sizes = [8, 16], strides = [1, 1]} : vector<8x160xf32> to vector<8x16xf32>
    %54 = arith.maximumf %52, %53 : vector<8x16xf32>
    %55 = vector.extract_strided_slice %39 {offsets = [0, 128], sizes = [8, 16], strides = [1, 1]} : vector<8x160xf32> to vector<8x16xf32>
    %56 = arith.maximumf %54, %55 : vector<8x16xf32>
    %57 = vector.extract_strided_slice %39 {offsets = [0, 144], sizes = [8, 16], strides = [1, 1]} : vector<8x160xf32> to vector<8x16xf32>
    %58 = arith.maximumf %56, %57 : vector<8x16xf32>
    %59 = math.tanh %58 : vector<8x16xf32>
    %60 = vector.extract_strided_slice %30 {offsets = [0, 0], sizes = [4, 128], strides = [1, 1]} : vector<4x192xf32> to vector<4x128xf32>
    %61 = vector.extract_strided_slice %30 {offsets = [0, 16], sizes = [4, 128], strides = [1, 1]} : vector<4x192xf32> to vector<4x128xf32>
    %62 = vector.extract_strided_slice %30 {offsets = [0, 32], sizes = [4, 128], strides = [1, 1]} : vector<4x192xf32> to vector<4x128xf32>
    %63 = vector.extract_strided_slice %30 {offsets = [0, 48], sizes = [4, 128], strides = [1, 1]} : vector<4x192xf32> to vector<4x128xf32>
    %64 = vector.extract_strided_slice %30 {offsets = [0, 64], sizes = [4, 128], strides = [1, 1]} : vector<4x192xf32> to vector<4x128xf32>
    %65 = tpu.concatenate %60, %61, %62, %63, %64 in 0 : vector<4x128xf32>, vector<4x128xf32>, vector<4x128xf32>, vector<4x128xf32>, vector<4x128xf32> -> vector<20x128xf32>
    %cst_63 = arith.constant dense<0.000000e+00> : vector<8x128xf32>
    %66 = tpu.matmul %2, %65, %cst_63 {dimension_numbers = #tpu.dot_dimension_numbers<[1], [0], [0], [1], [0, 0, 1, 1], [], []>} : vector<8x20xf32>, vector<20x128xf32>, vector<8x128xf32> -> vector<8x128xf32>
    %67 = vector.broadcast %3 : vector<8x1xf32> to vector<8x128xf32>
    %68 = arith.addf %66, %67 : vector<8x128xf32>
    %69 = vector.extract_strided_slice %68 {offsets = [0, 0], sizes = [8, 16], strides = [1, 1]} : vector<8x128xf32> to vector<8x16xf32>
    %70 = vector.extract_strided_slice %68 {offsets = [0, 16], sizes = [8, 16], strides = [1, 1]} : vector<8x128xf32> to vector<8x16xf32>
    %71 = arith.maximumf %69, %70 : vector<8x16xf32>
    %72 = vector.extract_strided_slice %68 {offsets = [0, 32], sizes = [8, 16], strides = [1, 1]} : vector<8x128xf32> to vector<8x16xf32>
    %73 = arith.maximumf %71, %72 : vector<8x16xf32>
    %74 = vector.extract_strided_slice %68 {offsets = [0, 48], sizes = [8, 16], strides = [1, 1]} : vector<8x128xf32> to vector<8x16xf32>
    %75 = arith.maximumf %73, %74 : vector<8x16xf32>
    %76 = vector.extract_strided_slice %68 {offsets = [0, 64], sizes = [8, 16], strides = [1, 1]} : vector<8x128xf32> to vector<8x16xf32>
    %77 = arith.maximumf %75, %76 : vector<8x16xf32>
    %78 = vector.extract_strided_slice %68 {offsets = [0, 80], sizes = [8, 16], strides = [1, 1]} : vector<8x128xf32> to vector<8x16xf32>
    %79 = arith.maximumf %77, %78 : vector<8x16xf32>
    %80 = vector.extract_strided_slice %68 {offsets = [0, 96], sizes = [8, 16], strides = [1, 1]} : vector<8x128xf32> to vector<8x16xf32>
    %81 = arith.maximumf %79, %80 : vector<8x16xf32>
    %82 = vector.extract_strided_slice %68 {offsets = [0, 112], sizes = [8, 16], strides = [1, 1]} : vector<8x128xf32> to vector<8x16xf32>
    %83 = arith.maximumf %81, %82 : vector<8x16xf32>
    %84 = math.tanh %83 : vector<8x16xf32>
    %85 = vector.extract_strided_slice %30 {offsets = [0, 0], sizes = [4, 128], strides = [1, 1]} : vector<4x192xf32> to vector<4x128xf32>
    %86 = vector.extract_strided_slice %30 {offsets = [0, 32], sizes = [4, 128], strides = [1, 1]} : vector<4x192xf32> to vector<4x128xf32>
    %87 = vector.extract_strided_slice %30 {offsets = [0, 64], sizes = [4, 128], strides = [1, 1]} : vector<4x192xf32> to vector<4x128xf32>
    %88 = tpu.concatenate %85, %86, %87 in 0 : vector<4x128xf32>, vector<4x128xf32>, vector<4x128xf32> -> vector<12x128xf32>
    %cst_64 = arith.constant dense<0.000000e+00> : vector<8x128xf32>
    %89 = tpu.matmul %4, %88, %cst_64 {dimension_numbers = #tpu.dot_dimension_numbers<[1], [0], [0], [1], [0, 0, 1, 1], [], []>} : vector<8x12xf32>, vector<12x128xf32>, vector<8x128xf32> -> vector<8x128xf32>
    %90 = vector.broadcast %5 : vector<8x1xf32> to vector<8x128xf32>
    %91 = arith.addf %89, %90 : vector<8x128xf32>
    %92 = vector.extract_strided_slice %91 {offsets = [0, 0], sizes = [8, 16], strides = [1, 1]} : vector<8x128xf32> to vector<8x16xf32>
    %93 = vector.extract_strided_slice %91 {offsets = [0, 16], sizes = [8, 16], strides = [1, 1]} : vector<8x128xf32> to vector<8x16xf32>
    %94 = arith.maximumf %92, %93 : vector<8x16xf32>
    %95 = vector.extract_strided_slice %91 {offsets = [0, 32], sizes = [8, 16], strides = [1, 1]} : vector<8x128xf32> to vector<8x16xf32>
    %96 = arith.maximumf %94, %95 : vector<8x16xf32>
    %97 = vector.extract_strided_slice %91 {offsets = [0, 48], sizes = [8, 16], strides = [1, 1]} : vector<8x128xf32> to vector<8x16xf32>
    %98 = arith.maximumf %96, %97 : vector<8x16xf32>
    %99 = vector.extract_strided_slice %91 {offsets = [0, 64], sizes = [8, 16], strides = [1, 1]} : vector<8x128xf32> to vector<8x16xf32>
    %100 = arith.maximumf %98, %99 : vector<8x16xf32>
    %101 = vector.extract_strided_slice %91 {offsets = [0, 80], sizes = [8, 16], strides = [1, 1]} : vector<8x128xf32> to vector<8x16xf32>
    %102 = arith.maximumf %100, %101 : vector<8x16xf32>
    %103 = vector.extract_strided_slice %91 {offsets = [0, 96], sizes = [8, 16], strides = [1, 1]} : vector<8x128xf32> to vector<8x16xf32>
    %104 = arith.maximumf %102, %103 : vector<8x16xf32>
    %105 = vector.extract_strided_slice %91 {offsets = [0, 112], sizes = [8, 16], strides = [1, 1]} : vector<8x128xf32> to vector<8x16xf32>
    %106 = arith.maximumf %104, %105 : vector<8x16xf32>
    %107 = math.tanh %106 : vector<8x16xf32>
    %108 = vector.extract_strided_slice %30 {offsets = [0, 0], sizes = [4, 64], strides = [1, 1]} : vector<4x192xf32> to vector<4x64xf32>
    %109 = vector.extract_strided_slice %30 {offsets = [0, 32], sizes = [4, 64], strides = [1, 1]} : vector<4x192xf32> to vector<4x64xf32>
    %110 = vector.extract_strided_slice %30 {offsets = [0, 64], sizes = [4, 64], strides = [1, 1]} : vector<4x192xf32> to vector<4x64xf32>
    %111 = vector.extract_strided_slice %30 {offsets = [0, 96], sizes = [4, 64], strides = [1, 1]} : vector<4x192xf32> to vector<4x64xf32>
    %112 = vector.extract_strided_slice %30 {offsets = [0, 128], sizes = [4, 64], strides = [1, 1]} : vector<4x192xf32> to vector<4x64xf32>
    %113 = tpu.concatenate %108, %109, %110, %111, %112 in 0 : vector<4x64xf32>, vector<4x64xf32>, vector<4x64xf32>, vector<4x64xf32>, vector<4x64xf32> -> vector<20x64xf32>
    %cst_65 = arith.constant dense<0.000000e+00> : vector<8x64xf32>
    %114 = tpu.matmul %6, %113, %cst_65 {dimension_numbers = #tpu.dot_dimension_numbers<[1], [0], [0], [1], [0, 0, 1, 1], [], []>} : vector<8x20xf32>, vector<20x64xf32>, vector<8x64xf32> -> vector<8x64xf32>
    %115 = vector.broadcast %7 : vector<8x1xf32> to vector<8x64xf32>
    %116 = arith.addf %114, %115 : vector<8x64xf32>
    %117 = vector.extract_strided_slice %116 {offsets = [0, 0], sizes = [8, 16], strides = [1, 1]} : vector<8x64xf32> to vector<8x16xf32>
    %118 = vector.extract_strided_slice %116 {offsets = [0, 16], sizes = [8, 16], strides = [1, 1]} : vector<8x64xf32> to vector<8x16xf32>
    %119 = arith.maximumf %117, %118 : vector<8x16xf32>
    %120 = vector.extract_strided_slice %116 {offsets = [0, 32], sizes = [8, 16], strides = [1, 1]} : vector<8x64xf32> to vector<8x16xf32>
    %121 = arith.maximumf %119, %120 : vector<8x16xf32>
    %122 = vector.extract_strided_slice %116 {offsets = [0, 48], sizes = [8, 16], strides = [1, 1]} : vector<8x64xf32> to vector<8x16xf32>
    %123 = arith.maximumf %121, %122 : vector<8x16xf32>
    %124 = math.tanh %123 : vector<8x16xf32>
    %125 = vector.extract_strided_slice %30 {offsets = [0, 0], sizes = [4, 16], strides = [1, 1]} : vector<4x192xf32> to vector<4x16xf32>
    %126 = vector.extract_strided_slice %30 {offsets = [0, 16], sizes = [4, 16], strides = [1, 1]} : vector<4x192xf32> to vector<4x16xf32>
    %127 = vector.extract_strided_slice %30 {offsets = [0, 32], sizes = [4, 16], strides = [1, 1]} : vector<4x192xf32> to vector<4x16xf32>
    %128 = vector.extract_strided_slice %30 {offsets = [0, 48], sizes = [4, 16], strides = [1, 1]} : vector<4x192xf32> to vector<4x16xf32>
    %129 = vector.extract_strided_slice %30 {offsets = [0, 64], sizes = [4, 16], strides = [1, 1]} : vector<4x192xf32> to vector<4x16xf32>
    %130 = vector.extract_strided_slice %30 {offsets = [0, 80], sizes = [4, 16], strides = [1, 1]} : vector<4x192xf32> to vector<4x16xf32>
    %131 = vector.extract_strided_slice %30 {offsets = [0, 96], sizes = [4, 16], strides = [1, 1]} : vector<4x192xf32> to vector<4x16xf32>
    %132 = vector.extract_strided_slice %30 {offsets = [0, 112], sizes = [4, 16], strides = [1, 1]} : vector<4x192xf32> to vector<4x16xf32>
    %133 = vector.extract_strided_slice %30 {offsets = [0, 128], sizes = [4, 16], strides = [1, 1]} : vector<4x192xf32> to vector<4x16xf32>
    %134 = vector.extract_strided_slice %30 {offsets = [0, 144], sizes = [4, 16], strides = [1, 1]} : vector<4x192xf32> to vector<4x16xf32>
    %135 = vector.extract_strided_slice %30 {offsets = [0, 160], sizes = [4, 16], strides = [1, 1]} : vector<4x192xf32> to vector<4x16xf32>
    %136 = vector.extract_strided_slice %30 {offsets = [0, 176], sizes = [4, 16], strides = [1, 1]} : vector<4x192xf32> to vector<4x16xf32>
    %137 = tpu.concatenate %125, %126, %127, %128, %129, %130, %131, %132, %133, %134, %135, %136 in 0 : vector<4x16xf32>, vector<4x16xf32>, vector<4x16xf32>, vector<4x16xf32>, vector<4x16xf32>, vector<4x16xf32>, vector<4x16xf32>, vector<4x16xf32>, vector<4x16xf32>, vector<4x16xf32>, vector<4x16xf32>, vector<4x16xf32> -> vector<48x16xf32>
    %cst_66 = arith.constant dense<0.000000e+00> : vector<8x16xf32>
    %138 = tpu.matmul %8, %137, %cst_66 {dimension_numbers = #tpu.dot_dimension_numbers<[1], [0], [0], [1], [0, 0, 1, 1], [], []>} : vector<8x48xf32>, vector<48x16xf32>, vector<8x16xf32> -> vector<8x16xf32>
    %139 = vector.broadcast %9 : vector<8x1xf32> to vector<8x16xf32>
    %140 = arith.addf %138, %139 : vector<8x16xf32>
    %141 = math.tanh %140 : vector<8x16xf32>
    %142 = tpu.concatenate %59, %84, %107, %124, %141 in 0 : vector<8x16xf32>, vector<8x16xf32>, vector<8x16xf32>, vector<8x16xf32>, vector<8x16xf32> -> vector<40x16xf32>
    %143 = math.tanh %142 : vector<40x16xf32>
    %cst_67 = arith.constant dense<0.000000e+00> : vector<32x16xf32>
    %144 = tpu.matmul %10, %143, %cst_67 {dimension_numbers = #tpu.dot_dimension_numbers<[1], [0], [0], [1], [0, 0, 1, 1], [], []>} : vector<32x40xf32>, vector<40x16xf32>, vector<32x16xf32> -> vector<32x16xf32>
    %145 = vector.broadcast %11 : vector<32x1xf32> to vector<32x16xf32>
    %146 = arith.addf %144, %145 : vector<32x16xf32>
    %cst_68 = arith.constant dense<0.000000e+00> : vector<32x16xf32>
    %147 = tpu.matmul %12, %143, %cst_68 {dimension_numbers = #tpu.dot_dimension_numbers<[1], [0], [0], [1], [0, 0, 1, 1], [], []>} : vector<32x40xf32>, vector<40x16xf32>, vector<32x16xf32> -> vector<32x16xf32>
    %148 = vector.broadcast %13 : vector<32x1xf32> to vector<32x16xf32>
    %149 = arith.addf %147, %148 : vector<32x16xf32>
    %cst_69 = arith.constant dense<0.000000e+00> : vector<16x16xf32>
    %150 = tpu.matmul %146, %149, %cst_69 {dimension_numbers = #tpu.dot_dimension_numbers<[0], [0], [1], [1], [0, 1, 1, 1], [], []>} : vector<32x16xf32>, vector<32x16xf32>, vector<16x16xf32> -> vector<16x16xf32>
    %151 = arith.mulf %150, %150 : vector<16x16xf32>
    %cst_70 = arith.constant dense<0.000000e+00> : vector<16xf32>
    %152 = vector.multi_reduction <add>, %151, %cst_70 [1] : vector<16x16xf32> to vector<16xf32>
    %153 = vector.shape_cast %152 : vector<16xf32> to vector<16x1xf32>
    %cst_71 = arith.constant 1.000000e-24 : f32
    %154 = vector.broadcast %cst_71 : f32 to vector<16x1xf32>
    %155 = arith.maximumf %153, %154 : vector<16x1xf32>
    %156 = math.rsqrt %155 : vector<16x1xf32>
    %157 = vector.broadcast %156 : vector<16x1xf32> to vector<16x16xf32>
    %158 = arith.mulf %150, %157 : vector<16x16xf32>
    %cst_72 = arith.constant 1.000000e+00 : f32
    %159 = vector.broadcast %cst_72 : f32 to vector<1x16xf32>
    %cst_73 = arith.constant dense<0.000000e+00> : vector<1x16xf32>
    %160 = tpu.matmul %159, %158, %cst_73 {dimension_numbers = #tpu.dot_dimension_numbers<[1], [1], [0], [0], [0, 0, 1, 0], [], []>} : vector<1x16xf32>, vector<16x16xf32>, vector<1x16xf32> -> vector<1x16xf32>
    %cst_74 = arith.constant dense<0.000000e+00> : vector<40x16xf32>
    %161 = tpu.matmul %14, %160, %cst_74 {dimension_numbers = #tpu.dot_dimension_numbers<[1], [0], [0], [1], [0, 0, 1, 1], [], []>} : vector<40x1xf32>, vector<1x16xf32>, vector<40x16xf32> -> vector<40x16xf32>
    %162 = vector.broadcast %15 : vector<40x1xf32> to vector<40x16xf32>
    %163 = arith.addf %161, %162 : vector<40x16xf32>
    %cst_75 = arith.constant 1.000000e+00 : f32
    %164 = vector.broadcast %cst_75 : f32 to vector<1x16xf32>
    %cst_76 = arith.constant dense<0.000000e+00> : vector<1x16xf32>
    %165 = tpu.matmul %164, %32, %cst_76 {dimension_numbers = #tpu.dot_dimension_numbers<[1], [1], [0], [0], [0, 0, 1, 0], [], []>} : vector<1x16xf32>, vector<16x16xf32>, vector<1x16xf32> -> vector<1x16xf32>
    %cst_77 = arith.constant dense<0.000000e+00> : vector<40x16xf32>
    %166 = tpu.matmul %16, %165, %cst_77 {dimension_numbers = #tpu.dot_dimension_numbers<[1], [0], [0], [1], [0, 0, 1, 1], [], []>} : vector<40x1xf32>, vector<1x16xf32>, vector<40x16xf32> -> vector<40x16xf32>
    %167 = vector.broadcast %17 : vector<40x1xf32> to vector<40x16xf32>
    %168 = arith.addf %166, %167 : vector<40x16xf32>
    %169 = arith.addf %143, %163 : vector<40x16xf32>
    %170 = arith.addf %169, %168 : vector<40x16xf32>
    %cst_78 = arith.constant 0.000000e+00 : f32
    %171 = vector.broadcast %cst_78 : f32 to vector<16x16xf32>
    %172 = arith.cmpf ogt, %32, %171 : vector<16x16xf32>
    %173 = arith.extui %172 : vector<16x16xi1> to vector<16x16xi32>
    %174 = arith.sitofp %173 : vector<16x16xi32> to vector<16x16xf32>
    %cst_79 = arith.constant dense<0.000000e+00> : vector<16xf32>
    %175 = vector.multi_reduction <add>, %174, %cst_79 [1] : vector<16x16xf32> to vector<16xf32>
    %176 = vector.shape_cast %175 : vector<16xf32> to vector<16x1xf32>
    %cst_80 = arith.constant 9.99999996E-13 : f32
    %177 = vector.broadcast %cst_80 : f32 to vector<16x1xf32>
    %178 = arith.addf %176, %177 : vector<16x1xf32>
    %179 = tpu.reciprocal %178 {approx = true} : vector<16x1xf32> -> vector<16x1xf32>
    %180 = vector.broadcast %179 : vector<16x1xf32> to vector<16x16xf32>
    %181 = arith.mulf %174, %180 : vector<16x16xf32>
    %cst_81 = arith.constant dense<0.000000e+00> : vector<40x16xf32>
    %182 = tpu.matmul %18, %170, %cst_81 {dimension_numbers = #tpu.dot_dimension_numbers<[1], [0], [0], [1], [0, 0, 1, 1], [], []>} : vector<40x40xf32>, vector<40x16xf32>, vector<40x16xf32> -> vector<40x16xf32>
    %cst_82 = arith.constant dense<0.000000e+00> : vector<16x4xf32>
    %183 = tpu.matmul %182, %19, %cst_82 {dimension_numbers = #tpu.dot_dimension_numbers<[0], [0], [1], [1], [0, 1, 1, 1], [], []>} : vector<40x16xf32>, vector<40x4xf32>, vector<16x4xf32> -> vector<16x4xf32>
    %cst_83 = arith.constant dense<0.000000e+00> : vector<4x16xf32>
    %184 = tpu.matmul %20, %182, %cst_83 {dimension_numbers = #tpu.dot_dimension_numbers<[1], [0], [0], [1], [0, 0, 1, 1], [], []>} : vector<4x40xf32>, vector<40x16xf32>, vector<4x16xf32> -> vector<4x16xf32>
    %185 = vector.extract_strided_slice %182 {offsets = [0, 0], sizes = [10, 16], strides = [1, 1]} : vector<40x16xf32> to vector<10x16xf32>
    %186 = vector.extract_strided_slice %183 {offsets = [0, 0], sizes = [16, 1], strides = [1, 1]} : vector<16x4xf32> to vector<16x1xf32>
    %187 = vector.extract_strided_slice %184 {offsets = [0, 0], sizes = [1, 16], strides = [1, 1]} : vector<4x16xf32> to vector<1x16xf32>
    %188 = vector.broadcast %186 : vector<16x1xf32> to vector<16x16xf32>
    %189 = vector.broadcast %187 : vector<1x16xf32> to vector<16x16xf32>
    %190 = arith.addf %188, %189 : vector<16x16xf32>
    %cst_84 = arith.constant 0.000000e+00 : f32
    %191 = vector.broadcast %cst_84 : f32 to vector<16x16xf32>
    %192 = arith.cmpf ogt, %190, %191 : vector<16x16xf32>
    %cst_85 = arith.constant 2.000000e-01 : f32
    %193 = vector.broadcast %cst_85 : f32 to vector<16x16xf32>
    %194 = arith.mulf %193, %190 : vector<16x16xf32>
    %195 = arith.select %192, %190, %194 : vector<16x16xi1>, vector<16x16xf32>
    %cst_86 = arith.constant 0.000000e+00 : f32
    %196 = vector.broadcast %cst_86 : f32 to vector<16x16xf32>
    %197 = arith.cmpf oeq, %181, %196 : vector<16x16xf32>
    %cst_87 = arith.constant -1.000000e+30 : f32
    %198 = vector.broadcast %cst_87 : f32 to vector<16x16xf32>
    %199 = arith.select %197, %198, %195 : vector<16x16xi1>, vector<16x16xf32>
    %cst_88 = arith.constant dense<0xFF800000> : vector<16xf32>
    %200 = vector.multi_reduction <maximumf>, %199, %cst_88 [1] : vector<16x16xf32> to vector<16xf32>
    %201 = vector.shape_cast %200 : vector<16xf32> to vector<16x1xf32>
    %202 = vector.broadcast %201 : vector<16x1xf32> to vector<16x16xf32>
    %203 = arith.subf %199, %202 : vector<16x16xf32>
    %204 = math.exp %203 : vector<16x16xf32>
    %cst_89 = arith.constant dense<0.000000e+00> : vector<16xf32>
    %205 = vector.multi_reduction <add>, %204, %cst_89 [1] : vector<16x16xf32> to vector<16xf32>
    %206 = vector.shape_cast %205 : vector<16xf32> to vector<16x1xf32>
    %207 = tpu.reciprocal %206 {approx = true} : vector<16x1xf32> -> vector<16x1xf32>
    %208 = vector.broadcast %207 : vector<16x1xf32> to vector<16x16xf32>
    %209 = arith.mulf %204, %208 : vector<16x16xf32>
    %cst_90 = arith.constant dense<0.000000e+00> : vector<10x16xf32>
    %210 = tpu.matmul %185, %209, %cst_90 {dimension_numbers = #tpu.dot_dimension_numbers<[1], [1], [0], [0], [0, 0, 1, 0], [], []>} : vector<10x16xf32>, vector<16x16xf32>, vector<10x16xf32> -> vector<10x16xf32>
    %211 = vector.extract_strided_slice %182 {offsets = [10, 0], sizes = [10, 16], strides = [1, 1]} : vector<40x16xf32> to vector<10x16xf32>
    %212 = vector.extract_strided_slice %183 {offsets = [0, 1], sizes = [16, 1], strides = [1, 1]} : vector<16x4xf32> to vector<16x1xf32>
    %213 = vector.extract_strided_slice %184 {offsets = [1, 0], sizes = [1, 16], strides = [1, 1]} : vector<4x16xf32> to vector<1x16xf32>
    %214 = vector.broadcast %212 : vector<16x1xf32> to vector<16x16xf32>
    %215 = vector.broadcast %213 : vector<1x16xf32> to vector<16x16xf32>
    %216 = arith.addf %214, %215 : vector<16x16xf32>
    %cst_91 = arith.constant 0.000000e+00 : f32
    %217 = vector.broadcast %cst_91 : f32 to vector<16x16xf32>
    %218 = arith.cmpf ogt, %216, %217 : vector<16x16xf32>
    %cst_92 = arith.constant 2.000000e-01 : f32
    %219 = vector.broadcast %cst_92 : f32 to vector<16x16xf32>
    %220 = arith.mulf %219, %216 : vector<16x16xf32>
    %221 = arith.select %218, %216, %220 : vector<16x16xi1>, vector<16x16xf32>
    %cst_93 = arith.constant 0.000000e+00 : f32
    %222 = vector.broadcast %cst_93 : f32 to vector<16x16xf32>
    %223 = arith.cmpf oeq, %181, %222 : vector<16x16xf32>
    %cst_94 = arith.constant -1.000000e+30 : f32
    %224 = vector.broadcast %cst_94 : f32 to vector<16x16xf32>
    %225 = arith.select %223, %224, %221 : vector<16x16xi1>, vector<16x16xf32>
    %cst_95 = arith.constant dense<0xFF800000> : vector<16xf32>
    %226 = vector.multi_reduction <maximumf>, %225, %cst_95 [1] : vector<16x16xf32> to vector<16xf32>
    %227 = vector.shape_cast %226 : vector<16xf32> to vector<16x1xf32>
    %228 = vector.broadcast %227 : vector<16x1xf32> to vector<16x16xf32>
    %229 = arith.subf %225, %228 : vector<16x16xf32>
    %230 = math.exp %229 : vector<16x16xf32>
    %cst_96 = arith.constant dense<0.000000e+00> : vector<16xf32>
    %231 = vector.multi_reduction <add>, %230, %cst_96 [1] : vector<16x16xf32> to vector<16xf32>
    %232 = vector.shape_cast %231 : vector<16xf32> to vector<16x1xf32>
    %233 = tpu.reciprocal %232 {approx = true} : vector<16x1xf32> -> vector<16x1xf32>
    %234 = vector.broadcast %233 : vector<16x1xf32> to vector<16x16xf32>
    %235 = arith.mulf %230, %234 : vector<16x16xf32>
    %cst_97 = arith.constant dense<0.000000e+00> : vector<10x16xf32>
    %236 = tpu.matmul %211, %235, %cst_97 {dimension_numbers = #tpu.dot_dimension_numbers<[1], [1], [0], [0], [0, 0, 1, 0], [], []>} : vector<10x16xf32>, vector<16x16xf32>, vector<10x16xf32> -> vector<10x16xf32>
    %237 = vector.extract_strided_slice %182 {offsets = [20, 0], sizes = [10, 16], strides = [1, 1]} : vector<40x16xf32> to vector<10x16xf32>
    %238 = vector.extract_strided_slice %183 {offsets = [0, 2], sizes = [16, 1], strides = [1, 1]} : vector<16x4xf32> to vector<16x1xf32>
    %239 = vector.extract_strided_slice %184 {offsets = [2, 0], sizes = [1, 16], strides = [1, 1]} : vector<4x16xf32> to vector<1x16xf32>
    %240 = vector.broadcast %238 : vector<16x1xf32> to vector<16x16xf32>
    %241 = vector.broadcast %239 : vector<1x16xf32> to vector<16x16xf32>
    %242 = arith.addf %240, %241 : vector<16x16xf32>
    %cst_98 = arith.constant 0.000000e+00 : f32
    %243 = vector.broadcast %cst_98 : f32 to vector<16x16xf32>
    %244 = arith.cmpf ogt, %242, %243 : vector<16x16xf32>
    %cst_99 = arith.constant 2.000000e-01 : f32
    %245 = vector.broadcast %cst_99 : f32 to vector<16x16xf32>
    %246 = arith.mulf %245, %242 : vector<16x16xf32>
    %247 = arith.select %244, %242, %246 : vector<16x16xi1>, vector<16x16xf32>
    %cst_100 = arith.constant 0.000000e+00 : f32
    %248 = vector.broadcast %cst_100 : f32 to vector<16x16xf32>
    %249 = arith.cmpf oeq, %181, %248 : vector<16x16xf32>
    %cst_101 = arith.constant -1.000000e+30 : f32
    %250 = vector.broadcast %cst_101 : f32 to vector<16x16xf32>
    %251 = arith.select %249, %250, %247 : vector<16x16xi1>, vector<16x16xf32>
    %cst_102 = arith.constant dense<0xFF800000> : vector<16xf32>
    %252 = vector.multi_reduction <maximumf>, %251, %cst_102 [1] : vector<16x16xf32> to vector<16xf32>
    %253 = vector.shape_cast %252 : vector<16xf32> to vector<16x1xf32>
    %254 = vector.broadcast %253 : vector<16x1xf32> to vector<16x16xf32>
    %255 = arith.subf %251, %254 : vector<16x16xf32>
    %256 = math.exp %255 : vector<16x16xf32>
    %cst_103 = arith.constant dense<0.000000e+00> : vector<16xf32>
    %257 = vector.multi_reduction <add>, %256, %cst_103 [1] : vector<16x16xf32> to vector<16xf32>
    %258 = vector.shape_cast %257 : vector<16xf32> to vector<16x1xf32>
    %259 = tpu.reciprocal %258 {approx = true} : vector<16x1xf32> -> vector<16x1xf32>
    %260 = vector.broadcast %259 : vector<16x1xf32> to vector<16x16xf32>
    %261 = arith.mulf %256, %260 : vector<16x16xf32>
    %cst_104 = arith.constant dense<0.000000e+00> : vector<10x16xf32>
    %262 = tpu.matmul %237, %261, %cst_104 {dimension_numbers = #tpu.dot_dimension_numbers<[1], [1], [0], [0], [0, 0, 1, 0], [], []>} : vector<10x16xf32>, vector<16x16xf32>, vector<10x16xf32> -> vector<10x16xf32>
    %263 = vector.extract_strided_slice %182 {offsets = [30, 0], sizes = [10, 16], strides = [1, 1]} : vector<40x16xf32> to vector<10x16xf32>
    %264 = vector.extract_strided_slice %183 {offsets = [0, 3], sizes = [16, 1], strides = [1, 1]} : vector<16x4xf32> to vector<16x1xf32>
    %265 = vector.extract_strided_slice %184 {offsets = [3, 0], sizes = [1, 16], strides = [1, 1]} : vector<4x16xf32> to vector<1x16xf32>
    %266 = vector.broadcast %264 : vector<16x1xf32> to vector<16x16xf32>
    %267 = vector.broadcast %265 : vector<1x16xf32> to vector<16x16xf32>
    %268 = arith.addf %266, %267 : vector<16x16xf32>
    %cst_105 = arith.constant 0.000000e+00 : f32
    %269 = vector.broadcast %cst_105 : f32 to vector<16x16xf32>
    %270 = arith.cmpf ogt, %268, %269 : vector<16x16xf32>
    %cst_106 = arith.constant 2.000000e-01 : f32
    %271 = vector.broadcast %cst_106 : f32 to vector<16x16xf32>
    %272 = arith.mulf %271, %268 : vector<16x16xf32>
    %273 = arith.select %270, %268, %272 : vector<16x16xi1>, vector<16x16xf32>
    %cst_107 = arith.constant 0.000000e+00 : f32
    %274 = vector.broadcast %cst_107 : f32 to vector<16x16xf32>
    %275 = arith.cmpf oeq, %181, %274 : vector<16x16xf32>
    %cst_108 = arith.constant -1.000000e+30 : f32
    %276 = vector.broadcast %cst_108 : f32 to vector<16x16xf32>
    %277 = arith.select %275, %276, %273 : vector<16x16xi1>, vector<16x16xf32>
    %cst_109 = arith.constant dense<0xFF800000> : vector<16xf32>
    %278 = vector.multi_reduction <maximumf>, %277, %cst_109 [1] : vector<16x16xf32> to vector<16xf32>
    %279 = vector.shape_cast %278 : vector<16xf32> to vector<16x1xf32>
    %280 = vector.broadcast %279 : vector<16x1xf32> to vector<16x16xf32>
    %281 = arith.subf %277, %280 : vector<16x16xf32>
    %282 = math.exp %281 : vector<16x16xf32>
    %cst_110 = arith.constant dense<0.000000e+00> : vector<16xf32>
    %283 = vector.multi_reduction <add>, %282, %cst_110 [1] : vector<16x16xf32> to vector<16xf32>
    %284 = vector.shape_cast %283 : vector<16xf32> to vector<16x1xf32>
    %285 = tpu.reciprocal %284 {approx = true} : vector<16x1xf32> -> vector<16x1xf32>
    %286 = vector.broadcast %285 : vector<16x1xf32> to vector<16x16xf32>
    %287 = arith.mulf %282, %286 : vector<16x16xf32>
    %cst_111 = arith.constant dense<0.000000e+00> : vector<10x16xf32>
    %288 = tpu.matmul %263, %287, %cst_111 {dimension_numbers = #tpu.dot_dimension_numbers<[1], [1], [0], [0], [0, 0, 1, 0], [], []>} : vector<10x16xf32>, vector<16x16xf32>, vector<10x16xf32> -> vector<10x16xf32>
    %289 = tpu.concatenate %210, %236, %262, %288 in 0 : vector<10x16xf32>, vector<10x16xf32>, vector<10x16xf32>, vector<10x16xf32> -> vector<40x16xf32>
    %cst_112 = arith.constant 0.000000e+00 : f32
    %290 = vector.broadcast %cst_112 : f32 to vector<40x16xf32>
    %291 = arith.cmpf ogt, %289, %290 : vector<40x16xf32>
    %292 = math.exp %289 : vector<40x16xf32>
    %cst_113 = arith.constant 1.000000e+00 : f32
    %293 = vector.broadcast %cst_113 : f32 to vector<40x16xf32>
    %294 = arith.subf %292, %293 : vector<40x16xf32>
    %295 = arith.select %291, %289, %294 : vector<40x16xi1>, vector<40x16xf32>
    %cst_114 = arith.constant dense<0.000000e+00> : vector<40x16xf32>
    %296 = tpu.matmul %21, %295, %cst_114 {dimension_numbers = #tpu.dot_dimension_numbers<[1], [0], [0], [1], [0, 0, 1, 1], [], []>} : vector<40x40xf32>, vector<40x16xf32>, vector<40x16xf32> -> vector<40x16xf32>
    %cst_115 = arith.constant dense<0.000000e+00> : vector<16x4xf32>
    %297 = tpu.matmul %296, %22, %cst_115 {dimension_numbers = #tpu.dot_dimension_numbers<[0], [0], [1], [1], [0, 1, 1, 1], [], []>} : vector<40x16xf32>, vector<40x4xf32>, vector<16x4xf32> -> vector<16x4xf32>
    %cst_116 = arith.constant dense<0.000000e+00> : vector<4x16xf32>
    %298 = tpu.matmul %23, %296, %cst_116 {dimension_numbers = #tpu.dot_dimension_numbers<[1], [0], [0], [1], [0, 0, 1, 1], [], []>} : vector<4x40xf32>, vector<40x16xf32>, vector<4x16xf32> -> vector<4x16xf32>
    %299 = vector.extract_strided_slice %296 {offsets = [0, 0], sizes = [10, 16], strides = [1, 1]} : vector<40x16xf32> to vector<10x16xf32>
    %300 = vector.extract_strided_slice %297 {offsets = [0, 0], sizes = [16, 1], strides = [1, 1]} : vector<16x4xf32> to vector<16x1xf32>
    %301 = vector.extract_strided_slice %298 {offsets = [0, 0], sizes = [1, 16], strides = [1, 1]} : vector<4x16xf32> to vector<1x16xf32>
    %302 = vector.broadcast %300 : vector<16x1xf32> to vector<16x16xf32>
    %303 = vector.broadcast %301 : vector<1x16xf32> to vector<16x16xf32>
    %304 = arith.addf %302, %303 : vector<16x16xf32>
    %cst_117 = arith.constant 0.000000e+00 : f32
    %305 = vector.broadcast %cst_117 : f32 to vector<16x16xf32>
    %306 = arith.cmpf ogt, %304, %305 : vector<16x16xf32>
    %cst_118 = arith.constant 2.000000e-01 : f32
    %307 = vector.broadcast %cst_118 : f32 to vector<16x16xf32>
    %308 = arith.mulf %307, %304 : vector<16x16xf32>
    %309 = arith.select %306, %304, %308 : vector<16x16xi1>, vector<16x16xf32>
    %cst_119 = arith.constant 0.000000e+00 : f32
    %310 = vector.broadcast %cst_119 : f32 to vector<16x16xf32>
    %311 = arith.cmpf oeq, %181, %310 : vector<16x16xf32>
    %cst_120 = arith.constant -1.000000e+30 : f32
    %312 = vector.broadcast %cst_120 : f32 to vector<16x16xf32>
    %313 = arith.select %311, %312, %309 : vector<16x16xi1>, vector<16x16xf32>
    %cst_121 = arith.constant dense<0xFF800000> : vector<16xf32>
    %314 = vector.multi_reduction <maximumf>, %313, %cst_121 [1] : vector<16x16xf32> to vector<16xf32>
    %315 = vector.shape_cast %314 : vector<16xf32> to vector<16x1xf32>
    %316 = vector.broadcast %315 : vector<16x1xf32> to vector<16x16xf32>
    %317 = arith.subf %313, %316 : vector<16x16xf32>
    %318 = math.exp %317 : vector<16x16xf32>
    %cst_122 = arith.constant dense<0.000000e+00> : vector<16xf32>
    %319 = vector.multi_reduction <add>, %318, %cst_122 [1] : vector<16x16xf32> to vector<16xf32>
    %320 = vector.shape_cast %319 : vector<16xf32> to vector<16x1xf32>
    %321 = tpu.reciprocal %320 {approx = true} : vector<16x1xf32> -> vector<16x1xf32>
    %322 = vector.broadcast %321 : vector<16x1xf32> to vector<16x16xf32>
    %323 = arith.mulf %318, %322 : vector<16x16xf32>
    %cst_123 = arith.constant dense<0.000000e+00> : vector<10x16xf32>
    %324 = tpu.matmul %299, %323, %cst_123 {dimension_numbers = #tpu.dot_dimension_numbers<[1], [1], [0], [0], [0, 0, 1, 0], [], []>} : vector<10x16xf32>, vector<16x16xf32>, vector<10x16xf32> -> vector<10x16xf32>
    %325 = vector.extract_strided_slice %296 {offsets = [10, 0], sizes = [10, 16], strides = [1, 1]} : vector<40x16xf32> to vector<10x16xf32>
    %326 = vector.extract_strided_slice %297 {offsets = [0, 1], sizes = [16, 1], strides = [1, 1]} : vector<16x4xf32> to vector<16x1xf32>
    %327 = vector.extract_strided_slice %298 {offsets = [1, 0], sizes = [1, 16], strides = [1, 1]} : vector<4x16xf32> to vector<1x16xf32>
    %328 = vector.broadcast %326 : vector<16x1xf32> to vector<16x16xf32>
    %329 = vector.broadcast %327 : vector<1x16xf32> to vector<16x16xf32>
    %330 = arith.addf %328, %329 : vector<16x16xf32>
    %cst_124 = arith.constant 0.000000e+00 : f32
    %331 = vector.broadcast %cst_124 : f32 to vector<16x16xf32>
    %332 = arith.cmpf ogt, %330, %331 : vector<16x16xf32>
    %cst_125 = arith.constant 2.000000e-01 : f32
    %333 = vector.broadcast %cst_125 : f32 to vector<16x16xf32>
    %334 = arith.mulf %333, %330 : vector<16x16xf32>
    %335 = arith.select %332, %330, %334 : vector<16x16xi1>, vector<16x16xf32>
    %cst_126 = arith.constant 0.000000e+00 : f32
    %336 = vector.broadcast %cst_126 : f32 to vector<16x16xf32>
    %337 = arith.cmpf oeq, %181, %336 : vector<16x16xf32>
    %cst_127 = arith.constant -1.000000e+30 : f32
    %338 = vector.broadcast %cst_127 : f32 to vector<16x16xf32>
    %339 = arith.select %337, %338, %335 : vector<16x16xi1>, vector<16x16xf32>
    %cst_128 = arith.constant dense<0xFF800000> : vector<16xf32>
    %340 = vector.multi_reduction <maximumf>, %339, %cst_128 [1] : vector<16x16xf32> to vector<16xf32>
    %341 = vector.shape_cast %340 : vector<16xf32> to vector<16x1xf32>
    %342 = vector.broadcast %341 : vector<16x1xf32> to vector<16x16xf32>
    %343 = arith.subf %339, %342 : vector<16x16xf32>
    %344 = math.exp %343 : vector<16x16xf32>
    %cst_129 = arith.constant dense<0.000000e+00> : vector<16xf32>
    %345 = vector.multi_reduction <add>, %344, %cst_129 [1] : vector<16x16xf32> to vector<16xf32>
    %346 = vector.shape_cast %345 : vector<16xf32> to vector<16x1xf32>
    %347 = tpu.reciprocal %346 {approx = true} : vector<16x1xf32> -> vector<16x1xf32>
    %348 = vector.broadcast %347 : vector<16x1xf32> to vector<16x16xf32>
    %349 = arith.mulf %344, %348 : vector<16x16xf32>
    %cst_130 = arith.constant dense<0.000000e+00> : vector<10x16xf32>
    %350 = tpu.matmul %325, %349, %cst_130 {dimension_numbers = #tpu.dot_dimension_numbers<[1], [1], [0], [0], [0, 0, 1, 0], [], []>} : vector<10x16xf32>, vector<16x16xf32>, vector<10x16xf32> -> vector<10x16xf32>
    %351 = vector.extract_strided_slice %296 {offsets = [20, 0], sizes = [10, 16], strides = [1, 1]} : vector<40x16xf32> to vector<10x16xf32>
    %352 = vector.extract_strided_slice %297 {offsets = [0, 2], sizes = [16, 1], strides = [1, 1]} : vector<16x4xf32> to vector<16x1xf32>
    %353 = vector.extract_strided_slice %298 {offsets = [2, 0], sizes = [1, 16], strides = [1, 1]} : vector<4x16xf32> to vector<1x16xf32>
    %354 = vector.broadcast %352 : vector<16x1xf32> to vector<16x16xf32>
    %355 = vector.broadcast %353 : vector<1x16xf32> to vector<16x16xf32>
    %356 = arith.addf %354, %355 : vector<16x16xf32>
    %cst_131 = arith.constant 0.000000e+00 : f32
    %357 = vector.broadcast %cst_131 : f32 to vector<16x16xf32>
    %358 = arith.cmpf ogt, %356, %357 : vector<16x16xf32>
    %cst_132 = arith.constant 2.000000e-01 : f32
    %359 = vector.broadcast %cst_132 : f32 to vector<16x16xf32>
    %360 = arith.mulf %359, %356 : vector<16x16xf32>
    %361 = arith.select %358, %356, %360 : vector<16x16xi1>, vector<16x16xf32>
    %cst_133 = arith.constant 0.000000e+00 : f32
    %362 = vector.broadcast %cst_133 : f32 to vector<16x16xf32>
    %363 = arith.cmpf oeq, %181, %362 : vector<16x16xf32>
    %cst_134 = arith.constant -1.000000e+30 : f32
    %364 = vector.broadcast %cst_134 : f32 to vector<16x16xf32>
    %365 = arith.select %363, %364, %361 : vector<16x16xi1>, vector<16x16xf32>
    %cst_135 = arith.constant dense<0xFF800000> : vector<16xf32>
    %366 = vector.multi_reduction <maximumf>, %365, %cst_135 [1] : vector<16x16xf32> to vector<16xf32>
    %367 = vector.shape_cast %366 : vector<16xf32> to vector<16x1xf32>
    %368 = vector.broadcast %367 : vector<16x1xf32> to vector<16x16xf32>
    %369 = arith.subf %365, %368 : vector<16x16xf32>
    %370 = math.exp %369 : vector<16x16xf32>
    %cst_136 = arith.constant dense<0.000000e+00> : vector<16xf32>
    %371 = vector.multi_reduction <add>, %370, %cst_136 [1] : vector<16x16xf32> to vector<16xf32>
    %372 = vector.shape_cast %371 : vector<16xf32> to vector<16x1xf32>
    %373 = tpu.reciprocal %372 {approx = true} : vector<16x1xf32> -> vector<16x1xf32>
    %374 = vector.broadcast %373 : vector<16x1xf32> to vector<16x16xf32>
    %375 = arith.mulf %370, %374 : vector<16x16xf32>
    %cst_137 = arith.constant dense<0.000000e+00> : vector<10x16xf32>
    %376 = tpu.matmul %351, %375, %cst_137 {dimension_numbers = #tpu.dot_dimension_numbers<[1], [1], [0], [0], [0, 0, 1, 0], [], []>} : vector<10x16xf32>, vector<16x16xf32>, vector<10x16xf32> -> vector<10x16xf32>
    %377 = vector.extract_strided_slice %296 {offsets = [30, 0], sizes = [10, 16], strides = [1, 1]} : vector<40x16xf32> to vector<10x16xf32>
    %378 = vector.extract_strided_slice %297 {offsets = [0, 3], sizes = [16, 1], strides = [1, 1]} : vector<16x4xf32> to vector<16x1xf32>
    %379 = vector.extract_strided_slice %298 {offsets = [3, 0], sizes = [1, 16], strides = [1, 1]} : vector<4x16xf32> to vector<1x16xf32>
    %380 = vector.broadcast %378 : vector<16x1xf32> to vector<16x16xf32>
    %381 = vector.broadcast %379 : vector<1x16xf32> to vector<16x16xf32>
    %382 = arith.addf %380, %381 : vector<16x16xf32>
    %cst_138 = arith.constant 0.000000e+00 : f32
    %383 = vector.broadcast %cst_138 : f32 to vector<16x16xf32>
    %384 = arith.cmpf ogt, %382, %383 : vector<16x16xf32>
    %cst_139 = arith.constant 2.000000e-01 : f32
    %385 = vector.broadcast %cst_139 : f32 to vector<16x16xf32>
    %386 = arith.mulf %385, %382 : vector<16x16xf32>
    %387 = arith.select %384, %382, %386 : vector<16x16xi1>, vector<16x16xf32>
    %cst_140 = arith.constant 0.000000e+00 : f32
    %388 = vector.broadcast %cst_140 : f32 to vector<16x16xf32>
    %389 = arith.cmpf oeq, %181, %388 : vector<16x16xf32>
    %cst_141 = arith.constant -1.000000e+30 : f32
    %390 = vector.broadcast %cst_141 : f32 to vector<16x16xf32>
    %391 = arith.select %389, %390, %387 : vector<16x16xi1>, vector<16x16xf32>
    %cst_142 = arith.constant dense<0xFF800000> : vector<16xf32>
    %392 = vector.multi_reduction <maximumf>, %391, %cst_142 [1] : vector<16x16xf32> to vector<16xf32>
    %393 = vector.shape_cast %392 : vector<16xf32> to vector<16x1xf32>
    %394 = vector.broadcast %393 : vector<16x1xf32> to vector<16x16xf32>
    %395 = arith.subf %391, %394 : vector<16x16xf32>
    %396 = math.exp %395 : vector<16x16xf32>
    %cst_143 = arith.constant dense<0.000000e+00> : vector<16xf32>
    %397 = vector.multi_reduction <add>, %396, %cst_143 [1] : vector<16x16xf32> to vector<16xf32>
    %398 = vector.shape_cast %397 : vector<16xf32> to vector<16x1xf32>
    %399 = tpu.reciprocal %398 {approx = true} : vector<16x1xf32> -> vector<16x1xf32>
    %400 = vector.broadcast %399 : vector<16x1xf32> to vector<16x16xf32>
    %401 = arith.mulf %396, %400 : vector<16x16xf32>
    %cst_144 = arith.constant dense<0.000000e+00> : vector<10x16xf32>
    %402 = tpu.matmul %377, %401, %cst_144 {dimension_numbers = #tpu.dot_dimension_numbers<[1], [1], [0], [0], [0, 0, 1, 0], [], []>} : vector<10x16xf32>, vector<16x16xf32>, vector<10x16xf32> -> vector<10x16xf32>
    %403 = tpu.concatenate %324, %350, %376, %402 in 0 : vector<10x16xf32>, vector<10x16xf32>, vector<10x16xf32>, vector<10x16xf32> -> vector<40x16xf32>
    %cst_145 = arith.constant 0.000000e+00 : f32
    %404 = vector.broadcast %cst_145 : f32 to vector<40x16xf32>
    %405 = arith.cmpf ogt, %403, %404 : vector<40x16xf32>
    %406 = math.exp %403 : vector<40x16xf32>
    %cst_146 = arith.constant 1.000000e+00 : f32
    %407 = vector.broadcast %cst_146 : f32 to vector<40x16xf32>
    %408 = arith.subf %406, %407 : vector<40x16xf32>
    %409 = arith.select %405, %403, %408 : vector<40x16xi1>, vector<40x16xf32>
    %cst_147 = arith.constant dense<0.000000e+00> : vector<40x16xf32>
    %410 = tpu.matmul %24, %409, %cst_147 {dimension_numbers = #tpu.dot_dimension_numbers<[1], [0], [0], [1], [0, 0, 1, 1], [], []>} : vector<40x40xf32>, vector<40x16xf32>, vector<40x16xf32> -> vector<40x16xf32>
    %cst_148 = arith.constant dense<0.000000e+00> : vector<16x4xf32>
    %411 = tpu.matmul %410, %25, %cst_148 {dimension_numbers = #tpu.dot_dimension_numbers<[0], [0], [1], [1], [0, 1, 1, 1], [], []>} : vector<40x16xf32>, vector<40x4xf32>, vector<16x4xf32> -> vector<16x4xf32>
    %cst_149 = arith.constant dense<0.000000e+00> : vector<4x16xf32>
    %412 = tpu.matmul %26, %410, %cst_149 {dimension_numbers = #tpu.dot_dimension_numbers<[1], [0], [0], [1], [0, 0, 1, 1], [], []>} : vector<4x40xf32>, vector<40x16xf32>, vector<4x16xf32> -> vector<4x16xf32>
    %413 = vector.extract_strided_slice %410 {offsets = [0, 0], sizes = [10, 16], strides = [1, 1]} : vector<40x16xf32> to vector<10x16xf32>
    %414 = vector.extract_strided_slice %411 {offsets = [0, 0], sizes = [16, 1], strides = [1, 1]} : vector<16x4xf32> to vector<16x1xf32>
    %415 = vector.extract_strided_slice %412 {offsets = [0, 0], sizes = [1, 16], strides = [1, 1]} : vector<4x16xf32> to vector<1x16xf32>
    %416 = vector.broadcast %414 : vector<16x1xf32> to vector<16x16xf32>
    %417 = vector.broadcast %415 : vector<1x16xf32> to vector<16x16xf32>
    %418 = arith.addf %416, %417 : vector<16x16xf32>
    %cst_150 = arith.constant 0.000000e+00 : f32
    %419 = vector.broadcast %cst_150 : f32 to vector<16x16xf32>
    %420 = arith.cmpf ogt, %418, %419 : vector<16x16xf32>
    %cst_151 = arith.constant 2.000000e-01 : f32
    %421 = vector.broadcast %cst_151 : f32 to vector<16x16xf32>
    %422 = arith.mulf %421, %418 : vector<16x16xf32>
    %423 = arith.select %420, %418, %422 : vector<16x16xi1>, vector<16x16xf32>
    %cst_152 = arith.constant 0.000000e+00 : f32
    %424 = vector.broadcast %cst_152 : f32 to vector<16x16xf32>
    %425 = arith.cmpf oeq, %181, %424 : vector<16x16xf32>
    %cst_153 = arith.constant -1.000000e+30 : f32
    %426 = vector.broadcast %cst_153 : f32 to vector<16x16xf32>
    %427 = arith.select %425, %426, %423 : vector<16x16xi1>, vector<16x16xf32>
    %cst_154 = arith.constant dense<0xFF800000> : vector<16xf32>
    %428 = vector.multi_reduction <maximumf>, %427, %cst_154 [1] : vector<16x16xf32> to vector<16xf32>
    %429 = vector.shape_cast %428 : vector<16xf32> to vector<16x1xf32>
    %430 = vector.broadcast %429 : vector<16x1xf32> to vector<16x16xf32>
    %431 = arith.subf %427, %430 : vector<16x16xf32>
    %432 = math.exp %431 : vector<16x16xf32>
    %cst_155 = arith.constant dense<0.000000e+00> : vector<16xf32>
    %433 = vector.multi_reduction <add>, %432, %cst_155 [1] : vector<16x16xf32> to vector<16xf32>
    %434 = vector.shape_cast %433 : vector<16xf32> to vector<16x1xf32>
    %435 = tpu.reciprocal %434 {approx = true} : vector<16x1xf32> -> vector<16x1xf32>
    %436 = vector.broadcast %435 : vector<16x1xf32> to vector<16x16xf32>
    %437 = arith.mulf %432, %436 : vector<16x16xf32>
    %cst_156 = arith.constant dense<0.000000e+00> : vector<10x16xf32>
    %438 = tpu.matmul %413, %437, %cst_156 {dimension_numbers = #tpu.dot_dimension_numbers<[1], [1], [0], [0], [0, 0, 1, 0], [], []>} : vector<10x16xf32>, vector<16x16xf32>, vector<10x16xf32> -> vector<10x16xf32>
    %439 = vector.extract_strided_slice %410 {offsets = [10, 0], sizes = [10, 16], strides = [1, 1]} : vector<40x16xf32> to vector<10x16xf32>
    %440 = vector.extract_strided_slice %411 {offsets = [0, 1], sizes = [16, 1], strides = [1, 1]} : vector<16x4xf32> to vector<16x1xf32>
    %441 = vector.extract_strided_slice %412 {offsets = [1, 0], sizes = [1, 16], strides = [1, 1]} : vector<4x16xf32> to vector<1x16xf32>
    %442 = vector.broadcast %440 : vector<16x1xf32> to vector<16x16xf32>
    %443 = vector.broadcast %441 : vector<1x16xf32> to vector<16x16xf32>
    %444 = arith.addf %442, %443 : vector<16x16xf32>
    %cst_157 = arith.constant 0.000000e+00 : f32
    %445 = vector.broadcast %cst_157 : f32 to vector<16x16xf32>
    %446 = arith.cmpf ogt, %444, %445 : vector<16x16xf32>
    %cst_158 = arith.constant 2.000000e-01 : f32
    %447 = vector.broadcast %cst_158 : f32 to vector<16x16xf32>
    %448 = arith.mulf %447, %444 : vector<16x16xf32>
    %449 = arith.select %446, %444, %448 : vector<16x16xi1>, vector<16x16xf32>
    %cst_159 = arith.constant 0.000000e+00 : f32
    %450 = vector.broadcast %cst_159 : f32 to vector<16x16xf32>
    %451 = arith.cmpf oeq, %181, %450 : vector<16x16xf32>
    %cst_160 = arith.constant -1.000000e+30 : f32
    %452 = vector.broadcast %cst_160 : f32 to vector<16x16xf32>
    %453 = arith.select %451, %452, %449 : vector<16x16xi1>, vector<16x16xf32>
    %cst_161 = arith.constant dense<0xFF800000> : vector<16xf32>
    %454 = vector.multi_reduction <maximumf>, %453, %cst_161 [1] : vector<16x16xf32> to vector<16xf32>
    %455 = vector.shape_cast %454 : vector<16xf32> to vector<16x1xf32>
    %456 = vector.broadcast %455 : vector<16x1xf32> to vector<16x16xf32>
    %457 = arith.subf %453, %456 : vector<16x16xf32>
    %458 = math.exp %457 : vector<16x16xf32>
    %cst_162 = arith.constant dense<0.000000e+00> : vector<16xf32>
    %459 = vector.multi_reduction <add>, %458, %cst_162 [1] : vector<16x16xf32> to vector<16xf32>
    %460 = vector.shape_cast %459 : vector<16xf32> to vector<16x1xf32>
    %461 = tpu.reciprocal %460 {approx = true} : vector<16x1xf32> -> vector<16x1xf32>
    %462 = vector.broadcast %461 : vector<16x1xf32> to vector<16x16xf32>
    %463 = arith.mulf %458, %462 : vector<16x16xf32>
    %cst_163 = arith.constant dense<0.000000e+00> : vector<10x16xf32>
    %464 = tpu.matmul %439, %463, %cst_163 {dimension_numbers = #tpu.dot_dimension_numbers<[1], [1], [0], [0], [0, 0, 1, 0], [], []>} : vector<10x16xf32>, vector<16x16xf32>, vector<10x16xf32> -> vector<10x16xf32>
    %465 = vector.extract_strided_slice %410 {offsets = [20, 0], sizes = [10, 16], strides = [1, 1]} : vector<40x16xf32> to vector<10x16xf32>
    %466 = vector.extract_strided_slice %411 {offsets = [0, 2], sizes = [16, 1], strides = [1, 1]} : vector<16x4xf32> to vector<16x1xf32>
    %467 = vector.extract_strided_slice %412 {offsets = [2, 0], sizes = [1, 16], strides = [1, 1]} : vector<4x16xf32> to vector<1x16xf32>
    %468 = vector.broadcast %466 : vector<16x1xf32> to vector<16x16xf32>
    %469 = vector.broadcast %467 : vector<1x16xf32> to vector<16x16xf32>
    %470 = arith.addf %468, %469 : vector<16x16xf32>
    %cst_164 = arith.constant 0.000000e+00 : f32
    %471 = vector.broadcast %cst_164 : f32 to vector<16x16xf32>
    %472 = arith.cmpf ogt, %470, %471 : vector<16x16xf32>
    %cst_165 = arith.constant 2.000000e-01 : f32
    %473 = vector.broadcast %cst_165 : f32 to vector<16x16xf32>
    %474 = arith.mulf %473, %470 : vector<16x16xf32>
    %475 = arith.select %472, %470, %474 : vector<16x16xi1>, vector<16x16xf32>
    %cst_166 = arith.constant 0.000000e+00 : f32
    %476 = vector.broadcast %cst_166 : f32 to vector<16x16xf32>
    %477 = arith.cmpf oeq, %181, %476 : vector<16x16xf32>
    %cst_167 = arith.constant -1.000000e+30 : f32
    %478 = vector.broadcast %cst_167 : f32 to vector<16x16xf32>
    %479 = arith.select %477, %478, %475 : vector<16x16xi1>, vector<16x16xf32>
    %cst_168 = arith.constant dense<0xFF800000> : vector<16xf32>
    %480 = vector.multi_reduction <maximumf>, %479, %cst_168 [1] : vector<16x16xf32> to vector<16xf32>
    %481 = vector.shape_cast %480 : vector<16xf32> to vector<16x1xf32>
    %482 = vector.broadcast %481 : vector<16x1xf32> to vector<16x16xf32>
    %483 = arith.subf %479, %482 : vector<16x16xf32>
    %484 = math.exp %483 : vector<16x16xf32>
    %cst_169 = arith.constant dense<0.000000e+00> : vector<16xf32>
    %485 = vector.multi_reduction <add>, %484, %cst_169 [1] : vector<16x16xf32> to vector<16xf32>
    %486 = vector.shape_cast %485 : vector<16xf32> to vector<16x1xf32>
    %487 = tpu.reciprocal %486 {approx = true} : vector<16x1xf32> -> vector<16x1xf32>
    %488 = vector.broadcast %487 : vector<16x1xf32> to vector<16x16xf32>
    %489 = arith.mulf %484, %488 : vector<16x16xf32>
    %cst_170 = arith.constant dense<0.000000e+00> : vector<10x16xf32>
    %490 = tpu.matmul %465, %489, %cst_170 {dimension_numbers = #tpu.dot_dimension_numbers<[1], [1], [0], [0], [0, 0, 1, 0], [], []>} : vector<10x16xf32>, vector<16x16xf32>, vector<10x16xf32> -> vector<10x16xf32>
    %491 = vector.extract_strided_slice %410 {offsets = [30, 0], sizes = [10, 16], strides = [1, 1]} : vector<40x16xf32> to vector<10x16xf32>
    %492 = vector.extract_strided_slice %411 {offsets = [0, 3], sizes = [16, 1], strides = [1, 1]} : vector<16x4xf32> to vector<16x1xf32>
    %493 = vector.extract_strided_slice %412 {offsets = [3, 0], sizes = [1, 16], strides = [1, 1]} : vector<4x16xf32> to vector<1x16xf32>
    %494 = vector.broadcast %492 : vector<16x1xf32> to vector<16x16xf32>
    %495 = vector.broadcast %493 : vector<1x16xf32> to vector<16x16xf32>
    %496 = arith.addf %494, %495 : vector<16x16xf32>
    %cst_171 = arith.constant 0.000000e+00 : f32
    %497 = vector.broadcast %cst_171 : f32 to vector<16x16xf32>
    %498 = arith.cmpf ogt, %496, %497 : vector<16x16xf32>
    %cst_172 = arith.constant 2.000000e-01 : f32
    %499 = vector.broadcast %cst_172 : f32 to vector<16x16xf32>
    %500 = arith.mulf %499, %496 : vector<16x16xf32>
    %501 = arith.select %498, %496, %500 : vector<16x16xi1>, vector<16x16xf32>
    %cst_173 = arith.constant 0.000000e+00 : f32
    %502 = vector.broadcast %cst_173 : f32 to vector<16x16xf32>
    %503 = arith.cmpf oeq, %181, %502 : vector<16x16xf32>
    %cst_174 = arith.constant -1.000000e+30 : f32
    %504 = vector.broadcast %cst_174 : f32 to vector<16x16xf32>
    %505 = arith.select %503, %504, %501 : vector<16x16xi1>, vector<16x16xf32>
    %cst_175 = arith.constant dense<0xFF800000> : vector<16xf32>
    %506 = vector.multi_reduction <maximumf>, %505, %cst_175 [1] : vector<16x16xf32> to vector<16xf32>
    %507 = vector.shape_cast %506 : vector<16xf32> to vector<16x1xf32>
    %508 = vector.broadcast %507 : vector<16x1xf32> to vector<16x16xf32>
    %509 = arith.subf %505, %508 : vector<16x16xf32>
    %510 = math.exp %509 : vector<16x16xf32>
    %cst_176 = arith.constant dense<0.000000e+00> : vector<16xf32>
    %511 = vector.multi_reduction <add>, %510, %cst_176 [1] : vector<16x16xf32> to vector<16xf32>
    %512 = vector.shape_cast %511 : vector<16xf32> to vector<16x1xf32>
    %513 = tpu.reciprocal %512 {approx = true} : vector<16x1xf32> -> vector<16x1xf32>
    %514 = vector.broadcast %513 : vector<16x1xf32> to vector<16x16xf32>
    %515 = arith.mulf %510, %514 : vector<16x16xf32>
    %cst_177 = arith.constant dense<0.000000e+00> : vector<10x16xf32>
    %516 = tpu.matmul %491, %515, %cst_177 {dimension_numbers = #tpu.dot_dimension_numbers<[1], [1], [0], [0], [0, 0, 1, 0], [], []>} : vector<10x16xf32>, vector<16x16xf32>, vector<10x16xf32> -> vector<10x16xf32>
    %517 = tpu.concatenate %438, %464, %490, %516 in 0 : vector<10x16xf32>, vector<10x16xf32>, vector<10x16xf32>, vector<10x16xf32> -> vector<40x16xf32>
    %cst_178 = arith.constant 0.000000e+00 : f32
    %518 = vector.broadcast %cst_178 : f32 to vector<40x16xf32>
    %519 = arith.cmpf ogt, %517, %518 : vector<40x16xf32>
    %520 = math.exp %517 : vector<40x16xf32>
    %cst_179 = arith.constant 1.000000e+00 : f32
    %521 = vector.broadcast %cst_179 : f32 to vector<40x16xf32>
    %522 = arith.subf %520, %521 : vector<40x16xf32>
    %523 = arith.select %519, %517, %522 : vector<40x16xi1>, vector<40x16xf32>
    %524 = tpu.concatenate %295, %409, %523, %170 in 0 : vector<40x16xf32>, vector<40x16xf32>, vector<40x16xf32>, vector<40x16xf32> -> vector<160x16xf32>
    %cst_180 = arith.constant dense<0.000000e+00> : vector<4x16xf32>
    %525 = tpu.matmul %27, %524, %cst_180 {dimension_numbers = #tpu.dot_dimension_numbers<[1], [0], [0], [1], [0, 0, 1, 1], [], []>} : vector<4x160xf32>, vector<160x16xf32>, vector<4x16xf32> -> vector<4x16xf32>
    %526 = vector.broadcast %28 : vector<4x1xf32> to vector<4x16xf32>
    %527 = arith.addf %525, %526 : vector<4x16xf32>
    %c0_181 = arith.constant 0 : index
    %c0_182 = arith.constant 0 : index
    %c0_183 = arith.constant 0 : index
    %528 = vector.load %arg36[%c0_181, %c0_182, %c0_183] : memref<1x4x16xf32, #tpu.memory_space<vmem>>, vector<1x4x16xf32>
    %529 = vector.shape_cast %528 : vector<1x4x16xf32> to vector<4x16xf32>
    %530 = vector.shape_cast %527 : vector<4x16xf32> to vector<1x4x16xf32>
    tpu.vector_store %arg36[%c0_181, %c0_182, %c0_183], %530 {strides = array<i32>} : memref<1x4x16xf32, #tpu.memory_space<vmem>>, vector<1x4x16xf32>,
    return
  }
  func.func @transform_0(%arg0: i32) -> (i32, i32, i32) {
    %c0_i32 = arith.constant 0 : i32
    %c0_i32_0 = arith.constant 0 : i32
    %c0_i32_1 = arith.constant 0 : i32
    return %arg0, %c0_i32, %c0_i32_0 : i32, i32, i32
  }
  func.func @transform_1(%arg0: i32) -> (i32, i32, i32) {
    %c0_i32 = arith.constant 0 : i32
    %c0_i32_0 = arith.constant 0 : i32
    %c0_i32_1 = arith.constant 0 : i32
    return %arg0, %c0_i32, %c0_i32_0 : i32, i32, i32
  }
  func.func @transform_2(%arg0: i32) -> (i32, i32) {
    %c0_i32 = arith.constant 0 : i32
    %c0_i32_0 = arith.constant 0 : i32
    %c0_i32_1 = arith.constant 0 : i32
    return %c0_i32, %c0_i32_0 : i32, i32
  }
  func.func @transform_3(%arg0: i32) -> (i32, i32) {
    %c0_i32 = arith.constant 0 : i32
    %c0_i32_0 = arith.constant 0 : i32
    %c0_i32_1 = arith.constant 0 : i32
    return %c0_i32, %c0_i32_0 : i32, i32
  }
  func.func @transform_4(%arg0: i32) -> (i32, i32) {
    %c0_i32 = arith.constant 0 : i32
    %c0_i32_0 = arith.constant 0 : i32
    %c0_i32_1 = arith.constant 0 : i32
    return %c0_i32, %c0_i32_0 : i32, i32
  }
  func.func @transform_5(%arg0: i32) -> (i32, i32) {
    %c0_i32 = arith.constant 0 : i32
    %c0_i32_0 = arith.constant 0 : i32
    %c0_i32_1 = arith.constant 0 : i32
    return %c0_i32, %c0_i32_0 : i32, i32
  }
  func.func @transform_6(%arg0: i32) -> (i32, i32) {
    %c0_i32 = arith.constant 0 : i32
    %c0_i32_0 = arith.constant 0 : i32
    %c0_i32_1 = arith.constant 0 : i32
    return %c0_i32, %c0_i32_0 : i32, i32
  }
  func.func @transform_7(%arg0: i32) -> (i32, i32) {
    %c0_i32 = arith.constant 0 : i32
    %c0_i32_0 = arith.constant 0 : i32
    %c0_i32_1 = arith.constant 0 : i32
    return %c0_i32, %c0_i32_0 : i32, i32
  }
  func.func @transform_8(%arg0: i32) -> (i32, i32) {
    %c0_i32 = arith.constant 0 : i32
    %c0_i32_0 = arith.constant 0 : i32
    %c0_i32_1 = arith.constant 0 : i32
    return %c0_i32, %c0_i32_0 : i32, i32
  }
  func.func @transform_9(%arg0: i32) -> (i32, i32) {
    %c0_i32 = arith.constant 0 : i32
    %c0_i32_0 = arith.constant 0 : i32
    %c0_i32_1 = arith.constant 0 : i32
    return %c0_i32, %c0_i32_0 : i32, i32
  }
  func.func @transform_10(%arg0: i32) -> (i32, i32) {
    %c0_i32 = arith.constant 0 : i32
    %c0_i32_0 = arith.constant 0 : i32
    %c0_i32_1 = arith.constant 0 : i32
    return %c0_i32, %c0_i32_0 : i32, i32
  }
  func.func @transform_11(%arg0: i32) -> (i32, i32) {
    %c0_i32 = arith.constant 0 : i32
    %c0_i32_0 = arith.constant 0 : i32
    %c0_i32_1 = arith.constant 0 : i32
    return %c0_i32, %c0_i32_0 : i32, i32
  }
  func.func @transform_12(%arg0: i32) -> (i32, i32) {
    %c0_i32 = arith.constant 0 : i32
    %c0_i32_0 = arith.constant 0 : i32
    %c0_i32_1 = arith.constant 0 : i32
    return %c0_i32, %c0_i32_0 : i32, i32
  }
  func.func @transform_13(%arg0: i32) -> (i32, i32) {
    %c0_i32 = arith.constant 0 : i32
    %c0_i32_0 = arith.constant 0 : i32
    %c0_i32_1 = arith.constant 0 : i32
    return %c0_i32, %c0_i32_0 : i32, i32
  }
  func.func @transform_14(%arg0: i32) -> (i32, i32) {
    %c0_i32 = arith.constant 0 : i32
    %c0_i32_0 = arith.constant 0 : i32
    %c0_i32_1 = arith.constant 0 : i32
    return %c0_i32, %c0_i32_0 : i32, i32
  }
  func.func @transform_15(%arg0: i32) -> (i32, i32) {
    %c0_i32 = arith.constant 0 : i32
    %c0_i32_0 = arith.constant 0 : i32
    %c0_i32_1 = arith.constant 0 : i32
    return %c0_i32, %c0_i32_0 : i32, i32
  }
  func.func @transform_16(%arg0: i32) -> (i32, i32) {
    %c0_i32 = arith.constant 0 : i32
    %c0_i32_0 = arith.constant 0 : i32
    %c0_i32_1 = arith.constant 0 : i32
    return %c0_i32, %c0_i32_0 : i32, i32
  }
  func.func @transform_17(%arg0: i32) -> (i32, i32) {
    %c0_i32 = arith.constant 0 : i32
    %c0_i32_0 = arith.constant 0 : i32
    %c0_i32_1 = arith.constant 0 : i32
    return %c0_i32, %c0_i32_0 : i32, i32
  }
  func.func @transform_18(%arg0: i32) -> (i32, i32) {
    %c0_i32 = arith.constant 0 : i32
    %c0_i32_0 = arith.constant 0 : i32
    %c0_i32_1 = arith.constant 0 : i32
    return %c0_i32, %c0_i32_0 : i32, i32
  }
  func.func @transform_19(%arg0: i32) -> (i32, i32) {
    %c0_i32 = arith.constant 0 : i32
    %c0_i32_0 = arith.constant 0 : i32
    %c0_i32_1 = arith.constant 0 : i32
    return %c0_i32, %c0_i32_0 : i32, i32
  }
  func.func @transform_20(%arg0: i32) -> (i32, i32) {
    %c0_i32 = arith.constant 0 : i32
    %c0_i32_0 = arith.constant 0 : i32
    %c0_i32_1 = arith.constant 0 : i32
    return %c0_i32, %c0_i32_0 : i32, i32
  }
  func.func @transform_21(%arg0: i32) -> (i32, i32) {
    %c0_i32 = arith.constant 0 : i32
    %c0_i32_0 = arith.constant 0 : i32
    %c0_i32_1 = arith.constant 0 : i32
    return %c0_i32, %c0_i32_0 : i32, i32
  }
  func.func @transform_22(%arg0: i32) -> (i32, i32) {
    %c0_i32 = arith.constant 0 : i32
    %c0_i32_0 = arith.constant 0 : i32
    %c0_i32_1 = arith.constant 0 : i32
    return %c0_i32, %c0_i32_0 : i32, i32
  }
  func.func @transform_23(%arg0: i32) -> (i32, i32) {
    %c0_i32 = arith.constant 0 : i32
    %c0_i32_0 = arith.constant 0 : i32
    %c0_i32_1 = arith.constant 0 : i32
    return %c0_i32, %c0_i32_0 : i32, i32
  }
  func.func @transform_24(%arg0: i32) -> (i32, i32) {
    %c0_i32 = arith.constant 0 : i32
    %c0_i32_0 = arith.constant 0 : i32
    %c0_i32_1 = arith.constant 0 : i32
    return %c0_i32, %c0_i32_0 : i32, i32
  }
  func.func @transform_25(%arg0: i32) -> (i32, i32) {
    %c0_i32 = arith.constant 0 : i32
    %c0_i32_0 = arith.constant 0 : i32
    %c0_i32_1 = arith.constant 0 : i32
    return %c0_i32, %c0_i32_0 : i32, i32
  }
  func.func @transform_26(%arg0: i32) -> (i32, i32) {
    %c0_i32 = arith.constant 0 : i32
    %c0_i32_0 = arith.constant 0 : i32
    %c0_i32_1 = arith.constant 0 : i32
    return %c0_i32, %c0_i32_0 : i32, i32
  }
  func.func @transform_27(%arg0: i32) -> (i32, i32) {
    %c0_i32 = arith.constant 0 : i32
    %c0_i32_0 = arith.constant 0 : i32
    %c0_i32_1 = arith.constant 0 : i32
    return %c0_i32, %c0_i32_0 : i32, i32
  }
  func.func @transform_28(%arg0: i32) -> (i32, i32) {
    %c0_i32 = arith.constant 0 : i32
    %c0_i32_0 = arith.constant 0 : i32
    %c0_i32_1 = arith.constant 0 : i32
    return %c0_i32, %c0_i32_0 : i32, i32
  }
  func.func @transform_29(%arg0: i32) -> (i32, i32) {
    %c0_i32 = arith.constant 0 : i32
    %c0_i32_0 = arith.constant 0 : i32
    %c0_i32_1 = arith.constant 0 : i32
    return %c0_i32, %c0_i32_0 : i32, i32
  }
  func.func @transform_30(%arg0: i32) -> (i32, i32) {
    %c0_i32 = arith.constant 0 : i32
    %c0_i32_0 = arith.constant 0 : i32
    %c0_i32_1 = arith.constant 0 : i32
    return %c0_i32, %c0_i32_0 : i32, i32
  }
  func.func @transform_31(%arg0: i32) -> (i32, i32) {
    %c0_i32 = arith.constant 0 : i32
    %c0_i32_0 = arith.constant 0 : i32
    %c0_i32_1 = arith.constant 0 : i32
    return %c0_i32, %c0_i32_0 : i32, i32
  }
  func.func @transform_32(%arg0: i32) -> (i32, i32) {
    %c0_i32 = arith.constant 0 : i32
    %c0_i32_0 = arith.constant 0 : i32
    %c0_i32_1 = arith.constant 0 : i32
    return %c0_i32, %c0_i32_0 : i32, i32
  }
  func.func @transform_33(%arg0: i32) -> (i32, i32) {
    %c0_i32 = arith.constant 0 : i32
    %c0_i32_0 = arith.constant 0 : i32
    %c0_i32_1 = arith.constant 0 : i32
    return %c0_i32, %c0_i32_0 : i32, i32
  }
  func.func @transform_34(%arg0: i32) -> (i32, i32) {
    %c0_i32 = arith.constant 0 : i32
    %c0_i32_0 = arith.constant 0 : i32
    %c0_i32_1 = arith.constant 0 : i32
    return %c0_i32, %c0_i32_0 : i32, i32
  }
  func.func @transform_35(%arg0: i32) -> (i32, i32, i32) {
    %c0_i32 = arith.constant 0 : i32
    %c0_i32_0 = arith.constant 0 : i32
    %c0_i32_1 = arith.constant 0 : i32
    return %arg0, %c0_i32, %c0_i32_0 : i32, i32, i32
  }
}

</mosaic_0001>

<llo_original>
// kernel: epignn_forward.1
$region0: #{epignn_forward.1}
  #allocation0 [shape = 'u32[]', space=smem, size = 0x4, offset = 0x4, fixed_abs, tag = 'smem constant byte address 0x4 - core index']
  #allocation1 [shape = 'u32[144,128]{1,0:T(1,128)}', space=vmem, size = 0x12000, scoped, tag = 'internal scratch']
  %s0 = inlined_call_operand.smem [shape: u32[36], index: -1, kind: input, shape index: {}]
  %s1 = sld [smem:[%s0]]
  %s2 = scalar_lea.smem %s0, 1
  %s3 = sld [smem:[%s2]]
  %s4 = scalar_lea.smem %s0, 2
  %s5 = sld [smem:[%s4]]
  %s6 = scalar_lea.smem %s0, 3
  %s7 = sld [smem:[%s6]]
  %s8 = scalar_lea.smem %s0, 4
  %s9 = sld [smem:[%s8]]
  %s10 = scalar_lea.smem %s0, 5
  %s11 = sld [smem:[%s10]]
  %s12 = scalar_lea.smem %s0, 6
  %s13 = sld [smem:[%s12]]
  %s14 = scalar_lea.smem %s0, 7
  %s15 = sld [smem:[%s14]]
  %s16 = scalar_lea.smem %s0, 8
  %s17 = sld [smem:[%s16]]
  %s18 = scalar_lea.smem %s0, 9
  %s19 = sld [smem:[%s18]]
  %s20 = scalar_lea.smem %s0, 10
  %s21 = sld [smem:[%s20]]
  %s22 = scalar_lea.smem %s0, 11
  %s23 = sld [smem:[%s22]]
  %s24 = scalar_lea.smem %s0, 12
  %s25 = sld [smem:[%s24]]
  %s26 = scalar_lea.smem %s0, 13
  %s27 = sld [smem:[%s26]]
  %s28 = scalar_lea.smem %s0, 14
  %s29 = sld [smem:[%s28]]
  %s30 = scalar_lea.smem %s0, 15
  %s31 = sld [smem:[%s30]]
  %s32 = scalar_lea.smem %s0, 16
  %s33 = sld [smem:[%s32]]
  %s34 = scalar_lea.smem %s0, 17
  %s35 = sld [smem:[%s34]]
  %s36 = scalar_lea.smem %s0, 18
  %s37 = sld [smem:[%s36]]
  %s38 = scalar_lea.smem %s0, 19
  %s39 = sld [smem:[%s38]]
  %s40 = scalar_lea.smem %s0, 20
  %s41 = sld [smem:[%s40]]
  %s42 = scalar_lea.smem %s0, 21
  %s43 = sld [smem:[%s42]]
  %s44 = scalar_lea.smem %s0, 22
  %s45 = sld [smem:[%s44]]
  %s46 = scalar_lea.smem %s0, 23
  %s47 = sld [smem:[%s46]]
  %s48 = scalar_lea.smem %s0, 24
  %s49 = sld [smem:[%s48]]
  %s50 = scalar_lea.smem %s0, 25
  %s51 = sld [smem:[%s50]]
  %s52 = scalar_lea.smem %s0, 26
  %s53 = sld [smem:[%s52]]
  %s54 = scalar_lea.smem %s0, 27
  %s55 = sld [smem:[%s54]]
  %s56 = scalar_lea.smem %s0, 28
  %s57 = sld [smem:[%s56]]
  %s58 = scalar_lea.smem %s0, 29
  %s59 = sld [smem:[%s58]]
  %s60 = scalar_lea.smem %s0, 30
  %s61 = sld [smem:[%s60]]
  %s62 = scalar_lea.smem %s0, 31
  %s63 = sld [smem:[%s62]]
  %s64 = scalar_lea.smem %s0, 32
  %s65 = sld [smem:[%s64]]
  %s66 = scalar_lea.smem %s0, 33
  %s67 = sld [smem:[%s66]]
  %s68 = scalar_lea.smem %s0, 34
  %s69 = sld [smem:[%s68]]
  %s70 = scalar_lea.smem %s0, 35
  %s71 = sld [smem:[%s70]]
  %s72 = sld [smem:[#allocation0]]
  $region173: #{epignn_forward.1} parent=0
    _
  %s74 = ssub.s32 1, %s72
  %s75 = scalar_select 0, %s74, %s72
  $region1: #{epignn_forward.1} parent=0
    #allocation2 [shape = 'u8[4096]{0}', space=vmem, size = 0x1000, scoped, tag = 'output window, operand 0']
    #allocation3 [shape = 's32[2]{0}', space=sflag, size = 0x8, scoped, tag = 'scoped memory for epignn_forward.1']
    %76 = vsyncpa [#allocation3], 0
    %s77 = scalar_lea.sflag [#allocation3], 1
    %78 = vsyncpa %s77, 0
    loop: start=0, step=1, limit=4
    $region2: #{epignn_forward.1} parent=1 // loop_pre_header
      _
    $region3: #{epignn_forward.1} parent=1 // loop_header
      %s80 = sphi 0, %s84
      %p81 = scmp.ge.s32.totalorder %s80, 4
      %s90 = sphi 0, %s92
      %s93 = sphi 0, %s90
      %s94 = sphi 0, %s93
      %s110 = sphi 0, %s94
      %s116 = sphi 0, %s118
      %s119 = sphi 0, %s116
      %s120 = sphi 0, %s119
      %s136 = sphi 0, %s120
      %s140 = sphi 0, %s140
      %s142 = sphi 0, %s140
      %s143 = sphi 0, %s142
      %s157 = sphi 0, %s143
      %s161 = sphi 0, %s161
      %s163 = sphi 0, %s161
      %s164 = sphi 0, %s163
      %s178 = sphi 0, %s164
      %s182 = sphi 0, %s182
      %s184 = sphi 0, %s182
      %s185 = sphi 0, %s184
      %s199 = sphi 0, %s185
      %s203 = sphi 0, %s203
      %s205 = sphi 0, %s203
      %s206 = sphi 0, %s205
      %s220 = sphi 0, %s206
      %s224 = sphi 0, %s224
      %s226 = sphi 0, %s224
      %s227 = sphi 0, %s226
      %s241 = sphi 0, %s227
      %s245 = sphi 0, %s245
      %s247 = sphi 0, %s245
      %s248 = sphi 0, %s247
      %s262 = sphi 0, %s248
      %s266 = sphi 0, %s266
      %s268 = sphi 0, %s266
      %s269 = sphi 0, %s268
      %s283 = sphi 0, %s269
      %s287 = sphi 0, %s287
      %s289 = sphi 0, %s287
      %s290 = sphi 0, %s289
      %s304 = sphi 0, %s290
      %s308 = sphi 0, %s308
      %s310 = sphi 0, %s308
      %s311 = sphi 0, %s310
      %s325 = sphi 0, %s311
      %s329 = sphi 0, %s329
      %s331 = sphi 0, %s329
      %s332 = sphi 0, %s331
      %s346 = sphi 0, %s332
      %s350 = sphi 0, %s350
      %s352 = sphi 0, %s350
      %s353 = sphi 0, %s352
      %s367 = sphi 0, %s353
      %s371 = sphi 0, %s371
      %s373 = sphi 0, %s371
      %s374 = sphi 0, %s373
      %s388 = sphi 0, %s374
      %s392 = sphi 0, %s392
      %s394 = sphi 0, %s392
      %s395 = sphi 0, %s394
      %s409 = sphi 0, %s395
      %s413 = sphi 0, %s413
      %s415 = sphi 0, %s413
      %s416 = sphi 0, %s415
      %s430 = sphi 0, %s416
      %s434 = sphi 0, %s434
      %s436 = sphi 0, %s434
      %s437 = sphi 0, %s436
      %s451 = sphi 0, %s437
      %s455 = sphi 0, %s455
      %s457 = sphi 0, %s455
      %s458 = sphi 0, %s457
      %s472 = sphi 0, %s458
      %s476 = sphi 0, %s476
      %s478 = sphi 0, %s476
      %s479 = sphi 0, %s478
      %s493 = sphi 0, %s479
      %s497 = sphi 0, %s497
      %s499 = sphi 0, %s497
      %s500 = sphi 0, %s499
      %s514 = sphi 0, %s500
      %s518 = sphi 0, %s518
      %s520 = sphi 0, %s518
      %s521 = sphi 0, %s520
      %s535 = sphi 0, %s521
      %s539 = sphi 0, %s539
      %s541 = sphi 0, %s539
      %s542 = sphi 0, %s541
      %s556 = sphi 0, %s542
      %s560 = sphi 0, %s560
      %s562 = sphi 0, %s560
      %s563 = sphi 0, %s562
      %s577 = sphi 0, %s563
      %s581 = sphi 0, %s581
      %s583 = sphi 0, %s581
      %s584 = sphi 0, %s583
      %s598 = sphi 0, %s584
      %s602 = sphi 0, %s602
      %s604 = sphi 0, %s602
      %s605 = sphi 0, %s604
      %s619 = sphi 0, %s605
      %s623 = sphi 0, %s623
      %s625 = sphi 0, %s623
      %s626 = sphi 0, %s625
      %s640 = sphi 0, %s626
      %s644 = sphi 0, %s644
      %s646 = sphi 0, %s644
      %s647 = sphi 0, %s646
      %s661 = sphi 0, %s647
      %s665 = sphi 0, %s665
      %s667 = sphi 0, %s665
      %s668 = sphi 0, %s667
      %s682 = sphi 0, %s668
      %s686 = sphi 0, %s686
      %s688 = sphi 0, %s686
      %s689 = sphi 0, %s688
      %s703 = sphi 0, %s689
      %s707 = sphi 0, %s707
      %s709 = sphi 0, %s707
      %s710 = sphi 0, %s709
      %s724 = sphi 0, %s710
      %s728 = sphi 0, %s728
      %s730 = sphi 0, %s728
      %s731 = sphi 0, %s730
      %s745 = sphi 0, %s731
      %s749 = sphi 0, %s749
      %s751 = sphi 0, %s749
      %s752 = sphi 0, %s751
      %s766 = sphi 0, %s752
      %s770 = sphi 0, %s770
      %s772 = sphi 0, %s770
      %s773 = sphi 0, %s772
      %s787 = sphi 0, %s773
      %s791 = sphi 0, %s791
      %s793 = sphi 0, %s791
      %s794 = sphi 0, %s793
      %s808 = sphi 0, %s794
      %s812 = sphi 0, %s812
      %s814 = sphi 0, %s812
      %s815 = sphi 0, %s814
      %s829 = sphi 0, %s815
      %s835 = sphi 0, %s837
      %s838 = sphi 0, %s835
      %s839 = sphi 0, %s838
      %s855 = sphi 0, %s839
    $region4: #{epignn_forward.1} parent=1 // loop_header_branch
      %83 = sbr.rel (%p81) target = $region8
    $region5: #{epignn_forward.1} parent=1 // loop_body
      %s85 = ssub.s32 %s80, 1
      %s86 = ssub.s32 %s80, 2
      %s87 = sadd.s32 %s80, 1
      %s88 = ssub.s32 %s80, %s87
      %p89 = scmp.eq.s32.totalorder %s88, 0
      %s91 = sadd.s32 %s90, 1
      %s92 = scalar_select %p89, %s90, %s91
      %p95 = pneg %p89
      %p96 = scmp.eq.s32.totalorder %s80, 1
      %p97 = por %p95, %p96
      %p98 = scmp.ne.s32.totalorder %s90, %s93
      %p99 = scmp.eq.s32.totalorder %s80, 0
      %p100 = por %p98, %p99
      %p101 = scmp.ne.s32.totalorder %s90, %s93
      %p102 = scmp.eq.s32.totalorder %s85, 1
      %p103 = por %p101, %p102
      %p104 = scmp.ne.s32.totalorder %s93, %s94
      %p105 = scmp.eq.s32.totalorder %s85, 0
      %p106 = por %p104, %p105
      %p107 = scmp.ne.s32.totalorder %s93, %s94
      %p108 = scmp.eq.s32.totalorder %s86, 1
      %p109 = por %p107, %p108
      %p111 = scmp.ne.s32.totalorder %s94, %s110
      %p112 = scmp.eq.s32.totalorder %s86, 0
      %p113 = por %p111, %p112
      %s114 = ssub.s32 %s80, %s87
      %p115 = scmp.eq.s32.totalorder %s114, 0
      %s117 = sadd.s32 %s116, 1
      %s118 = scalar_select %p115, %s116, %s117
      %p121 = pneg %p115
      %p122 = scmp.eq.s32.totalorder %s80, 1
      %p123 = por %p121, %p122
      %p124 = scmp.ne.s32.totalorder %s116, %s119
      %p125 = scmp.eq.s32.totalorder %s80, 0
      %p126 = por %p124, %p125
      %p127 = scmp.ne.s32.totalorder %s116, %s119
      %p128 = scmp.eq.s32.totalorder %s85, 1
      %p129 = por %p127, %p128
      %p130 = scmp.ne.s32.totalorder %s119, %s120
      %p131 = scmp.eq.s32.totalorder %s85, 0
      %p132 = por %p130, %p131
      %p133 = scmp.ne.s32.totalorder %s119, %s120
      %p134 = scmp.eq.s32.totalorder %s86, 1
      %p135 = por %p133, %p134
      %p137 = scmp.ne.s32.totalorder %s120, %s136
      %p138 = scmp.eq.s32.totalorder %s86, 0
      %p139 = por %p137, %p138
      %s141 = sadd.s32 %s140, 1
      %p144 = scmp.eq.s32.totalorder %s80, 1
      %p145 = scmp.ne.s32.totalorder %s140, %s142
      %p146 = scmp.eq.s32.totalorder %s80, 0
      %p147 = por %p145, %p146
      %p148 = scmp.ne.s32.totalorder %s140, %s142
      %p149 = scmp.eq.s32.totalorder %s85, 1
      %p150 = por %p148, %p149
      %p151 = scmp.ne.s32.totalorder %s142, %s143
      %p152 = scmp.eq.s32.totalorder %s85, 0
      %p153 = por %p151, %p152
      %p154 = scmp.ne.s32.totalorder %s142, %s143
      %p155 = scmp.eq.s32.totalorder %s86, 1
      %p156 = por %p154, %p155
      %p158 = scmp.ne.s32.totalorder %s143, %s157
      %p159 = scmp.eq.s32.totalorder %s86, 0
      %p160 = por %p158, %p159
      %s162 = sadd.s32 %s161, 1
      %p165 = scmp.eq.s32.totalorder %s80, 1
      %p166 = scmp.ne.s32.totalorder %s161, %s163
      %p167 = scmp.eq.s32.totalorder %s80, 0
      %p168 = por %p166, %p167
      %p169 = scmp.ne.s32.totalorder %s161, %s163
      %p170 = scmp.eq.s32.totalorder %s85, 1
      %p171 = por %p169, %p170
      %p172 = scmp.ne.s32.totalorder %s163, %s164
      %p173 = scmp.eq.s32.totalorder %s85, 0
      %p174 = por %p172, %p173
      %p175 = scmp.ne.s32.totalorder %s163, %s164
      %p176 = scmp.eq.s32.totalorder %s86, 1
      %p177 = por %p175, %p176
      %p179 = scmp.ne.s32.totalorder %s164, %s178
      %p180 = scmp.eq.s32.totalorder %s86, 0
      %p181 = por %p179, %p180
      %s183 = sadd.s32 %s182, 1
      %p186 = scmp.eq.s32.totalorder %s80, 1
      %p187 = scmp.ne.s32.totalorder %s182, %s184
      %p188 = scmp.eq.s32.totalorder %s80, 0
      %p189 = por %p187, %p188
      %p190 = scmp.ne.s32.totalorder %s182, %s184
      %p191 = scmp.eq.s32.totalorder %s85, 1
      %p192 = por %p190, %p191
      %p193 = scmp.ne.s32.totalorder %s184, %s185
      %p194 = scmp.eq.s32.totalorder %s85, 0
      %p195 = por %p193, %p194
      %p196 = scmp.ne.s32.totalorder %s184, %s185
      %p197 = scmp.eq.s32.totalorder %s86, 1
      %p198 = por %p196, %p197
      %p200 = scmp.ne.s32.totalorder %s185, %s199
      %p201 = scmp.eq.s32.totalorder %s86, 0
      %p202 = por %p200, %p201
      %s204 = sadd.s32 %s203, 1
      %p207 = scmp.eq.s32.totalorder %s80, 1
      %p208 = scmp.ne.s32.totalorder %s203, %s205
      %p209 = scmp.eq.s32.totalorder %s80, 0
      %p210 = por %p208, %p209
      %p211 = scmp.ne.s32.totalorder %s203, %s205
      %p212 = scmp.eq.s32.totalorder %s85, 1
      %p213 = por %p211, %p212
      %p214 = scmp.ne.s32.totalorder %s205, %s206
      %p215 = scmp.eq.s32.totalorder %s85, 0
      %p216 = por %p214, %p215
      %p217 = scmp.ne.s32.totalorder %s205, %s206
      %p218 = scmp.eq.s32.totalorder %s86, 1
      %p219 = por %p217, %p218
      %p221 = scmp.ne.s32.totalorder %s206, %s220
      %p222 = scmp.eq.s32.totalorder %s86, 0
      %p223 = por %p221, %p222
      %s225 = sadd.s32 %s224, 1
      %p228 = scmp.eq.s32.totalorder %s80, 1
      %p229 = scmp.ne.s32.totalorder %s224, %s226
      %p230 = scmp.eq.s32.totalorder %s80, 0
      %p231 = por %p229, %p230
      %p232 = scmp.ne.s32.totalorder %s224, %s226
      %p233 = scmp.eq.s32.totalorder %s85, 1
      %p234 = por %p232, %p233
      %p235 = scmp.ne.s32.totalorder %s226, %s227
      %p236 = scmp.eq.s32.totalorder %s85, 0
      %p237 = por %p235, %p236
      %p238 = scmp.ne.s32.totalorder %s226, %s227
      %p239 = scmp.eq.s32.totalorder %s86, 1
      %p240 = por %p238, %p239
      %p242 = scmp.ne.s32.totalorder %s227, %s241
      %p243 = scmp.eq.s32.totalorder %s86, 0
      %p244 = por %p242, %p243
      %s246 = sadd.s32 %s245, 1
      %p249 = scmp.eq.s32.totalorder %s80, 1
      %p250 = scmp.ne.s32.totalorder %s245, %s247
      %p251 = scmp.eq.s32.totalorder %s80, 0
      %p252 = por %p250, %p251
      %p253 = scmp.ne.s32.totalorder %s245, %s247
      %p254 = scmp.eq.s32.totalorder %s85, 1
      %p255 = por %p253, %p254
      %p256 = scmp.ne.s32.totalorder %s247, %s248
      %p257 = scmp.eq.s32.totalorder %s85, 0
      %p258 = por %p256, %p257
      %p259 = scmp.ne.s32.totalorder %s247, %s248
      %p260 = scmp.eq.s32.totalorder %s86, 1
      %p261 = por %p259, %p260
      %p263 = scmp.ne.s32.totalorder %s248, %s262
      %p264 = scmp.eq.s32.totalorder %s86, 0
      %p265 = por %p263, %p264
      %s267 = sadd.s32 %s266, 1
      %p270 = scmp.eq.s32.totalorder %s80, 1
      %p271 = scmp.ne.s32.totalorder %s266, %s268
      %p272 = scmp.eq.s32.totalorder %s80, 0
      %p273 = por %p271, %p272
      %p274 = scmp.ne.s32.totalorder %s266, %s268
      %p275 = scmp.eq.s32.totalorder %s85, 1
      %p276 = por %p274, %p275
      %p277 = scmp.ne.s32.totalorder %s268, %s269
      %p278 = scmp.eq.s32.totalorder %s85, 0
      %p279 = por %p277, %p278
      %p280 = scmp.ne.s32.totalorder %s268, %s269
      %p281 = scmp.eq.s32.totalorder %s86, 1
      %p282 = por %p280, %p281
      %p284 = scmp.ne.s32.totalorder %s269, %s283
      %p285 = scmp.eq.s32.totalorder %s86, 0
      %p286 = por %p284, %p285
      %s288 = sadd.s32 %s287, 1
      %p291 = scmp.eq.s32.totalorder %s80, 1
      %p292 = scmp.ne.s32.totalorder %s287, %s289
      %p293 = scmp.eq.s32.totalorder %s80, 0
      %p294 = por %p292, %p293
      %p295 = scmp.ne.s32.totalorder %s287, %s289
      %p296 = scmp.eq.s32.totalorder %s85, 1
      %p297 = por %p295, %p296
      %p298 = scmp.ne.s32.totalorder %s289, %s290
      %p299 = scmp.eq.s32.totalorder %s85, 0
      %p300 = por %p298, %p299
      %p301 = scmp.ne.s32.totalorder %s289, %s290
      %p302 = scmp.eq.s32.totalorder %s86, 1
      %p303 = por %p301, %p302
      %p305 = scmp.ne.s32.totalorder %s290, %s304
      %p306 = scmp.eq.s32.totalorder %s86, 0
      %p307 = por %p305, %p306
      %s309 = sadd.s32 %s308, 1
      %p312 = scmp.eq.s32.totalorder %s80, 1
      %p313 = scmp.ne.s32.totalorder %s308, %s310
      %p314 = scmp.eq.s32.totalorder %s80, 0
      %p315 = por %p313, %p314
      %p316 = scmp.ne.s32.totalorder %s308, %s310
      %p317 = scmp.eq.s32.totalorder %s85, 1
      %p318 = por %p316, %p317
      %p319 = scmp.ne.s32.totalorder %s310, %s311
      %p320 = scmp.eq.s32.totalorder %s85, 0
      %p321 = por %p319, %p320
      %p322 = scmp.ne.s32.totalorder %s310, %s311
      %p323 = scmp.eq.s32.totalorder %s86, 1
      %p324 = por %p322, %p323
      %p326 = scmp.ne.s32.totalorder %s311, %s325
      %p327 = scmp.eq.s32.totalorder %s86, 0
      %p328 = por %p326, %p327
      %s330 = sadd.s32 %s329, 1
      %p333 = scmp.eq.s32.totalorder %s80, 1
      %p334 = scmp.ne.s32.totalorder %s329, %s331
      %p335 = scmp.eq.s32.totalorder %s80, 0
      %p336 = por %p334, %p335
      %p337 = scmp.ne.s32.totalorder %s329, %s331
      %p338 = scmp.eq.s32.totalorder %s85, 1
      %p339 = por %p337, %p338
      %p340 = scmp.ne.s32.totalorder %s331, %s332
      %p341 = scmp.eq.s32.totalorder %s85, 0
      %p342 = por %p340, %p341
      %p343 = scmp.ne.s32.totalorder %s331, %s332
      %p344 = scmp.eq.s32.totalorder %s86, 1
      %p345 = por %p343, %p344
      %p347 = scmp.ne.s32.totalorder %s332, %s346
      %p348 = scmp.eq.s32.totalorder %s86, 0
      %p349 = por %p347, %p348
      %s351 = sadd.s32 %s350, 1
      %p354 = scmp.eq.s32.totalorder %s80, 1
      %p355 = scmp.ne.s32.totalorder %s350, %s352
      %p356 = scmp.eq.s32.totalorder %s80, 0
      %p357 = por %p355, %p356
      %p358 = scmp.ne.s32.totalorder %s350, %s352
      %p359 = scmp.eq.s32.totalorder %s85, 1
      %p360 = por %p358, %p359
      %p361 = scmp.ne.s32.totalorder %s352, %s353
      %p362 = scmp.eq.s32.totalorder %s85, 0
      %p363 = por %p361, %p362
      %p364 = scmp.ne.s32.totalorder %s352, %s353
      %p365 = scmp.eq.s32.totalorder %s86, 1
      %p366 = por %p364, %p365
      %p368 = scmp.ne.s32.totalorder %s353, %s367
      %p369 = scmp.eq.s32.totalorder %s86, 0
      %p370 = por %p368, %p369
      %s372 = sadd.s32 %s371, 1
      %p375 = scmp.eq.s32.totalorder %s80, 1
      %p376 = scmp.ne.s32.totalorder %s371, %s373
      %p377 = scmp.eq.s32.totalorder %s80, 0
      %p378 = por %p376, %p377
      %p379 = scmp.ne.s32.totalorder %s371, %s373
      %p380 = scmp.eq.s32.totalorder %s85, 1
      %p381 = por %p379, %p380
      %p382 = scmp.ne.s32.totalorder %s373, %s374
      %p383 = scmp.eq.s32.totalorder %s85, 0
      %p384 = por %p382, %p383
      %p385 = scmp.ne.s32.totalorder %s373, %s374
      %p386 = scmp.eq.s32.totalorder %s86, 1
      %p387 = por %p385, %p386
      %p389 = scmp.ne.s32.totalorder %s374, %s388
      %p390 = scmp.eq.s32.totalorder %s86, 0
      %p391 = por %p389, %p390
      %s393 = sadd.s32 %s392, 1
      %p396 = scmp.eq.s32.totalorder %s80, 1
      %p397 = scmp.ne.s32.totalorder %s392, %s394
      %p398 = scmp.eq.s32.totalorder %s80, 0
      %p399 = por %p397, %p398
      %p400 = scmp.ne.s32.totalorder %s392, %s394
      %p401 = scmp.eq.s32.totalorder %s85, 1
      %p402 = por %p400, %p401
      %p403 = scmp.ne.s32.totalorder %s394, %s395
      %p404 = scmp.eq.s32.totalorder %s85, 0
      %p405 = por %p403, %p404
      %p406 = scmp.ne.s32.totalorder %s394, %s395
      %p407 = scmp.eq.s32.totalorder %s86, 1
      %p408 = por %p406, %p407
      %p410 = scmp.ne.s32.totalorder %s395, %s409
      %p411 = scmp.eq.s32.totalorder %s86, 0
      %p412 = por %p410, %p411
      %s414 = sadd.s32 %s413, 1
      %p417 = scmp.eq.s32.totalorder %s80, 1
      %p418 = scmp.ne.s32.totalorder %s413, %s415
      %p419 = scmp.eq.s32.totalorder %s80, 0
      %p420 = por %p418, %p419
      %p421 = scmp.ne.s32.totalorder %s413, %s415
      %p422 = scmp.eq.s32.totalorder %s85, 1
      %p423 = por %p421, %p422
      %p424 = scmp.ne.s32.totalorder %s415, %s416
      %p425 = scmp.eq.s32.totalorder %s85, 0
      %p426 = por %p424, %p425
      %p427 = scmp.ne.s32.totalorder %s415, %s416
      %p428 = scmp.eq.s32.totalorder %s86, 1
      %p429 = por %p427, %p428
      %p431 = scmp.ne.s32.totalorder %s416, %s430
      %p432 = scmp.eq.s32.totalorder %s86, 0
      %p433 = por %p431, %p432
      %s435 = sadd.s32 %s434, 1
      %p438 = scmp.eq.s32.totalorder %s80, 1
      %p439 = scmp.ne.s32.totalorder %s434, %s436
      %p440 = scmp.eq.s32.totalorder %s80, 0
      %p441 = por %p439, %p440
      %p442 = scmp.ne.s32.totalorder %s434, %s436
      %p443 = scmp.eq.s32.totalorder %s85, 1
      %p444 = por %p442, %p443
      %p445 = scmp.ne.s32.totalorder %s436, %s437
      %p446 = scmp.eq.s32.totalorder %s85, 0
      %p447 = por %p445, %p446
      %p448 = scmp.ne.s32.totalorder %s436, %s437
      %p449 = scmp.eq.s32.totalorder %s86, 1
      %p450 = por %p448, %p449
      %p452 = scmp.ne.s32.totalorder %s437, %s451
      %p453 = scmp.eq.s32.totalorder %s86, 0
      %p454 = por %p452, %p453
      %s456 = sadd.s32 %s455, 1
      %p459 = scmp.eq.s32.totalorder %s80, 1
      %p460 = scmp.ne.s32.totalorder %s455, %s457
      %p461 = scmp.eq.s32.totalorder %s80, 0
      %p462 = por %p460, %p461
      %p463 = scmp.ne.s32.totalorder %s455, %s457
      %p464 = scmp.eq.s32.totalorder %s85, 1
      %p465 = por %p463, %p464
      %p466 = scmp.ne.s32.totalorder %s457, %s458
      %p467 = scmp.eq.s32.totalorder %s85, 0
      %p468 = por %p466, %p467
      %p469 = scmp.ne.s32.totalorder %s457, %s458
      %p470 = scmp.eq.s32.totalorder %s86, 1
      %p471 = por %p469, %p470
      %p473 = scmp.ne.s32.totalorder %s458, %s472
      %p474 = scmp.eq.s32.totalorder %s86, 0
      %p475 = por %p473, %p474
      %s477 = sadd.s32 %s476, 1
      %p480 = scmp.eq.s32.totalorder %s80, 1
      %p481 = scmp.ne.s32.totalorder %s476, %s478
      %p482 = scmp.eq.s32.totalorder %s80, 0
      %p483 = por %p481, %p482
      %p484 = scmp.ne.s32.totalorder %s476, %s478
      %p485 = scmp.eq.s32.totalorder %s85, 1
      %p486 = por %p484, %p485
      %p487 = scmp.ne.s32.totalorder %s478, %s479
      %p488 = scmp.eq.s32.totalorder %s85, 0
      %p489 = por %p487, %p488
      %p490 = scmp.ne.s32.totalorder %s478, %s479
      %p491 = scmp.eq.s32.totalorder %s86, 1
      %p492 = por %p490, %p491
      %p494 = scmp.ne.s32.totalorder %s479, %s493
      %p495 = scmp.eq.s32.totalorder %s86, 0
      %p496 = por %p494, %p495
      %s498 = sadd.s32 %s497, 1
      %p501 = scmp.eq.s32.totalorder %s80, 1
      %p502 = scmp.ne.s32.totalorder %s497, %s499
      %p503 = scmp.eq.s32.totalorder %s80, 0
      %p504 = por %p502, %p503
      %p505 = scmp.ne.s32.totalorder %s497, %s499
      %p506 = scmp.eq.s32.totalorder %s85, 1
      %p507 = por %p505, %p506
      %p508 = scmp.ne.s32.totalorder %s499, %s500
      %p509 = scmp.eq.s32.totalorder %s85, 0
      %p510 = por %p508, %p509
      %p511 = scmp.ne.s32.totalorder %s499, %s500
      %p512 = scmp.eq.s32.totalorder %s86, 1
      %p513 = por %p511, %p512
      %p515 = scmp.ne.s32.totalorder %s500, %s514
      %p516 = scmp.eq.s32.totalorder %s86, 0
      %p517 = por %p515, %p516
      %s519 = sadd.s32 %s518, 1
      %p522 = scmp.eq.s32.totalorder %s80, 1
      %p523 = scmp.ne.s32.totalorder %s518, %s520
      %p524 = scmp.eq.s32.totalorder %s80, 0
      %p525 = por %p523, %p524
      %p526 = scmp.ne.s32.totalorder %s518, %s520
      %p527 = scmp.eq.s32.totalorder %s85, 1
      %p528 = por %p526, %p527
      %p529 = scmp.ne.s32.totalorder %s520, %s521
      %p530 = scmp.eq.s32.totalorder %s85, 0
      %p531 = por %p529, %p530
      %p532 = scmp.ne.s32.totalorder %s520, %s521
      %p533 = scmp.eq.s32.totalorder %s86, 1
      %p534 = por %p532, %p533
      %p536 = scmp.ne.s32.totalorder %s521, %s535
      %p537 = scmp.eq.s32.totalorder %s86, 0
      %p538 = por %p536, %p537
      %s540 = sadd.s32 %s539, 1
      %p543 = scmp.eq.s32.totalorder %s80, 1
      %p544 = scmp.ne.s32.totalorder %s539, %s541
      %p545 = scmp.eq.s32.totalorder %s80, 0
      %p546 = por %p544, %p545
      %p547 = scmp.ne.s32.totalorder %s539, %s541
      %p548 = scmp.eq.s32.totalorder %s85, 1
      %p549 = por %p547, %p548
      %p550 = scmp.ne.s32.totalorder %s541, %s542
      %p551 = scmp.eq.s32.totalorder %s85, 0
      %p552 = por %p550, %p551
      %p553 = scmp.ne.s32.totalorder %s541, %s542
      %p554 = scmp.eq.s32.totalorder %s86, 1
      %p555 = por %p553, %p554
      %p557 = scmp.ne.s32.totalorder %s542, %s556
      %p558 = scmp.eq.s32.totalorder %s86, 0
      %p559 = por %p557, %p558
      %s561 = sadd.s32 %s560, 1
      %p564 = scmp.eq.s32.totalorder %s80, 1
      %p565 = scmp.ne.s32.totalorder %s560, %s562
      %p566 = scmp.eq.s32.totalorder %s80, 0
      %p567 = por %p565, %p566
      %p568 = scmp.ne.s32.totalorder %s560, %s562
      %p569 = scmp.eq.s32.totalorder %s85, 1
      %p570 = por %p568, %p569
      %p571 = scmp.ne.s32.totalorder %s562, %s563
      %p572 = scmp.eq.s32.totalorder %s85, 0
      %p573 = por %p571, %p572
      %p574 = scmp.ne.s32.totalorder %s562, %s563
      %p575 = scmp.eq.s32.totalorder %s86, 1
      %p576 = por %p574, %p575
      %p578 = scmp.ne.s32.totalorder %s563, %s577
      %p579 = scmp.eq.s32.totalorder %s86, 0
      %p580 = por %p578, %p579
      %s582 = sadd.s32 %s581, 1
      %p585 = scmp.eq.s32.totalorder %s80, 1
      %p586 = scmp.ne.s32.totalorder %s581, %s583
      %p587 = scmp.eq.s32.totalorder %s80, 0
      %p588 = por %p586, %p587
      %p589 = scmp.ne.s32.totalorder %s581, %s583
      %p590 = scmp.eq.s32.totalorder %s85, 1
      %p591 = por %p589, %p590
      %p592 = scmp.ne.s32.totalorder %s583, %s584
      %p593 = scmp.eq.s32.totalorder %s85, 0
      %p594 = por %p592, %p593
      %p595 = scmp.ne.s32.totalorder %s583, %s584
      %p596 = scmp.eq.s32.totalorder %s86, 1
      %p597 = por %p595, %p596
      %p599 = scmp.ne.s32.totalorder %s584, %s598
      %p600 = scmp.eq.s32.totalorder %s86, 0
      %p601 = por %p599, %p600
      %s603 = sadd.s32 %s602, 1
      %p606 = scmp.eq.s32.totalorder %s80, 1
      %p607 = scmp.ne.s32.totalorder %s602, %s604
      %p608 = scmp.eq.s32.totalorder %s80, 0
      %p609 = por %p607, %p608
      %p610 = scmp.ne.s32.totalorder %s602, %s604
      %p611 = scmp.eq.s32.totalorder %s85, 1
      %p612 = por %p610, %p611
      %p613 = scmp.ne.s32.totalorder %s604, %s605
      %p614 = scmp.eq.s32.totalorder %s85, 0
      %p615 = por %p613, %p614
      %p616 = scmp.ne.s32.totalorder %s604, %s605
      %p617 = scmp.eq.s32.totalorder %s86, 1
      %p618 = por %p616, %p617
      %p620 = scmp.ne.s32.totalorder %s605, %s619
      %p621 = scmp.eq.s32.totalorder %s86, 0
      %p622 = por %p620, %p621
      %s624 = sadd.s32 %s623, 1
      %p627 = scmp.eq.s32.totalorder %s80, 1
      %p628 = scmp.ne.s32.totalorder %s623, %s625
      %p629 = scmp.eq.s32.totalorder %s80, 0
      %p630 = por %p628, %p629
      %p631 = scmp.ne.s32.totalorder %s623, %s625
      %p632 = scmp.eq.s32.totalorder %s85, 1
      %p633 = por %p631, %p632
      %p634 = scmp.ne.s32.totalorder %s625, %s626
      %p635 = scmp.eq.s32.totalorder %s85, 0
      %p636 = por %p634, %p635
      %p637 = scmp.ne.s32.totalorder %s625, %s626
      %p638 = scmp.eq.s32.totalorder %s86, 1
      %p639 = por %p637, %p638
      %p641 = scmp.ne.s32.totalorder %s626, %s640
      %p642 = scmp.eq.s32.totalorder %s86, 0
      %p643 = por %p641, %p642
      %s645 = sadd.s32 %s644, 1
      %p648 = scmp.eq.s32.totalorder %s80, 1
      %p649 = scmp.ne.s32.totalorder %s644, %s646
      %p650 = scmp.eq.s32.totalorder %s80, 0
      %p651 = por %p649, %p650
      %p652 = scmp.ne.s32.totalorder %s644, %s646
      %p653 = scmp.eq.s32.totalorder %s85, 1
      %p654 = por %p652, %p653
      %p655 = scmp.ne.s32.totalorder %s646, %s647
      %p656 = scmp.eq.s32.totalorder %s85, 0
      %p657 = por %p655, %p656
      %p658 = scmp.ne.s32.totalorder %s646, %s647
      %p659 = scmp.eq.s32.totalorder %s86, 1
      %p660 = por %p658, %p659
      %p662 = scmp.ne.s32.totalorder %s647, %s661
      %p663 = scmp.eq.s32.totalorder %s86, 0
      %p664 = por %p662, %p663
      %s666 = sadd.s32 %s665, 1
      %p669 = scmp.eq.s32.totalorder %s80, 1
      %p670 = scmp.ne.s32.totalorder %s665, %s667
      %p671 = scmp.eq.s32.totalorder %s80, 0
      %p672 = por %p670, %p671
      %p673 = scmp.ne.s32.totalorder %s665, %s667
      %p674 = scmp.eq.s32.totalorder %s85, 1
      %p675 = por %p673, %p674
      %p676 = scmp.ne.s32.totalorder %s667, %s668
      %p677 = scmp.eq.s32.totalorder %s85, 0
      %p678 = por %p676, %p677
      %p679 = scmp.ne.s32.totalorder %s667, %s668
      %p680 = scmp.eq.s32.totalorder %s86, 1
      %p681 = por %p679, %p680
      %p683 = scmp.ne.s32.totalorder %s668, %s682
      %p684 = scmp.eq.s32.totalorder %s86, 0
      %p685 = por %p683, %p684
      %s687 = sadd.s32 %s686, 1
      %p690 = scmp.eq.s32.totalorder %s80, 1
      %p691 = scmp.ne.s32.totalorder %s686, %s688
      %p692 = scmp.eq.s32.totalorder %s80, 0
      %p693 = por %p691, %p692
      %p694 = scmp.ne.s32.totalorder %s686, %s688
      %p695 = scmp.eq.s32.totalorder %s85, 1
      %p696 = por %p694, %p695
      %p697 = scmp.ne.s32.totalorder %s688, %s689
      %p698 = scmp.eq.s32.totalorder %s85, 0
      %p699 = por %p697, %p698
      %p700 = scmp.ne.s32.totalorder %s688, %s689
      %p701 = scmp.eq.s32.totalorder %s86, 1
      %p702 = por %p700, %p701
      %p704 = scmp.ne.s32.totalorder %s689, %s703
      %p705 = scmp.eq.s32.totalorder %s86, 0
      %p706 = por %p704, %p705
      %s708 = sadd.s32 %s707, 1
      %p711 = scmp.eq.s32.totalorder %s80, 1
      %p712 = scmp.ne.s32.totalorder %s707, %s709
      %p713 = scmp.eq.s32.totalorder %s80, 0
      %p714 = por %p712, %p713
      %p715 = scmp.ne.s32.totalorder %s707, %s709
      %p716 = scmp.eq.s32.totalorder %s85, 1
      %p717 = por %p715, %p716
      %p718 = scmp.ne.s32.totalorder %s709, %s710
      %p719 = scmp.eq.s32.totalorder %s85, 0
      %p720 = por %p718, %p719
      %p721 = scmp.ne.s32.totalorder %s709, %s710
      %p722 = scmp.eq.s32.totalorder %s86, 1
      %p723 = por %p721, %p722
      %p725 = scmp.ne.s32.totalorder %s710, %s724
      %p726 = scmp.eq.s32.totalorder %s86, 0
      %p727 = por %p725, %p726
      %s729 = sadd.s32 %s728, 1
      %p732 = scmp.eq.s32.totalorder %s80, 1
      %p733 = scmp.ne.s32.totalorder %s728, %s730
      %p734 = scmp.eq.s32.totalorder %s80, 0
      %p735 = por %p733, %p734
      %p736 = scmp.ne.s32.totalorder %s728, %s730
      %p737 = scmp.eq.s32.totalorder %s85, 1
      %p738 = por %p736, %p737
      %p739 = scmp.ne.s32.totalorder %s730, %s731
      %p740 = scmp.eq.s32.totalorder %s85, 0
      %p741 = por %p739, %p740
      %p742 = scmp.ne.s32.totalorder %s730, %s731
      %p743 = scmp.eq.s32.totalorder %s86, 1
      %p744 = por %p742, %p743
      %p746 = scmp.ne.s32.totalorder %s731, %s745
      %p747 = scmp.eq.s32.totalorder %s86, 0
      %p748 = por %p746, %p747
      %s750 = sadd.s32 %s749, 1
      %p753 = scmp.eq.s32.totalorder %s80, 1
      %p754 = scmp.ne.s32.totalorder %s749, %s751
      %p755 = scmp.eq.s32.totalorder %s80, 0
      %p756 = por %p754, %p755
      %p757 = scmp.ne.s32.totalorder %s749, %s751
      %p758 = scmp.eq.s32.totalorder %s85, 1
      %p759 = por %p757, %p758
      %p760 = scmp.ne.s32.totalorder %s751, %s752
      %p761 = scmp.eq.s32.totalorder %s85, 0
      %p762 = por %p760, %p761
      %p763 = scmp.ne.s32.totalorder %s751, %s752
      %p764 = scmp.eq.s32.totalorder %s86, 1
      %p765 = por %p763, %p764
      %p767 = scmp.ne.s32.totalorder %s752, %s766
      %p768 = scmp.eq.s32.totalorder %s86, 0
      %p769 = por %p767, %p768
      %s771 = sadd.s32 %s770, 1
      %p774 = scmp.eq.s32.totalorder %s80, 1
      %p775 = scmp.ne.s32.totalorder %s770, %s772
      %p776 = scmp.eq.s32.totalorder %s80, 0
      %p777 = por %p775, %p776
      %p778 = scmp.ne.s32.totalorder %s770, %s772
      %p779 = scmp.eq.s32.totalorder %s85, 1
      %p780 = por %p778, %p779
      %p781 = scmp.ne.s32.totalorder %s772, %s773
      %p782 = scmp.eq.s32.totalorder %s85, 0
      %p783 = por %p781, %p782
      %p784 = scmp.ne.s32.totalorder %s772, %s773
      %p785 = scmp.eq.s32.totalorder %s86, 1
      %p786 = por %p784, %p785
      %p788 = scmp.ne.s32.totalorder %s773, %s787
      %p789 = scmp.eq.s32.totalorder %s86, 0
      %p790 = por %p788, %p789
      %s792 = sadd.s32 %s791, 1
      %p795 = scmp.eq.s32.totalorder %s80, 1
      %p796 = scmp.ne.s32.totalorder %s791, %s793
      %p797 = scmp.eq.s32.totalorder %s80, 0
      %p798 = por %p796, %p797
      %p799 = scmp.ne.s32.totalorder %s791, %s793
      %p800 = scmp.eq.s32.totalorder %s85, 1
      %p801 = por %p799, %p800
      %p802 = scmp.ne.s32.totalorder %s793, %s794
      %p803 = scmp.eq.s32.totalorder %s85, 0
      %p804 = por %p802, %p803
      %p805 = scmp.ne.s32.totalorder %s793, %s794
      %p806 = scmp.eq.s32.totalorder %s86, 1
      %p807 = por %p805, %p806
      %p809 = scmp.ne.s32.totalorder %s794, %s808
      %p810 = scmp.eq.s32.totalorder %s86, 0
      %p811 = por %p809, %p810
      %s813 = sadd.s32 %s812, 1
      %p816 = scmp.eq.s32.totalorder %s80, 1
      %p817 = scmp.ne.s32.totalorder %s812, %s814
      %p818 = scmp.eq.s32.totalorder %s80, 0
      %p819 = por %p817, %p818
      %p820 = scmp.ne.s32.totalorder %s812, %s814
      %p821 = scmp.eq.s32.totalorder %s85, 1
      %p822 = por %p820, %p821
      %p823 = scmp.ne.s32.totalorder %s814, %s815
      %p824 = scmp.eq.s32.totalorder %s85, 0
      %p825 = por %p823, %p824
      %p826 = scmp.ne.s32.totalorder %s814, %s815
      %p827 = scmp.eq.s32.totalorder %s86, 1
      %p828 = por %p826, %p827
      %p830 = scmp.ne.s32.totalorder %s815, %s829
      %p831 = scmp.eq.s32.totalorder %s86, 0
      %p832 = por %p830, %p831
      %s833 = ssub.s32 %s80, %s87
      %p834 = scmp.eq.s32.totalorder %s833, 0
      %s836 = sadd.s32 %s835, 1
      %s837 = scalar_select %p834, %s835, %s836
      %p840 = pneg %p834
      %p841 = scmp.eq.s32.totalorder %s80, 1
      %p842 = por %p840, %p841
      %p843 = scmp.ne.s32.totalorder %s835, %s838
      %p844 = scmp.eq.s32.totalorder %s80, 0
      %p845 = por %p843, %p844
      %p846 = scmp.ne.s32.totalorder %s835, %s838
      %p847 = scmp.eq.s32.totalorder %s85, 1
      %p848 = por %p846, %p847
      %p849 = scmp.ne.s32.totalorder %s838, %s839
      %p850 = scmp.eq.s32.totalorder %s85, 0
      %p851 = por %p849, %p850
      %p852 = scmp.ne.s32.totalorder %s838, %s839
      %p853 = scmp.eq.s32.totalorder %s86, 1
      %p854 = por %p852, %p853
      %p856 = scmp.ne.s32.totalorder %s839, %s855
      %p857 = scmp.eq.s32.totalorder %s86, 0
      %p858 = por %p856, %p857
      %p859 = scmp.le.s32.totalorder 1, %s80
      %p860 = scmp.lt.s32.totalorder %s80, 3
      %p861 = pnand %p859, %p860
      %p862 = pneg %p861
      // Predicated region
      $region9: #{epignn_forward.1} parent=5 // pred_check
        _
      $region10: #{epignn_forward.1} parent=5 // pred_check_branch
        %864 = sbr.rel (%p861) target = $region12
      $region11: #{epignn_forward.1} parent=5 // pred_region
        %s865 = ssub.s32 %s80, 1
        // Predicated region
        $region13: #{epignn_forward.1} parent=11 // pred_check
          %p866 = pneg %p153
        $region14: #{epignn_forward.1} parent=11 // pred_check_branch
          %868 = sbr.rel (%p866) target = $region16
        $region15: #{epignn_forward.1} parent=11 // pred_region
          _
        $region16: #{epignn_forward.1} parent=11 // pred_fallthru
          _
        // Predicated region
        $region17: #{epignn_forward.1} parent=11 // pred_check
          %p869 = pneg %p174
        $region18: #{epignn_forward.1} parent=11 // pred_check_branch
          %871 = sbr.rel (%p869) target = $region20
        $region19: #{epignn_forward.1} parent=11 // pred_region
          _
        $region20: #{epignn_forward.1} parent=11 // pred_fallthru
          _
        // Predicated region
        $region21: #{epignn_forward.1} parent=11 // pred_check
          %p872 = pneg %p195
        $region22: #{epignn_forward.1} parent=11 // pred_check_branch
          %874 = sbr.rel (%p872) target = $region24
        $region23: #{epignn_forward.1} parent=11 // pred_region
          _
        $region24: #{epignn_forward.1} parent=11 // pred_fallthru
          _
        // Predicated region
        $region25: #{epignn_forward.1} parent=11 // pred_check
          %p875 = pneg %p216
        $region26: #{epignn_forward.1} parent=11 // pred_check_branch
          %877 = sbr.rel (%p875) target = $region28
        $region27: #{epignn_forward.1} parent=11 // pred_region
          _
        $region28: #{epignn_forward.1} parent=11 // pred_fallthru
          _
        // Predicated region
        $region29: #{epignn_forward.1} parent=11 // pred_check
          %p878 = pneg %p237
        $region30: #{epignn_forward.1} parent=11 // pred_check_branch
          %880 = sbr.rel (%p878) target = $region32
        $region31: #{epignn_forward.1} parent=11 // pred_region
          _
        $region32: #{epignn_forward.1} parent=11 // pred_fallthru
          _
        // Predicated region
        $region33: #{epignn_forward.1} parent=11 // pred_check
          %p881 = pneg %p258
        $region34: #{epignn_forward.1} parent=11 // pred_check_branch
          %883 = sbr.rel (%p881) target = $region36
        $region35: #{epignn_forward.1} parent=11 // pred_region
          _
        $region36: #{epignn_forward.1} parent=11 // pred_fallthru
          _
        // Predicated region
        $region37: #{epignn_forward.1} parent=11 // pred_check
          %p884 = pneg %p279
        $region38: #{epignn_forward.1} parent=11 // pred_check_branch
          %886 = sbr.rel (%p884) target = $region40
        $region39: #{epignn_forward.1} parent=11 // pred_region
          _
        $region40: #{epignn_forward.1} parent=11 // pred_fallthru
          _
        // Predicated region
        $region41: #{epignn_forward.1} parent=11 // pred_check
          %p887 = pneg %p300
        $region42: #{epignn_forward.1} parent=11 // pred_check_branch
          %889 = sbr.rel (%p887) target = $region44
        $region43: #{epignn_forward.1} parent=11 // pred_region
          _
        $region44: #{epignn_forward.1} parent=11 // pred_fallthru
          _
        // Predicated region
        $region45: #{epignn_forward.1} parent=11 // pred_check
          %p890 = pneg %p321
        $region46: #{epignn_forward.1} parent=11 // pred_check_branch
          %892 = sbr.rel (%p890) target = $region48
        $region47: #{epignn_forward.1} parent=11 // pred_region
          _
        $region48: #{epignn_forward.1} parent=11 // pred_fallthru
          _
        // Predicated region
        $region49: #{epignn_forward.1} parent=11 // pred_check
          %p893 = pneg %p342
        $region50: #{epignn_forward.1} parent=11 // pred_check_branch
          %895 = sbr.rel (%p893) target = $region52
        $region51: #{epignn_forward.1} parent=11 // pred_region
          _
        $region52: #{epignn_forward.1} parent=11 // pred_fallthru
          _
        // Predicated region
        $region53: #{epignn_forward.1} parent=11 // pred_check
          %p896 = pneg %p363
        $region54: #{epignn_forward.1} parent=11 // pred_check_branch
          %898 = sbr.rel (%p896) target = $region56
        $region55: #{epignn_forward.1} parent=11 // pred_region
          _
        $region56: #{epignn_forward.1} parent=11 // pred_fallthru
          _
        // Predicated region
        $region57: #{epignn_forward.1} parent=11 // pred_check
          %p899 = pneg %p384
        $region58: #{epignn_forward.1} parent=11 // pred_check_branch
          %901 = sbr.rel (%p899) target = $region60
        $region59: #{epignn_forward.1} parent=11 // pred_region
          _
        $region60: #{epignn_forward.1} parent=11 // pred_fallthru
          _
        // Predicated region
        $region61: #{epignn_forward.1} parent=11 // pred_check
          %p902 = pneg %p405
        $region62: #{epignn_forward.1} parent=11 // pred_check_branch
          %904 = sbr.rel (%p902) target = $region64
        $region63: #{epignn_forward.1} parent=11 // pred_region
          _
        $region64: #{epignn_forward.1} parent=11 // pred_fallthru
          _
        // Predicated region
        $region65: #{epignn_forward.1} parent=11 // pred_check
          %p905 = pneg %p426
        $region66: #{epignn_forward.1} parent=11 // pred_check_branch
          %907 = sbr.rel (%p905) target = $region68
        $region67: #{epignn_forward.1} parent=11 // pred_region
          _
        $region68: #{epignn_forward.1} parent=11 // pred_fallthru
          _
        // Predicated region
        $region69: #{epignn_forward.1} parent=11 // pred_check
          %p908 = pneg %p447
        $region70: #{epignn_forward.1} parent=11 // pred_check_branch
          %910 = sbr.rel (%p908) target = $region72
        $region71: #{epignn_forward.1} parent=11 // pred_region
          _
        $region72: #{epignn_forward.1} parent=11 // pred_fallthru
          _
        // Predicated region
        $region73: #{epignn_forward.1} parent=11 // pred_check
          %p911 = pneg %p468
        $region74: #{epignn_forward.1} parent=11 // pred_check_branch
          %913 = sbr.rel (%p911) target = $region76
        $region75: #{epignn_forward.1} parent=11 // pred_region
          _
        $region76: #{epignn_forward.1} parent=11 // pred_fallthru
          _
        // Predicated region
        $region77: #{epignn_forward.1} parent=11 // pred_check
          %p914 = pneg %p489
        $region78: #{epignn_forward.1} parent=11 // pred_check_branch
          %916 = sbr.rel (%p914) target = $region80
        $region79: #{epignn_forward.1} parent=11 // pred_region
          _
        $region80: #{epignn_forward.1} parent=11 // pred_fallthru
          _
        // Predicated region
        $region81: #{epignn_forward.1} parent=11 // pred_check
          %p917 = pneg %p510
        $region82: #{epignn_forward.1} parent=11 // pred_check_branch
          %919 = sbr.rel (%p917) target = $region84
        $region83: #{epignn_forward.1} parent=11 // pred_region
          _
        $region84: #{epignn_forward.1} parent=11 // pred_fallthru
          _
        // Predicated region
        $region85: #{epignn_forward.1} parent=11 // pred_check
          %p920 = pneg %p531
        $region86: #{epignn_forward.1} parent=11 // pred_check_branch
          %922 = sbr.rel (%p920) target = $region88
        $region87: #{epignn_forward.1} parent=11 // pred_region
          _
        $region88: #{epignn_forward.1} parent=11 // pred_fallthru
          _
        // Predicated region
        $region89: #{epignn_forward.1} parent=11 // pred_check
          %p923 = pneg %p552
        $region90: #{epignn_forward.1} parent=11 // pred_check_branch
          %925 = sbr.rel (%p923) target = $region92
        $region91: #{epignn_forward.1} parent=11 // pred_region
          _
        $region92: #{epignn_forward.1} parent=11 // pred_fallthru
          _
        // Predicated region
        $region93: #{epignn_forward.1} parent=11 // pred_check
          %p926 = pneg %p573
        $region94: #{epignn_forward.1} parent=11 // pred_check_branch
          %928 = sbr.rel (%p926) target = $region96
        $region95: #{epignn_forward.1} parent=11 // pred_region
          _
        $region96: #{epignn_forward.1} parent=11 // pred_fallthru
          _
        // Predicated region
        $region97: #{epignn_forward.1} parent=11 // pred_check
          %p929 = pneg %p594
        $region98: #{epignn_forward.1} parent=11 // pred_check_branch
          %931 = sbr.rel (%p929) target = $region100
        $region99: #{epignn_forward.1} parent=11 // pred_region
          _
        $region100: #{epignn_forward.1} parent=11 // pred_fallthru
          _
        // Predicated region
        $region101: #{epignn_forward.1} parent=11 // pred_check
          %p932 = pneg %p615
        $region102: #{epignn_forward.1} parent=11 // pred_check_branch
          %934 = sbr.rel (%p932) target = $region104
        $region103: #{epignn_forward.1} parent=11 // pred_region
          _
        $region104: #{epignn_forward.1} parent=11 // pred_fallthru
          _
        // Predicated region
        $region105: #{epignn_forward.1} parent=11 // pred_check
          %p935 = pneg %p636
        $region106: #{epignn_forward.1} parent=11 // pred_check_branch
          %937 = sbr.rel (%p935) target = $region108
        $region107: #{epignn_forward.1} parent=11 // pred_region
          _
        $region108: #{epignn_forward.1} parent=11 // pred_fallthru
          _
        // Predicated region
        $region109: #{epignn_forward.1} parent=11 // pred_check
          %p938 = pneg %p657
        $region110: #{epignn_forward.1} parent=11 // pred_check_branch
          %940 = sbr.rel (%p938) target = $region112
        $region111: #{epignn_forward.1} parent=11 // pred_region
          _
        $region112: #{epignn_forward.1} parent=11 // pred_fallthru
          _
        // Predicated region
        $region113: #{epignn_forward.1} parent=11 // pred_check
          %p941 = pneg %p678
        $region114: #{epignn_forward.1} parent=11 // pred_check_branch
          %943 = sbr.rel (%p941) target = $region116
        $region115: #{epignn_forward.1} parent=11 // pred_region
          _
        $region116: #{epignn_forward.1} parent=11 // pred_fallthru
          _
        // Predicated region
        $region117: #{epignn_forward.1} parent=11 // pred_check
          %p944 = pneg %p699
        $region118: #{epignn_forward.1} parent=11 // pred_check_branch
          %946 = sbr.rel (%p944) target = $region120
        $region119: #{epignn_forward.1} parent=11 // pred_region
          _
        $region120: #{epignn_forward.1} parent=11 // pred_fallthru
          _
        // Predicated region
        $region121: #{epignn_forward.1} parent=11 // pred_check
          %p947 = pneg %p720
        $region122: #{epignn_forward.1} parent=11 // pred_check_branch
          %949 = sbr.rel (%p947) target = $region124
        $region123: #{epignn_forward.1} parent=11 // pred_region
          _
        $region124: #{epignn_forward.1} parent=11 // pred_fallthru
          _
        // Predicated region
        $region125: #{epignn_forward.1} parent=11 // pred_check
          %p950 = pneg %p741
        $region126: #{epignn_forward.1} parent=11 // pred_check_branch
          %952 = sbr.rel (%p950) target = $region128
        $region127: #{epignn_forward.1} parent=11 // pred_region
          _
        $region128: #{epignn_forward.1} parent=11 // pred_fallthru
          _
        // Predicated region
        $region129: #{epignn_forward.1} parent=11 // pred_check
          %p953 = pneg %p762
        $region130: #{epignn_forward.1} parent=11 // pred_check_branch
          %955 = sbr.rel (%p953) target = $region132
        $region131: #{epignn_forward.1} parent=11 // pred_region
          _
        $region132: #{epignn_forward.1} parent=11 // pred_fallthru
          _
        // Predicated region
        $region133: #{epignn_forward.1} parent=11 // pred_check
          %p956 = pneg %p783
        $region134: #{epignn_forward.1} parent=11 // pred_check_branch
          %958 = sbr.rel (%p956) target = $region136
        $region135: #{epignn_forward.1} parent=11 // pred_region
          _
        $region136: #{epignn_forward.1} parent=11 // pred_fallthru
          _
        // Predicated region
        $region137: #{epignn_forward.1} parent=11 // pred_check
          %p959 = pneg %p804
        $region138: #{epignn_forward.1} parent=11 // pred_check_branch
          %961 = sbr.rel (%p959) target = $region140
        $region139: #{epignn_forward.1} parent=11 // pred_region
          _
        $region140: #{epignn_forward.1} parent=11 // pred_fallthru
          _
        // Predicated region
        $region141: #{epignn_forward.1} parent=11 // pred_check
          %p962 = pneg %p825
        $region142: #{epignn_forward.1} parent=11 // pred_check_branch
          %964 = sbr.rel (%p962) target = $region144
        $region143: #{epignn_forward.1} parent=11 // pred_region
          _
        $region144: #{epignn_forward.1} parent=11 // pred_fallthru
          _
      $region12: #{epignn_forward.1} parent=5 // pred_fallthru
        _
      %p965 = scmp.lt.s32.totalorder %s80, 2
      // Predicated region
      $region145: #{epignn_forward.1} parent=5 // pred_check
        %p966 = pneg %p965
      $region146: #{epignn_forward.1} parent=5 // pred_check_branch
        %968 = sbr.rel (%p966) target = $region148
      $region147: #{epignn_forward.1} parent=5 // pred_region
        // Predicated region
        $region149: #{epignn_forward.1} parent=147 // pred_check
          %p969 = pneg %p100
        $region150: #{epignn_forward.1} parent=147 // pred_check_branch
          %971 = sbr.rel (%p969) target = $region152
        $region151: #{epignn_forward.1} parent=147 // pred_region
          %p972 = scmp.lt.s32.totalorder %s80, 1
          %s973 = scalar_select %p972, %s80, 1
          %s974 = smul.addr %s973, 2
          %s975 = smul.addr %s974, 4
          %s976 = scalar_lea.vmem %s1, %s975
        $region152: #{epignn_forward.1} parent=147 // pred_fallthru
          _
        // Predicated region
        $region153: #{epignn_forward.1} parent=147 // pred_check
          %p977 = pneg %p126
        $region154: #{epignn_forward.1} parent=147 // pred_check_branch
          %979 = sbr.rel (%p977) target = $region156
        $region155: #{epignn_forward.1} parent=147 // pred_region
          %p980 = scmp.lt.s32.totalorder %s80, 1
          %s981 = scalar_select %p980, %s80, 1
          %s982 = smul.addr %s981, 2
          %s983 = smul.addr %s982, 8
          %s984 = scalar_lea.vmem %s3, %s983
        $region156: #{epignn_forward.1} parent=147 // pred_fallthru
          _
      $region148: #{epignn_forward.1} parent=5 // pred_fallthru
        _
      %p985 = scmp.le.s32.totalorder 1, %s80
      %p986 = scmp.lt.s32.totalorder %s80, 3
      %p987 = pnand %p985, %p986
      %p988 = pneg %p987
      // Predicated region
      $region157: #{epignn_forward.1} parent=5 // pred_check
        _
      $region158: #{epignn_forward.1} parent=5 // pred_check_branch
        %990 = sbr.rel (%p987) target = $region160
      $region159: #{epignn_forward.1} parent=5 // pred_region
        %s991 = ssub.s32 %s80, 1
        %p992 = scmp.lt.s32.totalorder %s85, 1
        %s993 = scalar_select %p992, %s85, 1
        %s994 = smul.addr %s993, 2
        %s995 = smul.addr %s994, 4
        %s996 = scalar_lea.vmem %s1, %s995
        %p997 = pneg %p106
        %p998 = pneg %p103
        %p999 = scmp.lt.s32.totalorder %s85, 1
        %s1000 = scalar_select %p999, %s85, 1
        %s1001 = smul.addr %s1000, 2
        %s1002 = smul.addr %s1001, 8
        %s1003 = scalar_lea.vmem %s3, %s1002
        %p1004 = pneg %p132
        %p1005 = pneg %p129
        %p1006 = pneg %p153
        %p1007 = pneg %p150
        %p1008 = pneg %p174
        %p1009 = pneg %p171
        %p1010 = pneg %p195
        %p1011 = pneg %p192
        %p1012 = pneg %p216
        %p1013 = pneg %p213
        %p1014 = pneg %p237
        %p1015 = pneg %p234
        %p1016 = pneg %p258
        %p1017 = pneg %p255
        %p1018 = pneg %p279
        %p1019 = pneg %p276
        %p1020 = pneg %p300
        %p1021 = pneg %p297
        %p1022 = pneg %p321
        %p1023 = pneg %p318
        %p1024 = pneg %p342
        %p1025 = pneg %p339
        %p1026 = pneg %p363
        %p1027 = pneg %p360
        %p1028 = pneg %p384
        %p1029 = pneg %p381
        %p1030 = pneg %p405
        %p1031 = pneg %p402
        %p1032 = pneg %p426
        %p1033 = pneg %p423
        %p1034 = pneg %p447
        %p1035 = pneg %p444
        %p1036 = pneg %p468
        %p1037 = pneg %p465
        %p1038 = pneg %p489
        %p1039 = pneg %p486
        %p1040 = pneg %p510
        %p1041 = pneg %p507
        %p1042 = pneg %p531
        %p1043 = pneg %p528
        %p1044 = pneg %p552
        %p1045 = pneg %p549
        %p1046 = pneg %p573
        %p1047 = pneg %p570
        %p1048 = pneg %p594
        %p1049 = pneg %p591
        %p1050 = pneg %p615
        %p1051 = pneg %p612
        %p1052 = pneg %p636
        %p1053 = pneg %p633
        %p1054 = pneg %p657
        %p1055 = pneg %p654
        %p1056 = pneg %p678
        %p1057 = pneg %p675
        %p1058 = pneg %p699
        %p1059 = pneg %p696
        %p1060 = pneg %p720
        %p1061 = pneg %p717
        %p1062 = pneg %p741
        %p1063 = pneg %p738
        %p1064 = pneg %p762
        %p1065 = pneg %p759
        %p1066 = pneg %p783
        %p1067 = pneg %p780
        %p1068 = pneg %p804
        %p1069 = pneg %p801
        %p1070 = pneg %p825
        %p1071 = pneg %p822
        %p1072 = pneg %p851
        %p1073 = pneg %p848
        %s1074 = sand.u32 %s838, 1
        %s1075 = scalar_lea.sflag [#allocation3], %s1074
        %s1076 = sand.u32 %s838, 1
        %s1077 = smul.addr %s1076, 4
        %s1078 = scalar_lea.vmem [#allocation2], %s1077
        %p1079 = scmp.lt.s32.totalorder %s85, 1
        %s1080 = scalar_select %p1079, %s85, 1
        %s1081 = smul.addr %s1080, 2
        %s1082 = smul.addr %s1081, 4
        %s1083 = scalar_lea.vmem %s1, %s1082
        %p1084 = scmp.lt.s32.totalorder %s85, 1
        %s1085 = scalar_select %p1084, %s85, 1
        %s1086 = smul.addr %s1085, 2
        %s1087 = smul.addr %s1086, 8
        %s1088 = scalar_lea.vmem %s3, %s1087
        %v1089 = vld [vmem:[%s5] sm:$0xff]
        %v1090 = vld [vmem:[%s7] sm:$0xff]
        %v1091 = vld [vmem:[%s9] sm:$0xff]
        %v1092 = vld [vmem:[%s11] sm:$0xff]
        %v1093 = vld [vmem:[%s13] sm:$0xff]
        %v1094 = vld [vmem:[%s15] sm:$0xff]
        %v1095 = vld [vmem:[%s17] sm:$0xff]
        %v1096 = vld [vmem:[%s19] sm:$0xff]
        %v1097 = vld [vmem:[%s21] sm:$0xff]
        %v1098 = vld [vmem:[%s23] sm:$0xff]
        %v1099 = vld [vmem:[%s25] sm:$0xff]
        %v1100 = vld [vmem:[%s25 + $0x8] sm:$0xff]
        %v1101 = vld [vmem:[%s25 + $0x10] sm:$0xff]
        %v1102 = vld [vmem:[%s25 + $0x18] sm:$0xff]
        %v1103 = vld [vmem:[%s27] sm:$0xff]
        %v1104 = vld [vmem:[%s27 + $0x8] sm:$0xff]
        %v1105 = vld [vmem:[%s27 + $0x10] sm:$0xff]
        %v1106 = vld [vmem:[%s27 + $0x18] sm:$0xff]
        %v1107 = vld [vmem:[%s29] sm:$0xff]
        %v1108 = vld [vmem:[%s29 + $0x8] sm:$0xff]
        %v1109 = vld [vmem:[%s29 + $0x10] sm:$0xff]
        %v1110 = vld [vmem:[%s29 + $0x18] sm:$0xff]
        %v1111 = vld [vmem:[%s31] sm:$0xff]
        %v1112 = vld [vmem:[%s31 + $0x8] sm:$0xff]
        %v1113 = vld [vmem:[%s31 + $0x10] sm:$0xff]
        %v1114 = vld [vmem:[%s31 + $0x18] sm:$0xff]
        %v1115 = vld [vmem:[%s33] sm:$0xff]
        %v1116 = vld [vmem:[%s33 + $0x8] sm:$0xff]
        %v1117 = vld [vmem:[%s33 + $0x10] sm:$0xff]
        %v1118 = vld [vmem:[%s33 + $0x18] sm:$0xff]
        %v1119 = vld [vmem:[%s33 + $0x20] sm:$0xff]
        %v1120 = vld [vmem:[%s35] sm:$0xff]
        %v1121 = vld [vmem:[%s35 + $0x8] sm:$0xff]
        %v1122 = vld [vmem:[%s35 + $0x10] sm:$0xff]
        %v1123 = vld [vmem:[%s35 + $0x18] sm:$0xff]
        %v1124 = vld [vmem:[%s35 + $0x20] sm:$0xff]
        %v1125 = vld [vmem:[%s37] sm:$0xff]
        %v1126 = vld [vmem:[%s37 + $0x8] sm:$0xff]
        %v1127 = vld [vmem:[%s37 + $0x10] sm:$0xff]
        %v1128 = vld [vmem:[%s37 + $0x18] sm:$0xff]
        %v1129 = vld [vmem:[%s37 + $0x20] sm:$0xff]
        %v1130 = vld [vmem:[%s39] sm:$0xff]
        %v1131 = vld [vmem:[%s39 + $0x8] sm:$0xff]
        %v1132 = vld [vmem:[%s39 + $0x10] sm:$0xff]
        %v1133 = vld [vmem:[%s39 + $0x18] sm:$0xff]
        %v1134 = vld [vmem:[%s39 + $0x20] sm:$0xff]
        %v1135 = vld [vmem:[%s49] sm:$0xff]
        %v1136 = vld [vmem:[%s49 + $0x8] sm:$0xff]
        %v1137 = vld [vmem:[%s49 + $0x10] sm:$0xff]
        %v1138 = vld [vmem:[%s49 + $0x18] sm:$0xff]
        %v1139 = vld [vmem:[%s49 + $0x20] sm:$0xff]
        %v1140 = vld [vmem:[%s51] sm:$0xff]
        %v1141 = vld [vmem:[%s51 + $0x8] sm:$0xff]
        %v1142 = vld [vmem:[%s51 + $0x10] sm:$0xff]
        %v1143 = vld [vmem:[%s51 + $0x18] sm:$0xff]
        %v1144 = vld [vmem:[%s51 + $0x20] sm:$0xff]
        %v1145 = vld [vmem:[%s53] sm:$0xf]
        %v1146 = vld [vmem:[%s55] sm:$0xff]
        %v1147 = vld [vmem:[%s55 + $0x8] sm:$0xff]
        %v1148 = vld [vmem:[%s55 + $0x10] sm:$0xff]
        %v1149 = vld [vmem:[%s55 + $0x18] sm:$0xff]
        %v1150 = vld [vmem:[%s55 + $0x20] sm:$0xff]
        %v1151 = vld [vmem:[%s57] sm:$0xff]
        %v1152 = vld [vmem:[%s57 + $0x8] sm:$0xff]
        %v1153 = vld [vmem:[%s57 + $0x10] sm:$0xff]
        %v1154 = vld [vmem:[%s57 + $0x18] sm:$0xff]
        %v1155 = vld [vmem:[%s57 + $0x20] sm:$0xff]
        %v1156 = vld [vmem:[%s59] sm:$0xf]
        %v1157 = vld [vmem:[%s61] sm:$0xff]
        %v1158 = vld [vmem:[%s61 + $0x8] sm:$0xff]
        %v1159 = vld [vmem:[%s61 + $0x10] sm:$0xff]
        %v1160 = vld [vmem:[%s61 + $0x18] sm:$0xff]
        %v1161 = vld [vmem:[%s61 + $0x20] sm:$0xff]
        %v1162 = vld [vmem:[%s63] sm:$0xff]
        %v1163 = vld [vmem:[%s63 + $0x8] sm:$0xff]
        %v1164 = vld [vmem:[%s63 + $0x10] sm:$0xff]
        %v1165 = vld [vmem:[%s63 + $0x18] sm:$0xff]
        %v1166 = vld [vmem:[%s63 + $0x20] sm:$0xff]
        %v1167 = vld [vmem:[%s65] sm:$0xf]
        %v1168 = vld [vmem:[%s67] sm:$0xff]
        %v1169 = vld [vmem:[%s69] sm:$0xf]
        %v1170 = vld [vmem:[%s1083] sm:$0xff]
        %v1171 = vld [vmem:[%s1088] sm:$0xff]
        %v1172 = vld [vmem:[%s1088 + $0x8] sm:$0xff]
        %v1174 = vcombine.high %v1170, %v1170
        %v1176 = vcombine.low %v1170, %v1170
        %1177 = vrot.lane.b32.xlu0 %v1176, 112
        %v1178 = vpop.permute.xlu0 %1177
        %1179 = vrot.lane.b32.xlu0 %v1170, 112
        %v1180 = vpop.permute.xlu0 %1179
        %vm1181 = vcmask 916480
        %v1182 = vsel %vm1181, %v1178, %v1180
        %1185 = vrot.lane.b32.xlu0 %v1170, 96
        %v1186 = vpop.permute.xlu0 %1185
        %1187 = vrot.lane.b32.xlu0 %v1174, 96
        %v1188 = vpop.permute.xlu0 %1187
        %vm1189 = vcmask 785408
        %v1190 = vsel %vm1189, %v1186, %v1188
        %vm1191 = vcmask 1043456
        %v1192 = vsel %vm1191, %v1170, %v1182
        %v1193 = vsel %vm1191, %v1174, %v1180
        %1195 = vset.pattern.permute.xlu0 0
        %1196 = vperm.xlu0 %1195, %v1090
        %v1197 = vpop.permute.xlu0 %1196
        %vm1199 = vcmask 97280
        %v1201 = vsel %vm1199, %v1089, 0
        %v1203 = vsel %vm1191, %v1190, 0
        %v1205 = vsel %vm1191, %v1188, 0
        %1207 = vmatprep.subr.mxu0 %v1193
        %1208 = vmatpush1.msra.mxu0 %v1192
        %1209 = vmatprep.subr.mxu0 %v1205
        %1210 = vmatpush1.msra.mxu0 %v1203
        %1211 = vmatprep.subr.mxu0 0.0
        %1212 = vmatpush1.msra.mxu0 0.0
        %1213 = vmatprep.subr.mxu0 0.0
        %1214 = vmatpush1.msra.mxu0 0.0
        %1215 = vmatprep.subr.mxu0 0.0
        %1216 = vmatpush1.msra.mxu0 0.0
        %1217 = vmatprep.subr.mxu0 0.0
        %1218 = vmatpush1.msra.mxu0 0.0
        %1219 = vmatprep.subr.mxu0 0.0
        %1220 = vmatpush1.msra.mxu0 0.0
        %1221 = vmatprep.subr.mxu0 0.0
        %1222 = vmatpush1.msra.mxu0 0.0
        %1223 = vmatprep.subr.mxu0 0.0
        %1224 = vmatpush1.msra.mxu0 0.0
        %1225 = vmatprep.subr.mxu0 0.0
        %1226 = vmatpush1.msra.mxu0 0.0
        %1227 = vmatprep.subr.mxu0 0.0
        %1228 = vmatpush1.msra.mxu0 0.0
        %1229 = vmatprep.subr.mxu0 0.0
        %1230 = vmatpush1.msra.mxu0 0.0
        %1231 = vmatprep.subr.mxu0 0.0
        %1232 = vmatpush1.msra.mxu0 0.0
        %1233 = vmatprep.subr.mxu0 0.0
        %1234 = vmatpush1.msra.mxu0 0.0
        %1235 = vmatprep.subr.mxu0 0.0
        %1236 = vmatpush1.msra.mxu0 0.0
        %1237 = vmatprep.subr.mxu0 0.0
        %1238 = vmatpush1.msra.mxu0 0.0
        %1239 = vmatprep.subr.mxu0 0.0
        %1240 = vmatpush1.msra.mxu0 0.0
        %1241 = vmatprep.subr.mxu0 0.0
        %1242 = vmatpush1.msra.mxu0 0.0
        %1243 = vmatprep.subr.mxu0 0.0
        %1244 = vmatpush1.msra.mxu0 0.0
        %1245 = vmatprep.subr.mxu0 0.0
        %1246 = vmatpush1.msra.mxu0 0.0
        %1247 = vmatprep.subr.mxu0 0.0
        %1248 = vmatpush1.msra.mxu0 0.0
        %1249 = vmatprep.subr.mxu0 0.0
        %1250 = vmatpush1.msra.mxu0 0.0
        %1251 = vmatprep.subr.mxu0 0.0
        %1252 = vmatpush1.msra.mxu0 0.0
        %1253 = vmatprep.subr.mxu0 0.0
        %1254 = vmatpush1.msra.mxu0 0.0
        %1255 = vmatprep.subr.mxu0 0.0
        %1256 = vmatpush1.msra.mxu0 0.0
        %1257 = vmatprep.subr.mxu0 0.0
        %1258 = vmatpush1.msra.mxu0 0.0
        %1259 = vmatprep.subr.mxu0 0.0
        %1260 = vmatpush1.msra.mxu0 0.0
        %1261 = vmatprep.subr.mxu0 0.0
        %1262 = vmatpush1.msra.mxu0 0.0
        %1263 = vmatprep.subr.mxu0 0.0
        %1264 = vmatpush1.msra.mxu0 0.0
        %1265 = vmatprep.subr.mxu0 0.0
        %1266 = vmatpush1.msra.mxu0 0.0
        %1267 = vmatprep.subr.mxu0 0.0
        %1268 = vmatpush1.msra.mxu0 0.0
        %1269 = vmatprep.subr.mxu0 0.0
        %1270 = vmatpush1.msra.mxu0 0.0
        %1271 = vmatprep.mubr.f32.mxu0 0.0
        %1272 = vmatmul.mubr.f32.gmra.mrb[0].mxu0 %v1201
        %v1273 = vpop.f32.mrb[0].mxu0
        %v1274 = vadd.f32 %v1197, %v1273
        %v1275 = vpop.f32.mrb[0].mxu0
        %v1276 = vadd.f32 %v1197, %v1275
        %1277 = vdwg.mxu0
        %1279 = vrot.lane.b32.xlu0 %v1274, 112
        %v1280 = vpop.permute.xlu0 %1279
        %v1282 = vmax.f32 %v1274, %v1280
        %1283 = vrot.lane.b32.xlu0 %v1274, 96
        %v1284 = vpop.permute.xlu0 %1283
        %v1286 = vmax.f32 %v1282, %v1284
        %1287 = vrot.lane.b32.xlu0 %v1274, 80
        %v1288 = vpop.permute.xlu0 %1287
        %v1290 = vmax.f32 %v1286, %v1288
        %1291 = vrot.lane.b32.xlu0 %v1274, 64
        %v1292 = vpop.permute.xlu0 %1291
        %v1294 = vmax.f32 %v1290, %v1292
        %1295 = vrot.lane.b32.xlu0 %v1274, 48
        %v1296 = vpop.permute.xlu0 %1295
        %v1298 = vmax.f32 %v1294, %v1296
        %1299 = vrot.lane.b32.xlu0 %v1274, 32
        %v1300 = vpop.permute.xlu0 %1299
        %v1302 = vmax.f32 %v1298, %v1300
        %1303 = vrot.lane.b32.xlu0 %v1274, 16
        %v1304 = vpop.permute.xlu0 %1303
        %v1306 = vmax.f32 %v1302, %v1304
        %v1307 = vmax.f32 %v1306, %v1276
        %1309 = vrot.lane.b32.xlu0 %v1276, 112
        %v1310 = vpop.permute.xlu0 %1309
        %v1312 = vmax.f32 %v1307, %v1310
        %v1313 = vtanh.pop %v1312
        %1315 = vrot.lane.b32.xlu0 %v1176, 80
        %v1316 = vpop.permute.xlu0 %1315
        %1317 = vrot.lane.b32.xlu0 %v1170, 80
        %v1318 = vpop.permute.xlu0 %1317
        %vm1319 = vcmask 654336
        %v1320 = vsel %vm1319, %v1316, %v1318
        %1322 = vrot.lane.b32.xlu0 %v1170, 64
        %v1323 = vpop.permute.xlu0 %1322
        %1324 = vrot.lane.b32.xlu0 %v1174, 64
        %v1325 = vpop.permute.xlu0 %1324
        %vm1326 = vcmask 523264
        %v1327 = vsel %vm1326, %v1323, %v1325
        %v1328 = vsel %vm1191, %v1190, %v1320
        %1330 = vset.pattern.permute.xlu0 0
        %1331 = vperm.xlu0 %1330, %v1092
        %v1332 = vpop.permute.xlu0 %1331
        %vm1334 = vcmask 162816
        %v1336 = vsel %vm1334, %v1091, 0
        %v1338 = vsel %vm1191, %v1327, 0
        %1340 = vmatprep.subr.mxu0 0.0
        %1341 = vmatpush1.msra.mxu0 %v1192
        %1342 = vmatprep.subr.mxu0 0.0
        %1343 = vmatpush1.msra.mxu0 %v1328
        %1344 = vmatprep.subr.mxu0 0.0
        %1345 = vmatpush1.msra.mxu0 %v1338
        %1346 = vmatprep.subr.mxu0 0.0
        %1347 = vmatpush1.msra.mxu0 0.0
        %1348 = vmatprep.subr.mxu0 0.0
        %1349 = vmatpush1.msra.mxu0 0.0
        %1350 = vmatprep.subr.mxu0 0.0
        %1351 = vmatpush1.msra.mxu0 0.0
        %1352 = vmatprep.subr.mxu0 0.0
        %1353 = vmatpush1.msra.mxu0 0.0
        %1354 = vmatprep.subr.mxu0 0.0
        %1355 = vmatpush1.msra.mxu0 0.0
        %1356 = vmatprep.subr.mxu0 0.0
        %1357 = vmatpush1.msra.mxu0 0.0
        %1358 = vmatprep.subr.mxu0 0.0
        %1359 = vmatpush1.msra.mxu0 0.0
        %1360 = vmatprep.subr.mxu0 0.0
        %1361 = vmatpush1.msra.mxu0 0.0
        %1362 = vmatprep.subr.mxu0 0.0
        %1363 = vmatpush1.msra.mxu0 0.0
        %1364 = vmatprep.subr.mxu0 0.0
        %1365 = vmatpush1.msra.mxu0 0.0
        %1366 = vmatprep.subr.mxu0 0.0
        %1367 = vmatpush1.msra.mxu0 0.0
        %1368 = vmatprep.subr.mxu0 0.0
        %1369 = vmatpush1.msra.mxu0 0.0
        %1370 = vmatprep.subr.mxu0 0.0
        %1371 = vmatpush1.msra.mxu0 0.0
        %1372 = vmatprep.subr.mxu0 0.0
        %1373 = vmatpush1.msra.mxu0 0.0
        %1374 = vmatprep.subr.mxu0 0.0
        %1375 = vmatpush1.msra.mxu0 0.0
        %1376 = vmatprep.subr.mxu0 0.0
        %1377 = vmatpush1.msra.mxu0 0.0
        %1378 = vmatprep.subr.mxu0 0.0
        %1379 = vmatpush1.msra.mxu0 0.0
        %1380 = vmatprep.subr.mxu0 0.0
        %1381 = vmatpush1.msra.mxu0 0.0
        %1382 = vmatprep.subr.mxu0 0.0
        %1383 = vmatpush1.msra.mxu0 0.0
        %1384 = vmatprep.subr.mxu0 0.0
        %1385 = vmatpush1.msra.mxu0 0.0
        %1386 = vmatprep.subr.mxu0 0.0
        %1387 = vmatpush1.msra.mxu0 0.0
        %1388 = vmatprep.subr.mxu0 0.0
        %1389 = vmatpush1.msra.mxu0 0.0
        %1390 = vmatprep.subr.mxu0 0.0
        %1391 = vmatpush1.msra.mxu0 0.0
        %1392 = vmatprep.subr.mxu0 0.0
        %1393 = vmatpush1.msra.mxu0 0.0
        %1394 = vmatprep.subr.mxu0 0.0
        %1395 = vmatpush1.msra.mxu0 0.0
        %1396 = vmatprep.subr.mxu0 0.0
        %1397 = vmatpush1.msra.mxu0 0.0
        %1398 = vmatprep.subr.mxu0 0.0
        %1399 = vmatpush1.msra.mxu0 0.0
        %1400 = vmatprep.subr.mxu0 0.0
        %1401 = vmatpush1.msra.mxu0 0.0
        %1402 = vmatprep.subr.mxu0 0.0
        %1403 = vmatpush1.msra.mxu0 0.0
        %1404 = vmatprep.mubr.f32.mxu0 0.0
        %1405 = vmatmul.mubr.f32.gmra.mrb[0].mxu0 %v1336
        %v1406 = vpop.f32.mrb[0].mxu0
        %v1407 = vadd.f32 %v1332, %v1406
        %v1408 = vpop.f32.mrb[0].mxu0
        %1409 = vdwg.mxu0
        %1411 = vrot.lane.b32.xlu0 %v1407, 112
        %v1412 = vpop.permute.xlu0 %1411
        %v1414 = vmax.f32 %v1407, %v1412
        %1415 = vrot.lane.b32.xlu0 %v1407, 96
        %v1416 = vpop.permute.xlu0 %1415
        %v1418 = vmax.f32 %v1414, %v1416
        %1419 = vrot.lane.b32.xlu0 %v1407, 80
        %v1420 = vpop.permute.xlu0 %1419
        %v1422 = vmax.f32 %v1418, %v1420
        %1423 = vrot.lane.b32.xlu0 %v1407, 64
        %v1424 = vpop.permute.xlu0 %1423
        %v1426 = vmax.f32 %v1422, %v1424
        %1427 = vrot.lane.b32.xlu0 %v1407, 48
        %v1428 = vpop.permute.xlu0 %1427
        %v1430 = vmax.f32 %v1426, %v1428
        %1431 = vrot.lane.b32.xlu0 %v1407, 32
        %v1432 = vpop.permute.xlu0 %1431
        %v1434 = vmax.f32 %v1430, %v1432
        %1435 = vrot.lane.b32.xlu0 %v1407, 16
        %v1436 = vpop.permute.xlu0 %1435
        %v1438 = vmax.f32 %v1434, %v1436
        %v1439 = vtanh.pop %v1438
        %1440 = vrot.lane.b32.xlu0 %v1176, 96
        %v1441 = vpop.permute.xlu0 %1440
        %v1442 = vsel %vm1189, %v1441, %v1186
        %v1444 = vsel %vm1191, %v1170, %v1442
        %1446 = vset.pattern.permute.xlu0 0
        %1447 = vperm.xlu0 %1446, %v1094
        %v1448 = vpop.permute.xlu0 %1447
        %v1451 = vsel %vm1199, %v1093, 0
        %1453 = vmatprep.subr.mxu0 0.0
        %1454 = vmatpush1.msra.mxu0 %v1444
        %1455 = vmatprep.subr.mxu0 0.0
        %1456 = vmatpush1.msra.mxu0 %v1338
        %1457 = vmatprep.subr.mxu0 0.0
        %1458 = vmatpush1.msra.mxu0 0.0
        %1459 = vmatprep.subr.mxu0 0.0
        %1460 = vmatpush1.msra.mxu0 0.0
        %1461 = vmatprep.subr.mxu0 0.0
        %1462 = vmatpush1.msra.mxu0 0.0
        %1463 = vmatprep.subr.mxu0 0.0
        %1464 = vmatpush1.msra.mxu0 0.0
        %1465 = vmatprep.subr.mxu0 0.0
        %1466 = vmatpush1.msra.mxu0 0.0
        %1467 = vmatprep.subr.mxu0 0.0
        %1468 = vmatpush1.msra.mxu0 0.0
        %1469 = vmatprep.subr.mxu0 0.0
        %1470 = vmatpush1.msra.mxu0 0.0
        %1471 = vmatprep.subr.mxu0 0.0
        %1472 = vmatpush1.msra.mxu0 0.0
        %1473 = vmatprep.subr.mxu0 0.0
        %1474 = vmatpush1.msra.mxu0 0.0
        %1475 = vmatprep.subr.mxu0 0.0
        %1476 = vmatpush1.msra.mxu0 0.0
        %1477 = vmatprep.subr.mxu0 0.0
        %1478 = vmatpush1.msra.mxu0 0.0
        %1479 = vmatprep.subr.mxu0 0.0
        %1480 = vmatpush1.msra.mxu0 0.0
        %1481 = vmatprep.subr.mxu0 0.0
        %1482 = vmatpush1.msra.mxu0 0.0
        %1483 = vmatprep.subr.mxu0 0.0
        %1484 = vmatpush1.msra.mxu0 0.0
        %1485 = vmatprep.subr.mxu0 0.0
        %1486 = vmatpush1.msra.mxu0 0.0
        %1487 = vmatprep.subr.mxu0 0.0
        %1488 = vmatpush1.msra.mxu0 0.0
        %1489 = vmatprep.subr.mxu0 0.0
        %1490 = vmatpush1.msra.mxu0 0.0
        %1491 = vmatprep.subr.mxu0 0.0
        %1492 = vmatpush1.msra.mxu0 0.0
        %1493 = vmatprep.subr.mxu0 0.0
        %1494 = vmatpush1.msra.mxu0 0.0
        %1495 = vmatprep.subr.mxu0 0.0
        %1496 = vmatpush1.msra.mxu0 0.0
        %1497 = vmatprep.subr.mxu0 0.0
        %1498 = vmatpush1.msra.mxu0 0.0
        %1499 = vmatprep.subr.mxu0 0.0
        %1500 = vmatpush1.msra.mxu0 0.0
        %1501 = vmatprep.subr.mxu0 0.0
        %1502 = vmatpush1.msra.mxu0 0.0
        %1503 = vmatprep.subr.mxu0 0.0
        %1504 = vmatpush1.msra.mxu0 0.0
        %1505 = vmatprep.subr.mxu0 0.0
        %1506 = vmatpush1.msra.mxu0 0.0
        %1507 = vmatprep.subr.mxu0 0.0
        %1508 = vmatpush1.msra.mxu0 0.0
        %1509 = vmatprep.subr.mxu0 0.0
        %1510 = vmatpush1.msra.mxu0 0.0
        %1511 = vmatprep.subr.mxu0 0.0
        %1512 = vmatpush1.msra.mxu0 0.0
        %1513 = vmatprep.subr.mxu0 0.0
        %1514 = vmatpush1.msra.mxu0 0.0
        %1515 = vmatprep.subr.mxu0 0.0
        %1516 = vmatpush1.msra.mxu0 0.0
        %1517 = vmatprep.mubr.f32.mxu0 0.0
        %1518 = vmatmul.mubr.f32.gmra.mrb[0].mxu0 %v1451
        %v1519 = vpop.f32.mrb[0].mxu0
        %v1520 = vadd.f32 %v1448, %v1519
        %v1521 = vpop.f32.mrb[0].mxu0
        %1522 = vdwg.mxu0
        %1524 = vrot.lane.b32.xlu0 %v1520, 112
        %v1525 = vpop.permute.xlu0 %1524
        %v1527 = vmax.f32 %v1520, %v1525
        %1528 = vrot.lane.b32.xlu0 %v1520, 96
        %v1529 = vpop.permute.xlu0 %1528
        %v1531 = vmax.f32 %v1527, %v1529
        %1532 = vrot.lane.b32.xlu0 %v1520, 80
        %v1533 = vpop.permute.xlu0 %1532
        %v1535 = vmax.f32 %v1531, %v1533
        %1536 = vrot.lane.b32.xlu0 %v1520, 64
        %v1537 = vpop.permute.xlu0 %1536
        %v1539 = vmax.f32 %v1535, %v1537
        %1540 = vrot.lane.b32.xlu0 %v1520, 48
        %v1541 = vpop.permute.xlu0 %1540
        %v1543 = vmax.f32 %v1539, %v1541
        %1544 = vrot.lane.b32.xlu0 %v1520, 32
        %v1545 = vpop.permute.xlu0 %1544
        %v1547 = vmax.f32 %v1543, %v1545
        %1548 = vrot.lane.b32.xlu0 %v1520, 16
        %v1549 = vpop.permute.xlu0 %1548
        %v1551 = vmax.f32 %v1547, %v1549
        %v1552 = vtanh.pop %v1551
        %1555 = vrot.lane.b32.xlu0 %v1176, 32
        %v1556 = vpop.permute.xlu0 %1555
        %1557 = vrot.lane.b32.xlu0 %v1170, 32
        %v1558 = vpop.permute.xlu0 %1557
        %vm1559 = vcmask 261120
        %v1560 = vsel %vm1559, %v1556, %v1558
        %v1562 = vsel %vm1191, %v1170, %v1441
        %v1563 = vsel %vm1191, %v1323, %v1560
        %1565 = vset.pattern.permute.xlu0 0
        %1566 = vperm.xlu0 %1565, %v1096
        %v1567 = vpop.permute.xlu0 %1566
        %v1570 = vsel %vm1334, %v1095, 0
        %v1572 = vsel %vm1191, %v1174, 0
        %1574 = vmatprep.subr.mxu0 0.0
        %1575 = vmatpush1.msra.mxu0 %v1562
        %1576 = vmatprep.subr.mxu0 0.0
        %1577 = vmatpush1.msra.mxu0 %v1563
        %1578 = vmatprep.subr.mxu0 0.0
        %1579 = vmatpush1.msra.mxu0 %v1572
        %1580 = vmatprep.subr.mxu0 0.0
        %1581 = vmatpush1.msra.mxu0 0.0
        %1582 = vmatprep.subr.mxu0 0.0
        %1583 = vmatpush1.msra.mxu0 0.0
        %1584 = vmatprep.subr.mxu0 0.0
        %1585 = vmatpush1.msra.mxu0 0.0
        %1586 = vmatprep.subr.mxu0 0.0
        %1587 = vmatpush1.msra.mxu0 0.0
        %1588 = vmatprep.subr.mxu0 0.0
        %1589 = vmatpush1.msra.mxu0 0.0
        %1590 = vmatprep.subr.mxu0 0.0
        %1591 = vmatpush1.msra.mxu0 0.0
        %1592 = vmatprep.subr.mxu0 0.0
        %1593 = vmatpush1.msra.mxu0 0.0
        %1594 = vmatprep.subr.mxu0 0.0
        %1595 = vmatpush1.msra.mxu0 0.0
        %1596 = vmatprep.subr.mxu0 0.0
        %1597 = vmatpush1.msra.mxu0 0.0
        %1598 = vmatprep.subr.mxu0 0.0
        %1599 = vmatpush1.msra.mxu0 0.0
        %1600 = vmatprep.subr.mxu0 0.0
        %1601 = vmatpush1.msra.mxu0 0.0
        %1602 = vmatprep.subr.mxu0 0.0
        %1603 = vmatpush1.msra.mxu0 0.0
        %1604 = vmatprep.subr.mxu0 0.0
        %1605 = vmatpush1.msra.mxu0 0.0
        %1606 = vmatprep.subr.mxu0 0.0
        %1607 = vmatpush1.msra.mxu0 0.0
        %1608 = vmatprep.subr.mxu0 0.0
        %1609 = vmatpush1.msra.mxu0 0.0
        %1610 = vmatprep.subr.mxu0 0.0
        %1611 = vmatpush1.msra.mxu0 0.0
        %1612 = vmatprep.subr.mxu0 0.0
        %1613 = vmatpush1.msra.mxu0 0.0
        %1614 = vmatprep.subr.mxu0 0.0
        %1615 = vmatpush1.msra.mxu0 0.0
        %1616 = vmatprep.subr.mxu0 0.0
        %1617 = vmatpush1.msra.mxu0 0.0
        %1618 = vmatprep.subr.mxu0 0.0
        %1619 = vmatpush1.msra.mxu0 0.0
        %1620 = vmatprep.subr.mxu0 0.0
        %1621 = vmatpush1.msra.mxu0 0.0
        %1622 = vmatprep.subr.mxu0 0.0
        %1623 = vmatpush1.msra.mxu0 0.0
        %1624 = vmatprep.subr.mxu0 0.0
        %1625 = vmatpush1.msra.mxu0 0.0
        %1626 = vmatprep.subr.mxu0 0.0
        %1627 = vmatpush1.msra.mxu0 0.0
        %1628 = vmatprep.subr.mxu0 0.0
        %1629 = vmatpush1.msra.mxu0 0.0
        %1630 = vmatprep.subr.mxu0 0.0
        %1631 = vmatpush1.msra.mxu0 0.0
        %1632 = vmatprep.subr.mxu0 0.0
        %1633 = vmatpush1.msra.mxu0 0.0
        %1634 = vmatprep.subr.mxu0 0.0
        %1635 = vmatpush1.msra.mxu0 0.0
        %1636 = vmatprep.subr.mxu0 0.0
        %1637 = vmatpush1.msra.mxu0 0.0
        %1638 = vmatprep.mubr.f32.mxu0 0.0
        %1639 = vmatmul.mubr.f32.gmra.mrb[0].mxu0 %v1570
        %v1640 = vpop.f32.mrb[0].mxu0
        %v1641 = vadd.f32 %v1567, %v1640
        %v1642 = vpop.f32.mrb[0].mxu0
        %1643 = vdwg.mxu0
        %1645 = vrot.lane.b32.xlu0 %v1641, 112
        %v1646 = vpop.permute.xlu0 %1645
        %v1648 = vmax.f32 %v1641, %v1646
        %1649 = vrot.lane.b32.xlu0 %v1641, 96
        %v1650 = vpop.permute.xlu0 %1649
        %v1652 = vmax.f32 %v1648, %v1650
        %1653 = vrot.lane.b32.xlu0 %v1641, 80
        %v1654 = vpop.permute.xlu0 %1653
        %v1656 = vmax.f32 %v1652, %v1654
        %v1657 = vtanh.pop %v1656
        %1661 = vrot.lane.b32.xlu0 %v1176, 48
        %v1662 = vpop.permute.xlu0 %1661
        %1665 = vrot.lane.b32.xlu0 %v1176, 16
        %v1666 = vpop.permute.xlu0 %1665
        %v1670 = vsel %vm1191, %v1170, %v1178
        %v1671 = vsel %vm1191, %v1186, %v1316
        %v1672 = vsel %vm1191, %v1323, %v1662
        %v1673 = vsel %vm1191, %v1558, %v1666
        %v1674 = vsel %vm1191, %v1188, %v1318
        %1676 = vset.pattern.permute.xlu0 0
        %1677 = vperm.xlu0 %1676, %v1098
        %v1678 = vpop.permute.xlu0 %1677
        %vm1680 = vcmask 392192
        %v1682 = vsel %vm1680, %v1097, 0
        %1684 = vmatprep.subr.mxu0 0.0
        %1685 = vmatpush1.msra.mxu0 %v1670
        %1686 = vmatprep.subr.mxu0 0.0
        %1687 = vmatpush1.msra.mxu0 %v1671
        %1688 = vmatprep.subr.mxu0 0.0
        %1689 = vmatpush1.msra.mxu0 %v1672
        %1690 = vmatprep.subr.mxu0 0.0
        %1691 = vmatpush1.msra.mxu0 %v1673
        %1692 = vmatprep.subr.mxu0 0.0
        %1693 = vmatpush1.msra.mxu0 %v1193
        %1694 = vmatprep.subr.mxu0 0.0
        %1695 = vmatpush1.msra.mxu0 %v1674
        %1696 = vmatprep.subr.mxu0 0.0
        %1697 = vmatpush1.msra.mxu0 0.0
        %1698 = vmatprep.subr.mxu0 0.0
        %1699 = vmatpush1.msra.mxu0 0.0
        %1700 = vmatprep.subr.mxu0 0.0
        %1701 = vmatpush1.msra.mxu0 0.0
        %1702 = vmatprep.subr.mxu0 0.0
        %1703 = vmatpush1.msra.mxu0 0.0
        %1704 = vmatprep.subr.mxu0 0.0
        %1705 = vmatpush1.msra.mxu0 0.0
        %1706 = vmatprep.subr.mxu0 0.0
        %1707 = vmatpush1.msra.mxu0 0.0
        %1708 = vmatprep.subr.mxu0 0.0
        %1709 = vmatpush1.msra.mxu0 0.0
        %1710 = vmatprep.subr.mxu0 0.0
        %1711 = vmatpush1.msra.mxu0 0.0
        %1712 = vmatprep.subr.mxu0 0.0
        %1713 = vmatpush1.msra.mxu0 0.0
        %1714 = vmatprep.subr.mxu0 0.0
        %1715 = vmatpush1.msra.mxu0 0.0
        %1716 = vmatprep.subr.mxu0 0.0
        %1717 = vmatpush1.msra.mxu0 0.0
        %1718 = vmatprep.subr.mxu0 0.0
        %1719 = vmatpush1.msra.mxu0 0.0
        %1720 = vmatprep.subr.mxu0 0.0
        %1721 = vmatpush1.msra.mxu0 0.0
        %1722 = vmatprep.subr.mxu0 0.0
        %1723 = vmatpush1.msra.mxu0 0.0
        %1724 = vmatprep.subr.mxu0 0.0
        %1725 = vmatpush1.msra.mxu0 0.0
        %1726 = vmatprep.subr.mxu0 0.0
        %1727 = vmatpush1.msra.mxu0 0.0
        %1728 = vmatprep.subr.mxu0 0.0
        %1729 = vmatpush1.msra.mxu0 0.0
        %1730 = vmatprep.subr.mxu0 0.0
        %1731 = vmatpush1.msra.mxu0 0.0
        %1732 = vmatprep.subr.mxu0 0.0
        %1733 = vmatpush1.msra.mxu0 0.0
        %1734 = vmatprep.subr.mxu0 0.0
        %1735 = vmatpush1.msra.mxu0 0.0
        %1736 = vmatprep.subr.mxu0 0.0
        %1737 = vmatpush1.msra.mxu0 0.0
        %1738 = vmatprep.subr.mxu0 0.0
        %1739 = vmatpush1.msra.mxu0 0.0
        %1740 = vmatprep.subr.mxu0 0.0
        %1741 = vmatpush1.msra.mxu0 0.0
        %1742 = vmatprep.subr.mxu0 0.0
        %1743 = vmatpush1.msra.mxu0 0.0
        %1744 = vmatprep.subr.mxu0 0.0
        %1745 = vmatpush1.msra.mxu0 0.0
        %1746 = vmatprep.subr.mxu0 0.0
        %1747 = vmatpush1.msra.mxu0 0.0
        %1748 = vmatprep.mubr.f32.mxu0 0.0
        %1749 = vmatmul.mubr.f32.gmra.mrb[0].mxu0 %v1682
        %v1750 = vpop.f32.mrb[0].mxu0
        %v1751 = vadd.f32 %v1678, %v1750
        %v1752 = vpop.f32.mrb[0].mxu0
        %1753 = vdwg.mxu0
        %v1754 = vtanh.pop %v1751
        %v1755 = vtanh.pop %v1313
        %v1756 = vtanh.pop %v1439
        %v1757 = vtanh.pop %v1552
        %v1758 = vtanh.pop %v1657
        %v1759 = vtanh.pop %v1754
        %1761 = vset.pattern.permute.xlu0 0
        %1762 = vperm.xlu0 %1761, %v1103
        %v1763 = vpop.permute.xlu0 %1762
        %1766 = vset.pattern.permute.xlu0 0
        %1767 = vperm.xlu0 %1766, %v1104
        %v1768 = vpop.permute.xlu0 %1767
        %1771 = vset.pattern.permute.xlu0 0
        %1772 = vperm.xlu0 %1771, %v1105
        %v1773 = vpop.permute.xlu0 %1772
        %1776 = vset.pattern.permute.xlu0 0
        %1777 = vperm.xlu0 %1776, %v1106
        %v1778 = vpop.permute.xlu0 %1777
        %vm1780 = vcmask 326656
        %v1782 = vsel %vm1780, %v1099, 0
        %v1785 = vsel %vm1780, %v1100, 0
        %v1788 = vsel %vm1780, %v1101, 0
        %v1791 = vsel %vm1780, %v1102, 0
        %1793 = vmatprep.subr.mxu0 0.0
        %1794 = vmatpush1.msra.mxu0 %v1755
        %1795 = vmatprep.subr.mxu0 0.0
        %1796 = vmatpush1.msra.mxu0 %v1756
        %1797 = vmatprep.subr.mxu0 0.0
        %1798 = vmatpush1.msra.mxu0 %v1757
        %1799 = vmatprep.subr.mxu0 0.0
        %1800 = vmatpush1.msra.mxu0 %v1758
        %1801 = vmatprep.subr.mxu0 0.0
        %1802 = vmatpush1.msra.mxu0 %v1759
        %1803 = vmatprep.subr.mxu0 0.0
        %1804 = vmatpush1.msra.mxu0 0.0
        %1805 = vmatprep.subr.mxu0 0.0
        %1806 = vmatpush1.msra.mxu0 0.0
        %1807 = vmatprep.subr.mxu0 0.0
        %1808 = vmatpush1.msra.mxu0 0.0
        %1809 = vmatprep.subr.mxu0 0.0
        %1810 = vmatpush1.msra.mxu0 0.0
        %1811 = vmatprep.subr.mxu0 0.0
        %1812 = vmatpush1.msra.mxu0 0.0
        %1813 = vmatprep.subr.mxu0 0.0
        %1814 = vmatpush1.msra.mxu0 0.0
        %1815 = vmatprep.subr.mxu0 0.0
        %1816 = vmatpush1.msra.mxu0 0.0
        %1817 = vmatprep.subr.mxu0 0.0
        %1818 = vmatpush1.msra.mxu0 0.0
        %1819 = vmatprep.subr.mxu0 0.0
        %1820 = vmatpush1.msra.mxu0 0.0
        %1821 = vmatprep.subr.mxu0 0.0
        %1822 = vmatpush1.msra.mxu0 0.0
        %1823 = vmatprep.subr.mxu0 0.0
        %1824 = vmatpush1.msra.mxu0 0.0
        %1825 = vmatprep.subr.mxu0 0.0
        %1826 = vmatpush1.msra.mxu0 0.0
        %1827 = vmatprep.subr.mxu0 0.0
        %1828 = vmatpush1.msra.mxu0 0.0
        %1829 = vmatprep.subr.mxu0 0.0
        %1830 = vmatpush1.msra.mxu0 0.0
        %1831 = vmatprep.subr.mxu0 0.0
        %1832 = vmatpush1.msra.mxu0 0.0
        %1833 = vmatprep.subr.mxu0 0.0
        %1834 = vmatpush1.msra.mxu0 0.0
        %1835 = vmatprep.subr.mxu0 0.0
        %1836 = vmatpush1.msra.mxu0 0.0
        %1837 = vmatprep.subr.mxu0 0.0
        %1838 = vmatpush1.msra.mxu0 0.0
        %1839 = vmatprep.subr.mxu0 0.0
        %1840 = vmatpush1.msra.mxu0 0.0
        %1841 = vmatprep.subr.mxu0 0.0
        %1842 = vmatpush1.msra.mxu0 0.0
        %1843 = vmatprep.subr.mxu0 0.0
        %1844 = vmatpush1.msra.mxu0 0.0
        %1845 = vmatprep.subr.mxu0 0.0
        %1846 = vmatpush1.msra.mxu0 0.0
        %1847 = vmatprep.subr.mxu0 0.0
        %1848 = vmatpush1.msra.mxu0 0.0
        %1849 = vmatprep.subr.mxu0 0.0
        %1850 = vmatpush1.msra.mxu0 0.0
        %1851 = vmatprep.subr.mxu0 0.0
        %1852 = vmatpush1.msra.mxu0 0.0
        %1853 = vmatprep.subr.mxu0 0.0
        %1854 = vmatpush1.msra.mxu0 0.0
        %1855 = vmatprep.subr.mxu0 0.0
        %1856 = vmatpush1.msra.mxu0 0.0
        %1857 = vmatprep.mubr.f32.mxu0 0.0
        %1858 = vmatmul.mubr.f32.gmra.mrb[0].mxu0 %v1782
        %v1859 = vpop.f32.mrb[0].mxu0
        %v1860 = vadd.f32 %v1763, %v1859
        %v1861 = vpop.f32.mrb[0].mxu0
        %1862 = vmatprep.mubr.f32.mxu0 0.0
        %1863 = vmatmul.mubr.f32.gmra.mrb[0].mxu0 %v1785
        %v1864 = vpop.f32.mrb[0].mxu0
        %v1865 = vadd.f32 %v1768, %v1864
        %v1866 = vpop.f32.mrb[0].mxu0
        %1867 = vmatprep.mubr.f32.mxu0 0.0
        %1868 = vmatmul.mubr.f32.gmra.mrb[0].mxu0 %v1788
        %v1869 = vpop.f32.mrb[0].mxu0
        %v1870 = vadd.f32 %v1773, %v1869
        %v1871 = vpop.f32.mrb[0].mxu0
        %1872 = vmatprep.mubr.f32.mxu0 0.0
        %1873 = vmatmul.mubr.f32.gmra.mrb[0].mxu0 %v1791
        %v1874 = vpop.f32.mrb[0].mxu0
        %v1875 = vadd.f32 %v1778, %v1874
        %v1876 = vpop.f32.mrb[0].mxu0
        %1877 = vdwg.mxu0
        %1879 = vset.pattern.permute.xlu0 0
        %1880 = vperm.xlu0 %1879, %v1111
        %v1881 = vpop.permute.xlu0 %1880
        %1884 = vset.pattern.permute.xlu0 0
        %1885 = vperm.xlu0 %1884, %v1112
        %v1886 = vpop.permute.xlu0 %1885
        %1889 = vset.pattern.permute.xlu0 0
        %1890 = vperm.xlu0 %1889, %v1113
        %v1891 = vpop.permute.xlu0 %1890
        %1894 = vset.pattern.permute.xlu0 0
        %1895 = vperm.xlu0 %1894, %v1114
        %v1896 = vpop.permute.xlu0 %1895
        %v1899 = vsel %vm1780, %v1107, 0
        %v1902 = vsel %vm1780, %v1108, 0
        %v1905 = vsel %vm1780, %v1109, 0
        %v1908 = vsel %vm1780, %v1110, 0
        %1910 = vmatprep.subr.mxu0 0.0
        %1911 = vmatpush1.msra.mxu0 %v1755
        %1912 = vmatprep.subr.mxu0 0.0
        %1913 = vmatpush1.msra.mxu0 %v1756
        %1914 = vmatprep.subr.mxu0 0.0
        %1915 = vmatpush1.msra.mxu0 %v1757
        %1916 = vmatprep.subr.mxu0 0.0
        %1917 = vmatpush1.msra.mxu0 %v1758
        %1918 = vmatprep.subr.mxu0 0.0
        %1919 = vmatpush1.msra.mxu0 %v1759
        %1920 = vmatprep.subr.mxu0 0.0
        %1921 = vmatpush1.msra.mxu0 0.0
        %1922 = vmatprep.subr.mxu0 0.0
        %1923 = vmatpush1.msra.mxu0 0.0
        %1924 = vmatprep.subr.mxu0 0.0
        %1925 = vmatpush1.msra.mxu0 0.0
        %1926 = vmatprep.subr.mxu0 0.0
        %1927 = vmatpush1.msra.mxu0 0.0
        %1928 = vmatprep.subr.mxu0 0.0
        %1929 = vmatpush1.msra.mxu0 0.0
        %1930 = vmatprep.subr.mxu0 0.0
        %1931 = vmatpush1.msra.mxu0 0.0
        %1932 = vmatprep.subr.mxu0 0.0
        %1933 = vmatpush1.msra.mxu0 0.0
        %1934 = vmatprep.subr.mxu0 0.0
        %1935 = vmatpush1.msra.mxu0 0.0
        %1936 = vmatprep.subr.mxu0 0.0
        %1937 = vmatpush1.msra.mxu0 0.0
        %1938 = vmatprep.subr.mxu0 0.0
        %1939 = vmatpush1.msra.mxu0 0.0
        %1940 = vmatprep.subr.mxu0 0.0
        %1941 = vmatpush1.msra.mxu0 0.0
        %1942 = vmatprep.subr.mxu0 0.0
        %1943 = vmatpush1.msra.mxu0 0.0
        %1944 = vmatprep.subr.mxu0 0.0
        %1945 = vmatpush1.msra.mxu0 0.0
        %1946 = vmatprep.subr.mxu0 0.0
        %1947 = vmatpush1.msra.mxu0 0.0
        %1948 = vmatprep.subr.mxu0 0.0
        %1949 = vmatpush1.msra.mxu0 0.0
        %1950 = vmatprep.subr.mxu0 0.0
        %1951 = vmatpush1.msra.mxu0 0.0
        %1952 = vmatprep.subr.mxu0 0.0
        %1953 = vmatpush1.msra.mxu0 0.0
        %1954 = vmatprep.subr.mxu0 0.0
        %1955 = vmatpush1.msra.mxu0 0.0
        %1956 = vmatprep.subr.mxu0 0.0
        %1957 = vmatpush1.msra.mxu0 0.0
        %1958 = vmatprep.subr.mxu0 0.0
        %1959 = vmatpush1.msra.mxu0 0.0
        %1960 = vmatprep.subr.mxu0 0.0
        %1961 = vmatpush1.msra.mxu0 0.0
        %1962 = vmatprep.subr.mxu0 0.0
        %1963 = vmatpush1.msra.mxu0 0.0
        %1964 = vmatprep.subr.mxu0 0.0
        %1965 = vmatpush1.msra.mxu0 0.0
        %1966 = vmatprep.subr.mxu0 0.0
        %1967 = vmatpush1.msra.mxu0 0.0
        %1968 = vmatprep.subr.mxu0 0.0
        %1969 = vmatpush1.msra.mxu0 0.0
        %1970 = vmatprep.subr.mxu0 0.0
        %1971 = vmatpush1.msra.mxu0 0.0
        %1972 = vmatprep.subr.mxu0 0.0
        %1973 = vmatpush1.msra.mxu0 0.0
        %1974 = vmatprep.mubr.f32.mxu0 0.0
        %1975 = vmatmul.mubr.f32.gmra.mrb[0].mxu0 %v1899
        %v1976 = vpop.f32.mrb[0].mxu0
        %v1977 = vadd.f32 %v1881, %v1976
        %v1978 = vpop.f32.mrb[0].mxu0
        %1979 = vmatprep.mubr.f32.mxu0 0.0
        %1980 = vmatmul.mubr.f32.gmra.mrb[0].mxu0 %v1902
        %v1981 = vpop.f32.mrb[0].mxu0
        %v1982 = vadd.f32 %v1886, %v1981
        %v1983 = vpop.f32.mrb[0].mxu0
        %1984 = vmatprep.mubr.f32.mxu0 0.0
        %1985 = vmatmul.mubr.f32.gmra.mrb[0].mxu0 %v1905
        %v1986 = vpop.f32.mrb[0].mxu0
        %v1987 = vadd.f32 %v1891, %v1986
        %v1988 = vpop.f32.mrb[0].mxu0
        %1989 = vmatprep.mubr.f32.mxu0 0.0
        %1990 = vmatmul.mubr.f32.gmra.mrb[0].mxu0 %v1908
        %v1991 = vpop.f32.mrb[0].mxu0
        %v1992 = vadd.f32 %v1896, %v1991
        %v1993 = vpop.f32.mrb[0].mxu0
        %1994 = vdwg.mxu0
        %1995 = vxpose.xlu0.b32.start [1/16] %v1860, 128
        %1996 = vxpose.xlu0.b32.cont [2/16] %v1865, 128
        %1997 = vxpose.xlu0.b32.cont [3/16] %v1870, 128
        %1998 = vxpose.xlu0.b32.cont [4/16] %v1875, 128
        %1999 = vxpose.xlu0.b32.cont [5/16] 0.0, 128
        %2000 = vxpose.xlu0.b32.cont [6/16] 0.0, 128
        %2001 = vxpose.xlu0.b32.cont [7/16] 0.0, 128
        %2002 = vxpose.xlu0.b32.cont [8/16] 0.0, 128
        %2003 = vxpose.xlu0.b32.cont [9/16] 0.0, 128
        %2004 = vxpose.xlu0.b32.cont [10/16] 0.0, 128
        %2005 = vxpose.xlu0.b32.cont [11/16] 0.0, 128
        %2006 = vxpose.xlu0.b32.cont [12/16] 0.0, 128
        %2007 = vxpose.xlu0.b32.cont [13/16] 0.0, 128
        %2008 = vxpose.xlu0.b32.cont [14/16] 0.0, 128
        %2009 = vxpose.xlu0.b32.cont [15/16] 0.0, 128
        %2010 = vxpose.xlu0.b32.end [16/16] 0.0, 128
        %v2011 = vpop.trf.xlu0
        %v2012 = vpop.trf.xlu0
        %v2013 = vpop.trf.xlu0
        %v2014 = vpop.trf.xlu0
        %v2015 = vpop.trf.xlu0
        %v2016 = vpop.trf.xlu0
        %v2017 = vpop.trf.xlu0
        %v2018 = vpop.trf.xlu0
        %v2019 = vpop.trf.xlu0
        %v2020 = vpop.trf.xlu0
        %v2021 = vpop.trf.xlu0
        %v2022 = vpop.trf.xlu0
        %v2023 = vpop.trf.xlu0
        %v2024 = vpop.trf.xlu0
        %v2025 = vpop.trf.xlu0
        %v2026 = vpop.trf.xlu0
        %v2028 = vsel %vm1559, %v2011, 0
        %v2031 = vsel %vm1559, %v2012, 0
        %2033 = vmatprep.subr.mxu0 0.0
        %2034 = vmatpush1.msra.mxu0 %v1977
        %2035 = vmatprep.subr.mxu0 0.0
        %2036 = vmatpush1.msra.mxu0 %v1982
        %2037 = vmatprep.subr.mxu0 0.0
        %2038 = vmatpush1.msra.mxu0 %v1987
        %2039 = vmatprep.subr.mxu0 0.0
        %2040 = vmatpush1.msra.mxu0 %v1992
        %2041 = vmatprep.subr.mxu0 0.0
        %2042 = vmatpush1.msra.mxu0 0.0
        %2043 = vmatprep.subr.mxu0 0.0
        %2044 = vmatpush1.msra.mxu0 0.0
        %2045 = vmatprep.subr.mxu0 0.0
        %2046 = vmatpush1.msra.mxu0 0.0
        %2047 = vmatprep.subr.mxu0 0.0
        %2048 = vmatpush1.msra.mxu0 0.0
        %2049 = vmatprep.subr.mxu0 0.0
        %2050 = vmatpush1.msra.mxu0 0.0
        %2051 = vmatprep.subr.mxu0 0.0
        %2052 = vmatpush1.msra.mxu0 0.0
        %2053 = vmatprep.subr.mxu0 0.0
        %2054 = vmatpush1.msra.mxu0 0.0
        %2055 = vmatprep.subr.mxu0 0.0
        %2056 = vmatpush1.msra.mxu0 0.0
        %2057 = vmatprep.subr.mxu0 0.0
        %2058 = vmatpush1.msra.mxu0 0.0
        %2059 = vmatprep.subr.mxu0 0.0
        %2060 = vmatpush1.msra.mxu0 0.0
        %2061 = vmatprep.subr.mxu0 0.0
        %2062 = vmatpush1.msra.mxu0 0.0
        %2063 = vmatprep.subr.mxu0 0.0
        %2064 = vmatpush1.msra.mxu0 0.0
        %2065 = vmatprep.subr.mxu0 0.0
        %2066 = vmatpush1.msra.mxu0 0.0
        %2067 = vmatprep.subr.mxu0 0.0
        %2068 = vmatpush1.msra.mxu0 0.0
        %2069 = vmatprep.subr.mxu0 0.0
        %2070 = vmatpush1.msra.mxu0 0.0
        %2071 = vmatprep.subr.mxu0 0.0
        %2072 = vmatpush1.msra.mxu0 0.0
        %2073 = vmatprep.subr.mxu0 0.0
        %2074 = vmatpush1.msra.mxu0 0.0
        %2075 = vmatprep.subr.mxu0 0.0
        %2076 = vmatpush1.msra.mxu0 0.0
        %2077 = vmatprep.subr.mxu0 0.0
        %2078 = vmatpush1.msra.mxu0 0.0
        %2079 = vmatprep.subr.mxu0 0.0
        %2080 = vmatpush1.msra.mxu0 0.0
        %2081 = vmatprep.subr.mxu0 0.0
        %2082 = vmatpush1.msra.mxu0 0.0
        %2083 = vmatprep.subr.mxu0 0.0
        %2084 = vmatpush1.msra.mxu0 0.0
        %2085 = vmatprep.subr.mxu0 0.0
        %2086 = vmatpush1.msra.mxu0 0.0
        %2087 = vmatprep.subr.mxu0 0.0
        %2088 = vmatpush1.msra.mxu0 0.0
        %2089 = vmatprep.subr.mxu0 0.0
        %2090 = vmatpush1.msra.mxu0 0.0
        %2091 = vmatprep.subr.mxu0 0.0
        %2092 = vmatpush1.msra.mxu0 0.0
        %2093 = vmatprep.subr.mxu0 0.0
        %2094 = vmatpush1.msra.mxu0 0.0
        %2095 = vmatprep.subr.mxu0 0.0
        %2096 = vmatpush1.msra.mxu0 0.0
        %2097 = vmatprep.mubr.f32.mxu0 0.0
        %2098 = vmatmul.mubr.f32.gmra.mrb[0].mxu0 %v2028
        %v2099 = vpop.f32.mrb[0].mxu0
        %v2100 = vadd.f32 0.0, %v2099
        %v2101 = vpop.f32.mrb[0].mxu0
        %2102 = vmatprep.mubr.f32.mxu0 0.0
        %2103 = vmatmul.mubr.f32.gmra.mrb[0].mxu0 %v2031
        %v2104 = vpop.f32.mrb[0].mxu0
        %v2105 = vadd.f32 0.0, %v2104
        %v2106 = vpop.f32.mrb[0].mxu0
        %2107 = vdwg.mxu0
        %v2108 = vmul.f32 %v2100, %v2100
        %v2109 = vmul.f32 %v2105, %v2105
        %vm2110 = vcmask 130048
        %v2111 = vsel %vm2110, %v2108, 0.0
        %2112 = vadd.xlane.f32.xlu0 %v2111
        %v2113 = vpop.xlane.xlu0 %2112
        %v2114 = vsel %vm2110, %v2109, 0.0
        %2115 = vadd.xlane.f32.xlu0 %v2114
        %v2116 = vpop.xlane.xlu0 %2115
        %v2117 = vmax.f32 %v2113, 1e-24
        %v2118 = vmax.f32 %v2116, 1e-24
        %v2119 = vrsqrt.pop %v2117
        %v2120 = vrsqrt.pop %v2118
        %v2121 = vmul.f32 %v2100, %v2119
        %v2122 = vmul.f32 %v2105, %v2120
        %v2124 = vsel %vm2110, 1.0, 0
        %v2127 = vsel %vm2110, %v2121, 0
        %v2130 = vsel %vm2110, %v2122, 0
        %2132 = vmatprep.subr.mxu0 0.0
        %2133 = vmatpush1.xpose.msra.mxu0 %v2127
        %2134 = vmatprep.subr.mxu0 0.0
        %2135 = vmatpush1.xpose.msra.mxu0 %v2130
        %2136 = vmatprep.subr.mxu0 0.0
        %2137 = vmatpush1.xpose.msra.mxu0 0.0
        %2138 = vmatprep.subr.mxu0 0.0
        %2139 = vmatpush1.xpose.msra.mxu0 0.0
        %2140 = vmatprep.subr.mxu0 0.0
        %2141 = vmatpush1.xpose.msra.mxu0 0.0
        %2142 = vmatprep.subr.mxu0 0.0
        %2143 = vmatpush1.xpose.msra.mxu0 0.0
        %2144 = vmatprep.subr.mxu0 0.0
        %2145 = vmatpush1.xpose.msra.mxu0 0.0
        %2146 = vmatprep.subr.mxu0 0.0
        %2147 = vmatpush1.xpose.msra.mxu0 0.0
        %2148 = vmatprep.subr.mxu0 0.0
        %2149 = vmatpush1.xpose.msra.mxu0 0.0
        %2150 = vmatprep.subr.mxu0 0.0
        %2151 = vmatpush1.xpose.msra.mxu0 0.0
        %2152 = vmatprep.subr.mxu0 0.0
        %2153 = vmatpush1.xpose.msra.mxu0 0.0
        %2154 = vmatprep.subr.mxu0 0.0
        %2155 = vmatpush1.xpose.msra.mxu0 0.0
        %2156 = vmatprep.subr.mxu0 0.0
        %2157 = vmatpush1.xpose.msra.mxu0 0.0
        %2158 = vmatprep.subr.mxu0 0.0
        %2159 = vmatpush1.xpose.msra.mxu0 0.0
        %2160 = vmatprep.subr.mxu0 0.0
        %2161 = vmatpush1.xpose.msra.mxu0 0.0
        %2162 = vmatprep.subr.mxu0 0.0
        %2163 = vmatpush1.xpose.msra.mxu0 0.0
        %2164 = vmatprep.subr.mxu0 0.0
        %2165 = vmatpush1.xpose.msra.mxu0 0.0
        %2166 = vmatprep.subr.mxu0 0.0
        %2167 = vmatpush1.xpose.msra.mxu0 0.0
        %2168 = vmatprep.subr.mxu0 0.0
        %2169 = vmatpush1.xpose.msra.mxu0 0.0
        %2170 = vmatprep.subr.mxu0 0.0
        %2171 = vmatpush1.xpose.msra.mxu0 0.0
        %2172 = vmatprep.subr.mxu0 0.0
        %2173 = vmatpush1.xpose.msra.mxu0 0.0
        %2174 = vmatprep.subr.mxu0 0.0
        %2175 = vmatpush1.xpose.msra.mxu0 0.0
        %2176 = vmatprep.subr.mxu0 0.0
        %2177 = vmatpush1.xpose.msra.mxu0 0.0
        %2178 = vmatprep.subr.mxu0 0.0
        %2179 = vmatpush1.xpose.msra.mxu0 0.0
        %2180 = vmatprep.subr.mxu0 0.0
        %2181 = vmatpush1.xpose.msra.mxu0 0.0
        %2182 = vmatprep.subr.mxu0 0.0
        %2183 = vmatpush1.xpose.msra.mxu0 0.0
        %2184 = vmatprep.subr.mxu0 0.0
        %2185 = vmatpush1.xpose.msra.mxu0 0.0
        %2186 = vmatprep.subr.mxu0 0.0
        %2187 = vmatpush1.xpose.msra.mxu0 0.0
        %2188 = vmatprep.subr.mxu0 0.0
        %2189 = vmatpush1.xpose.msra.mxu0 0.0
        %2190 = vmatprep.subr.mxu0 0.0
        %2191 = vmatpush1.xpose.msra.mxu0 0.0
        %2192 = vmatprep.subr.mxu0 0.0
        %2193 = vmatpush1.xpose.msra.mxu0 0.0
        %2194 = vmatprep.subr.mxu0 0.0
        %2195 = vmatpush1.xpose.msra.mxu0 0.0
        %2196 = vmatprep.mubr.f32.mxu0 0.0
        %2197 = vmatmul.mubr.f32.gmra.mrb[0].mxu0 %v2124
        %v2198 = vpop.f32.mrb[0].mxu0
        %v2199 = vadd.f32 0.0, %v2198
        %v2200 = vpop.f32.mrb[0].mxu0
        %2201 = vdwg.mxu0
        %2203 = vset.pattern.permute.xlu0 0
        %2204 = vperm.xlu0 %2203, %v1120
        %v2205 = vpop.permute.xlu0 %2204
        %2208 = vset.pattern.permute.xlu0 0
        %2209 = vperm.xlu0 %2208, %v1121
        %v2210 = vpop.permute.xlu0 %2209
        %2213 = vset.pattern.permute.xlu0 0
        %2214 = vperm.xlu0 %2213, %v1122
        %v2215 = vpop.permute.xlu0 %2214
        %2218 = vset.pattern.permute.xlu0 0
        %2219 = vperm.xlu0 %2218, %v1123
        %v2220 = vpop.permute.xlu0 %2219
        %2223 = vset.pattern.permute.xlu0 0
        %2224 = vperm.xlu0 %2223, %v1124
        %v2225 = vpop.permute.xlu0 %2224
        %vm2227 = vcmask 7168
        %v2229 = vsel %vm2227, %v1115, 0
        %v2232 = vsel %vm2227, %v1116, 0
        %v2235 = vsel %vm2227, %v1117, 0
        %v2238 = vsel %vm2227, %v1118, 0
        %v2241 = vsel %vm2227, %v1119, 0
        %vm2243 = vcmask 1040384
        %v2245 = vsel %vm2243, %v2199, 0
        %2247 = vmatprep.subr.mxu0 0.0
        %2248 = vmatpush1.msra.mxu0 %v2245
        %2249 = vmatprep.subr.mxu0 0.0
        %2250 = vmatpush1.msra.mxu0 0.0
        %2251 = vmatprep.subr.mxu0 0.0
        %2252 = vmatpush1.msra.mxu0 0.0
        %2253 = vmatprep.subr.mxu0 0.0
        %2254 = vmatpush1.msra.mxu0 0.0
        %2255 = vmatprep.subr.mxu0 0.0
        %2256 = vmatpush1.msra.mxu0 0.0
        %2257 = vmatprep.subr.mxu0 0.0
        %2258 = vmatpush1.msra.mxu0 0.0
        %2259 = vmatprep.subr.mxu0 0.0
        %2260 = vmatpush1.msra.mxu0 0.0
        %2261 = vmatprep.subr.mxu0 0.0
        %2262 = vmatpush1.msra.mxu0 0.0
        %2263 = vmatprep.subr.mxu0 0.0
        %2264 = vmatpush1.msra.mxu0 0.0
        %2265 = vmatprep.subr.mxu0 0.0
        %2266 = vmatpush1.msra.mxu0 0.0
        %2267 = vmatprep.subr.mxu0 0.0
        %2268 = vmatpush1.msra.mxu0 0.0
        %2269 = vmatprep.subr.mxu0 0.0
        %2270 = vmatpush1.msra.mxu0 0.0
        %2271 = vmatprep.subr.mxu0 0.0
        %2272 = vmatpush1.msra.mxu0 0.0
        %2273 = vmatprep.subr.mxu0 0.0
        %2274 = vmatpush1.msra.mxu0 0.0
        %2275 = vmatprep.subr.mxu0 0.0
        %2276 = vmatpush1.msra.mxu0 0.0
        %2277 = vmatprep.subr.mxu0 0.0
        %2278 = vmatpush1.msra.mxu0 0.0
        %2279 = vmatprep.subr.mxu0 0.0
        %2280 = vmatpush1.msra.mxu0 0.0
        %2281 = vmatprep.subr.mxu0 0.0
        %2282 = vmatpush1.msra.mxu0 0.0
        %2283 = vmatprep.subr.mxu0 0.0
        %2284 = vmatpush1.msra.mxu0 0.0
        %2285 = vmatprep.subr.mxu0 0.0
        %2286 = vmatpush1.msra.mxu0 0.0
        %2287 = vmatprep.subr.mxu0 0.0
        %2288 = vmatpush1.msra.mxu0 0.0
        %2289 = vmatprep.subr.mxu0 0.0
        %2290 = vmatpush1.msra.mxu0 0.0
        %2291 = vmatprep.subr.mxu0 0.0
        %2292 = vmatpush1.msra.mxu0 0.0
        %2293 = vmatprep.subr.mxu0 0.0
        %2294 = vmatpush1.msra.mxu0 0.0
        %2295 = vmatprep.subr.mxu0 0.0
        %2296 = vmatpush1.msra.mxu0 0.0
        %2297 = vmatprep.subr.mxu0 0.0
        %2298 = vmatpush1.msra.mxu0 0.0
        %2299 = vmatprep.subr.mxu0 0.0
        %2300 = vmatpush1.msra.mxu0 0.0
        %2301 = vmatprep.subr.mxu0 0.0
        %2302 = vmatpush1.msra.mxu0 0.0
        %2303 = vmatprep.subr.mxu0 0.0
        %2304 = vmatpush1.msra.mxu0 0.0
        %2305 = vmatprep.subr.mxu0 0.0
        %2306 = vmatpush1.msra.mxu0 0.0
        %2307 = vmatprep.subr.mxu0 0.0
        %2308 = vmatpush1.msra.mxu0 0.0
        %2309 = vmatprep.subr.mxu0 0.0
        %2310 = vmatpush1.msra.mxu0 0.0
        %2311 = vmatprep.mubr.f32.mxu0 0.0
        %2312 = vmatmul.mubr.f32.gmra.mrb[0].mxu0 %v2229
        %v2313 = vpop.f32.mrb[0].mxu0
        %v2314 = vadd.f32 %v2205, %v2313
        %v2315 = vpop.f32.mrb[0].mxu0
        %2316 = vmatprep.mubr.f32.mxu0 0.0
        %2317 = vmatmul.mubr.f32.gmra.mrb[0].mxu0 %v2232
        %v2318 = vpop.f32.mrb[0].mxu0
        %v2319 = vadd.f32 %v2210, %v2318
        %v2320 = vpop.f32.mrb[0].mxu0
        %2321 = vmatprep.mubr.f32.mxu0 0.0
        %2322 = vmatmul.mubr.f32.gmra.mrb[0].mxu0 %v2235
        %v2323 = vpop.f32.mrb[0].mxu0
        %v2324 = vadd.f32 %v2215, %v2323
        %v2325 = vpop.f32.mrb[0].mxu0
        %2326 = vmatprep.mubr.f32.mxu0 0.0
        %2327 = vmatmul.mubr.f32.gmra.mrb[0].mxu0 %v2238
        %v2328 = vpop.f32.mrb[0].mxu0
        %v2329 = vadd.f32 %v2220, %v2328
        %v2330 = vpop.f32.mrb[0].mxu0
        %2331 = vmatprep.mubr.f32.mxu0 0.0
        %2332 = vmatmul.mubr.f32.gmra.mrb[0].mxu0 %v2241
        %v2333 = vpop.f32.mrb[0].mxu0
        %v2334 = vadd.f32 %v2225, %v2333
        %v2335 = vpop.f32.mrb[0].mxu0
        %2336 = vdwg.mxu0
        %v2338 = vsel %vm2110, %v1171, 0
        %v2341 = vsel %vm2110, %v1172, 0
        %2343 = vmatprep.subr.mxu0 0.0
        %2344 = vmatpush1.xpose.msra.mxu0 %v2338
        %2345 = vmatprep.subr.mxu0 0.0
        %2346 = vmatpush1.xpose.msra.mxu0 %v2341
        %2347 = vmatprep.subr.mxu0 0.0
        %2348 = vmatpush1.xpose.msra.mxu0 0.0
        %2349 = vmatprep.subr.mxu0 0.0
        %2350 = vmatpush1.xpose.msra.mxu0 0.0
        %2351 = vmatprep.subr.mxu0 0.0
        %2352 = vmatpush1.xpose.msra.mxu0 0.0
        %2353 = vmatprep.subr.mxu0 0.0
        %2354 = vmatpush1.xpose.msra.mxu0 0.0
        %2355 = vmatprep.subr.mxu0 0.0
        %2356 = vmatpush1.xpose.msra.mxu0 0.0
        %2357 = vmatprep.subr.mxu0 0.0
        %2358 = vmatpush1.xpose.msra.mxu0 0.0
        %2359 = vmatprep.subr.mxu0 0.0
        %2360 = vmatpush1.xpose.msra.mxu0 0.0
        %2361 = vmatprep.subr.mxu0 0.0
        %2362 = vmatpush1.xpose.msra.mxu0 0.0
        %2363 = vmatprep.subr.mxu0 0.0
        %2364 = vmatpush1.xpose.msra.mxu0 0.0
        %2365 = vmatprep.subr.mxu0 0.0
        %2366 = vmatpush1.xpose.msra.mxu0 0.0
        %2367 = vmatprep.subr.mxu0 0.0
        %2368 = vmatpush1.xpose.msra.mxu0 0.0
        %2369 = vmatprep.subr.mxu0 0.0
        %2370 = vmatpush1.xpose.msra.mxu0 0.0
        %2371 = vmatprep.subr.mxu0 0.0
        %2372 = vmatpush1.xpose.msra.mxu0 0.0
        %2373 = vmatprep.subr.mxu0 0.0
        %2374 = vmatpush1.xpose.msra.mxu0 0.0
        %2375 = vmatprep.subr.mxu0 0.0
        %2376 = vmatpush1.xpose.msra.mxu0 0.0
        %2377 = vmatprep.subr.mxu0 0.0
        %2378 = vmatpush1.xpose.msra.mxu0 0.0
        %2379 = vmatprep.subr.mxu0 0.0
        %2380 = vmatpush1.xpose.msra.mxu0 0.0
        %2381 = vmatprep.subr.mxu0 0.0
        %2382 = vmatpush1.xpose.msra.mxu0 0.0
        %2383 = vmatprep.subr.mxu0 0.0
        %2384 = vmatpush1.xpose.msra.mxu0 0.0
        %2385 = vmatprep.subr.mxu0 0.0
        %2386 = vmatpush1.xpose.msra.mxu0 0.0
        %2387 = vmatprep.subr.mxu0 0.0
        %2388 = vmatpush1.xpose.msra.mxu0 0.0
        %2389 = vmatprep.subr.mxu0 0.0
        %2390 = vmatpush1.xpose.msra.mxu0 0.0
        %2391 = vmatprep.subr.mxu0 0.0
        %2392 = vmatpush1.xpose.msra.mxu0 0.0
        %2393 = vmatprep.subr.mxu0 0.0
        %2394 = vmatpush1.xpose.msra.mxu0 0.0
        %2395 = vmatprep.subr.mxu0 0.0
        %2396 = vmatpush1.xpose.msra.mxu0 0.0
        %2397 = vmatprep.subr.mxu0 0.0
        %2398 = vmatpush1.xpose.msra.mxu0 0.0
        %2399 = vmatprep.subr.mxu0 0.0
        %2400 = vmatpush1.xpose.msra.mxu0 0.0
        %2401 = vmatprep.subr.mxu0 0.0
        %2402 = vmatpush1.xpose.msra.mxu0 0.0
        %2403 = vmatprep.subr.mxu0 0.0
        %2404 = vmatpush1.xpose.msra.mxu0 0.0
        %2405 = vmatprep.subr.mxu0 0.0
        %2406 = vmatpush1.xpose.msra.mxu0 0.0
        %2407 = vmatprep.mubr.f32.mxu0 0.0
        %2408 = vmatmul.mubr.f32.gmra.mrb[0].mxu0 %v2124
        %v2409 = vpop.f32.mrb[0].mxu0
        %v2410 = vadd.f32 0.0, %v2409
        %v2411 = vpop.f32.mrb[0].mxu0
        %2412 = vdwg.mxu0
        %2414 = vset.pattern.permute.xlu0 0
        %2415 = vperm.xlu0 %2414, %v1130
        %v2416 = vpop.permute.xlu0 %2415
        %2419 = vset.pattern.permute.xlu0 0
        %2420 = vperm.xlu0 %2419, %v1131
        %v2421 = vpop.permute.xlu0 %2420
        %2424 = vset.pattern.permute.xlu0 0
        %2425 = vperm.xlu0 %2424, %v1132
        %v2426 = vpop.permute.xlu0 %2425
        %2429 = vset.pattern.permute.xlu0 0
        %2430 = vperm.xlu0 %2429, %v1133
        %v2431 = vpop.permute.xlu0 %2430
        %2434 = vset.pattern.permute.xlu0 0
        %2435 = vperm.xlu0 %2434, %v1134
        %v2436 = vpop.permute.xlu0 %2435
        %v2439 = vsel %vm2227, %v1125, 0
        %v2442 = vsel %vm2227, %v1126, 0
        %v2445 = vsel %vm2227, %v1127, 0
        %v2448 = vsel %vm2227, %v1128, 0
        %v2451 = vsel %vm2227, %v1129, 0
        %v2454 = vsel %vm2243, %v2410, 0
        %2456 = vmatprep.subr.mxu0 0.0
        %2457 = vmatpush1.msra.mxu0 %v2454
        %2458 = vmatprep.subr.mxu0 0.0
        %2459 = vmatpush1.msra.mxu0 0.0
        %2460 = vmatprep.subr.mxu0 0.0
        %2461 = vmatpush1.msra.mxu0 0.0
        %2462 = vmatprep.subr.mxu0 0.0
        %2463 = vmatpush1.msra.mxu0 0.0
        %2464 = vmatprep.subr.mxu0 0.0
        %2465 = vmatpush1.msra.mxu0 0.0
        %2466 = vmatprep.subr.mxu0 0.0
        %2467 = vmatpush1.msra.mxu0 0.0
        %2468 = vmatprep.subr.mxu0 0.0
        %2469 = vmatpush1.msra.mxu0 0.0
        %2470 = vmatprep.subr.mxu0 0.0
        %2471 = vmatpush1.msra.mxu0 0.0
        %2472 = vmatprep.subr.mxu0 0.0
        %2473 = vmatpush1.msra.mxu0 0.0
        %2474 = vmatprep.subr.mxu0 0.0
        %2475 = vmatpush1.msra.mxu0 0.0
        %2476 = vmatprep.subr.mxu0 0.0
        %2477 = vmatpush1.msra.mxu0 0.0
        %2478 = vmatprep.subr.mxu0 0.0
        %2479 = vmatpush1.msra.mxu0 0.0
        %2480 = vmatprep.subr.mxu0 0.0
        %2481 = vmatpush1.msra.mxu0 0.0
        %2482 = vmatprep.subr.mxu0 0.0
        %2483 = vmatpush1.msra.mxu0 0.0
        %2484 = vmatprep.subr.mxu0 0.0
        %2485 = vmatpush1.msra.mxu0 0.0
        %2486 = vmatprep.subr.mxu0 0.0
        %2487 = vmatpush1.msra.mxu0 0.0
        %2488 = vmatprep.subr.mxu0 0.0
        %2489 = vmatpush1.msra.mxu0 0.0
        %2490 = vmatprep.subr.mxu0 0.0
        %2491 = vmatpush1.msra.mxu0 0.0
        %2492 = vmatprep.subr.mxu0 0.0
        %2493 = vmatpush1.msra.mxu0 0.0
        %2494 = vmatprep.subr.mxu0 0.0
        %2495 = vmatpush1.msra.mxu0 0.0
        %2496 = vmatprep.subr.mxu0 0.0
        %2497 = vmatpush1.msra.mxu0 0.0
        %2498 = vmatprep.subr.mxu0 0.0
        %2499 = vmatpush1.msra.mxu0 0.0
        %2500 = vmatprep.subr.mxu0 0.0
        %2501 = vmatpush1.msra.mxu0 0.0
        %2502 = vmatprep.subr.mxu0 0.0
        %2503 = vmatpush1.msra.mxu0 0.0
        %2504 = vmatprep.subr.mxu0 0.0
        %2505 = vmatpush1.msra.mxu0 0.0
        %2506 = vmatprep.subr.mxu0 0.0
        %2507 = vmatpush1.msra.mxu0 0.0
        %2508 = vmatprep.subr.mxu0 0.0
        %2509 = vmatpush1.msra.mxu0 0.0
        %2510 = vmatprep.subr.mxu0 0.0
        %2511 = vmatpush1.msra.mxu0 0.0
        %2512 = vmatprep.subr.mxu0 0.0
        %2513 = vmatpush1.msra.mxu0 0.0
        %2514 = vmatprep.subr.mxu0 0.0
        %2515 = vmatpush1.msra.mxu0 0.0
        %2516 = vmatprep.subr.mxu0 0.0
        %2517 = vmatpush1.msra.mxu0 0.0
        %2518 = vmatprep.subr.mxu0 0.0
        %2519 = vmatpush1.msra.mxu0 0.0
        %2520 = vmatprep.mubr.f32.mxu0 0.0
        %2521 = vmatmul.mubr.f32.gmra.mrb[0].mxu0 %v2439
        %v2522 = vpop.f32.mrb[0].mxu0
        %v2523 = vadd.f32 %v2416, %v2522
        %v2524 = vpop.f32.mrb[0].mxu0
        %2525 = vmatprep.mubr.f32.mxu0 0.0
        %2526 = vmatmul.mubr.f32.gmra.mrb[0].mxu0 %v2442
        %v2527 = vpop.f32.mrb[0].mxu0
        %v2528 = vadd.f32 %v2421, %v2527
        %v2529 = vpop.f32.mrb[0].mxu0
        %2530 = vmatprep.mubr.f32.mxu0 0.0
        %2531 = vmatmul.mubr.f32.gmra.mrb[0].mxu0 %v2445
        %v2532 = vpop.f32.mrb[0].mxu0
        %v2533 = vadd.f32 %v2426, %v2532
        %v2534 = vpop.f32.mrb[0].mxu0
        %2535 = vmatprep.mubr.f32.mxu0 0.0
        %2536 = vmatmul.mubr.f32.gmra.mrb[0].mxu0 %v2448
        %v2537 = vpop.f32.mrb[0].mxu0
        %v2538 = vadd.f32 %v2431, %v2537
        %v2539 = vpop.f32.mrb[0].mxu0
        %2540 = vmatprep.mubr.f32.mxu0 0.0
        %2541 = vmatmul.mubr.f32.gmra.mrb[0].mxu0 %v2451
        %v2542 = vpop.f32.mrb[0].mxu0
        %v2543 = vadd.f32 %v2436, %v2542
        %v2544 = vpop.f32.mrb[0].mxu0
        %2545 = vdwg.mxu0
        %v2546 = vadd.f32 %v1755, %v2314
        %v2547 = vadd.f32 %v1756, %v2319
        %v2548 = vadd.f32 %v1757, %v2324
        %v2549 = vadd.f32 %v1758, %v2329
        %v2550 = vadd.f32 %v1759, %v2334
        %v2551 = vadd.f32 %v2546, %v2523
        %v2552 = vadd.f32 %v2547, %v2528
        %v2553 = vadd.f32 %v2548, %v2533
        %v2554 = vadd.f32 %v2549, %v2538
        %v2555 = vadd.f32 %v2550, %v2543
        %vm2556 = vcmp.gt.f32.partialorder %v1171, 0.0
        %vm2557 = vcmp.gt.f32.partialorder %v1172, 0.0
        %v2558 = vsel %vm2556, 1, 0
        %v2559 = vsel %vm2557, 1, 0
        %v2560 = vcvt.s32.f32 %v2558
        %v2561 = vcvt.s32.f32 %v2559
        %v2562 = vsel %vm2110, %v2560, 0.0
        %2563 = vadd.xlane.f32.xlu0 %v2562
        %v2564 = vpop.xlane.xlu0 %2563
        %v2565 = vsel %vm2110, %v2561, 0.0
        %2566 = vadd.xlane.f32.xlu0 %v2565
        %v2567 = vpop.xlane.xlu0 %2566
        %v2568 = vadd.f32 %v2564, 1e-12
        %v2569 = vadd.f32 %v2567, 1e-12
        %v2570 = vrcp.pop %v2568
        %v2571 = vrcp.pop %v2569
        %v2572 = vmul.f32 %v2560, %v2570
        %v2573 = vmul.f32 %v2561, %v2571
        %v2575 = vsel %vm1780, %v1135, 0
        %v2578 = vsel %vm1780, %v1136, 0
        %v2581 = vsel %vm1780, %v1137, 0
        %v2584 = vsel %vm1780, %v1138, 0
        %v2587 = vsel %vm1780, %v1139, 0
        %2589 = vmatprep.subr.mxu0 0.0
        %2590 = vmatpush1.msra.mxu0 %v2551
        %2591 = vmatprep.subr.mxu0 0.0
        %2592 = vmatpush1.msra.mxu0 %v2552
        %2593 = vmatprep.subr.mxu0 0.0
        %2594 = vmatpush1.msra.mxu0 %v2553
        %2595 = vmatprep.subr.mxu0 0.0
        %2596 = vmatpush1.msra.mxu0 %v2554
        %2597 = vmatprep.subr.mxu0 0.0
        %2598 = vmatpush1.msra.mxu0 %v2555
        %2599 = vmatprep.subr.mxu0 0.0
        %2600 = vmatpush1.msra.mxu0 0.0
        %2601 = vmatprep.subr.mxu0 0.0
        %2602 = vmatpush1.msra.mxu0 0.0
        %2603 = vmatprep.subr.mxu0 0.0
        %2604 = vmatpush1.msra.mxu0 0.0
        %2605 = vmatprep.subr.mxu0 0.0
        %2606 = vmatpush1.msra.mxu0 0.0
        %2607 = vmatprep.subr.mxu0 0.0
        %2608 = vmatpush1.msra.mxu0 0.0
        %2609 = vmatprep.subr.mxu0 0.0
        %2610 = vmatpush1.msra.mxu0 0.0
        %2611 = vmatprep.subr.mxu0 0.0
        %2612 = vmatpush1.msra.mxu0 0.0
        %2613 = vmatprep.subr.mxu0 0.0
        %2614 = vmatpush1.msra.mxu0 0.0
        %2615 = vmatprep.subr.mxu0 0.0
        %2616 = vmatpush1.msra.mxu0 0.0
        %2617 = vmatprep.subr.mxu0 0.0
        %2618 = vmatpush1.msra.mxu0 0.0
        %2619 = vmatprep.subr.mxu0 0.0
        %2620 = vmatpush1.msra.mxu0 0.0
        %2621 = vmatprep.subr.mxu0 0.0
        %2622 = vmatpush1.msra.mxu0 0.0
        %2623 = vmatprep.subr.mxu0 0.0
        %2624 = vmatpush1.msra.mxu0 0.0
        %2625 = vmatprep.subr.mxu0 0.0
        %2626 = vmatpush1.msra.mxu0 0.0
        %2627 = vmatprep.subr.mxu0 0.0
        %2628 = vmatpush1.msra.mxu0 0.0
        %2629 = vmatprep.subr.mxu0 0.0
        %2630 = vmatpush1.msra.mxu0 0.0
        %2631 = vmatprep.subr.mxu0 0.0
        %2632 = vmatpush1.msra.mxu0 0.0
        %2633 = vmatprep.subr.mxu0 0.0
        %2634 = vmatpush1.msra.mxu0 0.0
        %2635 = vmatprep.subr.mxu0 0.0
        %2636 = vmatpush1.msra.mxu0 0.0
        %2637 = vmatprep.subr.mxu0 0.0
        %2638 = vmatpush1.msra.mxu0 0.0
        %2639 = vmatprep.subr.mxu0 0.0
        %2640 = vmatpush1.msra.mxu0 0.0
        %2641 = vmatprep.subr.mxu0 0.0
        %2642 = vmatpush1.msra.mxu0 0.0
        %2643 = vmatprep.subr.mxu0 0.0
        %2644 = vmatpush1.msra.mxu0 0.0
        %2645 = vmatprep.subr.mxu0 0.0
        %2646 = vmatpush1.msra.mxu0 0.0
        %2647 = vmatprep.subr.mxu0 0.0
        %2648 = vmatpush1.msra.mxu0 0.0
        %2649 = vmatprep.subr.mxu0 0.0
        %2650 = vmatpush1.msra.mxu0 0.0
        %2651 = vmatprep.subr.mxu0 0.0
        %2652 = vmatpush1.msra.mxu0 0.0
        %2653 = vmatprep.mubr.f32.mxu0 0.0
        %2654 = vmatmul.mubr.f32.gmra.mrb[0].mxu0 %v2575
        %v2655 = vpop.f32.mrb[0].mxu0
        %v2656 = vadd.f32 0.0, %v2655
        %v2657 = vpop.f32.mrb[0].mxu0
        %2658 = vmatprep.mubr.f32.mxu0 0.0
        %2659 = vmatmul.mubr.f32.gmra.mrb[0].mxu0 %v2578
        %v2660 = vpop.f32.mrb[0].mxu0
        %v2661 = vadd.f32 0.0, %v2660
        %v2662 = vpop.f32.mrb[0].mxu0
        %2663 = vmatprep.mubr.f32.mxu0 0.0
        %2664 = vmatmul.mubr.f32.gmra.mrb[0].mxu0 %v2581
        %v2665 = vpop.f32.mrb[0].mxu0
        %v2666 = vadd.f32 0.0, %v2665
        %v2667 = vpop.f32.mrb[0].mxu0
        %2668 = vmatprep.mubr.f32.mxu0 0.0
        %2669 = vmatmul.mubr.f32.gmra.mrb[0].mxu0 %v2584
        %v2670 = vpop.f32.mrb[0].mxu0
        %v2671 = vadd.f32 0.0, %v2670
        %v2672 = vpop.f32.mrb[0].mxu0
        %2673 = vmatprep.mubr.f32.mxu0 0.0
        %2674 = vmatmul.mubr.f32.gmra.mrb[0].mxu0 %v2587
        %v2675 = vpop.f32.mrb[0].mxu0
        %v2676 = vadd.f32 0.0, %v2675
        %v2677 = vpop.f32.mrb[0].mxu0
        %2678 = vdwg.mxu0
        %2679 = vxpose.xlu0.b32.start [1/16] %v2656, 128
        %2680 = vxpose.xlu0.b32.cont [2/16] %v2661, 128
        %2681 = vxpose.xlu0.b32.cont [3/16] %v2666, 128
        %2682 = vxpose.xlu0.b32.cont [4/16] %v2671, 128
        %2683 = vxpose.xlu0.b32.cont [5/16] %v2676, 128
        %2684 = vxpose.xlu0.b32.cont [6/16] 0.0, 128
        %2685 = vxpose.xlu0.b32.cont [7/16] 0.0, 128
        %2686 = vxpose.xlu0.b32.cont [8/16] 0.0, 128
        %2687 = vxpose.xlu0.b32.cont [9/16] 0.0, 128
        %2688 = vxpose.xlu0.b32.cont [10/16] 0.0, 128
        %2689 = vxpose.xlu0.b32.cont [11/16] 0.0, 128
        %2690 = vxpose.xlu0.b32.cont [12/16] 0.0, 128
        %2691 = vxpose.xlu0.b32.cont [13/16] 0.0, 128
        %2692 = vxpose.xlu0.b32.cont [14/16] 0.0, 128
        %2693 = vxpose.xlu0.b32.cont [15/16] 0.0, 128
        %2694 = vxpose.xlu0.b32.end [16/16] 0.0, 128
        %v2695 = vpop.trf.xlu0
        %v2696 = vpop.trf.xlu0
        %v2697 = vpop.trf.xlu0
        %v2698 = vpop.trf.xlu0
        %v2699 = vpop.trf.xlu0
        %v2700 = vpop.trf.xlu0
        %v2701 = vpop.trf.xlu0
        %v2702 = vpop.trf.xlu0
        %v2703 = vpop.trf.xlu0
        %v2704 = vpop.trf.xlu0
        %v2705 = vpop.trf.xlu0
        %v2706 = vpop.trf.xlu0
        %v2707 = vpop.trf.xlu0
        %v2708 = vpop.trf.xlu0
        %v2709 = vpop.trf.xlu0
        %v2710 = vpop.trf.xlu0
        %v2712 = vsel %vm1780, %v2695, 0
        %v2715 = vsel %vm1780, %v2696, 0
        %2717 = vmatprep.subr.mxu0 0.0
        %2718 = vmatpush1.msra.mxu0 %v1140
        %2719 = vmatprep.subr.mxu0 0.0
        %2720 = vmatpush1.msra.mxu0 %v1141
        %2721 = vmatprep.subr.mxu0 0.0
        %2722 = vmatpush1.msra.mxu0 %v1142
        %2723 = vmatprep.subr.mxu0 0.0
        %2724 = vmatpush1.msra.mxu0 %v1143
        %2725 = vmatprep.subr.mxu0 0.0
        %2726 = vmatpush1.msra.mxu0 %v1144
        %2727 = vmatprep.subr.mxu0 0.0
        %2728 = vmatpush1.msra.mxu0 0.0
        %2729 = vmatprep.subr.mxu0 0.0
        %2730 = vmatpush1.msra.mxu0 0.0
        %2731 = vmatprep.subr.mxu0 0.0
        %2732 = vmatpush1.msra.mxu0 0.0
        %2733 = vmatprep.subr.mxu0 0.0
        %2734 = vmatpush1.msra.mxu0 0.0
        %2735 = vmatprep.subr.mxu0 0.0
        %2736 = vmatpush1.msra.mxu0 0.0
        %2737 = vmatprep.subr.mxu0 0.0
        %2738 = vmatpush1.msra.mxu0 0.0
        %2739 = vmatprep.subr.mxu0 0.0
        %2740 = vmatpush1.msra.mxu0 0.0
        %2741 = vmatprep.subr.mxu0 0.0
        %2742 = vmatpush1.msra.mxu0 0.0
        %2743 = vmatprep.subr.mxu0 0.0
        %2744 = vmatpush1.msra.mxu0 0.0
        %2745 = vmatprep.subr.mxu0 0.0
        %2746 = vmatpush1.msra.mxu0 0.0
        %2747 = vmatprep.subr.mxu0 0.0
        %2748 = vmatpush1.msra.mxu0 0.0
        %2749 = vmatprep.subr.mxu0 0.0
        %2750 = vmatpush1.msra.mxu0 0.0
        %2751 = vmatprep.subr.mxu0 0.0
        %2752 = vmatpush1.msra.mxu0 0.0
        %2753 = vmatprep.subr.mxu0 0.0
        %2754 = vmatpush1.msra.mxu0 0.0
        %2755 = vmatprep.subr.mxu0 0.0
        %2756 = vmatpush1.msra.mxu0 0.0
        %2757 = vmatprep.subr.mxu0 0.0
        %2758 = vmatpush1.msra.mxu0 0.0
        %2759 = vmatprep.subr.mxu0 0.0
        %2760 = vmatpush1.msra.mxu0 0.0
        %2761 = vmatprep.subr.mxu0 0.0
        %2762 = vmatpush1.msra.mxu0 0.0
        %2763 = vmatprep.subr.mxu0 0.0
        %2764 = vmatpush1.msra.mxu0 0.0
        %2765 = vmatprep.subr.mxu0 0.0
        %2766 = vmatpush1.msra.mxu0 0.0
        %2767 = vmatprep.subr.mxu0 0.0
        %2768 = vmatpush1.msra.mxu0 0.0
        %2769 = vmatprep.subr.mxu0 0.0
        %2770 = vmatpush1.msra.mxu0 0.0
        %2771 = vmatprep.subr.mxu0 0.0
        %2772 = vmatpush1.msra.mxu0 0.0
        %2773 = vmatprep.subr.mxu0 0.0
        %2774 = vmatpush1.msra.mxu0 0.0
        %2775 = vmatprep.subr.mxu0 0.0
        %2776 = vmatpush1.msra.mxu0 0.0
        %2777 = vmatprep.subr.mxu0 0.0
        %2778 = vmatpush1.msra.mxu0 0.0
        %2779 = vmatprep.subr.mxu0 0.0
        %2780 = vmatpush1.msra.mxu0 0.0
        %2781 = vmatprep.mubr.f32.mxu0 0.0
        %2782 = vmatmul.mubr.f32.gmra.mrb[0].mxu0 %v2712
        %v2783 = vpop.f32.mrb[0].mxu0
        %v2784 = vadd.f32 0.0, %v2783
        %v2785 = vpop.f32.mrb[0].mxu0
        %2786 = vmatprep.mubr.f32.mxu0 0.0
        %2787 = vmatmul.mubr.f32.gmra.mrb[0].mxu0 %v2715
        %v2788 = vpop.f32.mrb[0].mxu0
        %v2789 = vadd.f32 0.0, %v2788
        %v2790 = vpop.f32.mrb[0].mxu0
        %2791 = vdwg.mxu0
        %v2793 = vsel %vm1780, %v1145, 0
        %2795 = vmatprep.subr.mxu0 0.0
        %2796 = vmatpush1.msra.mxu0 %v2656
        %2797 = vmatprep.subr.mxu0 0.0
        %2798 = vmatpush1.msra.mxu0 %v2661
        %2799 = vmatprep.subr.mxu0 0.0
        %2800 = vmatpush1.msra.mxu0 %v2666
        %2801 = vmatprep.subr.mxu0 0.0
        %2802 = vmatpush1.msra.mxu0 %v2671
        %2803 = vmatprep.subr.mxu0 0.0
        %2804 = vmatpush1.msra.mxu0 %v2676
        %2805 = vmatprep.subr.mxu0 0.0
        %2806 = vmatpush1.msra.mxu0 0.0
        %2807 = vmatprep.subr.mxu0 0.0
        %2808 = vmatpush1.msra.mxu0 0.0
        %2809 = vmatprep.subr.mxu0 0.0
        %2810 = vmatpush1.msra.mxu0 0.0
        %2811 = vmatprep.subr.mxu0 0.0
        %2812 = vmatpush1.msra.mxu0 0.0
        %2813 = vmatprep.subr.mxu0 0.0
        %2814 = vmatpush1.msra.mxu0 0.0
        %2815 = vmatprep.subr.mxu0 0.0
        %2816 = vmatpush1.msra.mxu0 0.0
        %2817 = vmatprep.subr.mxu0 0.0
        %2818 = vmatpush1.msra.mxu0 0.0
        %2819 = vmatprep.subr.mxu0 0.0
        %2820 = vmatpush1.msra.mxu0 0.0
        %2821 = vmatprep.subr.mxu0 0.0
        %2822 = vmatpush1.msra.mxu0 0.0
        %2823 = vmatprep.subr.mxu0 0.0
        %2824 = vmatpush1.msra.mxu0 0.0
        %2825 = vmatprep.subr.mxu0 0.0
        %2826 = vmatpush1.msra.mxu0 0.0
        %2827 = vmatprep.subr.mxu0 0.0
        %2828 = vmatpush1.msra.mxu0 0.0
        %2829 = vmatprep.subr.mxu0 0.0
        %2830 = vmatpush1.msra.mxu0 0.0
        %2831 = vmatprep.subr.mxu0 0.0
        %2832 = vmatpush1.msra.mxu0 0.0
        %2833 = vmatprep.subr.mxu0 0.0
        %2834 = vmatpush1.msra.mxu0 0.0
        %2835 = vmatprep.subr.mxu0 0.0
        %2836 = vmatpush1.msra.mxu0 0.0
        %2837 = vmatprep.subr.mxu0 0.0
        %2838 = vmatpush1.msra.mxu0 0.0
        %2839 = vmatprep.subr.mxu0 0.0
        %2840 = vmatpush1.msra.mxu0 0.0
        %2841 = vmatprep.subr.mxu0 0.0
        %2842 = vmatpush1.msra.mxu0 0.0
        %2843 = vmatprep.subr.mxu0 0.0
        %2844 = vmatpush1.msra.mxu0 0.0
        %2845 = vmatprep.subr.mxu0 0.0
        %2846 = vmatpush1.msra.mxu0 0.0
        %2847 = vmatprep.subr.mxu0 0.0
        %2848 = vmatpush1.msra.mxu0 0.0
        %2849 = vmatprep.subr.mxu0 0.0
        %2850 = vmatpush1.msra.mxu0 0.0
        %2851 = vmatprep.subr.mxu0 0.0
        %2852 = vmatpush1.msra.mxu0 0.0
        %2853 = vmatprep.subr.mxu0 0.0
        %2854 = vmatpush1.msra.mxu0 0.0
        %2855 = vmatprep.subr.mxu0 0.0
        %2856 = vmatpush1.msra.mxu0 0.0
        %2857 = vmatprep.subr.mxu0 0.0
        %2858 = vmatpush1.msra.mxu0 0.0
        %2859 = vmatprep.mubr.f32.mxu0 0.0
        %2860 = vmatmul.mubr.f32.gmra.mrb[0].mxu0 %v2793
        %v2861 = vpop.f32.mrb[0].mxu0
        %v2862 = vadd.f32 0.0, %v2861
        %v2863 = vpop.f32.mrb[0].mxu0
        %2864 = vdwg.mxu0
        %2866 = vset.pattern.permute.xlu0 0
        %2867 = vperm.xlu0 %2866, %v2784
        %v2868 = vpop.permute.xlu0 %2867
        %2871 = vset.pattern.permute.xlu0 0
        %2872 = vperm.xlu0 %2871, %v2789
        %v2873 = vpop.permute.xlu0 %2872
        %v2875 = vlaneseq
        %v2876 = vshrl.u32 %v2875, 7
        %v2877 = vsub.s32 0, %v2876
        %v2878 = vrot.slane %v2862, %v2877
        %v2879 = vadd.f32 %v2868, %v2878
        %v2880 = vadd.f32 %v2873, %v2878
        %vm2881 = vcmp.gt.f32.partialorder %v2879, 0.0
        %vm2882 = vcmp.gt.f32.partialorder %v2880, 0.0
        %v2883 = vmul.f32 %v2879, 0.2
        %v2884 = vmul.f32 %v2880, 0.2
        %v2885 = vsel %vm2881, %v2879, %v2883
        %v2886 = vsel %vm2882, %v2880, %v2884
        %vm2887 = vcmp.eq.f32.partialorder %v2572, 0.0
        %vm2888 = vcmp.eq.f32.partialorder %v2573, 0.0
        %v2889 = vsel %vm2887, -1e+30, %v2885
        %v2890 = vsel %vm2888, -1e+30, %v2886
        %v2891 = vsel %vm2110, %v2889, -inf
        %2892 = vmax.xlane.f32.xlu0 %v2891
        %v2893 = vpop.xlane.xlu0 %2892
        %v2894 = vsel %vm2110, %v2890, -inf
        %2895 = vmax.xlane.f32.xlu0 %v2894
        %v2896 = vpop.xlane.xlu0 %2895
        %v2897 = vsub.f32 %v2889, %v2893
        %v2898 = vsub.f32 %v2890, %v2896
        %v2899 = vmul.f32 %v2897, 1.442695
        %v2900 = vpow.pop %v2899
        %v2901 = vmul.f32 %v2898, 1.442695
        %v2902 = vpow.pop %v2901
        %v2903 = vsel %vm2110, %v2900, 0.0
        %2904 = vadd.xlane.f32.xlu0 %v2903
        %v2905 = vpop.xlane.xlu0 %2904
        %v2906 = vsel %vm2110, %v2902, 0.0
        %2907 = vadd.xlane.f32.xlu0 %v2906
        %v2908 = vpop.xlane.xlu0 %2907
        %v2909 = vrcp.pop %v2905
        %v2910 = vrcp.pop %v2908
        %v2911 = vmul.f32 %v2900, %v2909
        %v2912 = vmul.f32 %v2902, %v2910
        %v2914 = vsel %vm2110, %v2656, 0
        %v2917 = vsel %vm2110, %v2661, 0
        %v2920 = vsel %vm2110, %v2911, 0
        %v2923 = vsel %vm2110, %v2912, 0
        %2925 = vmatprep.subr.mxu0 0.0
        %2926 = vmatpush1.xpose.msra.mxu0 %v2920
        %2927 = vmatprep.subr.mxu0 0.0
        %2928 = vmatpush1.xpose.msra.mxu0 %v2923
        %2929 = vmatprep.subr.mxu0 0.0
        %2930 = vmatpush1.xpose.msra.mxu0 0.0
        %2931 = vmatprep.subr.mxu0 0.0
        %2932 = vmatpush1.xpose.msra.mxu0 0.0
        %2933 = vmatprep.subr.mxu0 0.0
        %2934 = vmatpush1.xpose.msra.mxu0 0.0
        %2935 = vmatprep.subr.mxu0 0.0
        %2936 = vmatpush1.xpose.msra.mxu0 0.0
        %2937 = vmatprep.subr.mxu0 0.0
        %2938 = vmatpush1.xpose.msra.mxu0 0.0
        %2939 = vmatprep.subr.mxu0 0.0
        %2940 = vmatpush1.xpose.msra.mxu0 0.0
        %2941 = vmatprep.subr.mxu0 0.0
        %2942 = vmatpush1.xpose.msra.mxu0 0.0
        %2943 = vmatprep.subr.mxu0 0.0
        %2944 = vmatpush1.xpose.msra.mxu0 0.0
        %2945 = vmatprep.subr.mxu0 0.0
        %2946 = vmatpush1.xpose.msra.mxu0 0.0
        %2947 = vmatprep.subr.mxu0 0.0
        %2948 = vmatpush1.xpose.msra.mxu0 0.0
        %2949 = vmatprep.subr.mxu0 0.0
        %2950 = vmatpush1.xpose.msra.mxu0 0.0
        %2951 = vmatprep.subr.mxu0 0.0
        %2952 = vmatpush1.xpose.msra.mxu0 0.0
        %2953 = vmatprep.subr.mxu0 0.0
        %2954 = vmatpush1.xpose.msra.mxu0 0.0
        %2955 = vmatprep.subr.mxu0 0.0
        %2956 = vmatpush1.xpose.msra.mxu0 0.0
        %2957 = vmatprep.subr.mxu0 0.0
        %2958 = vmatpush1.xpose.msra.mxu0 0.0
        %2959 = vmatprep.subr.mxu0 0.0
        %2960 = vmatpush1.xpose.msra.mxu0 0.0
        %2961 = vmatprep.subr.mxu0 0.0
        %2962 = vmatpush1.xpose.msra.mxu0 0.0
        %2963 = vmatprep.subr.mxu0 0.0
        %2964 = vmatpush1.xpose.msra.mxu0 0.0
        %2965 = vmatprep.subr.mxu0 0.0
        %2966 = vmatpush1.xpose.msra.mxu0 0.0
        %2967 = vmatprep.subr.mxu0 0.0
        %2968 = vmatpush1.xpose.msra.mxu0 0.0
        %2969 = vmatprep.subr.mxu0 0.0
        %2970 = vmatpush1.xpose.msra.mxu0 0.0
        %2971 = vmatprep.subr.mxu0 0.0
        %2972 = vmatpush1.xpose.msra.mxu0 0.0
        %2973 = vmatprep.subr.mxu0 0.0
        %2974 = vmatpush1.xpose.msra.mxu0 0.0
        %2975 = vmatprep.subr.mxu0 0.0
        %2976 = vmatpush1.xpose.msra.mxu0 0.0
        %2977 = vmatprep.subr.mxu0 0.0
        %2978 = vmatpush1.xpose.msra.mxu0 0.0
        %2979 = vmatprep.subr.mxu0 0.0
        %2980 = vmatpush1.xpose.msra.mxu0 0.0
        %2981 = vmatprep.subr.mxu0 0.0
        %2982 = vmatpush1.xpose.msra.mxu0 0.0
        %2983 = vmatprep.subr.mxu0 0.0
        %2984 = vmatpush1.xpose.msra.mxu0 0.0
        %2985 = vmatprep.subr.mxu0 0.0
        %2986 = vmatpush1.xpose.msra.mxu0 0.0
        %2987 = vmatprep.subr.mxu0 0.0
        %2988 = vmatpush1.xpose.msra.mxu0 0.0
        %2989 = vmatprep.mubr.f32.mxu0 0.0
        %2990 = vmatmul.mubr.f32.gmra.mrb[0].mxu0 %v2914
        %v2991 = vpop.f32.mrb[0].mxu0
        %v2992 = vadd.f32 0.0, %v2991
        %v2993 = vpop.f32.mrb[0].mxu0
        %2994 = vmatprep.mubr.f32.mxu0 0.0
        %2995 = vmatmul.mubr.f32.gmra.mrb[0].mxu0 %v2917
        %v2996 = vpop.f32.mrb[0].mxu0
        %v2997 = vadd.f32 0.0, %v2996
        %v2998 = vpop.f32.mrb[0].mxu0
        %2999 = vdwg.mxu0
        %3000 = vset.pattern.permute.xlu0 1
        %3001 = vperm.xlu0 %3000, %v2784
        %v3002 = vpop.permute.xlu0 %3001
        %3004 = vset.pattern.permute.xlu0 1
        %3005 = vperm.xlu0 %3004, %v2789
        %v3006 = vpop.permute.xlu0 %3005
        %v3008 = vlaneseq
        %v3009 = vshrl.u32 %v3008, 7
        %v3010 = vsub.s32 1, %v3009
        %v3011 = vrot.slane %v2862, %v3010
        %v3012 = vadd.f32 %v3002, %v3011
        %v3013 = vadd.f32 %v3006, %v3011
        %vm3014 = vcmp.gt.f32.partialorder %v3012, 0.0
        %vm3015 = vcmp.gt.f32.partialorder %v3013, 0.0
        %v3016 = vmul.f32 %v3012, 0.2
        %v3017 = vmul.f32 %v3013, 0.2
        %v3018 = vsel %vm3014, %v3012, %v3016
        %v3019 = vsel %vm3015, %v3013, %v3017
        %v3020 = vsel %vm2887, -1e+30, %v3018
        %v3021 = vsel %vm2888, -1e+30, %v3019
        %v3022 = vsel %vm2110, %v3020, -inf
        %3023 = vmax.xlane.f32.xlu0 %v3022
        %v3024 = vpop.xlane.xlu0 %3023
        %v3025 = vsel %vm2110, %v3021, -inf
        %3026 = vmax.xlane.f32.xlu0 %v3025
        %v3027 = vpop.xlane.xlu0 %3026
        %v3028 = vsub.f32 %v3020, %v3024
        %v3029 = vsub.f32 %v3021, %v3027
        %v3030 = vmul.f32 %v3028, 1.442695
        %v3031 = vpow.pop %v3030
        %v3032 = vmul.f32 %v3029, 1.442695
        %v3033 = vpow.pop %v3032
        %v3034 = vsel %vm2110, %v3031, 0.0
        %3035 = vadd.xlane.f32.xlu0 %v3034
        %v3036 = vpop.xlane.xlu0 %3035
        %v3037 = vsel %vm2110, %v3033, 0.0
        %3038 = vadd.xlane.f32.xlu0 %v3037
        %v3039 = vpop.xlane.xlu0 %3038
        %v3040 = vrcp.pop %v3036
        %v3041 = vrcp.pop %v3039
        %v3042 = vmul.f32 %v3031, %v3040
        %v3043 = vmul.f32 %v3033, %v3041
        %vm3045 = vcmask 1045504
        %v3046 = vrot.slane %v2661, 2
        %v3047 = vrot.slane %v2666, 2
        %v3048 = vsel %vm3045, %v3046, %v3047
        %v3049 = vsel %vm2110, %v3048, 0
        %v3051 = vsel %vm2110, %v3047, 0
        %v3054 = vsel %vm2110, %v3042, 0
        %v3057 = vsel %vm2110, %v3043, 0
        %3059 = vmatprep.subr.mxu0 0.0
        %3060 = vmatpush1.xpose.msra.mxu0 %v3054
        %3061 = vmatprep.subr.mxu0 0.0
        %3062 = vmatpush1.xpose.msra.mxu0 %v3057
        %3063 = vmatprep.subr.mxu0 0.0
        %3064 = vmatpush1.xpose.msra.mxu0 0.0
        %3065 = vmatprep.subr.mxu0 0.0
        %3066 = vmatpush1.xpose.msra.mxu0 0.0
        %3067 = vmatprep.subr.mxu0 0.0
        %3068 = vmatpush1.xpose.msra.mxu0 0.0
        %3069 = vmatprep.subr.mxu0 0.0
        %3070 = vmatpush1.xpose.msra.mxu0 0.0
        %3071 = vmatprep.subr.mxu0 0.0
        %3072 = vmatpush1.xpose.msra.mxu0 0.0
        %3073 = vmatprep.subr.mxu0 0.0
        %3074 = vmatpush1.xpose.msra.mxu0 0.0
        %3075 = vmatprep.subr.mxu0 0.0
        %3076 = vmatpush1.xpose.msra.mxu0 0.0
        %3077 = vmatprep.subr.mxu0 0.0
        %3078 = vmatpush1.xpose.msra.mxu0 0.0
        %3079 = vmatprep.subr.mxu0 0.0
        %3080 = vmatpush1.xpose.msra.mxu0 0.0
        %3081 = vmatprep.subr.mxu0 0.0
        %3082 = vmatpush1.xpose.msra.mxu0 0.0
        %3083 = vmatprep.subr.mxu0 0.0
        %3084 = vmatpush1.xpose.msra.mxu0 0.0
        %3085 = vmatprep.subr.mxu0 0.0
        %3086 = vmatpush1.xpose.msra.mxu0 0.0
        %3087 = vmatprep.subr.mxu0 0.0
        %3088 = vmatpush1.xpose.msra.mxu0 0.0
        %3089 = vmatprep.subr.mxu0 0.0
        %3090 = vmatpush1.xpose.msra.mxu0 0.0
        %3091 = vmatprep.subr.mxu0 0.0
        %3092 = vmatpush1.xpose.msra.mxu0 0.0
        %3093 = vmatprep.subr.mxu0 0.0
        %3094 = vmatpush1.xpose.msra.mxu0 0.0
        %3095 = vmatprep.subr.mxu0 0.0
        %3096 = vmatpush1.xpose.msra.mxu0 0.0
        %3097 = vmatprep.subr.mxu0 0.0
        %3098 = vmatpush1.xpose.msra.mxu0 0.0
        %3099 = vmatprep.subr.mxu0 0.0
        %3100 = vmatpush1.xpose.msra.mxu0 0.0
        %3101 = vmatprep.subr.mxu0 0.0
        %3102 = vmatpush1.xpose.msra.mxu0 0.0
        %3103 = vmatprep.subr.mxu0 0.0
        %3104 = vmatpush1.xpose.msra.mxu0 0.0
        %3105 = vmatprep.subr.mxu0 0.0
        %3106 = vmatpush1.xpose.msra.mxu0 0.0
        %3107 = vmatprep.subr.mxu0 0.0
        %3108 = vmatpush1.xpose.msra.mxu0 0.0
        %3109 = vmatprep.subr.mxu0 0.0
        %3110 = vmatpush1.xpose.msra.mxu0 0.0
        %3111 = vmatprep.subr.mxu0 0.0
        %3112 = vmatpush1.xpose.msra.mxu0 0.0
        %3113 = vmatprep.subr.mxu0 0.0
        %3114 = vmatpush1.xpose.msra.mxu0 0.0
        %3115 = vmatprep.subr.mxu0 0.0
        %3116 = vmatpush1.xpose.msra.mxu0 0.0
        %3117 = vmatprep.subr.mxu0 0.0
        %3118 = vmatpush1.xpose.msra.mxu0 0.0
        %3119 = vmatprep.subr.mxu0 0.0
        %3120 = vmatpush1.xpose.msra.mxu0 0.0
        %3121 = vmatprep.subr.mxu0 0.0
        %3122 = vmatpush1.xpose.msra.mxu0 0.0
        %3123 = vmatprep.mubr.f32.mxu0 0.0
        %3124 = vmatmul.mubr.f32.gmra.mrb[0].mxu0 %v3049
        %v3125 = vpop.f32.mrb[0].mxu0
        %v3126 = vadd.f32 0.0, %v3125
        %v3127 = vpop.f32.mrb[0].mxu0
        %3128 = vmatprep.mubr.f32.mxu0 0.0
        %3129 = vmatmul.mubr.f32.gmra.mrb[0].mxu0 %v3051
        %v3130 = vpop.f32.mrb[0].mxu0
        %v3131 = vadd.f32 0.0, %v3130
        %v3132 = vpop.f32.mrb[0].mxu0
        %3133 = vdwg.mxu0
        %3134 = vset.pattern.permute.xlu0 2
        %3135 = vperm.xlu0 %3134, %v2784
        %v3136 = vpop.permute.xlu0 %3135
        %3138 = vset.pattern.permute.xlu0 2
        %3139 = vperm.xlu0 %3138, %v2789
        %v3140 = vpop.permute.xlu0 %3139
        %v3142 = vlaneseq
        %v3143 = vshrl.u32 %v3142, 7
        %v3144 = vsub.s32 2, %v3143
        %v3145 = vrot.slane %v2862, %v3144
        %v3146 = vadd.f32 %v3136, %v3145
        %v3147 = vadd.f32 %v3140, %v3145
        %vm3148 = vcmp.gt.f32.partialorder %v3146, 0.0
        %vm3149 = vcmp.gt.f32.partialorder %v3147, 0.0
        %v3150 = vmul.f32 %v3146, 0.2
        %v3151 = vmul.f32 %v3147, 0.2
        %v3152 = vsel %vm3148, %v3146, %v3150
        %v3153 = vsel %vm3149, %v3147, %v3151
        %v3154 = vsel %vm2887, -1e+30, %v3152
        %v3155 = vsel %vm2888, -1e+30, %v3153
        %v3156 = vsel %vm2110, %v3154, -inf
        %3157 = vmax.xlane.f32.xlu0 %v3156
        %v3158 = vpop.xlane.xlu0 %3157
        %v3159 = vsel %vm2110, %v3155, -inf
        %3160 = vmax.xlane.f32.xlu0 %v3159
        %v3161 = vpop.xlane.xlu0 %3160
        %v3162 = vsub.f32 %v3154, %v3158
        %v3163 = vsub.f32 %v3155, %v3161
        %v3164 = vmul.f32 %v3162, 1.442695
        %v3165 = vpow.pop %v3164
        %v3166 = vmul.f32 %v3163, 1.442695
        %v3167 = vpow.pop %v3166
        %v3168 = vsel %vm2110, %v3165, 0.0
        %3169 = vadd.xlane.f32.xlu0 %v3168
        %v3170 = vpop.xlane.xlu0 %3169
        %v3171 = vsel %vm2110, %v3167, 0.0
        %3172 = vadd.xlane.f32.xlu0 %v3171
        %v3173 = vpop.xlane.xlu0 %3172
        %v3174 = vrcp.pop %v3170
        %v3175 = vrcp.pop %v3173
        %v3176 = vmul.f32 %v3165, %v3174
        %v3177 = vmul.f32 %v3167, %v3175
        %v3179 = vrot.slane %v2666, 4
        %v3180 = vrot.slane %v2671, 4
        %v3181 = vsel %vm1191, %v3179, %v3180
        %v3182 = vsel %vm2110, %v3181, 0
        %v3184 = vsel %vm2110, %v3180, 0
        %v3187 = vsel %vm2110, %v3176, 0
        %v3190 = vsel %vm2110, %v3177, 0
        %3192 = vmatprep.subr.mxu0 0.0
        %3193 = vmatpush1.xpose.msra.mxu0 %v3187
        %3194 = vmatprep.subr.mxu0 0.0
        %3195 = vmatpush1.xpose.msra.mxu0 %v3190
        %3196 = vmatprep.subr.mxu0 0.0
        %3197 = vmatpush1.xpose.msra.mxu0 0.0
        %3198 = vmatprep.subr.mxu0 0.0
        %3199 = vmatpush1.xpose.msra.mxu0 0.0
        %3200 = vmatprep.subr.mxu0 0.0
        %3201 = vmatpush1.xpose.msra.mxu0 0.0
        %3202 = vmatprep.subr.mxu0 0.0
        %3203 = vmatpush1.xpose.msra.mxu0 0.0
        %3204 = vmatprep.subr.mxu0 0.0
        %3205 = vmatpush1.xpose.msra.mxu0 0.0
        %3206 = vmatprep.subr.mxu0 0.0
        %3207 = vmatpush1.xpose.msra.mxu0 0.0
        %3208 = vmatprep.subr.mxu0 0.0
        %3209 = vmatpush1.xpose.msra.mxu0 0.0
        %3210 = vmatprep.subr.mxu0 0.0
        %3211 = vmatpush1.xpose.msra.mxu0 0.0
        %3212 = vmatprep.subr.mxu0 0.0
        %3213 = vmatpush1.xpose.msra.mxu0 0.0
        %3214 = vmatprep.subr.mxu0 0.0
        %3215 = vmatpush1.xpose.msra.mxu0 0.0
        %3216 = vmatprep.subr.mxu0 0.0
        %3217 = vmatpush1.xpose.msra.mxu0 0.0
        %3218 = vmatprep.subr.mxu0 0.0
        %3219 = vmatpush1.xpose.msra.mxu0 0.0
        %3220 = vmatprep.subr.mxu0 0.0
        %3221 = vmatpush1.xpose.msra.mxu0 0.0
        %3222 = vmatprep.subr.mxu0 0.0
        %3223 = vmatpush1.xpose.msra.mxu0 0.0
        %3224 = vmatprep.subr.mxu0 0.0
        %3225 = vmatpush1.xpose.msra.mxu0 0.0
        %3226 = vmatprep.subr.mxu0 0.0
        %3227 = vmatpush1.xpose.msra.mxu0 0.0
        %3228 = vmatprep.subr.mxu0 0.0
        %3229 = vmatpush1.xpose.msra.mxu0 0.0
        %3230 = vmatprep.subr.mxu0 0.0
        %3231 = vmatpush1.xpose.msra.mxu0 0.0
        %3232 = vmatprep.subr.mxu0 0.0
        %3233 = vmatpush1.xpose.msra.mxu0 0.0
        %3234 = vmatprep.subr.mxu0 0.0
        %3235 = vmatpush1.xpose.msra.mxu0 0.0
        %3236 = vmatprep.subr.mxu0 0.0
        %3237 = vmatpush1.xpose.msra.mxu0 0.0
        %3238 = vmatprep.subr.mxu0 0.0
        %3239 = vmatpush1.xpose.msra.mxu0 0.0
        %3240 = vmatprep.subr.mxu0 0.0
        %3241 = vmatpush1.xpose.msra.mxu0 0.0
        %3242 = vmatprep.subr.mxu0 0.0
        %3243 = vmatpush1.xpose.msra.mxu0 0.0
        %3244 = vmatprep.subr.mxu0 0.0
        %3245 = vmatpush1.xpose.msra.mxu0 0.0
        %3246 = vmatprep.subr.mxu0 0.0
        %3247 = vmatpush1.xpose.msra.mxu0 0.0
        %3248 = vmatprep.subr.mxu0 0.0
        %3249 = vmatpush1.xpose.msra.mxu0 0.0
        %3250 = vmatprep.subr.mxu0 0.0
        %3251 = vmatpush1.xpose.msra.mxu0 0.0
        %3252 = vmatprep.subr.mxu0 0.0
        %3253 = vmatpush1.xpose.msra.mxu0 0.0
        %3254 = vmatprep.subr.mxu0 0.0
        %3255 = vmatpush1.xpose.msra.mxu0 0.0
        %3256 = vmatprep.mubr.f32.mxu0 0.0
        %3257 = vmatmul.mubr.f32.gmra.mrb[0].mxu0 %v3182
        %v3258 = vpop.f32.mrb[0].mxu0
        %v3259 = vadd.f32 0.0, %v3258
        %v3260 = vpop.f32.mrb[0].mxu0
        %3261 = vmatprep.mubr.f32.mxu0 0.0
        %3262 = vmatmul.mubr.f32.gmra.mrb[0].mxu0 %v3184
        %v3263 = vpop.f32.mrb[0].mxu0
        %v3264 = vadd.f32 0.0, %v3263
        %v3265 = vpop.f32.mrb[0].mxu0
        %3266 = vdwg.mxu0
        %3267 = vset.pattern.permute.xlu0 3
        %3268 = vperm.xlu0 %3267, %v2784
        %v3269 = vpop.permute.xlu0 %3268
        %3271 = vset.pattern.permute.xlu0 3
        %3272 = vperm.xlu0 %3271, %v2789
        %v3273 = vpop.permute.xlu0 %3272
        %v3275 = vlaneseq
        %v3276 = vshrl.u32 %v3275, 7
        %v3277 = vsub.s32 3, %v3276
        %v3278 = vrot.slane %v2862, %v3277
        %v3279 = vadd.f32 %v3269, %v3278
        %v3280 = vadd.f32 %v3273, %v3278
        %vm3281 = vcmp.gt.f32.partialorder %v3279, 0.0
        %vm3282 = vcmp.gt.f32.partialorder %v3280, 0.0
        %v3283 = vmul.f32 %v3279, 0.2
        %v3284 = vmul.f32 %v3280, 0.2
        %v3285 = vsel %vm3281, %v3279, %v3283
        %v3286 = vsel %vm3282, %v3280, %v3284
        %v3287 = vsel %vm2887, -1e+30, %v3285
        %v3288 = vsel %vm2888, -1e+30, %v3286
        %v3289 = vsel %vm2110, %v3287, -inf
        %3290 = vmax.xlane.f32.xlu0 %v3289
        %v3291 = vpop.xlane.xlu0 %3290
        %v3292 = vsel %vm2110, %v3288, -inf
        %3293 = vmax.xlane.f32.xlu0 %v3292
        %v3294 = vpop.xlane.xlu0 %3293
        %v3295 = vsub.f32 %v3287, %v3291
        %v3296 = vsub.f32 %v3288, %v3294
        %v3297 = vmul.f32 %v3295, 1.442695
        %v3298 = vpow.pop %v3297
        %v3299 = vmul.f32 %v3296, 1.442695
        %v3300 = vpow.pop %v3299
        %v3301 = vsel %vm2110, %v3298, 0.0
        %3302 = vadd.xlane.f32.xlu0 %v3301
        %v3303 = vpop.xlane.xlu0 %3302
        %v3304 = vsel %vm2110, %v3300, 0.0
        %3305 = vadd.xlane.f32.xlu0 %v3304
        %v3306 = vpop.xlane.xlu0 %3305
        %v3307 = vrcp.pop %v3303
        %v3308 = vrcp.pop %v3306
        %v3309 = vmul.f32 %v3298, %v3307
        %v3310 = vmul.f32 %v3300, %v3308
        %vm3312 = vcmask 1041408
        %v3313 = vrot.slane %v2671, 6
        %v3314 = vrot.slane %v2676, 6
        %v3315 = vsel %vm3312, %v3313, %v3314
        %v3316 = vsel %vm2110, %v3315, 0
        %v3318 = vsel %vm2110, %v3314, 0
        %v3321 = vsel %vm2110, %v3309, 0
        %v3324 = vsel %vm2110, %v3310, 0
        %3326 = vmatprep.subr.mxu0 0.0
        %3327 = vmatpush1.xpose.msra.mxu0 %v3321
        %3328 = vmatprep.subr.mxu0 0.0
        %3329 = vmatpush1.xpose.msra.mxu0 %v3324
        %3330 = vmatprep.subr.mxu0 0.0
        %3331 = vmatpush1.xpose.msra.mxu0 0.0
        %3332 = vmatprep.subr.mxu0 0.0
        %3333 = vmatpush1.xpose.msra.mxu0 0.0
        %3334 = vmatprep.subr.mxu0 0.0
        %3335 = vmatpush1.xpose.msra.mxu0 0.0
        %3336 = vmatprep.subr.mxu0 0.0
        %3337 = vmatpush1.xpose.msra.mxu0 0.0
        %3338 = vmatprep.subr.mxu0 0.0
        %3339 = vmatpush1.xpose.msra.mxu0 0.0
        %3340 = vmatprep.subr.mxu0 0.0
        %3341 = vmatpush1.xpose.msra.mxu0 0.0
        %3342 = vmatprep.subr.mxu0 0.0
        %3343 = vmatpush1.xpose.msra.mxu0 0.0
        %3344 = vmatprep.subr.mxu0 0.0
        %3345 = vmatpush1.xpose.msra.mxu0 0.0
        %3346 = vmatprep.subr.mxu0 0.0
        %3347 = vmatpush1.xpose.msra.mxu0 0.0
        %3348 = vmatprep.subr.mxu0 0.0
        %3349 = vmatpush1.xpose.msra.mxu0 0.0
        %3350 = vmatprep.subr.mxu0 0.0
        %3351 = vmatpush1.xpose.msra.mxu0 0.0
        %3352 = vmatprep.subr.mxu0 0.0
        %3353 = vmatpush1.xpose.msra.mxu0 0.0
        %3354 = vmatprep.subr.mxu0 0.0
        %3355 = vmatpush1.xpose.msra.mxu0 0.0
        %3356 = vmatprep.subr.mxu0 0.0
        %3357 = vmatpush1.xpose.msra.mxu0 0.0
        %3358 = vmatprep.subr.mxu0 0.0
        %3359 = vmatpush1.xpose.msra.mxu0 0.0
        %3360 = vmatprep.subr.mxu0 0.0
        %3361 = vmatpush1.xpose.msra.mxu0 0.0
        %3362 = vmatprep.subr.mxu0 0.0
        %3363 = vmatpush1.xpose.msra.mxu0 0.0
        %3364 = vmatprep.subr.mxu0 0.0
        %3365 = vmatpush1.xpose.msra.mxu0 0.0
        %3366 = vmatprep.subr.mxu0 0.0
        %3367 = vmatpush1.xpose.msra.mxu0 0.0
        %3368 = vmatprep.subr.mxu0 0.0
        %3369 = vmatpush1.xpose.msra.mxu0 0.0
        %3370 = vmatprep.subr.mxu0 0.0
        %3371 = vmatpush1.xpose.msra.mxu0 0.0
        %3372 = vmatprep.subr.mxu0 0.0
        %3373 = vmatpush1.xpose.msra.mxu0 0.0
        %3374 = vmatprep.subr.mxu0 0.0
        %3375 = vmatpush1.xpose.msra.mxu0 0.0
        %3376 = vmatprep.subr.mxu0 0.0
        %3377 = vmatpush1.xpose.msra.mxu0 0.0
        %3378 = vmatprep.subr.mxu0 0.0
        %3379 = vmatpush1.xpose.msra.mxu0 0.0
        %3380 = vmatprep.subr.mxu0 0.0
        %3381 = vmatpush1.xpose.msra.mxu0 0.0
        %3382 = vmatprep.subr.mxu0 0.0
        %3383 = vmatpush1.xpose.msra.mxu0 0.0
        %3384 = vmatprep.subr.mxu0 0.0
        %3385 = vmatpush1.xpose.msra.mxu0 0.0
        %3386 = vmatprep.subr.mxu0 0.0
        %3387 = vmatpush1.xpose.msra.mxu0 0.0
        %3388 = vmatprep.subr.mxu0 0.0
        %3389 = vmatpush1.xpose.msra.mxu0 0.0
        %3390 = vmatprep.mubr.f32.mxu0 0.0
        %3391 = vmatmul.mubr.f32.gmra.mrb[0].mxu0 %v3316
        %v3392 = vpop.f32.mrb[0].mxu0
        %v3393 = vadd.f32 0.0, %v3392
        %v3394 = vpop.f32.mrb[0].mxu0
        %3395 = vmatprep.mubr.f32.mxu0 0.0
        %3396 = vmatmul.mubr.f32.gmra.mrb[0].mxu0 %v3318
        %v3397 = vpop.f32.mrb[0].mxu0
        %v3398 = vadd.f32 0.0, %v3397
        %v3399 = vpop.f32.mrb[0].mxu0
        %3400 = vdwg.mxu0
        %v3403 = vrot.slane %v3126, 6
        %v3404 = vrot.slane %v3131, 6
        %v3405 = vsel %vm3312, %v3403, %v3404
        %v3410 = vrot.slane %v3259, 4
        %v3411 = vrot.slane %v3264, 4
        %v3412 = vsel %vm1191, %v3410, %v3411
        %v3417 = vrot.slane %v3393, 2
        %v3418 = vrot.slane %v3398, 2
        %v3419 = vsel %vm3045, %v3417, %v3418
        %v3422 = vsel %vm3312, %v2997, %v3403
        %v3423 = vsel %vm1191, %v3405, %v3410
        %v3424 = vsel %vm3045, %v3412, %v3417
        %vm3425 = vcmp.gt.f32.partialorder %v2992, 0.0
        %vm3426 = vcmp.gt.f32.partialorder %v3422, 0.0
        %vm3427 = vcmp.gt.f32.partialorder %v3423, 0.0
        %vm3428 = vcmp.gt.f32.partialorder %v3424, 0.0
        %vm3429 = vcmp.gt.f32.partialorder %v3419, 0.0
        %v3430 = vmul.f32 %v2992, 1.442695
        %v3431 = vpow.pop %v3430
        %v3432 = vmul.f32 %v3422, 1.442695
        %v3433 = vpow.pop %v3432
        %v3434 = vmul.f32 %v3423, 1.442695
        %v3435 = vpow.pop %v3434
        %v3436 = vmul.f32 %v3424, 1.442695
        %v3437 = vpow.pop %v3436
        %v3438 = vmul.f32 %v3419, 1.442695
        %v3439 = vpow.pop %v3438
        %v3440 = vsub.f32 %v3431, 1.0
        %v3441 = vsub.f32 %v3433, 1.0
        %v3442 = vsub.f32 %v3435, 1.0
        %v3443 = vsub.f32 %v3437, 1.0
        %v3444 = vsub.f32 %v3439, 1.0
        %v3445 = vsel %vm3425, %v2992, %v3440
        %v3446 = vsel %vm3426, %v3422, %v3441
        %v3447 = vsel %vm3427, %v3423, %v3442
        %v3448 = vsel %vm3428, %v3424, %v3443
        %v3449 = vsel %vm3429, %v3419, %v3444
        %v3451 = vsel %vm1780, %v1146, 0
        %v3454 = vsel %vm1780, %v1147, 0
        %v3457 = vsel %vm1780, %v1148, 0
        %v3460 = vsel %vm1780, %v1149, 0
        %v3463 = vsel %vm1780, %v1150, 0
        %3465 = vmatprep.subr.mxu0 0.0
        %3466 = vmatpush1.msra.mxu0 %v3445
        %3467 = vmatprep.subr.mxu0 0.0
        %3468 = vmatpush1.msra.mxu0 %v3446
        %3469 = vmatprep.subr.mxu0 0.0
        %3470 = vmatpush1.msra.mxu0 %v3447
        %3471 = vmatprep.subr.mxu0 0.0
        %3472 = vmatpush1.msra.mxu0 %v3448
        %3473 = vmatprep.subr.mxu0 0.0
        %3474 = vmatpush1.msra.mxu0 %v3449
        %3475 = vmatprep.subr.mxu0 0.0
        %3476 = vmatpush1.msra.mxu0 0.0
        %3477 = vmatprep.subr.mxu0 0.0
        %3478 = vmatpush1.msra.mxu0 0.0
        %3479 = vmatprep.subr.mxu0 0.0
        %3480 = vmatpush1.msra.mxu0 0.0
        %3481 = vmatprep.subr.mxu0 0.0
        %3482 = vmatpush1.msra.mxu0 0.0
        %3483 = vmatprep.subr.mxu0 0.0
        %3484 = vmatpush1.msra.mxu0 0.0
        %3485 = vmatprep.subr.mxu0 0.0
        %3486 = vmatpush1.msra.mxu0 0.0
        %3487 = vmatprep.subr.mxu0 0.0
        %3488 = vmatpush1.msra.mxu0 0.0
        %3489 = vmatprep.subr.mxu0 0.0
        %3490 = vmatpush1.msra.mxu0 0.0
        %3491 = vmatprep.subr.mxu0 0.0
        %3492 = vmatpush1.msra.mxu0 0.0
        %3493 = vmatprep.subr.mxu0 0.0
        %3494 = vmatpush1.msra.mxu0 0.0
        %3495 = vmatprep.subr.mxu0 0.0
        %3496 = vmatpush1.msra.mxu0 0.0
        %3497 = vmatprep.subr.mxu0 0.0
        %3498 = vmatpush1.msra.mxu0 0.0
        %3499 = vmatprep.subr.mxu0 0.0
        %3500 = vmatpush1.msra.mxu0 0.0
        %3501 = vmatprep.subr.mxu0 0.0
        %3502 = vmatpush1.msra.mxu0 0.0
        %3503 = vmatprep.subr.mxu0 0.0
        %3504 = vmatpush1.msra.mxu0 0.0
        %3505 = vmatprep.subr.mxu0 0.0
        %3506 = vmatpush1.msra.mxu0 0.0
        %3507 = vmatprep.subr.mxu0 0.0
        %3508 = vmatpush1.msra.mxu0 0.0
        %3509 = vmatprep.subr.mxu0 0.0
        %3510 = vmatpush1.msra.mxu0 0.0
        %3511 = vmatprep.subr.mxu0 0.0
        %3512 = vmatpush1.msra.mxu0 0.0
        %3513 = vmatprep.subr.mxu0 0.0
        %3514 = vmatpush1.msra.mxu0 0.0
        %3515 = vmatprep.subr.mxu0 0.0
        %3516 = vmatpush1.msra.mxu0 0.0
        %3517 = vmatprep.subr.mxu0 0.0
        %3518 = vmatpush1.msra.mxu0 0.0
        %3519 = vmatprep.subr.mxu0 0.0
        %3520 = vmatpush1.msra.mxu0 0.0
        %3521 = vmatprep.subr.mxu0 0.0
        %3522 = vmatpush1.msra.mxu0 0.0
        %3523 = vmatprep.subr.mxu0 0.0
        %3524 = vmatpush1.msra.mxu0 0.0
        %3525 = vmatprep.subr.mxu0 0.0
        %3526 = vmatpush1.msra.mxu0 0.0
        %3527 = vmatprep.subr.mxu0 0.0
        %3528 = vmatpush1.msra.mxu0 0.0
        %3529 = vmatprep.mubr.f32.mxu0 0.0
        %3530 = vmatmul.mubr.f32.gmra.mrb[0].mxu0 %v3451
        %v3531 = vpop.f32.mrb[0].mxu0
        %v3532 = vadd.f32 0.0, %v3531
        %v3533 = vpop.f32.mrb[0].mxu0
        %3534 = vmatprep.mubr.f32.mxu0 0.0
        %3535 = vmatmul.mubr.f32.gmra.mrb[0].mxu0 %v3454
        %v3536 = vpop.f32.mrb[0].mxu0
        %v3537 = vadd.f32 0.0, %v3536
        %v3538 = vpop.f32.mrb[0].mxu0
        %3539 = vmatprep.mubr.f32.mxu0 0.0
        %3540 = vmatmul.mubr.f32.gmra.mrb[0].mxu0 %v3457
        %v3541 = vpop.f32.mrb[0].mxu0
        %v3542 = vadd.f32 0.0, %v3541
        %v3543 = vpop.f32.mrb[0].mxu0
        %3544 = vmatprep.mubr.f32.mxu0 0.0
        %3545 = vmatmul.mubr.f32.gmra.mrb[0].mxu0 %v3460
        %v3546 = vpop.f32.mrb[0].mxu0
        %v3547 = vadd.f32 0.0, %v3546
        %v3548 = vpop.f32.mrb[0].mxu0
        %3549 = vmatprep.mubr.f32.mxu0 0.0
        %3550 = vmatmul.mubr.f32.gmra.mrb[0].mxu0 %v3463
        %v3551 = vpop.f32.mrb[0].mxu0
        %v3552 = vadd.f32 0.0, %v3551
        %v3553 = vpop.f32.mrb[0].mxu0
        %3554 = vdwg.mxu0
        %3555 = vxpose.xlu0.b32.start [1/16] %v3532, 128
        %3556 = vxpose.xlu0.b32.cont [2/16] %v3537, 128
        %3557 = vxpose.xlu0.b32.cont [3/16] %v3542, 128
        %3558 = vxpose.xlu0.b32.cont [4/16] %v3547, 128
        %3559 = vxpose.xlu0.b32.cont [5/16] %v3552, 128
        %3560 = vxpose.xlu0.b32.cont [6/16] 0.0, 128
        %3561 = vxpose.xlu0.b32.cont [7/16] 0.0, 128
        %3562 = vxpose.xlu0.b32.cont [8/16] 0.0, 128
        %3563 = vxpose.xlu0.b32.cont [9/16] 0.0, 128
        %3564 = vxpose.xlu0.b32.cont [10/16] 0.0, 128
        %3565 = vxpose.xlu0.b32.cont [11/16] 0.0, 128
        %3566 = vxpose.xlu0.b32.cont [12/16] 0.0, 128
        %3567 = vxpose.xlu0.b32.cont [13/16] 0.0, 128
        %3568 = vxpose.xlu0.b32.cont [14/16] 0.0, 128
        %3569 = vxpose.xlu0.b32.cont [15/16] 0.0, 128
        %3570 = vxpose.xlu0.b32.end [16/16] 0.0, 128
        %v3571 = vpop.trf.xlu0
        %v3572 = vpop.trf.xlu0
        %v3573 = vpop.trf.xlu0
        %v3574 = vpop.trf.xlu0
        %v3575 = vpop.trf.xlu0
        %v3576 = vpop.trf.xlu0
        %v3577 = vpop.trf.xlu0
        %v3578 = vpop.trf.xlu0
        %v3579 = vpop.trf.xlu0
        %v3580 = vpop.trf.xlu0
        %v3581 = vpop.trf.xlu0
        %v3582 = vpop.trf.xlu0
        %v3583 = vpop.trf.xlu0
        %v3584 = vpop.trf.xlu0
        %v3585 = vpop.trf.xlu0
        %v3586 = vpop.trf.xlu0
        %v3588 = vsel %vm1780, %v3571, 0
        %v3591 = vsel %vm1780, %v3572, 0
        %3593 = vmatprep.subr.mxu0 0.0
        %3594 = vmatpush1.msra.mxu0 %v1151
        %3595 = vmatprep.subr.mxu0 0.0
        %3596 = vmatpush1.msra.mxu0 %v1152
        %3597 = vmatprep.subr.mxu0 0.0
        %3598 = vmatpush1.msra.mxu0 %v1153
        %3599 = vmatprep.subr.mxu0 0.0
        %3600 = vmatpush1.msra.mxu0 %v1154
        %3601 = vmatprep.subr.mxu0 0.0
        %3602 = vmatpush1.msra.mxu0 %v1155
        %3603 = vmatprep.subr.mxu0 0.0
        %3604 = vmatpush1.msra.mxu0 0.0
        %3605 = vmatprep.subr.mxu0 0.0
        %3606 = vmatpush1.msra.mxu0 0.0
        %3607 = vmatprep.subr.mxu0 0.0
        %3608 = vmatpush1.msra.mxu0 0.0
        %3609 = vmatprep.subr.mxu0 0.0
        %3610 = vmatpush1.msra.mxu0 0.0
        %3611 = vmatprep.subr.mxu0 0.0
        %3612 = vmatpush1.msra.mxu0 0.0
        %3613 = vmatprep.subr.mxu0 0.0
        %3614 = vmatpush1.msra.mxu0 0.0
        %3615 = vmatprep.subr.mxu0 0.0
        %3616 = vmatpush1.msra.mxu0 0.0
        %3617 = vmatprep.subr.mxu0 0.0
        %3618 = vmatpush1.msra.mxu0 0.0
        %3619 = vmatprep.subr.mxu0 0.0
        %3620 = vmatpush1.msra.mxu0 0.0
        %3621 = vmatprep.subr.mxu0 0.0
        %3622 = vmatpush1.msra.mxu0 0.0
        %3623 = vmatprep.subr.mxu0 0.0
        %3624 = vmatpush1.msra.mxu0 0.0
        %3625 = vmatprep.subr.mxu0 0.0
        %3626 = vmatpush1.msra.mxu0 0.0
        %3627 = vmatprep.subr.mxu0 0.0
        %3628 = vmatpush1.msra.mxu0 0.0
        %3629 = vmatprep.subr.mxu0 0.0
        %3630 = vmatpush1.msra.mxu0 0.0
        %3631 = vmatprep.subr.mxu0 0.0
        %3632 = vmatpush1.msra.mxu0 0.0
        %3633 = vmatprep.subr.mxu0 0.0
        %3634 = vmatpush1.msra.mxu0 0.0
        %3635 = vmatprep.subr.mxu0 0.0
        %3636 = vmatpush1.msra.mxu0 0.0
        %3637 = vmatprep.subr.mxu0 0.0
        %3638 = vmatpush1.msra.mxu0 0.0
        %3639 = vmatprep.subr.mxu0 0.0
        %3640 = vmatpush1.msra.mxu0 0.0
        %3641 = vmatprep.subr.mxu0 0.0
        %3642 = vmatpush1.msra.mxu0 0.0
        %3643 = vmatprep.subr.mxu0 0.0
        %3644 = vmatpush1.msra.mxu0 0.0
        %3645 = vmatprep.subr.mxu0 0.0
        %3646 = vmatpush1.msra.mxu0 0.0
        %3647 = vmatprep.subr.mxu0 0.0
        %3648 = vmatpush1.msra.mxu0 0.0
        %3649 = vmatprep.subr.mxu0 0.0
        %3650 = vmatpush1.msra.mxu0 0.0
        %3651 = vmatprep.subr.mxu0 0.0
        %3652 = vmatpush1.msra.mxu0 0.0
        %3653 = vmatprep.subr.mxu0 0.0
        %3654 = vmatpush1.msra.mxu0 0.0
        %3655 = vmatprep.subr.mxu0 0.0
        %3656 = vmatpush1.msra.mxu0 0.0
        %3657 = vmatprep.mubr.f32.mxu0 0.0
        %3658 = vmatmul.mubr.f32.gmra.mrb[0].mxu0 %v3588
        %v3659 = vpop.f32.mrb[0].mxu0
        %v3660 = vadd.f32 0.0, %v3659
        %v3661 = vpop.f32.mrb[0].mxu0
        %3662 = vmatprep.mubr.f32.mxu0 0.0
        %3663 = vmatmul.mubr.f32.gmra.mrb[0].mxu0 %v3591
        %v3664 = vpop.f32.mrb[0].mxu0
        %v3665 = vadd.f32 0.0, %v3664
        %v3666 = vpop.f32.mrb[0].mxu0
        %3667 = vdwg.mxu0
        %v3669 = vsel %vm1780, %v1156, 0
        %3671 = vmatprep.subr.mxu0 0.0
        %3672 = vmatpush1.msra.mxu0 %v3532
        %3673 = vmatprep.subr.mxu0 0.0
        %3674 = vmatpush1.msra.mxu0 %v3537
        %3675 = vmatprep.subr.mxu0 0.0
        %3676 = vmatpush1.msra.mxu0 %v3542
        %3677 = vmatprep.subr.mxu0 0.0
        %3678 = vmatpush1.msra.mxu0 %v3547
        %3679 = vmatprep.subr.mxu0 0.0
        %3680 = vmatpush1.msra.mxu0 %v3552
        %3681 = vmatprep.subr.mxu0 0.0
        %3682 = vmatpush1.msra.mxu0 0.0
        %3683 = vmatprep.subr.mxu0 0.0
        %3684 = vmatpush1.msra.mxu0 0.0
        %3685 = vmatprep.subr.mxu0 0.0
        %3686 = vmatpush1.msra.mxu0 0.0
        %3687 = vmatprep.subr.mxu0 0.0
        %3688 = vmatpush1.msra.mxu0 0.0
        %3689 = vmatprep.subr.mxu0 0.0
        %3690 = vmatpush1.msra.mxu0 0.0
        %3691 = vmatprep.subr.mxu0 0.0
        %3692 = vmatpush1.msra.mxu0 0.0
        %3693 = vmatprep.subr.mxu0 0.0
        %3694 = vmatpush1.msra.mxu0 0.0
        %3695 = vmatprep.subr.mxu0 0.0
        %3696 = vmatpush1.msra.mxu0 0.0
        %3697 = vmatprep.subr.mxu0 0.0
        %3698 = vmatpush1.msra.mxu0 0.0
        %3699 = vmatprep.subr.mxu0 0.0
        %3700 = vmatpush1.msra.mxu0 0.0
        %3701 = vmatprep.subr.mxu0 0.0
        %3702 = vmatpush1.msra.mxu0 0.0
        %3703 = vmatprep.subr.mxu0 0.0
        %3704 = vmatpush1.msra.mxu0 0.0
        %3705 = vmatprep.subr.mxu0 0.0
        %3706 = vmatpush1.msra.mxu0 0.0
        %3707 = vmatprep.subr.mxu0 0.0
        %3708 = vmatpush1.msra.mxu0 0.0
        %3709 = vmatprep.subr.mxu0 0.0
        %3710 = vmatpush1.msra.mxu0 0.0
        %3711 = vmatprep.subr.mxu0 0.0
        %3712 = vmatpush1.msra.mxu0 0.0
        %3713 = vmatprep.subr.mxu0 0.0
        %3714 = vmatpush1.msra.mxu0 0.0
        %3715 = vmatprep.subr.mxu0 0.0
        %3716 = vmatpush1.msra.mxu0 0.0
        %3717 = vmatprep.subr.mxu0 0.0
        %3718 = vmatpush1.msra.mxu0 0.0
        %3719 = vmatprep.subr.mxu0 0.0
        %3720 = vmatpush1.msra.mxu0 0.0
        %3721 = vmatprep.subr.mxu0 0.0
        %3722 = vmatpush1.msra.mxu0 0.0
        %3723 = vmatprep.subr.mxu0 0.0
        %3724 = vmatpush1.msra.mxu0 0.0
        %3725 = vmatprep.subr.mxu0 0.0
        %3726 = vmatpush1.msra.mxu0 0.0
        %3727 = vmatprep.subr.mxu0 0.0
        %3728 = vmatpush1.msra.mxu0 0.0
        %3729 = vmatprep.subr.mxu0 0.0
        %3730 = vmatpush1.msra.mxu0 0.0
        %3731 = vmatprep.subr.mxu0 0.0
        %3732 = vmatpush1.msra.mxu0 0.0
        %3733 = vmatprep.subr.mxu0 0.0
        %3734 = vmatpush1.msra.mxu0 0.0
        %3735 = vmatprep.mubr.f32.mxu0 0.0
        %3736 = vmatmul.mubr.f32.gmra.mrb[0].mxu0 %v3669
        %v3737 = vpop.f32.mrb[0].mxu0
        %v3738 = vadd.f32 0.0, %v3737
        %v3739 = vpop.f32.mrb[0].mxu0
        %3740 = vdwg.mxu0
        %3742 = vset.pattern.permute.xlu0 0
        %3743 = vperm.xlu0 %3742, %v3660
        %v3744 = vpop.permute.xlu0 %3743
        %3747 = vset.pattern.permute.xlu0 0
        %3748 = vperm.xlu0 %3747, %v3665
        %v3749 = vpop.permute.xlu0 %3748
        %v3751 = vlaneseq
        %v3752 = vshrl.u32 %v3751, 7
        %v3753 = vsub.s32 0, %v3752
        %v3754 = vrot.slane %v3738, %v3753
        %v3755 = vadd.f32 %v3744, %v3754
        %v3756 = vadd.f32 %v3749, %v3754
        %vm3757 = vcmp.gt.f32.partialorder %v3755, 0.0
        %vm3758 = vcmp.gt.f32.partialorder %v3756, 0.0
        %v3759 = vmul.f32 %v3755, 0.2
        %v3760 = vmul.f32 %v3756, 0.2
        %v3761 = vsel %vm3757, %v3755, %v3759
        %v3762 = vsel %vm3758, %v3756, %v3760
        %v3763 = vsel %vm2887, -1e+30, %v3761
        %v3764 = vsel %vm2888, -1e+30, %v3762
        %v3765 = vsel %vm2110, %v3763, -inf
        %3766 = vmax.xlane.f32.xlu0 %v3765
        %v3767 = vpop.xlane.xlu0 %3766
        %v3768 = vsel %vm2110, %v3764, -inf
        %3769 = vmax.xlane.f32.xlu0 %v3768
        %v3770 = vpop.xlane.xlu0 %3769
        %v3771 = vsub.f32 %v3763, %v3767
        %v3772 = vsub.f32 %v3764, %v3770
        %v3773 = vmul.f32 %v3771, 1.442695
        %v3774 = vpow.pop %v3773
        %v3775 = vmul.f32 %v3772, 1.442695
        %v3776 = vpow.pop %v3775
        %v3777 = vsel %vm2110, %v3774, 0.0
        %3778 = vadd.xlane.f32.xlu0 %v3777
        %v3779 = vpop.xlane.xlu0 %3778
        %v3780 = vsel %vm2110, %v3776, 0.0
        %3781 = vadd.xlane.f32.xlu0 %v3780
        %v3782 = vpop.xlane.xlu0 %3781
        %v3783 = vrcp.pop %v3779
        %v3784 = vrcp.pop %v3782
        %v3785 = vmul.f32 %v3774, %v3783
        %v3786 = vmul.f32 %v3776, %v3784
        %v3788 = vsel %vm2110, %v3532, 0
        %v3791 = vsel %vm2110, %v3537, 0
        %v3794 = vsel %vm2110, %v3785, 0
        %v3797 = vsel %vm2110, %v3786, 0
        %3799 = vmatprep.subr.mxu0 0.0
        %3800 = vmatpush1.xpose.msra.mxu0 %v3794
        %3801 = vmatprep.subr.mxu0 0.0
        %3802 = vmatpush1.xpose.msra.mxu0 %v3797
        %3803 = vmatprep.subr.mxu0 0.0
        %3804 = vmatpush1.xpose.msra.mxu0 0.0
        %3805 = vmatprep.subr.mxu0 0.0
        %3806 = vmatpush1.xpose.msra.mxu0 0.0
        %3807 = vmatprep.subr.mxu0 0.0
        %3808 = vmatpush1.xpose.msra.mxu0 0.0
        %3809 = vmatprep.subr.mxu0 0.0
        %3810 = vmatpush1.xpose.msra.mxu0 0.0
        %3811 = vmatprep.subr.mxu0 0.0
        %3812 = vmatpush1.xpose.msra.mxu0 0.0
        %3813 = vmatprep.subr.mxu0 0.0
        %3814 = vmatpush1.xpose.msra.mxu0 0.0
        %3815 = vmatprep.subr.mxu0 0.0
        %3816 = vmatpush1.xpose.msra.mxu0 0.0
        %3817 = vmatprep.subr.mxu0 0.0
        %3818 = vmatpush1.xpose.msra.mxu0 0.0
        %3819 = vmatprep.subr.mxu0 0.0
        %3820 = vmatpush1.xpose.msra.mxu0 0.0
        %3821 = vmatprep.subr.mxu0 0.0
        %3822 = vmatpush1.xpose.msra.mxu0 0.0
        %3823 = vmatprep.subr.mxu0 0.0
        %3824 = vmatpush1.xpose.msra.mxu0 0.0
        %3825 = vmatprep.subr.mxu0 0.0
        %3826 = vmatpush1.xpose.msra.mxu0 0.0
        %3827 = vmatprep.subr.mxu0 0.0
        %3828 = vmatpush1.xpose.msra.mxu0 0.0
        %3829 = vmatprep.subr.mxu0 0.0
        %3830 = vmatpush1.xpose.msra.mxu0 0.0
        %3831 = vmatprep.subr.mxu0 0.0
        %3832 = vmatpush1.xpose.msra.mxu0 0.0
        %3833 = vmatprep.subr.mxu0 0.0
        %3834 = vmatpush1.xpose.msra.mxu0 0.0
        %3835 = vmatprep.subr.mxu0 0.0
        %3836 = vmatpush1.xpose.msra.mxu0 0.0
        %3837 = vmatprep.subr.mxu0 0.0
        %3838 = vmatpush1.xpose.msra.mxu0 0.0
        %3839 = vmatprep.subr.mxu0 0.0
        %3840 = vmatpush1.xpose.msra.mxu0 0.0
        %3841 = vmatprep.subr.mxu0 0.0
        %3842 = vmatpush1.xpose.msra.mxu0 0.0
        %3843 = vmatprep.subr.mxu0 0.0
        %3844 = vmatpush1.xpose.msra.mxu0 0.0
        %3845 = vmatprep.subr.mxu0 0.0
        %3846 = vmatpush1.xpose.msra.mxu0 0.0
        %3847 = vmatprep.subr.mxu0 0.0
        %3848 = vmatpush1.xpose.msra.mxu0 0.0
        %3849 = vmatprep.subr.mxu0 0.0
        %3850 = vmatpush1.xpose.msra.mxu0 0.0
        %3851 = vmatprep.subr.mxu0 0.0
        %3852 = vmatpush1.xpose.msra.mxu0 0.0
        %3853 = vmatprep.subr.mxu0 0.0
        %3854 = vmatpush1.xpose.msra.mxu0 0.0
        %3855 = vmatprep.subr.mxu0 0.0
        %3856 = vmatpush1.xpose.msra.mxu0 0.0
        %3857 = vmatprep.subr.mxu0 0.0
        %3858 = vmatpush1.xpose.msra.mxu0 0.0
        %3859 = vmatprep.subr.mxu0 0.0
        %3860 = vmatpush1.xpose.msra.mxu0 0.0
        %3861 = vmatprep.subr.mxu0 0.0
        %3862 = vmatpush1.xpose.msra.mxu0 0.0
        %3863 = vmatprep.mubr.f32.mxu0 0.0
        %3864 = vmatmul.mubr.f32.gmra.mrb[0].mxu0 %v3788
        %v3865 = vpop.f32.mrb[0].mxu0
        %v3866 = vadd.f32 0.0, %v3865
        %v3867 = vpop.f32.mrb[0].mxu0
        %3868 = vmatprep.mubr.f32.mxu0 0.0
        %3869 = vmatmul.mubr.f32.gmra.mrb[0].mxu0 %v3791
        %v3870 = vpop.f32.mrb[0].mxu0
        %v3871 = vadd.f32 0.0, %v3870
        %v3872 = vpop.f32.mrb[0].mxu0
        %3873 = vdwg.mxu0
        %3874 = vset.pattern.permute.xlu0 1
        %3875 = vperm.xlu0 %3874, %v3660
        %v3876 = vpop.permute.xlu0 %3875
        %3878 = vset.pattern.permute.xlu0 1
        %3879 = vperm.xlu0 %3878, %v3665
        %v3880 = vpop.permute.xlu0 %3879
        %v3882 = vlaneseq
        %v3883 = vshrl.u32 %v3882, 7
        %v3884 = vsub.s32 1, %v3883
        %v3885 = vrot.slane %v3738, %v3884
        %v3886 = vadd.f32 %v3876, %v3885
        %v3887 = vadd.f32 %v3880, %v3885
        %vm3888 = vcmp.gt.f32.partialorder %v3886, 0.0
        %vm3889 = vcmp.gt.f32.partialorder %v3887, 0.0
        %v3890 = vmul.f32 %v3886, 0.2
        %v3891 = vmul.f32 %v3887, 0.2
        %v3892 = vsel %vm3888, %v3886, %v3890
        %v3893 = vsel %vm3889, %v3887, %v3891
        %v3894 = vsel %vm2887, -1e+30, %v3892
        %v3895 = vsel %vm2888, -1e+30, %v3893
        %v3896 = vsel %vm2110, %v3894, -inf
        %3897 = vmax.xlane.f32.xlu0 %v3896
        %v3898 = vpop.xlane.xlu0 %3897
        %v3899 = vsel %vm2110, %v3895, -inf
        %3900 = vmax.xlane.f32.xlu0 %v3899
        %v3901 = vpop.xlane.xlu0 %3900
        %v3902 = vsub.f32 %v3894, %v3898
        %v3903 = vsub.f32 %v3895, %v3901
        %v3904 = vmul.f32 %v3902, 1.442695
        %v3905 = vpow.pop %v3904
        %v3906 = vmul.f32 %v3903, 1.442695
        %v3907 = vpow.pop %v3906
        %v3908 = vsel %vm2110, %v3905, 0.0
        %3909 = vadd.xlane.f32.xlu0 %v3908
        %v3910 = vpop.xlane.xlu0 %3909
        %v3911 = vsel %vm2110, %v3907, 0.0
        %3912 = vadd.xlane.f32.xlu0 %v3911
        %v3913 = vpop.xlane.xlu0 %3912
        %v3914 = vrcp.pop %v3910
        %v3915 = vrcp.pop %v3913
        %v3916 = vmul.f32 %v3905, %v3914
        %v3917 = vmul.f32 %v3907, %v3915
        %v3919 = vrot.slane %v3537, 2
        %v3920 = vrot.slane %v3542, 2
        %v3921 = vsel %vm3045, %v3919, %v3920
        %v3922 = vsel %vm2110, %v3921, 0
        %v3924 = vsel %vm2110, %v3920, 0
        %v3927 = vsel %vm2110, %v3916, 0
        %v3930 = vsel %vm2110, %v3917, 0
        %3932 = vmatprep.subr.mxu0 0.0
        %3933 = vmatpush1.xpose.msra.mxu0 %v3927
        %3934 = vmatprep.subr.mxu0 0.0
        %3935 = vmatpush1.xpose.msra.mxu0 %v3930
        %3936 = vmatprep.subr.mxu0 0.0
        %3937 = vmatpush1.xpose.msra.mxu0 0.0
        %3938 = vmatprep.subr.mxu0 0.0
        %3939 = vmatpush1.xpose.msra.mxu0 0.0
        %3940 = vmatprep.subr.mxu0 0.0
        %3941 = vmatpush1.xpose.msra.mxu0 0.0
        %3942 = vmatprep.subr.mxu0 0.0
        %3943 = vmatpush1.xpose.msra.mxu0 0.0
        %3944 = vmatprep.subr.mxu0 0.0
        %3945 = vmatpush1.xpose.msra.mxu0 0.0
        %3946 = vmatprep.subr.mxu0 0.0
        %3947 = vmatpush1.xpose.msra.mxu0 0.0
        %3948 = vmatprep.subr.mxu0 0.0
        %3949 = vmatpush1.xpose.msra.mxu0 0.0
        %3950 = vmatprep.subr.mxu0 0.0
        %3951 = vmatpush1.xpose.msra.mxu0 0.0
        %3952 = vmatprep.subr.mxu0 0.0
        %3953 = vmatpush1.xpose.msra.mxu0 0.0
        %3954 = vmatprep.subr.mxu0 0.0
        %3955 = vmatpush1.xpose.msra.mxu0 0.0
        %3956 = vmatprep.subr.mxu0 0.0
        %3957 = vmatpush1.xpose.msra.mxu0 0.0
        %3958 = vmatprep.subr.mxu0 0.0
        %3959 = vmatpush1.xpose.msra.mxu0 0.0
        %3960 = vmatprep.subr.mxu0 0.0
        %3961 = vmatpush1.xpose.msra.mxu0 0.0
        %3962 = vmatprep.subr.mxu0 0.0
        %3963 = vmatpush1.xpose.msra.mxu0 0.0
        %3964 = vmatprep.subr.mxu0 0.0
        %3965 = vmatpush1.xpose.msra.mxu0 0.0
        %3966 = vmatprep.subr.mxu0 0.0
        %3967 = vmatpush1.xpose.msra.mxu0 0.0
        %3968 = vmatprep.subr.mxu0 0.0
        %3969 = vmatpush1.xpose.msra.mxu0 0.0
        %3970 = vmatprep.subr.mxu0 0.0
        %3971 = vmatpush1.xpose.msra.mxu0 0.0
        %3972 = vmatprep.subr.mxu0 0.0
        %3973 = vmatpush1.xpose.msra.mxu0 0.0
        %3974 = vmatprep.subr.mxu0 0.0
        %3975 = vmatpush1.xpose.msra.mxu0 0.0
        %3976 = vmatprep.subr.mxu0 0.0
        %3977 = vmatpush1.xpose.msra.mxu0 0.0
        %3978 = vmatprep.subr.mxu0 0.0
        %3979 = vmatpush1.xpose.msra.mxu0 0.0
        %3980 = vmatprep.subr.mxu0 0.0
        %3981 = vmatpush1.xpose.msra.mxu0 0.0
        %3982 = vmatprep.subr.mxu0 0.0
        %3983 = vmatpush1.xpose.msra.mxu0 0.0
        %3984 = vmatprep.subr.mxu0 0.0
        %3985 = vmatpush1.xpose.msra.mxu0 0.0
        %3986 = vmatprep.subr.mxu0 0.0
        %3987 = vmatpush1.xpose.msra.mxu0 0.0
        %3988 = vmatprep.subr.mxu0 0.0
        %3989 = vmatpush1.xpose.msra.mxu0 0.0
        %3990 = vmatprep.subr.mxu0 0.0
        %3991 = vmatpush1.xpose.msra.mxu0 0.0
        %3992 = vmatprep.subr.mxu0 0.0
        %3993 = vmatpush1.xpose.msra.mxu0 0.0
        %3994 = vmatprep.subr.mxu0 0.0
        %3995 = vmatpush1.xpose.msra.mxu0 0.0
        %3996 = vmatprep.mubr.f32.mxu0 0.0
        %3997 = vmatmul.mubr.f32.gmra.mrb[0].mxu0 %v3922
        %v3998 = vpop.f32.mrb[0].mxu0
        %v3999 = vadd.f32 0.0, %v3998
        %v4000 = vpop.f32.mrb[0].mxu0
        %4001 = vmatprep.mubr.f32.mxu0 0.0
        %4002 = vmatmul.mubr.f32.gmra.mrb[0].mxu0 %v3924
        %v4003 = vpop.f32.mrb[0].mxu0
        %v4004 = vadd.f32 0.0, %v4003
        %v4005 = vpop.f32.mrb[0].mxu0
        %4006 = vdwg.mxu0
        %4007 = vset.pattern.permute.xlu0 2
        %4008 = vperm.xlu0 %4007, %v3660
        %v4009 = vpop.permute.xlu0 %4008
        %4011 = vset.pattern.permute.xlu0 2
        %4012 = vperm.xlu0 %4011, %v3665
        %v4013 = vpop.permute.xlu0 %4012
        %v4015 = vlaneseq
        %v4016 = vshrl.u32 %v4015, 7
        %v4017 = vsub.s32 2, %v4016
        %v4018 = vrot.slane %v3738, %v4017
        %v4019 = vadd.f32 %v4009, %v4018
        %v4020 = vadd.f32 %v4013, %v4018
        %vm4021 = vcmp.gt.f32.partialorder %v4019, 0.0
        %vm4022 = vcmp.gt.f32.partialorder %v4020, 0.0
        %v4023 = vmul.f32 %v4019, 0.2
        %v4024 = vmul.f32 %v4020, 0.2
        %v4025 = vsel %vm4021, %v4019, %v4023
        %v4026 = vsel %vm4022, %v4020, %v4024
        %v4027 = vsel %vm2887, -1e+30, %v4025
        %v4028 = vsel %vm2888, -1e+30, %v4026
        %v4029 = vsel %vm2110, %v4027, -inf
        %4030 = vmax.xlane.f32.xlu0 %v4029
        %v4031 = vpop.xlane.xlu0 %4030
        %v4032 = vsel %vm2110, %v4028, -inf
        %4033 = vmax.xlane.f32.xlu0 %v4032
        %v4034 = vpop.xlane.xlu0 %4033
        %v4035 = vsub.f32 %v4027, %v4031
        %v4036 = vsub.f32 %v4028, %v4034
        %v4037 = vmul.f32 %v4035, 1.442695
        %v4038 = vpow.pop %v4037
        %v4039 = vmul.f32 %v4036, 1.442695
        %v4040 = vpow.pop %v4039
        %v4041 = vsel %vm2110, %v4038, 0.0
        %4042 = vadd.xlane.f32.xlu0 %v4041
        %v4043 = vpop.xlane.xlu0 %4042
        %v4044 = vsel %vm2110, %v4040, 0.0
        %4045 = vadd.xlane.f32.xlu0 %v4044
        %v4046 = vpop.xlane.xlu0 %4045
        %v4047 = vrcp.pop %v4043
        %v4048 = vrcp.pop %v4046
        %v4049 = vmul.f32 %v4038, %v4047
        %v4050 = vmul.f32 %v4040, %v4048
        %v4052 = vrot.slane %v3542, 4
        %v4053 = vrot.slane %v3547, 4
        %v4054 = vsel %vm1191, %v4052, %v4053
        %v4055 = vsel %vm2110, %v4054, 0
        %v4057 = vsel %vm2110, %v4053, 0
        %v4060 = vsel %vm2110, %v4049, 0
        %v4063 = vsel %vm2110, %v4050, 0
        %4065 = vmatprep.subr.mxu0 0.0
        %4066 = vmatpush1.xpose.msra.mxu0 %v4060
        %4067 = vmatprep.subr.mxu0 0.0
        %4068 = vmatpush1.xpose.msra.mxu0 %v4063
        %4069 = vmatprep.subr.mxu0 0.0
        %4070 = vmatpush1.xpose.msra.mxu0 0.0
        %4071 = vmatprep.subr.mxu0 0.0
        %4072 = vmatpush1.xpose.msra.mxu0 0.0
        %4073 = vmatprep.subr.mxu0 0.0
        %4074 = vmatpush1.xpose.msra.mxu0 0.0
        %4075 = vmatprep.subr.mxu0 0.0
        %4076 = vmatpush1.xpose.msra.mxu0 0.0
        %4077 = vmatprep.subr.mxu0 0.0
        %4078 = vmatpush1.xpose.msra.mxu0 0.0
        %4079 = vmatprep.subr.mxu0 0.0
        %4080 = vmatpush1.xpose.msra.mxu0 0.0
        %4081 = vmatprep.subr.mxu0 0.0
        %4082 = vmatpush1.xpose.msra.mxu0 0.0
        %4083 = vmatprep.subr.mxu0 0.0
        %4084 = vmatpush1.xpose.msra.mxu0 0.0
        %4085 = vmatprep.subr.mxu0 0.0
        %4086 = vmatpush1.xpose.msra.mxu0 0.0
        %4087 = vmatprep.subr.mxu0 0.0
        %4088 = vmatpush1.xpose.msra.mxu0 0.0
        %4089 = vmatprep.subr.mxu0 0.0
        %4090 = vmatpush1.xpose.msra.mxu0 0.0
        %4091 = vmatprep.subr.mxu0 0.0
        %4092 = vmatpush1.xpose.msra.mxu0 0.0
        %4093 = vmatprep.subr.mxu0 0.0
        %4094 = vmatpush1.xpose.msra.mxu0 0.0
        %4095 = vmatprep.subr.mxu0 0.0
        %4096 = vmatpush1.xpose.msra.mxu0 0.0
        %4097 = vmatprep.subr.mxu0 0.0
        %4098 = vmatpush1.xpose.msra.mxu0 0.0
        %4099 = vmatprep.subr.mxu0 0.0
        %4100 = vmatpush1.xpose.msra.mxu0 0.0
        %4101 = vmatprep.subr.mxu0 0.0
        %4102 = vmatpush1.xpose.msra.mxu0 0.0
        %4103 = vmatprep.subr.mxu0 0.0
        %4104 = vmatpush1.xpose.msra.mxu0 0.0
        %4105 = vmatprep.subr.mxu0 0.0
        %4106 = vmatpush1.xpose.msra.mxu0 0.0
        %4107 = vmatprep.subr.mxu0 0.0
        %4108 = vmatpush1.xpose.msra.mxu0 0.0
        %4109 = vmatprep.subr.mxu0 0.0
        %4110 = vmatpush1.xpose.msra.mxu0 0.0
        %4111 = vmatprep.subr.mxu0 0.0
        %4112 = vmatpush1.xpose.msra.mxu0 0.0
        %4113 = vmatprep.subr.mxu0 0.0
        %4114 = vmatpush1.xpose.msra.mxu0 0.0
        %4115 = vmatprep.subr.mxu0 0.0
        %4116 = vmatpush1.xpose.msra.mxu0 0.0
        %4117 = vmatprep.subr.mxu0 0.0
        %4118 = vmatpush1.xpose.msra.mxu0 0.0
        %4119 = vmatprep.subr.mxu0 0.0
        %4120 = vmatpush1.xpose.msra.mxu0 0.0
        %4121 = vmatprep.subr.mxu0 0.0
        %4122 = vmatpush1.xpose.msra.mxu0 0.0
        %4123 = vmatprep.subr.mxu0 0.0
        %4124 = vmatpush1.xpose.msra.mxu0 0.0
        %4125 = vmatprep.subr.mxu0 0.0
        %4126 = vmatpush1.xpose.msra.mxu0 0.0
        %4127 = vmatprep.subr.mxu0 0.0
        %4128 = vmatpush1.xpose.msra.mxu0 0.0
        %4129 = vmatprep.mubr.f32.mxu0 0.0
        %4130 = vmatmul.mubr.f32.gmra.mrb[0].mxu0 %v4055
        %v4131 = vpop.f32.mrb[0].mxu0
        %v4132 = vadd.f32 0.0, %v4131
        %v4133 = vpop.f32.mrb[0].mxu0
        %4134 = vmatprep.mubr.f32.mxu0 0.0
        %4135 = vmatmul.mubr.f32.gmra.mrb[0].mxu0 %v4057
        %v4136 = vpop.f32.mrb[0].mxu0
        %v4137 = vadd.f32 0.0, %v4136
        %v4138 = vpop.f32.mrb[0].mxu0
        %4139 = vdwg.mxu0
        %4140 = vset.pattern.permute.xlu0 3
        %4141 = vperm.xlu0 %4140, %v3660
        %v4142 = vpop.permute.xlu0 %4141
        %4144 = vset.pattern.permute.xlu0 3
        %4145 = vperm.xlu0 %4144, %v3665
        %v4146 = vpop.permute.xlu0 %4145
        %v4148 = vlaneseq
        %v4149 = vshrl.u32 %v4148, 7
        %v4150 = vsub.s32 3, %v4149
        %v4151 = vrot.slane %v3738, %v4150
        %v4152 = vadd.f32 %v4142, %v4151
        %v4153 = vadd.f32 %v4146, %v4151
        %vm4154 = vcmp.gt.f32.partialorder %v4152, 0.0
        %vm4155 = vcmp.gt.f32.partialorder %v4153, 0.0
        %v4156 = vmul.f32 %v4152, 0.2
        %v4157 = vmul.f32 %v4153, 0.2
        %v4158 = vsel %vm4154, %v4152, %v4156
        %v4159 = vsel %vm4155, %v4153, %v4157
        %v4160 = vsel %vm2887, -1e+30, %v4158
        %v4161 = vsel %vm2888, -1e+30, %v4159
        %v4162 = vsel %vm2110, %v4160, -inf
        %4163 = vmax.xlane.f32.xlu0 %v4162
        %v4164 = vpop.xlane.xlu0 %4163
        %v4165 = vsel %vm2110, %v4161, -inf
        %4166 = vmax.xlane.f32.xlu0 %v4165
        %v4167 = vpop.xlane.xlu0 %4166
        %v4168 = vsub.f32 %v4160, %v4164
        %v4169 = vsub.f32 %v4161, %v4167
        %v4170 = vmul.f32 %v4168, 1.442695
        %v4171 = vpow.pop %v4170
        %v4172 = vmul.f32 %v4169, 1.442695
        %v4173 = vpow.pop %v4172
        %v4174 = vsel %vm2110, %v4171, 0.0
        %4175 = vadd.xlane.f32.xlu0 %v4174
        %v4176 = vpop.xlane.xlu0 %4175
        %v4177 = vsel %vm2110, %v4173, 0.0
        %4178 = vadd.xlane.f32.xlu0 %v4177
        %v4179 = vpop.xlane.xlu0 %4178
        %v4180 = vrcp.pop %v4176
        %v4181 = vrcp.pop %v4179
        %v4182 = vmul.f32 %v4171, %v4180
        %v4183 = vmul.f32 %v4173, %v4181
        %v4185 = vrot.slane %v3547, 6
        %v4186 = vrot.slane %v3552, 6
        %v4187 = vsel %vm3312, %v4185, %v4186
        %v4188 = vsel %vm2110, %v4187, 0
        %v4190 = vsel %vm2110, %v4186, 0
        %v4193 = vsel %vm2110, %v4182, 0
        %v4196 = vsel %vm2110, %v4183, 0
        %4198 = vmatprep.subr.mxu0 0.0
        %4199 = vmatpush1.xpose.msra.mxu0 %v4193
        %4200 = vmatprep.subr.mxu0 0.0
        %4201 = vmatpush1.xpose.msra.mxu0 %v4196
        %4202 = vmatprep.subr.mxu0 0.0
        %4203 = vmatpush1.xpose.msra.mxu0 0.0
        %4204 = vmatprep.subr.mxu0 0.0
        %4205 = vmatpush1.xpose.msra.mxu0 0.0
        %4206 = vmatprep.subr.mxu0 0.0
        %4207 = vmatpush1.xpose.msra.mxu0 0.0
        %4208 = vmatprep.subr.mxu0 0.0
        %4209 = vmatpush1.xpose.msra.mxu0 0.0
        %4210 = vmatprep.subr.mxu0 0.0
        %4211 = vmatpush1.xpose.msra.mxu0 0.0
        %4212 = vmatprep.subr.mxu0 0.0
        %4213 = vmatpush1.xpose.msra.mxu0 0.0
        %4214 = vmatprep.subr.mxu0 0.0
        %4215 = vmatpush1.xpose.msra.mxu0 0.0
        %4216 = vmatprep.subr.mxu0 0.0
        %4217 = vmatpush1.xpose.msra.mxu0 0.0
        %4218 = vmatprep.subr.mxu0 0.0
        %4219 = vmatpush1.xpose.msra.mxu0 0.0
        %4220 = vmatprep.subr.mxu0 0.0
        %4221 = vmatpush1.xpose.msra.mxu0 0.0
        %4222 = vmatprep.subr.mxu0 0.0
        %4223 = vmatpush1.xpose.msra.mxu0 0.0
        %4224 = vmatprep.subr.mxu0 0.0
        %4225 = vmatpush1.xpose.msra.mxu0 0.0
        %4226 = vmatprep.subr.mxu0 0.0
        %4227 = vmatpush1.xpose.msra.mxu0 0.0
        %4228 = vmatprep.subr.mxu0 0.0
        %4229 = vmatpush1.xpose.msra.mxu0 0.0
        %4230 = vmatprep.subr.mxu0 0.0
        %4231 = vmatpush1.xpose.msra.mxu0 0.0
        %4232 = vmatprep.subr.mxu0 0.0
        %4233 = vmatpush1.xpose.msra.mxu0 0.0
        %4234 = vmatprep.subr.mxu0 0.0
        %4235 = vmatpush1.xpose.msra.mxu0 0.0
        %4236 = vmatprep.subr.mxu0 0.0
        %4237 = vmatpush1.xpose.msra.mxu0 0.0
        %4238 = vmatprep.subr.mxu0 0.0
        %4239 = vmatpush1.xpose.msra.mxu0 0.0
        %4240 = vmatprep.subr.mxu0 0.0
        %4241 = vmatpush1.xpose.msra.mxu0 0.0
        %4242 = vmatprep.subr.mxu0 0.0
        %4243 = vmatpush1.xpose.msra.mxu0 0.0
        %4244 = vmatprep.subr.mxu0 0.0
        %4245 = vmatpush1.xpose.msra.mxu0 0.0
        %4246 = vmatprep.subr.mxu0 0.0
        %4247 = vmatpush1.xpose.msra.mxu0 0.0
        %4248 = vmatprep.subr.mxu0 0.0
        %4249 = vmatpush1.xpose.msra.mxu0 0.0
        %4250 = vmatprep.subr.mxu0 0.0
        %4251 = vmatpush1.xpose.msra.mxu0 0.0
        %4252 = vmatprep.subr.mxu0 0.0
        %4253 = vmatpush1.xpose.msra.mxu0 0.0
        %4254 = vmatprep.subr.mxu0 0.0
        %4255 = vmatpush1.xpose.msra.mxu0 0.0
        %4256 = vmatprep.subr.mxu0 0.0
        %4257 = vmatpush1.xpose.msra.mxu0 0.0
        %4258 = vmatprep.subr.mxu0 0.0
        %4259 = vmatpush1.xpose.msra.mxu0 0.0
        %4260 = vmatprep.subr.mxu0 0.0
        %4261 = vmatpush1.xpose.msra.mxu0 0.0
        %4262 = vmatprep.mubr.f32.mxu0 0.0
        %4263 = vmatmul.mubr.f32.gmra.mrb[0].mxu0 %v4188
        %v4264 = vpop.f32.mrb[0].mxu0
        %v4265 = vadd.f32 0.0, %v4264
        %v4266 = vpop.f32.mrb[0].mxu0
        %4267 = vmatprep.mubr.f32.mxu0 0.0
        %4268 = vmatmul.mubr.f32.gmra.mrb[0].mxu0 %v4190
        %v4269 = vpop.f32.mrb[0].mxu0
        %v4270 = vadd.f32 0.0, %v4269
        %v4271 = vpop.f32.mrb[0].mxu0
        %4272 = vdwg.mxu0
        %v4275 = vrot.slane %v3999, 6
        %v4276 = vrot.slane %v4004, 6
        %v4277 = vsel %vm3312, %v4275, %v4276
        %v4282 = vrot.slane %v4132, 4
        %v4283 = vrot.slane %v4137, 4
        %v4284 = vsel %vm1191, %v4282, %v4283
        %v4289 = vrot.slane %v4265, 2
        %v4290 = vrot.slane %v4270, 2
        %v4291 = vsel %vm3045, %v4289, %v4290
        %v4294 = vsel %vm3312, %v3871, %v4275
        %v4295 = vsel %vm1191, %v4277, %v4282
        %v4296 = vsel %vm3045, %v4284, %v4289
        %vm4297 = vcmp.gt.f32.partialorder %v3866, 0.0
        %vm4298 = vcmp.gt.f32.partialorder %v4294, 0.0
        %vm4299 = vcmp.gt.f32.partialorder %v4295, 0.0
        %vm4300 = vcmp.gt.f32.partialorder %v4296, 0.0
        %vm4301 = vcmp.gt.f32.partialorder %v4291, 0.0
        %v4302 = vmul.f32 %v3866, 1.442695
        %v4303 = vpow.pop %v4302
        %v4304 = vmul.f32 %v4294, 1.442695
        %v4305 = vpow.pop %v4304
        %v4306 = vmul.f32 %v4295, 1.442695
        %v4307 = vpow.pop %v4306
        %v4308 = vmul.f32 %v4296, 1.442695
        %v4309 = vpow.pop %v4308
        %v4310 = vmul.f32 %v4291, 1.442695
        %v4311 = vpow.pop %v4310
        %v4312 = vsub.f32 %v4303, 1.0
        %v4313 = vsub.f32 %v4305, 1.0
        %v4314 = vsub.f32 %v4307, 1.0
        %v4315 = vsub.f32 %v4309, 1.0
        %v4316 = vsub.f32 %v4311, 1.0
        %v4317 = vsel %vm4297, %v3866, %v4312
        %v4318 = vsel %vm4298, %v4294, %v4313
        %v4319 = vsel %vm4299, %v4295, %v4314
        %v4320 = vsel %vm4300, %v4296, %v4315
        %v4321 = vsel %vm4301, %v4291, %v4316
        %v4323 = vsel %vm1780, %v1157, 0
        %v4326 = vsel %vm1780, %v1158, 0
        %v4329 = vsel %vm1780, %v1159, 0
        %v4332 = vsel %vm1780, %v1160, 0
        %v4335 = vsel %vm1780, %v1161, 0
        %4337 = vmatprep.subr.mxu0 0.0
        %4338 = vmatpush1.msra.mxu0 %v4317
        %4339 = vmatprep.subr.mxu0 0.0
        %4340 = vmatpush1.msra.mxu0 %v4318
        %4341 = vmatprep.subr.mxu0 0.0
        %4342 = vmatpush1.msra.mxu0 %v4319
        %4343 = vmatprep.subr.mxu0 0.0
        %4344 = vmatpush1.msra.mxu0 %v4320
        %4345 = vmatprep.subr.mxu0 0.0
        %4346 = vmatpush1.msra.mxu0 %v4321
        %4347 = vmatprep.subr.mxu0 0.0
        %4348 = vmatpush1.msra.mxu0 0.0
        %4349 = vmatprep.subr.mxu0 0.0
        %4350 = vmatpush1.msra.mxu0 0.0
        %4351 = vmatprep.subr.mxu0 0.0
        %4352 = vmatpush1.msra.mxu0 0.0
        %4353 = vmatprep.subr.mxu0 0.0
        %4354 = vmatpush1.msra.mxu0 0.0
        %4355 = vmatprep.subr.mxu0 0.0
        %4356 = vmatpush1.msra.mxu0 0.0
        %4357 = vmatprep.subr.mxu0 0.0
        %4358 = vmatpush1.msra.mxu0 0.0
        %4359 = vmatprep.subr.mxu0 0.0
        %4360 = vmatpush1.msra.mxu0 0.0
        %4361 = vmatprep.subr.mxu0 0.0
        %4362 = vmatpush1.msra.mxu0 0.0
        %4363 = vmatprep.subr.mxu0 0.0
        %4364 = vmatpush1.msra.mxu0 0.0
        %4365 = vmatprep.subr.mxu0 0.0
        %4366 = vmatpush1.msra.mxu0 0.0
        %4367 = vmatprep.subr.mxu0 0.0
        %4368 = vmatpush1.msra.mxu0 0.0
        %4369 = vmatprep.subr.mxu0 0.0
        %4370 = vmatpush1.msra.mxu0 0.0
        %4371 = vmatprep.subr.mxu0 0.0
        %4372 = vmatpush1.msra.mxu0 0.0
        %4373 = vmatprep.subr.mxu0 0.0
        %4374 = vmatpush1.msra.mxu0 0.0
        %4375 = vmatprep.subr.mxu0 0.0
        %4376 = vmatpush1.msra.mxu0 0.0
        %4377 = vmatprep.subr.mxu0 0.0
        %4378 = vmatpush1.msra.mxu0 0.0
        %4379 = vmatprep.subr.mxu0 0.0
        %4380 = vmatpush1.msra.mxu0 0.0
        %4381 = vmatprep.subr.mxu0 0.0
        %4382 = vmatpush1.msra.mxu0 0.0
        %4383 = vmatprep.subr.mxu0 0.0
        %4384 = vmatpush1.msra.mxu0 0.0
        %4385 = vmatprep.subr.mxu0 0.0
        %4386 = vmatpush1.msra.mxu0 0.0
        %4387 = vmatprep.subr.mxu0 0.0
        %4388 = vmatpush1.msra.mxu0 0.0
        %4389 = vmatprep.subr.mxu0 0.0
        %4390 = vmatpush1.msra.mxu0 0.0
        %4391 = vmatprep.subr.mxu0 0.0
        %4392 = vmatpush1.msra.mxu0 0.0
        %4393 = vmatprep.subr.mxu0 0.0
        %4394 = vmatpush1.msra.mxu0 0.0
        %4395 = vmatprep.subr.mxu0 0.0
        %4396 = vmatpush1.msra.mxu0 0.0
        %4397 = vmatprep.subr.mxu0 0.0
        %4398 = vmatpush1.msra.mxu0 0.0
        %4399 = vmatprep.subr.mxu0 0.0
        %4400 = vmatpush1.msra.mxu0 0.0
        %4401 = vmatprep.mubr.f32.mxu0 0.0
        %4402 = vmatmul.mubr.f32.gmra.mrb[0].mxu0 %v4323
        %v4403 = vpop.f32.mrb[0].mxu0
        %v4404 = vadd.f32 0.0, %v4403
        %v4405 = vpop.f32.mrb[0].mxu0
        %4406 = vmatprep.mubr.f32.mxu0 0.0
        %4407 = vmatmul.mubr.f32.gmra.mrb[0].mxu0 %v4326
        %v4408 = vpop.f32.mrb[0].mxu0
        %v4409 = vadd.f32 0.0, %v4408
        %v4410 = vpop.f32.mrb[0].mxu0
        %4411 = vmatprep.mubr.f32.mxu0 0.0
        %4412 = vmatmul.mubr.f32.gmra.mrb[0].mxu0 %v4329
        %v4413 = vpop.f32.mrb[0].mxu0
        %v4414 = vadd.f32 0.0, %v4413
        %v4415 = vpop.f32.mrb[0].mxu0
        %4416 = vmatprep.mubr.f32.mxu0 0.0
        %4417 = vmatmul.mubr.f32.gmra.mrb[0].mxu0 %v4332
        %v4418 = vpop.f32.mrb[0].mxu0
        %v4419 = vadd.f32 0.0, %v4418
        %v4420 = vpop.f32.mrb[0].mxu0
        %4421 = vmatprep.mubr.f32.mxu0 0.0
        %4422 = vmatmul.mubr.f32.gmra.mrb[0].mxu0 %v4335
        %v4423 = vpop.f32.mrb[0].mxu0
        %v4424 = vadd.f32 0.0, %v4423
        %v4425 = vpop.f32.mrb[0].mxu0
        %4426 = vdwg.mxu0
        %4427 = vxpose.xlu0.b32.start [1/16] %v4404, 128
        %4428 = vxpose.xlu0.b32.cont [2/16] %v4409, 128
        %4429 = vxpose.xlu0.b32.cont [3/16] %v4414, 128
        %4430 = vxpose.xlu0.b32.cont [4/16] %v4419, 128
        %4431 = vxpose.xlu0.b32.cont [5/16] %v4424, 128
        %4432 = vxpose.xlu0.b32.cont [6/16] 0.0, 128
        %4433 = vxpose.xlu0.b32.cont [7/16] 0.0, 128
        %4434 = vxpose.xlu0.b32.cont [8/16] 0.0, 128
        %4435 = vxpose.xlu0.b32.cont [9/16] 0.0, 128
        %4436 = vxpose.xlu0.b32.cont [10/16] 0.0, 128
        %4437 = vxpose.xlu0.b32.cont [11/16] 0.0, 128
        %4438 = vxpose.xlu0.b32.cont [12/16] 0.0, 128
        %4439 = vxpose.xlu0.b32.cont [13/16] 0.0, 128
        %4440 = vxpose.xlu0.b32.cont [14/16] 0.0, 128
        %4441 = vxpose.xlu0.b32.cont [15/16] 0.0, 128
        %4442 = vxpose.xlu0.b32.end [16/16] 0.0, 128
        %v4443 = vpop.trf.xlu0
        %v4444 = vpop.trf.xlu0
        %v4445 = vpop.trf.xlu0
        %v4446 = vpop.trf.xlu0
        %v4447 = vpop.trf.xlu0
        %v4448 = vpop.trf.xlu0
        %v4449 = vpop.trf.xlu0
        %v4450 = vpop.trf.xlu0
        %v4451 = vpop.trf.xlu0
        %v4452 = vpop.trf.xlu0
        %v4453 = vpop.trf.xlu0
        %v4454 = vpop.trf.xlu0
        %v4455 = vpop.trf.xlu0
        %v4456 = vpop.trf.xlu0
        %v4457 = vpop.trf.xlu0
        %v4458 = vpop.trf.xlu0
        %v4460 = vsel %vm1780, %v4443, 0
        %v4463 = vsel %vm1780, %v4444, 0
        %4465 = vmatprep.subr.mxu0 0.0
        %4466 = vmatpush1.msra.mxu0 %v1162
        %4467 = vmatprep.subr.mxu0 0.0
        %4468 = vmatpush1.msra.mxu0 %v1163
        %4469 = vmatprep.subr.mxu0 0.0
        %4470 = vmatpush1.msra.mxu0 %v1164
        %4471 = vmatprep.subr.mxu0 0.0
        %4472 = vmatpush1.msra.mxu0 %v1165
        %4473 = vmatprep.subr.mxu0 0.0
        %4474 = vmatpush1.msra.mxu0 %v1166
        %4475 = vmatprep.subr.mxu0 0.0
        %4476 = vmatpush1.msra.mxu0 0.0
        %4477 = vmatprep.subr.mxu0 0.0
        %4478 = vmatpush1.msra.mxu0 0.0
        %4479 = vmatprep.subr.mxu0 0.0
        %4480 = vmatpush1.msra.mxu0 0.0
        %4481 = vmatprep.subr.mxu0 0.0
        %4482 = vmatpush1.msra.mxu0 0.0
        %4483 = vmatprep.subr.mxu0 0.0
        %4484 = vmatpush1.msra.mxu0 0.0
        %4485 = vmatprep.subr.mxu0 0.0
        %4486 = vmatpush1.msra.mxu0 0.0
        %4487 = vmatprep.subr.mxu0 0.0
        %4488 = vmatpush1.msra.mxu0 0.0
        %4489 = vmatprep.subr.mxu0 0.0
        %4490 = vmatpush1.msra.mxu0 0.0
        %4491 = vmatprep.subr.mxu0 0.0
        %4492 = vmatpush1.msra.mxu0 0.0
        %4493 = vmatprep.subr.mxu0 0.0
        %4494 = vmatpush1.msra.mxu0 0.0
        %4495 = vmatprep.subr.mxu0 0.0
        %4496 = vmatpush1.msra.mxu0 0.0
        %4497 = vmatprep.subr.mxu0 0.0
        %4498 = vmatpush1.msra.mxu0 0.0
        %4499 = vmatprep.subr.mxu0 0.0
        %4500 = vmatpush1.msra.mxu0 0.0
        %4501 = vmatprep.subr.mxu0 0.0
        %4502 = vmatpush1.msra.mxu0 0.0
        %4503 = vmatprep.subr.mxu0 0.0
        %4504 = vmatpush1.msra.mxu0 0.0
        %4505 = vmatprep.subr.mxu0 0.0
        %4506 = vmatpush1.msra.mxu0 0.0
        %4507 = vmatprep.subr.mxu0 0.0
        %4508 = vmatpush1.msra.mxu0 0.0
        %4509 = vmatprep.subr.mxu0 0.0
        %4510 = vmatpush1.msra.mxu0 0.0
        %4511 = vmatprep.subr.mxu0 0.0
        %4512 = vmatpush1.msra.mxu0 0.0
        %4513 = vmatprep.subr.mxu0 0.0
        %4514 = vmatpush1.msra.mxu0 0.0
        %4515 = vmatprep.subr.mxu0 0.0
        %4516 = vmatpush1.msra.mxu0 0.0
        %4517 = vmatprep.subr.mxu0 0.0
        %4518 = vmatpush1.msra.mxu0 0.0
        %4519 = vmatprep.subr.mxu0 0.0
        %4520 = vmatpush1.msra.mxu0 0.0
        %4521 = vmatprep.subr.mxu0 0.0
        %4522 = vmatpush1.msra.mxu0 0.0
        %4523 = vmatprep.subr.mxu0 0.0
        %4524 = vmatpush1.msra.mxu0 0.0
        %4525 = vmatprep.subr.mxu0 0.0
        %4526 = vmatpush1.msra.mxu0 0.0
        %4527 = vmatprep.subr.mxu0 0.0
        %4528 = vmatpush1.msra.mxu0 0.0
        %4529 = vmatprep.mubr.f32.mxu0 0.0
        %4530 = vmatmul.mubr.f32.gmra.mrb[0].mxu0 %v4460
        %v4531 = vpop.f32.mrb[0].mxu0
        %v4532 = vadd.f32 0.0, %v4531
        %v4533 = vpop.f32.mrb[0].mxu0
        %4534 = vmatprep.mubr.f32.mxu0 0.0
        %4535 = vmatmul.mubr.f32.gmra.mrb[0].mxu0 %v4463
        %v4536 = vpop.f32.mrb[0].mxu0
        %v4537 = vadd.f32 0.0, %v4536
        %v4538 = vpop.f32.mrb[0].mxu0
        %4539 = vdwg.mxu0
        %v4541 = vsel %vm1780, %v1167, 0
        %4543 = vmatprep.subr.mxu0 0.0
        %4544 = vmatpush1.msra.mxu0 %v4404
        %4545 = vmatprep.subr.mxu0 0.0
        %4546 = vmatpush1.msra.mxu0 %v4409
        %4547 = vmatprep.subr.mxu0 0.0
        %4548 = vmatpush1.msra.mxu0 %v4414
        %4549 = vmatprep.subr.mxu0 0.0
        %4550 = vmatpush1.msra.mxu0 %v4419
        %4551 = vmatprep.subr.mxu0 0.0
        %4552 = vmatpush1.msra.mxu0 %v4424
        %4553 = vmatprep.subr.mxu0 0.0
        %4554 = vmatpush1.msra.mxu0 0.0
        %4555 = vmatprep.subr.mxu0 0.0
        %4556 = vmatpush1.msra.mxu0 0.0
        %4557 = vmatprep.subr.mxu0 0.0
        %4558 = vmatpush1.msra.mxu0 0.0
        %4559 = vmatprep.subr.mxu0 0.0
        %4560 = vmatpush1.msra.mxu0 0.0
        %4561 = vmatprep.subr.mxu0 0.0
        %4562 = vmatpush1.msra.mxu0 0.0
        %4563 = vmatprep.subr.mxu0 0.0
        %4564 = vmatpush1.msra.mxu0 0.0
        %4565 = vmatprep.subr.mxu0 0.0
        %4566 = vmatpush1.msra.mxu0 0.0
        %4567 = vmatprep.subr.mxu0 0.0
        %4568 = vmatpush1.msra.mxu0 0.0
        %4569 = vmatprep.subr.mxu0 0.0
        %4570 = vmatpush1.msra.mxu0 0.0
        %4571 = vmatprep.subr.mxu0 0.0
        %4572 = vmatpush1.msra.mxu0 0.0
        %4573 = vmatprep.subr.mxu0 0.0
        %4574 = vmatpush1.msra.mxu0 0.0
        %4575 = vmatprep.subr.mxu0 0.0
        %4576 = vmatpush1.msra.mxu0 0.0
        %4577 = vmatprep.subr.mxu0 0.0
        %4578 = vmatpush1.msra.mxu0 0.0
        %4579 = vmatprep.subr.mxu0 0.0
        %4580 = vmatpush1.msra.mxu0 0.0
        %4581 = vmatprep.subr.mxu0 0.0
        %4582 = vmatpush1.msra.mxu0 0.0
        %4583 = vmatprep.subr.mxu0 0.0
        %4584 = vmatpush1.msra.mxu0 0.0
        %4585 = vmatprep.subr.mxu0 0.0
        %4586 = vmatpush1.msra.mxu0 0.0
        %4587 = vmatprep.subr.mxu0 0.0
        %4588 = vmatpush1.msra.mxu0 0.0
        %4589 = vmatprep.subr.mxu0 0.0
        %4590 = vmatpush1.msra.mxu0 0.0
        %4591 = vmatprep.subr.mxu0 0.0
        %4592 = vmatpush1.msra.mxu0 0.0
        %4593 = vmatprep.subr.mxu0 0.0
        %4594 = vmatpush1.msra.mxu0 0.0
        %4595 = vmatprep.subr.mxu0 0.0
        %4596 = vmatpush1.msra.mxu0 0.0
        %4597 = vmatprep.subr.mxu0 0.0
        %4598 = vmatpush1.msra.mxu0 0.0
        %4599 = vmatprep.subr.mxu0 0.0
        %4600 = vmatpush1.msra.mxu0 0.0
        %4601 = vmatprep.subr.mxu0 0.0
        %4602 = vmatpush1.msra.mxu0 0.0
        %4603 = vmatprep.subr.mxu0 0.0
        %4604 = vmatpush1.msra.mxu0 0.0
        %4605 = vmatprep.subr.mxu0 0.0
        %4606 = vmatpush1.msra.mxu0 0.0
        %4607 = vmatprep.mubr.f32.mxu0 0.0
        %4608 = vmatmul.mubr.f32.gmra.mrb[0].mxu0 %v4541
        %v4609 = vpop.f32.mrb[0].mxu0
        %v4610 = vadd.f32 0.0, %v4609
        %v4611 = vpop.f32.mrb[0].mxu0
        %4612 = vdwg.mxu0
        %4614 = vset.pattern.permute.xlu0 0
        %4615 = vperm.xlu0 %4614, %v4532
        %v4616 = vpop.permute.xlu0 %4615
        %4619 = vset.pattern.permute.xlu0 0
        %4620 = vperm.xlu0 %4619, %v4537
        %v4621 = vpop.permute.xlu0 %4620
        %v4623 = vlaneseq
        %v4624 = vshrl.u32 %v4623, 7
        %v4625 = vsub.s32 0, %v4624
        %v4626 = vrot.slane %v4610, %v4625
        %v4627 = vadd.f32 %v4616, %v4626
        %v4628 = vadd.f32 %v4621, %v4626
        %vm4629 = vcmp.gt.f32.partialorder %v4627, 0.0
        %vm4630 = vcmp.gt.f32.partialorder %v4628, 0.0
        %v4631 = vmul.f32 %v4627, 0.2
        %v4632 = vmul.f32 %v4628, 0.2
        %v4633 = vsel %vm4629, %v4627, %v4631
        %v4634 = vsel %vm4630, %v4628, %v4632
        %v4635 = vsel %vm2887, -1e+30, %v4633
        %v4636 = vsel %vm2888, -1e+30, %v4634
        %v4637 = vsel %vm2110, %v4635, -inf
        %4638 = vmax.xlane.f32.xlu0 %v4637
        %v4639 = vpop.xlane.xlu0 %4638
        %v4640 = vsel %vm2110, %v4636, -inf
        %4641 = vmax.xlane.f32.xlu0 %v4640
        %v4642 = vpop.xlane.xlu0 %4641
        %v4643 = vsub.f32 %v4635, %v4639
        %v4644 = vsub.f32 %v4636, %v4642
        %v4645 = vmul.f32 %v4643, 1.442695
        %v4646 = vpow.pop %v4645
        %v4647 = vmul.f32 %v4644, 1.442695
        %v4648 = vpow.pop %v4647
        %v4649 = vsel %vm2110, %v4646, 0.0
        %4650 = vadd.xlane.f32.xlu0 %v4649
        %v4651 = vpop.xlane.xlu0 %4650
        %v4652 = vsel %vm2110, %v4648, 0.0
        %4653 = vadd.xlane.f32.xlu0 %v4652
        %v4654 = vpop.xlane.xlu0 %4653
        %v4655 = vrcp.pop %v4651
        %v4656 = vrcp.pop %v4654
        %v4657 = vmul.f32 %v4646, %v4655
        %v4658 = vmul.f32 %v4648, %v4656
        %v4660 = vsel %vm2110, %v4404, 0
        %v4663 = vsel %vm2110, %v4409, 0
        %v4666 = vsel %vm2110, %v4657, 0
        %v4669 = vsel %vm2110, %v4658, 0
        %4671 = vmatprep.subr.mxu0 0.0
        %4672 = vmatpush1.xpose.msra.mxu0 %v4666
        %4673 = vmatprep.subr.mxu0 0.0
        %4674 = vmatpush1.xpose.msra.mxu0 %v4669
        %4675 = vmatprep.subr.mxu0 0.0
        %4676 = vmatpush1.xpose.msra.mxu0 0.0
        %4677 = vmatprep.subr.mxu0 0.0
        %4678 = vmatpush1.xpose.msra.mxu0 0.0
        %4679 = vmatprep.subr.mxu0 0.0
        %4680 = vmatpush1.xpose.msra.mxu0 0.0
        %4681 = vmatprep.subr.mxu0 0.0
        %4682 = vmatpush1.xpose.msra.mxu0 0.0
        %4683 = vmatprep.subr.mxu0 0.0
        %4684 = vmatpush1.xpose.msra.mxu0 0.0
        %4685 = vmatprep.subr.mxu0 0.0
        %4686 = vmatpush1.xpose.msra.mxu0 0.0
        %4687 = vmatprep.subr.mxu0 0.0
        %4688 = vmatpush1.xpose.msra.mxu0 0.0
        %4689 = vmatprep.subr.mxu0 0.0
        %4690 = vmatpush1.xpose.msra.mxu0 0.0
        %4691 = vmatprep.subr.mxu0 0.0
        %4692 = vmatpush1.xpose.msra.mxu0 0.0
        %4693 = vmatprep.subr.mxu0 0.0
        %4694 = vmatpush1.xpose.msra.mxu0 0.0
        %4695 = vmatprep.subr.mxu0 0.0
        %4696 = vmatpush1.xpose.msra.mxu0 0.0
        %4697 = vmatprep.subr.mxu0 0.0
        %4698 = vmatpush1.xpose.msra.mxu0 0.0
        %4699 = vmatprep.subr.mxu0 0.0
        %4700 = vmatpush1.xpose.msra.mxu0 0.0
        %4701 = vmatprep.subr.mxu0 0.0
        %4702 = vmatpush1.xpose.msra.mxu0 0.0
        %4703 = vmatprep.subr.mxu0 0.0
        %4704 = vmatpush1.xpose.msra.mxu0 0.0
        %4705 = vmatprep.subr.mxu0 0.0
        %4706 = vmatpush1.xpose.msra.mxu0 0.0
        %4707 = vmatprep.subr.mxu0 0.0
        %4708 = vmatpush1.xpose.msra.mxu0 0.0
        %4709 = vmatprep.subr.mxu0 0.0
        %4710 = vmatpush1.xpose.msra.mxu0 0.0
        %4711 = vmatprep.subr.mxu0 0.0
        %4712 = vmatpush1.xpose.msra.mxu0 0.0
        %4713 = vmatprep.subr.mxu0 0.0
        %4714 = vmatpush1.xpose.msra.mxu0 0.0
        %4715 = vmatprep.subr.mxu0 0.0
        %4716 = vmatpush1.xpose.msra.mxu0 0.0
        %4717 = vmatprep.subr.mxu0 0.0
        %4718 = vmatpush1.xpose.msra.mxu0 0.0
        %4719 = vmatprep.subr.mxu0 0.0
        %4720 = vmatpush1.xpose.msra.mxu0 0.0
        %4721 = vmatprep.subr.mxu0 0.0
        %4722 = vmatpush1.xpose.msra.mxu0 0.0
        %4723 = vmatprep.subr.mxu0 0.0
        %4724 = vmatpush1.xpose.msra.mxu0 0.0
        %4725 = vmatprep.subr.mxu0 0.0
        %4726 = vmatpush1.xpose.msra.mxu0 0.0
        %4727 = vmatprep.subr.mxu0 0.0
        %4728 = vmatpush1.xpose.msra.mxu0 0.0
        %4729 = vmatprep.subr.mxu0 0.0
        %4730 = vmatpush1.xpose.msra.mxu0 0.0
        %4731 = vmatprep.subr.mxu0 0.0
        %4732 = vmatpush1.xpose.msra.mxu0 0.0
        %4733 = vmatprep.subr.mxu0 0.0
        %4734 = vmatpush1.xpose.msra.mxu0 0.0
        %4735 = vmatprep.mubr.f32.mxu0 0.0
        %4736 = vmatmul.mubr.f32.gmra.mrb[0].mxu0 %v4660
        %v4737 = vpop.f32.mrb[0].mxu0
        %v4738 = vadd.f32 0.0, %v4737
        %v4739 = vpop.f32.mrb[0].mxu0
        %4740 = vmatprep.mubr.f32.mxu0 0.0
        %4741 = vmatmul.mubr.f32.gmra.mrb[0].mxu0 %v4663
        %v4742 = vpop.f32.mrb[0].mxu0
        %v4743 = vadd.f32 0.0, %v4742
        %v4744 = vpop.f32.mrb[0].mxu0
        %4745 = vdwg.mxu0
        %4746 = vset.pattern.permute.xlu0 1
        %4747 = vperm.xlu0 %4746, %v4532
        %v4748 = vpop.permute.xlu0 %4747
        %4750 = vset.pattern.permute.xlu0 1
        %4751 = vperm.xlu0 %4750, %v4537
        %v4752 = vpop.permute.xlu0 %4751
        %v4754 = vlaneseq
        %v4755 = vshrl.u32 %v4754, 7
        %v4756 = vsub.s32 1, %v4755
        %v4757 = vrot.slane %v4610, %v4756
        %v4758 = vadd.f32 %v4748, %v4757
        %v4759 = vadd.f32 %v4752, %v4757
        %vm4760 = vcmp.gt.f32.partialorder %v4758, 0.0
        %vm4761 = vcmp.gt.f32.partialorder %v4759, 0.0
        %v4762 = vmul.f32 %v4758, 0.2
        %v4763 = vmul.f32 %v4759, 0.2
        %v4764 = vsel %vm4760, %v4758, %v4762
        %v4765 = vsel %vm4761, %v4759, %v4763
        %v4766 = vsel %vm2887, -1e+30, %v4764
        %v4767 = vsel %vm2888, -1e+30, %v4765
        %v4768 = vsel %vm2110, %v4766, -inf
        %4769 = vmax.xlane.f32.xlu0 %v4768
        %v4770 = vpop.xlane.xlu0 %4769
        %v4771 = vsel %vm2110, %v4767, -inf
        %4772 = vmax.xlane.f32.xlu0 %v4771
        %v4773 = vpop.xlane.xlu0 %4772
        %v4774 = vsub.f32 %v4766, %v4770
        %v4775 = vsub.f32 %v4767, %v4773
        %v4776 = vmul.f32 %v4774, 1.442695
        %v4777 = vpow.pop %v4776
        %v4778 = vmul.f32 %v4775, 1.442695
        %v4779 = vpow.pop %v4778
        %v4780 = vsel %vm2110, %v4777, 0.0
        %4781 = vadd.xlane.f32.xlu0 %v4780
        %v4782 = vpop.xlane.xlu0 %4781
        %v4783 = vsel %vm2110, %v4779, 0.0
        %4784 = vadd.xlane.f32.xlu0 %v4783
        %v4785 = vpop.xlane.xlu0 %4784
        %v4786 = vrcp.pop %v4782
        %v4787 = vrcp.pop %v4785
        %v4788 = vmul.f32 %v4777, %v4786
        %v4789 = vmul.f32 %v4779, %v4787
        %v4791 = vrot.slane %v4409, 2
        %v4792 = vrot.slane %v4414, 2
        %v4793 = vsel %vm3045, %v4791, %v4792
        %v4794 = vsel %vm2110, %v4793, 0
        %v4796 = vsel %vm2110, %v4792, 0
        %v4799 = vsel %vm2110, %v4788, 0
        %v4802 = vsel %vm2110, %v4789, 0
        %4804 = vmatprep.subr.mxu0 0.0
        %4805 = vmatpush1.xpose.msra.mxu0 %v4799
        %4806 = vmatprep.subr.mxu0 0.0
        %4807 = vmatpush1.xpose.msra.mxu0 %v4802
        %4808 = vmatprep.subr.mxu0 0.0
        %4809 = vmatpush1.xpose.msra.mxu0 0.0
        %4810 = vmatprep.subr.mxu0 0.0
        %4811 = vmatpush1.xpose.msra.mxu0 0.0
        %4812 = vmatprep.subr.mxu0 0.0
        %4813 = vmatpush1.xpose.msra.mxu0 0.0
        %4814 = vmatprep.subr.mxu0 0.0
        %4815 = vmatpush1.xpose.msra.mxu0 0.0
        %4816 = vmatprep.subr.mxu0 0.0
        %4817 = vmatpush1.xpose.msra.mxu0 0.0
        %4818 = vmatprep.subr.mxu0 0.0
        %4819 = vmatpush1.xpose.msra.mxu0 0.0
        %4820 = vmatprep.subr.mxu0 0.0
        %4821 = vmatpush1.xpose.msra.mxu0 0.0
        %4822 = vmatprep.subr.mxu0 0.0
        %4823 = vmatpush1.xpose.msra.mxu0 0.0
        %4824 = vmatprep.subr.mxu0 0.0
        %4825 = vmatpush1.xpose.msra.mxu0 0.0
        %4826 = vmatprep.subr.mxu0 0.0
        %4827 = vmatpush1.xpose.msra.mxu0 0.0
        %4828 = vmatprep.subr.mxu0 0.0
        %4829 = vmatpush1.xpose.msra.mxu0 0.0
        %4830 = vmatprep.subr.mxu0 0.0
        %4831 = vmatpush1.xpose.msra.mxu0 0.0
        %4832 = vmatprep.subr.mxu0 0.0
        %4833 = vmatpush1.xpose.msra.mxu0 0.0
        %4834 = vmatprep.subr.mxu0 0.0
        %4835 = vmatpush1.xpose.msra.mxu0 0.0
        %4836 = vmatprep.subr.mxu0 0.0
        %4837 = vmatpush1.xpose.msra.mxu0 0.0
        %4838 = vmatprep.subr.mxu0 0.0
        %4839 = vmatpush1.xpose.msra.mxu0 0.0
        %4840 = vmatprep.subr.mxu0 0.0
        %4841 = vmatpush1.xpose.msra.mxu0 0.0
        %4842 = vmatprep.subr.mxu0 0.0
        %4843 = vmatpush1.xpose.msra.mxu0 0.0
        %4844 = vmatprep.subr.mxu0 0.0
        %4845 = vmatpush1.xpose.msra.mxu0 0.0
        %4846 = vmatprep.subr.mxu0 0.0
        %4847 = vmatpush1.xpose.msra.mxu0 0.0
        %4848 = vmatprep.subr.mxu0 0.0
        %4849 = vmatpush1.xpose.msra.mxu0 0.0
        %4850 = vmatprep.subr.mxu0 0.0
        %4851 = vmatpush1.xpose.msra.mxu0 0.0
        %4852 = vmatprep.subr.mxu0 0.0
        %4853 = vmatpush1.xpose.msra.mxu0 0.0
        %4854 = vmatprep.subr.mxu0 0.0
        %4855 = vmatpush1.xpose.msra.mxu0 0.0
        %4856 = vmatprep.subr.mxu0 0.0
        %4857 = vmatpush1.xpose.msra.mxu0 0.0
        %4858 = vmatprep.subr.mxu0 0.0
        %4859 = vmatpush1.xpose.msra.mxu0 0.0
        %4860 = vmatprep.subr.mxu0 0.0
        %4861 = vmatpush1.xpose.msra.mxu0 0.0
        %4862 = vmatprep.subr.mxu0 0.0
        %4863 = vmatpush1.xpose.msra.mxu0 0.0
        %4864 = vmatprep.subr.mxu0 0.0
        %4865 = vmatpush1.xpose.msra.mxu0 0.0
        %4866 = vmatprep.subr.mxu0 0.0
        %4867 = vmatpush1.xpose.msra.mxu0 0.0
        %4868 = vmatprep.mubr.f32.mxu0 0.0
        %4869 = vmatmul.mubr.f32.gmra.mrb[0].mxu0 %v4794
        %v4870 = vpop.f32.mrb[0].mxu0
        %v4871 = vadd.f32 0.0, %v4870
        %v4872 = vpop.f32.mrb[0].mxu0
        %4873 = vmatprep.mubr.f32.mxu0 0.0
        %4874 = vmatmul.mubr.f32.gmra.mrb[0].mxu0 %v4796
        %v4875 = vpop.f32.mrb[0].mxu0
        %v4876 = vadd.f32 0.0, %v4875
        %v4877 = vpop.f32.mrb[0].mxu0
        %4878 = vdwg.mxu0
        %4879 = vset.pattern.permute.xlu0 2
        %4880 = vperm.xlu0 %4879, %v4532
        %v4881 = vpop.permute.xlu0 %4880
        %4883 = vset.pattern.permute.xlu0 2
        %4884 = vperm.xlu0 %4883, %v4537
        %v4885 = vpop.permute.xlu0 %4884
        %v4887 = vlaneseq
        %v4888 = vshrl.u32 %v4887, 7
        %v4889 = vsub.s32 2, %v4888
        %v4890 = vrot.slane %v4610, %v4889
        %v4891 = vadd.f32 %v4881, %v4890
        %v4892 = vadd.f32 %v4885, %v4890
        %vm4893 = vcmp.gt.f32.partialorder %v4891, 0.0
        %vm4894 = vcmp.gt.f32.partialorder %v4892, 0.0
        %v4895 = vmul.f32 %v4891, 0.2
        %v4896 = vmul.f32 %v4892, 0.2
        %v4897 = vsel %vm4893, %v4891, %v4895
        %v4898 = vsel %vm4894, %v4892, %v4896
        %v4899 = vsel %vm2887, -1e+30, %v4897
        %v4900 = vsel %vm2888, -1e+30, %v4898
        %v4901 = vsel %vm2110, %v4899, -inf
        %4902 = vmax.xlane.f32.xlu0 %v4901
        %v4903 = vpop.xlane.xlu0 %4902
        %v4904 = vsel %vm2110, %v4900, -inf
        %4905 = vmax.xlane.f32.xlu0 %v4904
        %v4906 = vpop.xlane.xlu0 %4905
        %v4907 = vsub.f32 %v4899, %v4903
        %v4908 = vsub.f32 %v4900, %v4906
        %v4909 = vmul.f32 %v4907, 1.442695
        %v4910 = vpow.pop %v4909
        %v4911 = vmul.f32 %v4908, 1.442695
        %v4912 = vpow.pop %v4911
        %v4913 = vsel %vm2110, %v4910, 0.0
        %4914 = vadd.xlane.f32.xlu0 %v4913
        %v4915 = vpop.xlane.xlu0 %4914
        %v4916 = vsel %vm2110, %v4912, 0.0
        %4917 = vadd.xlane.f32.xlu0 %v4916
        %v4918 = vpop.xlane.xlu0 %4917
        %v4919 = vrcp.pop %v4915
        %v4920 = vrcp.pop %v4918
        %v4921 = vmul.f32 %v4910, %v4919
        %v4922 = vmul.f32 %v4912, %v4920
        %v4924 = vrot.slane %v4414, 4
        %v4925 = vrot.slane %v4419, 4
        %v4926 = vsel %vm1191, %v4924, %v4925
        %v4927 = vsel %vm2110, %v4926, 0
        %v4929 = vsel %vm2110, %v4925, 0
        %v4932 = vsel %vm2110, %v4921, 0
        %v4935 = vsel %vm2110, %v4922, 0
        %4937 = vmatprep.subr.mxu0 0.0
        %4938 = vmatpush1.xpose.msra.mxu0 %v4932
        %4939 = vmatprep.subr.mxu0 0.0
        %4940 = vmatpush1.xpose.msra.mxu0 %v4935
        %4941 = vmatprep.subr.mxu0 0.0
        %4942 = vmatpush1.xpose.msra.mxu0 0.0
        %4943 = vmatprep.subr.mxu0 0.0
        %4944 = vmatpush1.xpose.msra.mxu0 0.0
        %4945 = vmatprep.subr.mxu0 0.0
        %4946 = vmatpush1.xpose.msra.mxu0 0.0
        %4947 = vmatprep.subr.mxu0 0.0
        %4948 = vmatpush1.xpose.msra.mxu0 0.0
        %4949 = vmatprep.subr.mxu0 0.0
        %4950 = vmatpush1.xpose.msra.mxu0 0.0
        %4951 = vmatprep.subr.mxu0 0.0
        %4952 = vmatpush1.xpose.msra.mxu0 0.0
        %4953 = vmatprep.subr.mxu0 0.0
        %4954 = vmatpush1.xpose.msra.mxu0 0.0
        %4955 = vmatprep.subr.mxu0 0.0
        %4956 = vmatpush1.xpose.msra.mxu0 0.0
        %4957 = vmatprep.subr.mxu0 0.0
        %4958 = vmatpush1.xpose.msra.mxu0 0.0
        %4959 = vmatprep.subr.mxu0 0.0
        %4960 = vmatpush1.xpose.msra.mxu0 0.0
        %4961 = vmatprep.subr.mxu0 0.0
        %4962 = vmatpush1.xpose.msra.mxu0 0.0
        %4963 = vmatprep.subr.mxu0 0.0
        %4964 = vmatpush1.xpose.msra.mxu0 0.0
        %4965 = vmatprep.subr.mxu0 0.0
        %4966 = vmatpush1.xpose.msra.mxu0 0.0
        %4967 = vmatprep.subr.mxu0 0.0
        %4968 = vmatpush1.xpose.msra.mxu0 0.0
        %4969 = vmatprep.subr.mxu0 0.0
        %4970 = vmatpush1.xpose.msra.mxu0 0.0
        %4971 = vmatprep.subr.mxu0 0.0
        %4972 = vmatpush1.xpose.msra.mxu0 0.0
        %4973 = vmatprep.subr.mxu0 0.0
        %4974 = vmatpush1.xpose.msra.mxu0 0.0
        %4975 = vmatprep.subr.mxu0 0.0
        %4976 = vmatpush1.xpose.msra.mxu0 0.0
        %4977 = vmatprep.subr.mxu0 0.0
        %4978 = vmatpush1.xpose.msra.mxu0 0.0
        %4979 = vmatprep.subr.mxu0 0.0
        %4980 = vmatpush1.xpose.msra.mxu0 0.0
        %4981 = vmatprep.subr.mxu0 0.0
        %4982 = vmatpush1.xpose.msra.mxu0 0.0
        %4983 = vmatprep.subr.mxu0 0.0
        %4984 = vmatpush1.xpose.msra.mxu0 0.0
        %4985 = vmatprep.subr.mxu0 0.0
        %4986 = vmatpush1.xpose.msra.mxu0 0.0
        %4987 = vmatprep.subr.mxu0 0.0
        %4988 = vmatpush1.xpose.msra.mxu0 0.0
        %4989 = vmatprep.subr.mxu0 0.0
        %4990 = vmatpush1.xpose.msra.mxu0 0.0
        %4991 = vmatprep.subr.mxu0 0.0
        %4992 = vmatpush1.xpose.msra.mxu0 0.0
        %4993 = vmatprep.subr.mxu0 0.0
        %4994 = vmatpush1.xpose.msra.mxu0 0.0
        %4995 = vmatprep.subr.mxu0 0.0
        %4996 = vmatpush1.xpose.msra.mxu0 0.0
        %4997 = vmatprep.subr.mxu0 0.0
        %4998 = vmatpush1.xpose.msra.mxu0 0.0
        %4999 = vmatprep.subr.mxu0 0.0
        %5000 = vmatpush1.xpose.msra.mxu0 0.0
        %5001 = vmatprep.mubr.f32.mxu0 0.0
        %5002 = vmatmul.mubr.f32.gmra.mrb[0].mxu0 %v4927
        %v5003 = vpop.f32.mrb[0].mxu0
        %v5004 = vadd.f32 0.0, %v5003
        %v5005 = vpop.f32.mrb[0].mxu0
        %5006 = vmatprep.mubr.f32.mxu0 0.0
        %5007 = vmatmul.mubr.f32.gmra.mrb[0].mxu0 %v4929
        %v5008 = vpop.f32.mrb[0].mxu0
        %v5009 = vadd.f32 0.0, %v5008
        %v5010 = vpop.f32.mrb[0].mxu0
        %5011 = vdwg.mxu0
        %5012 = vset.pattern.permute.xlu0 3
        %5013 = vperm.xlu0 %5012, %v4532
        %v5014 = vpop.permute.xlu0 %5013
        %5016 = vset.pattern.permute.xlu0 3
        %5017 = vperm.xlu0 %5016, %v4537
        %v5018 = vpop.permute.xlu0 %5017
        %v5020 = vlaneseq
        %v5021 = vshrl.u32 %v5020, 7
        %v5022 = vsub.s32 3, %v5021
        %v5023 = vrot.slane %v4610, %v5022
        %v5024 = vadd.f32 %v5014, %v5023
        %v5025 = vadd.f32 %v5018, %v5023
        %vm5026 = vcmp.gt.f32.partialorder %v5024, 0.0
        %vm5027 = vcmp.gt.f32.partialorder %v5025, 0.0
        %v5028 = vmul.f32 %v5024, 0.2
        %v5029 = vmul.f32 %v5025, 0.2
        %v5030 = vsel %vm5026, %v5024, %v5028
        %v5031 = vsel %vm5027, %v5025, %v5029
        %v5032 = vsel %vm2887, -1e+30, %v5030
        %v5033 = vsel %vm2888, -1e+30, %v5031
        %v5034 = vsel %vm2110, %v5032, -inf
        %5035 = vmax.xlane.f32.xlu0 %v5034
        %v5036 = vpop.xlane.xlu0 %5035
        %v5037 = vsel %vm2110, %v5033, -inf
        %5038 = vmax.xlane.f32.xlu0 %v5037
        %v5039 = vpop.xlane.xlu0 %5038
        %v5040 = vsub.f32 %v5032, %v5036
        %v5041 = vsub.f32 %v5033, %v5039
        %v5042 = vmul.f32 %v5040, 1.442695
        %v5043 = vpow.pop %v5042
        %v5044 = vmul.f32 %v5041, 1.442695
        %v5045 = vpow.pop %v5044
        %v5046 = vsel %vm2110, %v5043, 0.0
        %5047 = vadd.xlane.f32.xlu0 %v5046
        %v5048 = vpop.xlane.xlu0 %5047
        %v5049 = vsel %vm2110, %v5045, 0.0
        %5050 = vadd.xlane.f32.xlu0 %v5049
        %v5051 = vpop.xlane.xlu0 %5050
        %v5052 = vrcp.pop %v5048
        %v5053 = vrcp.pop %v5051
        %v5054 = vmul.f32 %v5043, %v5052
        %v5055 = vmul.f32 %v5045, %v5053
        %v5057 = vrot.slane %v4419, 6
        %v5058 = vrot.slane %v4424, 6
        %v5059 = vsel %vm3312, %v5057, %v5058
        %v5060 = vsel %vm2110, %v5059, 0
        %v5062 = vsel %vm2110, %v5058, 0
        %v5065 = vsel %vm2110, %v5054, 0
        %v5068 = vsel %vm2110, %v5055, 0
        %5070 = vmatprep.subr.mxu0 0.0
        %5071 = vmatpush1.xpose.msra.mxu0 %v5065
        %5072 = vmatprep.subr.mxu0 0.0
        %5073 = vmatpush1.xpose.msra.mxu0 %v5068
        %5074 = vmatprep.subr.mxu0 0.0
        %5075 = vmatpush1.xpose.msra.mxu0 0.0
        %5076 = vmatprep.subr.mxu0 0.0
        %5077 = vmatpush1.xpose.msra.mxu0 0.0
        %5078 = vmatprep.subr.mxu0 0.0
        %5079 = vmatpush1.xpose.msra.mxu0 0.0
        %5080 = vmatprep.subr.mxu0 0.0
        %5081 = vmatpush1.xpose.msra.mxu0 0.0
        %5082 = vmatprep.subr.mxu0 0.0
        %5083 = vmatpush1.xpose.msra.mxu0 0.0
        %5084 = vmatprep.subr.mxu0 0.0
        %5085 = vmatpush1.xpose.msra.mxu0 0.0
        %5086 = vmatprep.subr.mxu0 0.0
        %5087 = vmatpush1.xpose.msra.mxu0 0.0
        %5088 = vmatprep.subr.mxu0 0.0
        %5089 = vmatpush1.xpose.msra.mxu0 0.0
        %5090 = vmatprep.subr.mxu0 0.0
        %5091 = vmatpush1.xpose.msra.mxu0 0.0
        %5092 = vmatprep.subr.mxu0 0.0
        %5093 = vmatpush1.xpose.msra.mxu0 0.0
        %5094 = vmatprep.subr.mxu0 0.0
        %5095 = vmatpush1.xpose.msra.mxu0 0.0
        %5096 = vmatprep.subr.mxu0 0.0
        %5097 = vmatpush1.xpose.msra.mxu0 0.0
        %5098 = vmatprep.subr.mxu0 0.0
        %5099 = vmatpush1.xpose.msra.mxu0 0.0
        %5100 = vmatprep.subr.mxu0 0.0
        %5101 = vmatpush1.xpose.msra.mxu0 0.0
        %5102 = vmatprep.subr.mxu0 0.0
        %5103 = vmatpush1.xpose.msra.mxu0 0.0
        %5104 = vmatprep.subr.mxu0 0.0
        %5105 = vmatpush1.xpose.msra.mxu0 0.0
        %5106 = vmatprep.subr.mxu0 0.0
        %5107 = vmatpush1.xpose.msra.mxu0 0.0
        %5108 = vmatprep.subr.mxu0 0.0
        %5109 = vmatpush1.xpose.msra.mxu0 0.0
        %5110 = vmatprep.subr.mxu0 0.0
        %5111 = vmatpush1.xpose.msra.mxu0 0.0
        %5112 = vmatprep.subr.mxu0 0.0
        %5113 = vmatpush1.xpose.msra.mxu0 0.0
        %5114 = vmatprep.subr.mxu0 0.0
        %5115 = vmatpush1.xpose.msra.mxu0 0.0
        %5116 = vmatprep.subr.mxu0 0.0
        %5117 = vmatpush1.xpose.msra.mxu0 0.0
        %5118 = vmatprep.subr.mxu0 0.0
        %5119 = vmatpush1.xpose.msra.mxu0 0.0
        %5120 = vmatprep.subr.mxu0 0.0
        %5121 = vmatpush1.xpose.msra.mxu0 0.0
        %5122 = vmatprep.subr.mxu0 0.0
        %5123 = vmatpush1.xpose.msra.mxu0 0.0
        %5124 = vmatprep.subr.mxu0 0.0
        %5125 = vmatpush1.xpose.msra.mxu0 0.0
        %5126 = vmatprep.subr.mxu0 0.0
        %5127 = vmatpush1.xpose.msra.mxu0 0.0
        %5128 = vmatprep.subr.mxu0 0.0
        %5129 = vmatpush1.xpose.msra.mxu0 0.0
        %5130 = vmatprep.subr.mxu0 0.0
        %5131 = vmatpush1.xpose.msra.mxu0 0.0
        %5132 = vmatprep.subr.mxu0 0.0
        %5133 = vmatpush1.xpose.msra.mxu0 0.0
        %5134 = vmatprep.mubr.f32.mxu0 0.0
        %5135 = vmatmul.mubr.f32.gmra.mrb[0].mxu0 %v5060
        %v5136 = vpop.f32.mrb[0].mxu0
        %v5137 = vadd.f32 0.0, %v5136
        %v5138 = vpop.f32.mrb[0].mxu0
        %5139 = vmatprep.mubr.f32.mxu0 0.0
        %5140 = vmatmul.mubr.f32.gmra.mrb[0].mxu0 %v5062
        %v5141 = vpop.f32.mrb[0].mxu0
        %v5142 = vadd.f32 0.0, %v5141
        %v5143 = vpop.f32.mrb[0].mxu0
        %5144 = vdwg.mxu0
        %v5147 = vrot.slane %v4871, 6
        %v5148 = vrot.slane %v4876, 6
        %v5149 = vsel %vm3312, %v5147, %v5148
        %v5154 = vrot.slane %v5004, 4
        %v5155 = vrot.slane %v5009, 4
        %v5156 = vsel %vm1191, %v5154, %v5155
        %v5161 = vrot.slane %v5137, 2
        %v5162 = vrot.slane %v5142, 2
        %v5163 = vsel %vm3045, %v5161, %v5162
        %v5166 = vsel %vm3312, %v4743, %v5147
        %v5167 = vsel %vm1191, %v5149, %v5154
        %v5168 = vsel %vm3045, %v5156, %v5161
        %vm5169 = vcmp.gt.f32.partialorder %v4738, 0.0
        %vm5170 = vcmp.gt.f32.partialorder %v5166, 0.0
        %vm5171 = vcmp.gt.f32.partialorder %v5167, 0.0
        %vm5172 = vcmp.gt.f32.partialorder %v5168, 0.0
        %vm5173 = vcmp.gt.f32.partialorder %v5163, 0.0
        %v5174 = vmul.f32 %v4738, 1.442695
        %v5175 = vpow.pop %v5174
        %v5176 = vmul.f32 %v5166, 1.442695
        %v5177 = vpow.pop %v5176
        %v5178 = vmul.f32 %v5167, 1.442695
        %v5179 = vpow.pop %v5178
        %v5180 = vmul.f32 %v5168, 1.442695
        %v5181 = vpow.pop %v5180
        %v5182 = vmul.f32 %v5163, 1.442695
        %v5183 = vpow.pop %v5182
        %v5184 = vsub.f32 %v5175, 1.0
        %v5185 = vsub.f32 %v5177, 1.0
        %v5186 = vsub.f32 %v5179, 1.0
        %v5187 = vsub.f32 %v5181, 1.0
        %v5188 = vsub.f32 %v5183, 1.0
        %v5189 = vsel %vm5169, %v4738, %v5184
        %v5190 = vsel %vm5170, %v5166, %v5185
        %v5191 = vsel %vm5171, %v5167, %v5186
        %v5192 = vsel %vm5172, %v5168, %v5187
        %v5193 = vsel %vm5173, %v5163, %v5188
        %5195 = vset.pattern.permute.xlu0 0
        %5196 = vperm.xlu0 %5195, %v1169
        %v5197 = vpop.permute.xlu0 %5196
        %v5200 = vcombine.high %v1168, %v1168
        %v5201 = vsel %vm1559, %v5200, 0
        %5203 = vmatprep.subr.mxu0 0.0
        %5204 = vmatpush1.msra.mxu0 %v3445
        %5205 = vmatprep.subr.mxu0 0.0
        %5206 = vmatpush1.msra.mxu0 %v3446
        %5207 = vmatprep.subr.mxu0 0.0
        %5208 = vmatpush1.msra.mxu0 %v3447
        %5209 = vmatprep.subr.mxu0 0.0
        %5210 = vmatpush1.msra.mxu0 %v3448
        %5211 = vmatprep.subr.mxu0 0.0
        %5212 = vmatpush1.msra.mxu0 %v3449
        %5213 = vmatprep.subr.mxu0 0.0
        %5214 = vmatpush1.msra.mxu0 %v4317
        %5215 = vmatprep.subr.mxu0 0.0
        %5216 = vmatpush1.msra.mxu0 %v4318
        %5217 = vmatprep.subr.mxu0 0.0
        %5218 = vmatpush1.msra.mxu0 %v4319
        %5219 = vmatprep.subr.mxu0 0.0
        %5220 = vmatpush1.msra.mxu0 %v4320
        %5221 = vmatprep.subr.mxu0 0.0
        %5222 = vmatpush1.msra.mxu0 %v4321
        %5223 = vmatprep.subr.mxu0 0.0
        %5224 = vmatpush1.msra.mxu0 %v5189
        %5225 = vmatprep.subr.mxu0 0.0
        %5226 = vmatpush1.msra.mxu0 %v5190
        %5227 = vmatprep.subr.mxu0 0.0
        %5228 = vmatpush1.msra.mxu0 %v5191
        %5229 = vmatprep.subr.mxu0 0.0
        %5230 = vmatpush1.msra.mxu0 %v5192
        %5231 = vmatprep.subr.mxu0 0.0
        %5232 = vmatpush1.msra.mxu0 %v5193
        %5233 = vmatprep.subr.mxu0 0.0
        %5234 = vmatpush1.msra.mxu0 %v2551
        %5235 = vmatprep.subr.mxu0 0.0
        %5236 = vmatpush1.msra.mxu0 %v2552
        %5237 = vmatprep.subr.mxu0 0.0
        %5238 = vmatpush1.msra.mxu0 %v2553
        %5239 = vmatprep.subr.mxu0 0.0
        %5240 = vmatpush1.msra.mxu0 %v2554
        %5241 = vmatprep.subr.mxu0 0.0
        %5242 = vmatpush1.msra.mxu0 %v2555
        %5243 = vmatprep.subr.mxu0 0.0
        %5244 = vmatpush1.msra.mxu0 0.0
        %5245 = vmatprep.subr.mxu0 0.0
        %5246 = vmatpush1.msra.mxu0 0.0
        %5247 = vmatprep.subr.mxu0 0.0
        %5248 = vmatpush1.msra.mxu0 0.0
        %5249 = vmatprep.subr.mxu0 0.0
        %5250 = vmatpush1.msra.mxu0 0.0
        %5251 = vmatprep.subr.mxu0 0.0
        %5252 = vmatpush1.msra.mxu0 0.0
        %5253 = vmatprep.subr.mxu0 0.0
        %5254 = vmatpush1.msra.mxu0 0.0
        %5255 = vmatprep.subr.mxu0 0.0
        %5256 = vmatpush1.msra.mxu0 0.0
        %5257 = vmatprep.subr.mxu0 0.0
        %5258 = vmatpush1.msra.mxu0 0.0
        %5259 = vmatprep.subr.mxu0 0.0
        %5260 = vmatpush1.msra.mxu0 0.0
        %5261 = vmatprep.subr.mxu0 0.0
        %5262 = vmatpush1.msra.mxu0 0.0
        %5263 = vmatprep.subr.mxu0 0.0
        %5264 = vmatpush1.msra.mxu0 0.0
        %5265 = vmatprep.subr.mxu0 0.0
        %5266 = vmatpush1.msra.mxu0 0.0
        %5267 = vmatprep.mubr.f32.mxu0 %v5201
        %5268 = vmatmul.mubr.f32.gmra.mrb[0].mxu0 %v1168
        %v5269 = vpop.f32.mrb[0].mxu0
        %v5270 = vadd.f32 %v5197, %v5269
        %v5271 = vpop.f32.mrb[0].mxu0
        %5272 = vdwg.mxu0
        %vm5273 = vcmask 125952
        %5274 = vst.msk [vmem:[%s1078] sm:$0xf] %vm5273, %v5270
        %s5275 = sand.u32 %s838, 1
        %s5276 = scalar_lea.sflag [#allocation3], %s5275
        %s5277 = sand.u32 %s838, 1
        %s5278 = smul.addr %s5277, 4
        %s5279 = scalar_lea.vmem [#allocation2], %s5278
        // Predicated region
        $region161: #{epignn_forward.1} parent=159 // pred_check
          %p5280 = pneg %p848
        $region162: #{epignn_forward.1} parent=159 // pred_check_branch
          %5282 = sbr.rel (%p5280) target = $region164
        $region163: #{epignn_forward.1} parent=159 // pred_region
          %s5284 = ssub.s32 64, 64
          %5285 = vsyncadd %s5276, %s5284
          %s5286 = smul.addr %s85, 64
          %s5287 = scalar_lea.hbm %s71, %s5286
          %s5289 = sshll.u32 %s5279, 4
          %s5290 = int_to_ptr.vmem [resolvable:$true] %s5289
          %5292 = dma.vmem_to_hbm [thread:$0]  %s5290, 64, %s5287, %s5276
        $region164: #{epignn_forward.1} parent=159 // pred_fallthru
          _
      $region160: #{epignn_forward.1} parent=5 // pred_fallthru
        _
      %p5293 = scmp.le.s32.totalorder 2, %s80
      // Predicated region
      $region165: #{epignn_forward.1} parent=5 // pred_check
        %p5294 = pneg %p5293
      $region166: #{epignn_forward.1} parent=5 // pred_check_branch
        %5296 = sbr.rel (%p5294) target = $region168
      $region167: #{epignn_forward.1} parent=5 // pred_region
        %s5297 = ssub.s32 %s80, 2
        // Predicated region
        $region169: #{epignn_forward.1} parent=167 // pred_check
          %p5298 = pneg %p854
        $region170: #{epignn_forward.1} parent=167 // pred_check_branch
          %5300 = sbr.rel (%p5298) target = $region172
        $region171: #{epignn_forward.1} parent=167 // pred_region
          %s5301 = sand.u32 %s839, 1
          %s5302 = scalar_lea.sflag [#allocation3], %s5301
          %s5303 = sand.u32 %s839, 1
          %s5304 = smul.addr %s5303, 4
          %s5305 = scalar_lea.vmem [#allocation2], %s5304
          %5306 = dma.done %s5302, 64
        $region172: #{epignn_forward.1} parent=167 // pred_fallthru
          _
      $region168: #{epignn_forward.1} parent=5 // pred_fallthru
        _
    $region6: #{epignn_forward.1} parent=1 // loop_footer
      %s84 = sadd.s32 1, %s80
    $region7: #{epignn_forward.1} parent=1 // loop_footer_branch
      %79 = sbr.rel target = $region3
    $region8: #{epignn_forward.1} parent=1 // loop_exit
      _
    %5307 = vsyncpa [#allocation3], 1
    %s5308 = scalar_lea.sflag [#allocation3], 1
    %5309 = vsyncpa %s5308, 1

</llo_original>
